<compile_context>
chip_gen: v6e
topology: v6e:2x2x1
jax: 0.10.0
libtpu: 0.0.40
codegen_flags: <defaults>
</compile_context>

<pallas_src>
import functools

import jax
import jax.numpy as jnp
from jax.experimental import pallas as pl
from jax.experimental.pallas import tpu as pltpu

LATENT_SIZE = 32  # `latent_size` is a free variable in the reference module; fixed here.
KH = KW = 3       # every (de)conv in the module is 3x3


def _cdiv(a, b):
    return (a + b - 1) // b


def _round_up(x, m):
    return _cdiv(x, m) * m


# ---------------------------------------------------------------------------
# Pallas kernels
# ---------------------------------------------------------------------------
def _matmul_bias_act_kernel(x_ref, w_ref, b_ref, o_ref, *, act):
    # bf16 x bf16 on the MXU, f32 accumulate, f32 epilogue, store in o_ref.dtype.
    acc = jnp.dot(x_ref[...], w_ref[...], preferred_element_type=jnp.float32)
    acc = acc + b_ref[...]  # (1, Np) broadcast over rows
    if act == "relu":
        acc = jnp.maximum(acc, 0.0)
    elif act == "sigmoid":
        acc = jax.nn.sigmoid(acc)
    o_ref[...] = acc.astype(o_ref.dtype)


def pallas_matmul(x, w, b, act="none", out_dtype=jnp.bfloat16, tm=512):
    """Fused y = act(x @ w + b).  x:[M,K]  w:[K,N]  b:[N]  ->  [M,N] out_dtype.

    M is tiled (grid axis marked "parallel"), weight/bias stay resident,
    N is padded to a multiple of 128 (lane-dense stores), K to a multiple of 16
    (bf16 sublane packing).
    """
    M, K = x.shape
    Kw, N = w.shape
    assert K == Kw

    Kp = _round_up(K, 16)
    Np = _round_up(N, 128)
    g = _cdiv(M, tm)
    tm_eff = _round_up(_cdiv(M, g), 8)
    Mp = g * tm_eff

    xb = x.astype(jnp.bfloat16)
    if (Mp, Kp) != (M, K):
        xb = jnp.pad(xb, ((0, Mp - M), (0, Kp - K)))
    wb = w.astype(jnp.bfloat16)
    if (Kp, Np) != (K, N):
        wb = jnp.pad(wb, ((0, Kp - K), (0, Np - N)))
    bb = jnp.pad(b.astype(jnp.float32).reshape(-1), (0, Np - N)).reshape(1, Np)

    out = pl.pallas_call(
        functools.partial(_matmul_bias_act_kernel, act=act),
        out_shape=jax.ShapeDtypeStruct((Mp, Np), out_dtype),
        grid=(g,),
        in_specs=[
            pl.BlockSpec((tm_eff, Kp), lambda i: (i, 0)),
            pl.BlockSpec((Kp, Np), lambda i: (0, 0)),   # resident weight
            pl.BlockSpec((1, Np), lambda i: (0, 0)),    # resident bias
        ],
        out_specs=pl.BlockSpec((tm_eff, Np), lambda i: (i, 0)),
        compiler_params=pltpu.CompilerParams(
            dimension_semantics=("parallel",),
        ),
    )(xb, wb, bb)
    # TODO(synk): carry the 128-padded channel dim through the 64-channel chain
    # (slice only at the latent head / final output) once the layers around it
    # accept phantom channels; for now a single slice per layer remains.
    return out[:M, :N]


def _latent_kernel(flat_ref, wz_ref, bz_ref, eps_ref, wd_ref, bd_ref,
                   z_ref, dec_ref, *, latent):
    # h[:, :L] = z_mean, h[:, L:2L] = z_log_var  (weights concatenated, lane-padded to 128)
    h = jnp.dot(flat_ref[...], wz_ref[...], preferred_element_type=jnp.float32)
    h = h + bz_ref[...]
    mu = h[:, :latent]
    lv = h[:, latent:2 * latent]
    enc = mu + eps_ref[...] * jnp.exp(lv * 0.5)

    # Pack (mu | logvar | encoded | pad) into one lane-dense output block.
    pad = z_ref.shape[1] - 3 * latent
    pieces = [mu, lv, enc]
    if pad > 0:
        pieces.append(jnp.zeros((mu.shape[0], pad), jnp.float32))
    z_ref[...] = jnp.concatenate(pieces, axis=1)

    dec = jnp.dot(enc.astype(wd_ref.dtype), wd_ref[...],
                  preferred_element_type=jnp.float32) + bd_ref[...]
    dec_ref[...] = dec.astype(dec_ref.dtype)


def pallas_latent(flat, wz, bz, eps, wd, bd, latent, tb=128):
    """Single kernel (batch-tiled): z heads + reparameterize + decoder Linear."""
    B, K = flat.shape
    Nz = wz.shape[1]
    Nd = wd.shape[1]
    Zw = _round_up(3 * latent, 128)   # packed (mu|logvar|encoded|pad) width

    tb = min(tb, _round_up(B, 8))
    g = _cdiv(B, tb)
    Bp = g * tb

    flat_b = flat.astype(jnp.bfloat16)
    eps_f = eps.astype(jnp.float32)
    if Bp != B:
        flat_b = jnp.pad(flat_b, ((0, Bp - B), (0, 0)))
        eps_f = jnp.pad(eps_f, ((0, Bp - B), (0, 0)))

    z_packed, dec = pl.pallas_call(
        functools.partial(_latent_kernel, latent=latent),
        out_shape=(
            jax.ShapeDtypeStruct((Bp, Zw), jnp.float32),    # packed mu|logvar|encoded
            jax.ShapeDtypeStruct((Bp, Nd), jnp.bfloat16),   # decoder-linear output
        ),
        grid=(g,),
        in_specs=[
            pl.BlockSpec((tb, K), lambda i: (i, 0)),
            pl.BlockSpec((K, Nz), lambda i: (0, 0)),        # resident z-head weight
            pl.BlockSpec((1, Nz), lambda i: (0, 0)),
            pl.BlockSpec((tb, latent), lambda i: (i, 0)),
            pl.BlockSpec((latent, Nd), lambda i: (0, 0)),   # resident decoder weight
            pl.BlockSpec((1, Nd), lambda i: (0, 0)),
        ],
        out_specs=(
            pl.BlockSpec((tb, Zw), lambda i: (i, 0)),
            pl.BlockSpec((tb, Nd), lambda i: (i, 0)),
        ),
        compiler_params=pltpu.CompilerParams(
            dimension_semantics=("parallel",),
        ),
    )(flat_b, wz, bz, eps_f, wd, bd)

    z_mean = z_packed[:B, :latent]
    z_log_var = z_packed[:B, latent:2 * latent]
    encoded = z_packed[:B, 2 * latent:3 * latent]
    return z_mean, z_log_var, encoded, dec[:B]


# ---------------------------------------------------------------------------
# Conv helpers (im2col glue in JAX, matmul/bias/act in Pallas)
# ---------------------------------------------------------------------------
def _im2col(x_nhwc, kh, kw, stride, pad):
    # TODO(synk): for the 64->64 layers, an in-kernel shifted-matmul accumulator
    # (halo tiles + 9 tap offsets) would avoid the 9x im2col HBM amplification
    # at training-scale batch sizes.
    x = jnp.pad(x_nhwc, ((0, 0), (pad, pad), (pad, pad), (0, 0)))
    B, Hp, Wp, C = x.shape
    oh = (Hp - kh) // stride + 1
    ow = (Wp - kw) // stride + 1
    patches = []
    for i in range(kh):
        for j in range(kw):
            patches.append(x[:, i:i + stride * oh:stride, j:j + stride * ow:stride, :])
    p = jnp.stack(patches, axis=3)  # [B, oh, ow, kh*kw, C]
    return p.reshape(B * oh * ow, kh * kw * C), oh, ow


def conv2d(x_nhwc, wm, b, stride, pad, act, out_dtype=jnp.bfloat16):
    """Conv2d on NHWC data; wm already in matmul layout [kh*kw*C_in, C_out]."""
    cols, oh, ow = _im2col(x_nhwc, KH, KW, stride, pad)
    y = pallas_matmul(cols, wm, b, act, out_dtype=out_dtype)
    B = x_nhwc.shape[0]
    return y.reshape(B, oh, ow, wm.shape[1])


def deconv2d(x_nhwc, wm, b, stride, pad, act, out_dtype=jnp.bfloat16):
    """PyTorch ConvTranspose2d via zero-insertion + flipped-kernel conv (weight pre-converted)."""
    # TODO(synk): phase-decomposed (sub-pixel) transposed conv for the stride-2
    # layers would remove the ~75% zero MACs introduced by zero insertion.
    B, H, W, C = x_nhwc.shape
    s = stride
    if s > 1:
        xz = jnp.zeros((B, (H - 1) * s + 1, (W - 1) * s + 1, C), x_nhwc.dtype)
        xz = xz.at[:, ::s, ::s, :].set(x_nhwc)
    else:
        xz = x_nhwc
    return conv2d(xz, wm, b, stride=1, pad=KH - 1 - pad, act=act, out_dtype=out_dtype)


# ---------------------------------------------------------------------------
# Parameters: synthetic PyTorch-layout init + one-time layout folding
# ---------------------------------------------------------------------------
def init_params(key):
    p = {}

    def nrm(key, shape, fan_in):
        return (jax.random.normal(key, shape, jnp.float32) / jnp.sqrt(float(fan_in))).astype(jnp.float32)

    keys = iter(jax.random.split(key, 32))
    # encoder convs: [O, I, kh, kw]
    p["c1_w"] = nrm(next(keys), (32, 1, 3, 3), 1 * 9)
    p["c1_b"] = nrm(next(keys), (32,), 9)
    p["c2_w"] = nrm(next(keys), (64, 32, 3, 3), 32 * 9)
    p["c2_b"] = nrm(next(keys), (64,), 288)
    p["c3_w"] = nrm(next(keys), (64, 64, 3, 3), 64 * 9)
    p["c3_b"] = nrm(next(keys), (64,), 576)
    p["c4_w"] = nrm(next(keys), (64, 64, 3, 3), 64 * 9)
    p["c4_b"] = nrm(next(keys), (64,), 576)
    # latent heads: stored as [in(NCHW-flatten order), out]
    p["zm_w"] = nrm(next(keys), (3136, LATENT_SIZE), 3136)
    p["zm_b"] = nrm(next(keys), (LATENT_SIZE,), 3136)
    p["zv_w"] = nrm(next(keys), (3136, LATENT_SIZE), 3136)
    p["zv_b"] = nrm(next(keys), (LATENT_SIZE,), 3136)
    # decoder linear
    p["dl_w"] = nrm(next(keys), (LATENT_SIZE, 3136), LATENT_SIZE)
    p["dl_b"] = nrm(next(keys), (3136,), LATENT_SIZE)
    # decoder transposed convs: [I, O, kh, kw]
    p["d1_w"] = nrm(next(keys), (64, 64, 3, 3), 64 * 9)
    p["d1_b"] = nrm(next(keys), (64,), 576)
    p["d2_w"] = nrm(next(keys), (64, 64, 3, 3), 64 * 9)
    p["d2_b"] = nrm(next(keys), (64,), 576)
    p["d3_w"] = nrm(next(keys), (64, 32, 3, 3), 64 * 9)
    p["d3_b"] = nrm(next(keys), (32,), 576)
    p["d4_w"] = nrm(next(keys), (32, 1, 3, 3), 32 * 9)
    p["d4_b"] = nrm(next(keys), (1,), 288)
    return p


def _conv_w_to_matmul(w_oihw):
    O, I, kh, kw = w_oihw.shape
    # patch feature order is (i*kw + j)*C_in + c_in
    return jnp.transpose(w_oihw, (2, 3, 1, 0)).reshape(kh * kw * I, O).astype(jnp.bfloat16)


def _deconv_w_to_matmul(w_iohw):
    # flip spatial dims, swap in/out -> equivalent conv weight [O, I, kh, kw]
    w_eq = jnp.transpose(w_iohw[:, :, ::-1, ::-1], (1, 0, 2, 3))
    return _conv_w_to_matmul(w_eq)


def prepare_params(p):
    """One-time conversion to matmul-ready bf16 weights; folds NCHW flatten perms."""
    prep = {}
    for name in ("c1", "c2", "c3", "c4"):
        prep[name + "_w"] = _conv_w_to_matmul(p[name + "_w"])
        prep[name + "_b"] = p[name + "_b"].astype(jnp.float32)
    for name in ("d1", "d2", "d3", "d4"):
        prep[name + "_w"] = _deconv_w_to_matmul(p[name + "_w"])
        prep[name + "_b"] = p[name + "_b"].astype(jnp.float32)

    # perm[j_nhwc] = j_nchw for a 64x7x7 feature map (PyTorch Flatten / Reshape order).
    perm = jnp.arange(64 * 7 * 7).reshape(64, 7, 7).transpose(1, 2, 0).reshape(-1)

    # Fused latent head: [3136, 2L] (rows permuted to NHWC order), lane-padded to 128.
    wz = jnp.concatenate([p["zm_w"][perm, :], p["zv_w"][perm, :]], axis=1)
    nzp = _round_up(wz.shape[1], 128)
    prep["wz"] = jnp.pad(wz, ((0, 0), (0, nzp - wz.shape[1]))).astype(jnp.bfloat16)
    bz = jnp.concatenate([p["zm_b"], p["zv_b"]])
    prep["bz"] = jnp.pad(bz, (0, nzp - bz.shape[0])).reshape(1, nzp).astype(jnp.float32)

    # Decoder Linear with the NCHW Reshape permutation folded into its columns.
    prep["wd"] = p["dl_w"][:, perm].astype(jnp.bfloat16)
    prep["bd"] = p["dl_b"][perm].reshape(1, -1).astype(jnp.float32)
    return prep


# ---------------------------------------------------------------------------
# Forward pass
# ---------------------------------------------------------------------------
def vae_forward(prep, x_nchw, eps):
    B = x_nchw.shape[0]
    # NCHW -> NHWC, single up-front bf16 cast; activations stay bf16 end to end.
    x = jnp.transpose(x_nchw, (0, 2, 3, 1)).astype(jnp.bfloat16)

    # encoder
    h = conv2d(x, prep["c1_w"], prep["c1_b"], stride=1, pad=1, act="relu")   # [B,28,28,32]
    h = conv2d(h, prep["c2_w"], prep["c2_b"], stride=2, pad=1, act="relu")   # [B,14,14,64]
    h = conv2d(h, prep["c3_w"], prep["c3_b"], stride=2, pad=1, act="relu")   # [B, 7, 7,64]
    h = conv2d(h, prep["c4_w"], prep["c4_b"], stride=1, pad=1, act="none")   # [B, 7, 7,64]
    # TODO(synk): fuse c4 into pallas_latent so its output feeds the z-head
    # matmul directly from VMEM (removes one (B,3136) HBM round-trip).

    # NHWC flatten; the NCHW-flatten permutation is folded into wz / wd.
    flat = h.reshape(B, 7 * 7 * 64)

    # fused latent path: z_mean, z_log_var, reparameterize, decoder Linear
    z_mean, z_log_var, encoded, d = pallas_latent(
        flat, prep["wz"], prep["bz"], eps, prep["wd"], prep["bd"], LATENT_SIZE)

    # decoder (d is already in NHWC order thanks to folded perm)
    d = d.reshape(B, 7, 7, 64)
    d = deconv2d(d, prep["d1_w"], prep["d1_b"], stride=1, pad=1, act="relu")     # [B, 7, 7,64]
    d = deconv2d(d, prep["d2_w"], prep["d2_b"], stride=2, pad=1, act="relu")     # [B,13,13,64]
    d = deconv2d(d, prep["d3_w"], prep["d3_b"], stride=2, pad=0, act="relu")     # [B,27,27,32]
    d = deconv2d(d, prep["d4_w"], prep["d4_b"], stride=1, pad=0, act="sigmoid",
                 out_dtype=jnp.float32)                                          # [B,29,29, 1]
    # Trim() in the reference is x[:, :, :28, :28] (top-left); sigmoid is elementwise,
    # so fusing it before the trim is exact.
    d = d[:, :28, :28, :]
    decoded = jnp.transpose(d, (0, 3, 1, 2))  # back to NCHW [B,1,28,28]

    return encoded, z_mean, z_log_var, decoded


if __name__ == "__main__":
    key = jax.random.PRNGKey(0)
    k_param, k_x, k_eps = jax.random.split(key, 3)

    B = 2
    x = jax.random.normal(k_x, (B, 1, 28, 28), jnp.float32)        # NCHW like PyTorch
    eps = jax.random.normal(k_eps, (B, LATENT_SIZE), jnp.float32)  # reparameterization noise

    params = init_params(k_param)
    prep = prepare_params(params)

    fwd = jax.jit(vae_forward)
    encoded, z_mean, z_log_var, decoded = fwd(prep, x, eps)
    jax.block_until_ready((encoded, z_mean, z_log_var, decoded))

    assert encoded.shape == (B, LATENT_SIZE)
    assert z_mean.shape == (B, LATENT_SIZE)
    assert z_log_var.shape == (B, LATENT_SIZE)
    assert decoded.shape == (B, 1, 28, 28)
    assert bool(jnp.all(jnp.isfinite(encoded)))
    assert bool(jnp.all(jnp.isfinite(decoded)))
    print("KERNEL_OK")
</pallas_src>

<mosaic_0001>
module attributes {stable_mosaic.version = 11 : i64} {
  func.func @_matmul_bias_act_kernel(%arg0: i32, %arg1: memref<392x16xbf16, #tpu.memory_space<vmem>>, %arg2: memref<16x128xbf16, #tpu.memory_space<vmem>>, %arg3: memref<1x128xf32, #tpu.memory_space<vmem>>, %arg4: memref<392x128xbf16, #tpu.memory_space<vmem>>) attributes {dimension_semantics = [#tpu.dimension_semantics<parallel>], iteration_bounds = array<i64: 4>, scalar_prefetch = 0 : i64, scratch_operands = 0 : i64, tpu.core_type = #tpu.core_type<tc>, window_params = [{transform_indices = @transform_0, window_bounds = array<i64: 392, 16>}, {pipeline_mode = #tpu.pipeline_mode<synchronous>, transform_indices = @transform_1, window_bounds = array<i64: 16, 128>}, {pipeline_mode = #tpu.pipeline_mode<synchronous>, transform_indices = @transform_2, window_bounds = array<i64: 1, 128>}, {transform_indices = @transform_3, window_bounds = array<i64: 392, 128>}]} {
    %c0 = arith.constant 0 : index
    %c0_0 = arith.constant 0 : index
    %0 = vector.load %arg1[%c0, %c0_0] : memref<392x16xbf16, #tpu.memory_space<vmem>>, vector<392x16xbf16>
    %c0_1 = arith.constant 0 : index
    %c0_2 = arith.constant 0 : index
    %1 = vector.load %arg2[%c0_1, %c0_2] : memref<16x128xbf16, #tpu.memory_space<vmem>>, vector<16x128xbf16>
    %cst = arith.constant dense<0.000000e+00> : vector<392x128xf32>
    %2 = tpu.matmul %0, %1, %cst {dimension_numbers = #tpu.dot_dimension_numbers<[1], [0], [0], [1], [0, 0, 1, 1], [], []>} : vector<392x16xbf16>, vector<16x128xbf16>, vector<392x128xf32> -> vector<392x128xf32>
    %c0_3 = arith.constant 0 : index
    %c0_4 = arith.constant 0 : index
    %3 = vector.load %arg3[%c0_3, %c0_4] : memref<1x128xf32, #tpu.memory_space<vmem>>, vector<1x128xf32>
    %4 = vector.broadcast %3 : vector<1x128xf32> to vector<392x128xf32>
    %5 = arith.addf %2, %4 : vector<392x128xf32>
    %cst_5 = arith.constant 0.000000e+00 : f32
    %6 = vector.broadcast %cst_5 : f32 to vector<392x128xf32>
    %7 = arith.maximumf %5, %6 : vector<392x128xf32>
    %8 = arith.truncf %7 : vector<392x128xf32> to vector<392x128xbf16>
    %c0_6 = arith.constant 0 : index
    %c0_7 = arith.constant 0 : index
    %9 = vector.load %arg4[%c0_6, %c0_7] : memref<392x128xbf16, #tpu.memory_space<vmem>>, vector<392x128xbf16>
    tpu.vector_store %arg4[%c0_6, %c0_7], %8 {strides = array<i32>} : memref<392x128xbf16, #tpu.memory_space<vmem>>, vector<392x128xbf16>,
    return
  }
  func.func @transform_0(%arg0: i32) -> (i32, i32) {
    %c0_i32 = arith.constant 0 : i32
    %c0_i32_0 = arith.constant 0 : i32
    return %arg0, %c0_i32 : i32, i32
  }
  func.func @transform_1(%arg0: i32) -> (i32, i32) {
    %c0_i32 = arith.constant 0 : i32
    %c0_i32_0 = arith.constant 0 : i32
    %c0_i32_1 = arith.constant 0 : i32
    return %c0_i32, %c0_i32_0 : i32, i32
  }
  func.func @transform_2(%arg0: i32) -> (i32, i32) {
    %c0_i32 = arith.constant 0 : i32
    %c0_i32_0 = arith.constant 0 : i32
    %c0_i32_1 = arith.constant 0 : i32
    return %c0_i32, %c0_i32_0 : i32, i32
  }
  func.func @transform_3(%arg0: i32) -> (i32, i32) {
    %c0_i32 = arith.constant 0 : i32
    %c0_i32_0 = arith.constant 0 : i32
    return %arg0, %c0_i32 : i32, i32
  }
}

module attributes {stable_mosaic.version = 11 : i64} {
  func.func @_matmul_bias_act_kernel(%arg0: i32, %arg1: memref<392x288xbf16, #tpu.memory_space<vmem>>, %arg2: memref<288x128xbf16, #tpu.memory_space<vmem>>, %arg3: memref<1x128xf32, #tpu.memory_space<vmem>>, %arg4: memref<392x128xbf16, #tpu.memory_space<vmem>>) attributes {dimension_semantics = [#tpu.dimension_semantics<parallel>], iteration_bounds = array<i64: 1>, scalar_prefetch = 0 : i64, scratch_operands = 0 : i64, tpu.core_type = #tpu.core_type<tc>, window_params = [{transform_indices = @transform_0, window_bounds = array<i64: 392, 288>}, {pipeline_mode = #tpu.pipeline_mode<synchronous>, transform_indices = @transform_1, window_bounds = array<i64: 288, 128>}, {pipeline_mode = #tpu.pipeline_mode<synchronous>, transform_indices = @transform_2, window_bounds = array<i64: 1, 128>}, {transform_indices = @transform_3, window_bounds = array<i64: 392, 128>}]} {
    %c0 = arith.constant 0 : index
    %c0_0 = arith.constant 0 : index
    %0 = vector.load %arg1[%c0, %c0_0] : memref<392x288xbf16, #tpu.memory_space<vmem>>, vector<392x288xbf16>
    %c0_1 = arith.constant 0 : index
    %c0_2 = arith.constant 0 : index
    %1 = vector.load %arg2[%c0_1, %c0_2] : memref<288x128xbf16, #tpu.memory_space<vmem>>, vector<288x128xbf16>
    %cst = arith.constant dense<0.000000e+00> : vector<392x128xf32>
    %2 = tpu.matmul %0, %1, %cst {dimension_numbers = #tpu.dot_dimension_numbers<[1], [0], [0], [1], [0, 0, 1, 1], [], []>} : vector<392x288xbf16>, vector<288x128xbf16>, vector<392x128xf32> -> vector<392x128xf32>
    %c0_3 = arith.constant 0 : index
    %c0_4 = arith.constant 0 : index
    %3 = vector.load %arg3[%c0_3, %c0_4] : memref<1x128xf32, #tpu.memory_space<vmem>>, vector<1x128xf32>
    %4 = vector.broadcast %3 : vector<1x128xf32> to vector<392x128xf32>
    %5 = arith.addf %2, %4 : vector<392x128xf32>
    %cst_5 = arith.constant 0.000000e+00 : f32
    %6 = vector.broadcast %cst_5 : f32 to vector<392x128xf32>
    %7 = arith.maximumf %5, %6 : vector<392x128xf32>
    %8 = arith.truncf %7 : vector<392x128xf32> to vector<392x128xbf16>
    %c0_6 = arith.constant 0 : index
    %c0_7 = arith.constant 0 : index
    %9 = vector.load %arg4[%c0_6, %c0_7] : memref<392x128xbf16, #tpu.memory_space<vmem>>, vector<392x128xbf16>
    tpu.vector_store %arg4[%c0_6, %c0_7], %8 {strides = array<i32>} : memref<392x128xbf16, #tpu.memory_space<vmem>>, vector<392x128xbf16>,
    return
  }
  func.func @transform_0(%arg0: i32) -> (i32, i32) {
    %c0_i32 = arith.constant 0 : i32
    %c0_i32_0 = arith.constant 0 : i32
    return %arg0, %c0_i32 : i32, i32
  }
  func.func @transform_1(%arg0: i32) -> (i32, i32) {
    %c0_i32 = arith.constant 0 : i32
    %c0_i32_0 = arith.constant 0 : i32
    %c0_i32_1 = arith.constant 0 : i32
    return %c0_i32, %c0_i32_0 : i32, i32
  }
  func.func @transform_2(%arg0: i32) -> (i32, i32) {
    %c0_i32 = arith.constant 0 : i32
    %c0_i32_0 = arith.constant 0 : i32
    %c0_i32_1 = arith.constant 0 : i32
    return %c0_i32, %c0_i32_0 : i32, i32
  }
  func.func @transform_3(%arg0: i32) -> (i32, i32) {
    %c0_i32 = arith.constant 0 : i32
    %c0_i32_0 = arith.constant 0 : i32
    return %arg0, %c0_i32 : i32, i32
  }
}

module attributes {stable_mosaic.version = 11 : i64} {
  func.func @_matmul_bias_act_kernel(%arg0: i32, %arg1: memref<104x576xbf16, #tpu.memory_space<vmem>>, %arg2: memref<576x128xbf16, #tpu.memory_space<vmem>>, %arg3: memref<1x128xf32, #tpu.memory_space<vmem>>, %arg4: memref<104x128xbf16, #tpu.memory_space<vmem>>) attributes {dimension_semantics = [#tpu.dimension_semantics<parallel>], iteration_bounds = array<i64: 1>, scalar_prefetch = 0 : i64, scratch_operands = 0 : i64, tpu.core_type = #tpu.core_type<tc>, window_params = [{transform_indices = @transform_0, window_bounds = array<i64: 104, 576>}, {pipeline_mode = #tpu.pipeline_mode<synchronous>, transform_indices = @transform_1, window_bounds = array<i64: 576, 128>}, {pipeline_mode = #tpu.pipeline_mode<synchronous>, transform_indices = @transform_2, window_bounds = array<i64: 1, 128>}, {transform_indices = @transform_3, window_bounds = array<i64: 104, 128>}]} {
    %c0 = arith.constant 0 : index
    %c0_0 = arith.constant 0 : index
    %0 = vector.load %arg1[%c0, %c0_0] : memref<104x576xbf16, #tpu.memory_space<vmem>>, vector<104x576xbf16>
    %c0_1 = arith.constant 0 : index
    %c0_2 = arith.constant 0 : index
    %1 = vector.load %arg2[%c0_1, %c0_2] : memref<576x128xbf16, #tpu.memory_space<vmem>>, vector<576x128xbf16>
    %cst = arith.constant dense<0.000000e+00> : vector<104x128xf32>
    %2 = tpu.matmul %0, %1, %cst {dimension_numbers = #tpu.dot_dimension_numbers<[1], [0], [0], [1], [0, 0, 1, 1], [], []>} : vector<104x576xbf16>, vector<576x128xbf16>, vector<104x128xf32> -> vector<104x128xf32>
    %c0_3 = arith.constant 0 : index
    %c0_4 = arith.constant 0 : index
    %3 = vector.load %arg3[%c0_3, %c0_4] : memref<1x128xf32, #tpu.memory_space<vmem>>, vector<1x128xf32>
    %4 = vector.broadcast %3 : vector<1x128xf32> to vector<104x128xf32>
    %5 = arith.addf %2, %4 : vector<104x128xf32>
    %cst_5 = arith.constant 0.000000e+00 : f32
    %6 = vector.broadcast %cst_5 : f32 to vector<104x128xf32>
    %7 = arith.maximumf %5, %6 : vector<104x128xf32>
    %8 = arith.truncf %7 : vector<104x128xf32> to vector<104x128xbf16>
    %c0_6 = arith.constant 0 : index
    %c0_7 = arith.constant 0 : index
    %9 = vector.load %arg4[%c0_6, %c0_7] : memref<104x128xbf16, #tpu.memory_space<vmem>>, vector<104x128xbf16>
    tpu.vector_store %arg4[%c0_6, %c0_7], %8 {strides = array<i32>} : memref<104x128xbf16, #tpu.memory_space<vmem>>, vector<104x128xbf16>,
    return
  }
  func.func @transform_0(%arg0: i32) -> (i32, i32) {
    %c0_i32 = arith.constant 0 : i32
    %c0_i32_0 = arith.constant 0 : i32
    return %arg0, %c0_i32 : i32, i32
  }
  func.func @transform_1(%arg0: i32) -> (i32, i32) {
    %c0_i32 = arith.constant 0 : i32
    %c0_i32_0 = arith.constant 0 : i32
    %c0_i32_1 = arith.constant 0 : i32
    return %c0_i32, %c0_i32_0 : i32, i32
  }
  func.func @transform_2(%arg0: i32) -> (i32, i32) {
    %c0_i32 = arith.constant 0 : i32
    %c0_i32_0 = arith.constant 0 : i32
    %c0_i32_1 = arith.constant 0 : i32
    return %c0_i32, %c0_i32_0 : i32, i32
  }
  func.func @transform_3(%arg0: i32) -> (i32, i32) {
    %c0_i32 = arith.constant 0 : i32
    %c0_i32_0 = arith.constant 0 : i32
    return %arg0, %c0_i32 : i32, i32
  }
}

module attributes {stable_mosaic.version = 11 : i64} {
  func.func @_matmul_bias_act_kernel(%arg0: i32, %arg1: memref<104x576xbf16, #tpu.memory_space<vmem>>, %arg2: memref<576x128xbf16, #tpu.memory_space<vmem>>, %arg3: memref<1x128xf32, #tpu.memory_space<vmem>>, %arg4: memref<104x128xbf16, #tpu.memory_space<vmem>>) attributes {dimension_semantics = [#tpu.dimension_semantics<parallel>], iteration_bounds = array<i64: 1>, scalar_prefetch = 0 : i64, scratch_operands = 0 : i64, tpu.core_type = #tpu.core_type<tc>, window_params = [{transform_indices = @transform_0, window_bounds = array<i64: 104, 576>}, {pipeline_mode = #tpu.pipeline_mode<synchronous>, transform_indices = @transform_1, window_bounds = array<i64: 576, 128>}, {pipeline_mode = #tpu.pipeline_mode<synchronous>, transform_indices = @transform_2, window_bounds = array<i64: 1, 128>}, {transform_indices = @transform_3, window_bounds = array<i64: 104, 128>}]} {
    %c0 = arith.constant 0 : index
    %c0_0 = arith.constant 0 : index
    %0 = vector.load %arg1[%c0, %c0_0] : memref<104x576xbf16, #tpu.memory_space<vmem>>, vector<104x576xbf16>
    %c0_1 = arith.constant 0 : index
    %c0_2 = arith.constant 0 : index
    %1 = vector.load %arg2[%c0_1, %c0_2] : memref<576x128xbf16, #tpu.memory_space<vmem>>, vector<576x128xbf16>
    %cst = arith.constant dense<0.000000e+00> : vector<104x128xf32>
    %2 = tpu.matmul %0, %1, %cst {dimension_numbers = #tpu.dot_dimension_numbers<[1], [0], [0], [1], [0, 0, 1, 1], [], []>} : vector<104x576xbf16>, vector<576x128xbf16>, vector<104x128xf32> -> vector<104x128xf32>
    %c0_3 = arith.constant 0 : index
    %c0_4 = arith.constant 0 : index
    %3 = vector.load %arg3[%c0_3, %c0_4] : memref<1x128xf32, #tpu.memory_space<vmem>>, vector<1x128xf32>
    %4 = vector.broadcast %3 : vector<1x128xf32> to vector<104x128xf32>
    %5 = arith.addf %2, %4 : vector<104x128xf32>
    %6 = arith.truncf %5 : vector<104x128xf32> to vector<104x128xbf16>
    %c0_5 = arith.constant 0 : index
    %c0_6 = arith.constant 0 : index
    %7 = vector.load %arg4[%c0_5, %c0_6] : memref<104x128xbf16, #tpu.memory_space<vmem>>, vector<104x128xbf16>
    tpu.vector_store %arg4[%c0_5, %c0_6], %6 {strides = array<i32>} : memref<104x128xbf16, #tpu.memory_space<vmem>>, vector<104x128xbf16>,
    return
  }
  func.func @transform_0(%arg0: i32) -> (i32, i32) {
    %c0_i32 = arith.constant 0 : i32
    %c0_i32_0 = arith.constant 0 : i32
    return %arg0, %c0_i32 : i32, i32
  }
  func.func @transform_1(%arg0: i32) -> (i32, i32) {
    %c0_i32 = arith.constant 0 : i32
    %c0_i32_0 = arith.constant 0 : i32
    %c0_i32_1 = arith.constant 0 : i32
    return %c0_i32, %c0_i32_0 : i32, i32
  }
  func.func @transform_2(%arg0: i32) -> (i32, i32) {
    %c0_i32 = arith.constant 0 : i32
    %c0_i32_0 = arith.constant 0 : i32
    %c0_i32_1 = arith.constant 0 : i32
    return %c0_i32, %c0_i32_0 : i32, i32
  }
  func.func @transform_3(%arg0: i32) -> (i32, i32) {
    %c0_i32 = arith.constant 0 : i32
    %c0_i32_0 = arith.constant 0 : i32
    return %arg0, %c0_i32 : i32, i32
  }
}

module attributes {stable_mosaic.version = 11 : i64} {
  func.func @_latent_kernel(%arg0: i32, %arg1: memref<8x3136xbf16, #tpu.memory_space<vmem>>, %arg2: memref<3136x128xbf16, #tpu.memory_space<vmem>>, %arg3: memref<1x128xf32, #tpu.memory_space<vmem>>, %arg4: memref<8x32xf32, #tpu.memory_space<vmem>>, %arg5: memref<32x3136xbf16, #tpu.memory_space<vmem>>, %arg6: memref<1x3136xf32, #tpu.memory_space<vmem>>, %arg7: memref<8x128xf32, #tpu.memory_space<vmem>>, %arg8: memref<8x3136xbf16, #tpu.memory_space<vmem>>) attributes {dimension_semantics = [#tpu.dimension_semantics<parallel>], iteration_bounds = array<i64: 1>, scalar_prefetch = 0 : i64, scratch_operands = 0 : i64, tpu.core_type = #tpu.core_type<tc>, window_params = [{transform_indices = @transform_0, window_bounds = array<i64: 8, 3136>}, {pipeline_mode = #tpu.pipeline_mode<synchronous>, transform_indices = @transform_1, window_bounds = array<i64: 3136, 128>}, {pipeline_mode = #tpu.pipeline_mode<synchronous>, transform_indices = @transform_2, window_bounds = array<i64: 1, 128>}, {transform_indices = @transform_3, window_bounds = array<i64: 8, 32>}, {pipeline_mode = #tpu.pipeline_mode<synchronous>, transform_indices = @transform_4, window_bounds = array<i64: 32, 3136>}, {pipeline_mode = #tpu.pipeline_mode<synchronous>, transform_indices = @transform_5, window_bounds = array<i64: 1, 3136>}, {transform_indices = @transform_6, window_bounds = array<i64: 8, 128>}, {transform_indices = @transform_7, window_bounds = array<i64: 8, 3136>}]} {
    %c0 = arith.constant 0 : index
    %c0_0 = arith.constant 0 : index
    %0 = vector.load %arg1[%c0, %c0_0] : memref<8x3136xbf16, #tpu.memory_space<vmem>>, vector<8x3136xbf16>
    %c0_1 = arith.constant 0 : index
    %c0_2 = arith.constant 0 : index
    %1 = vector.load %arg2[%c0_1, %c0_2] : memref<3136x128xbf16, #tpu.memory_space<vmem>>, vector<3136x128xbf16>
    %cst = arith.constant dense<0.000000e+00> : vector<8x128xf32>
    %2 = tpu.matmul %0, %1, %cst {dimension_numbers = #tpu.dot_dimension_numbers<[1], [0], [0], [1], [0, 0, 1, 1], [], []>} : vector<8x3136xbf16>, vector<3136x128xbf16>, vector<8x128xf32> -> vector<8x128xf32>
    %c0_3 = arith.constant 0 : index
    %c0_4 = arith.constant 0 : index
    %3 = vector.load %arg3[%c0_3, %c0_4] : memref<1x128xf32, #tpu.memory_space<vmem>>, vector<1x128xf32>
    %4 = vector.broadcast %3 : vector<1x128xf32> to vector<8x128xf32>
    %5 = arith.addf %2, %4 : vector<8x128xf32>
    %6 = vector.extract_strided_slice %5 {offsets = [0, 0], sizes = [8, 32], strides = [1, 1]} : vector<8x128xf32> to vector<8x32xf32>
    %7 = vector.extract_strided_slice %5 {offsets = [0, 32], sizes = [8, 32], strides = [1, 1]} : vector<8x128xf32> to vector<8x32xf32>
    %c0_5 = arith.constant 0 : index
    %c0_6 = arith.constant 0 : index
    %8 = vector.load %arg4[%c0_5, %c0_6] : memref<8x32xf32, #tpu.memory_space<vmem>>, vector<8x32xf32>
    %cst_7 = arith.constant 5.000000e-01 : f32
    %9 = vector.broadcast %cst_7 : f32 to vector<8x32xf32>
    %10 = arith.mulf %7, %9 : vector<8x32xf32>
    %11 = math.exp %10 : vector<8x32xf32>
    %12 = arith.mulf %8, %11 : vector<8x32xf32>
    %13 = arith.addf %6, %12 : vector<8x32xf32>
    %cst_8 = arith.constant 0.000000e+00 : f32
    %14 = vector.broadcast %cst_8 : f32 to vector<8x32xf32>
    %15 = tpu.concatenate %6, %7, %13, %14 in 1 : vector<8x32xf32>, vector<8x32xf32>, vector<8x32xf32>, vector<8x32xf32> -> vector<8x128xf32>
    %c0_9 = arith.constant 0 : index
    %c0_10 = arith.constant 0 : index
    %16 = vector.load %arg7[%c0_9, %c0_10] : memref<8x128xf32, #tpu.memory_space<vmem>>, vector<8x128xf32>
    tpu.vector_store %arg7[%c0_9, %c0_10], %15 {strides = array<i32>} : memref<8x128xf32, #tpu.memory_space<vmem>>, vector<8x128xf32>,
    %17 = arith.truncf %13 : vector<8x32xf32> to vector<8x32xbf16>
    %c0_11 = arith.constant 0 : index
    %c0_12 = arith.constant 0 : index
    %18 = vector.load %arg5[%c0_11, %c0_12] : memref<32x3136xbf16, #tpu.memory_space<vmem>>, vector<32x3136xbf16>
    %cst_13 = arith.constant dense<0.000000e+00> : vector<8x3136xf32>
    %19 = tpu.matmul %17, %18, %cst_13 {dimension_numbers = #tpu.dot_dimension_numbers<[1], [0], [0], [1], [0, 0, 1, 1], [], []>} : vector<8x32xbf16>, vector<32x3136xbf16>, vector<8x3136xf32> -> vector<8x3136xf32>
    %c0_14 = arith.constant 0 : index
    %c0_15 = arith.constant 0 : index
    %20 = vector.load %arg6[%c0_14, %c0_15] : memref<1x3136xf32, #tpu.memory_space<vmem>>, vector<1x3136xf32>
    %21 = vector.broadcast %20 : vector<1x3136xf32> to vector<8x3136xf32>
    %22 = arith.addf %19, %21 : vector<8x3136xf32>
    %23 = arith.truncf %22 : vector<8x3136xf32> to vector<8x3136xbf16>
    %c0_16 = arith.constant 0 : index
    %c0_17 = arith.constant 0 : index
    %24 = vector.load %arg8[%c0_16, %c0_17] : memref<8x3136xbf16, #tpu.memory_space<vmem>>, vector<8x3136xbf16>
    tpu.vector_store %arg8[%c0_16, %c0_17], %23 {strides = array<i32>} : memref<8x3136xbf16, #tpu.memory_space<vmem>>, vector<8x3136xbf16>,
    return
  }
  func.func @transform_0(%arg0: i32) -> (i32, i32) {
    %c0_i32 = arith.constant 0 : i32
    %c0_i32_0 = arith.constant 0 : i32
    return %arg0, %c0_i32 : i32, i32
  }
  func.func @transform_1(%arg0: i32) -> (i32, i32) {
    %c0_i32 = arith.constant 0 : i32
    %c0_i32_0 = arith.constant 0 : i32
    %c0_i32_1 = arith.constant 0 : i32
    return %c0_i32, %c0_i32_0 : i32, i32
  }
  func.func @transform_2(%arg0: i32) -> (i32, i32) {
    %c0_i32 = arith.constant 0 : i32
    %c0_i32_0 = arith.constant 0 : i32
    %c0_i32_1 = arith.constant 0 : i32
    return %c0_i32, %c0_i32_0 : i32, i32
  }
  func.func @transform_3(%arg0: i32) -> (i32, i32) {
    %c0_i32 = arith.constant 0 : i32
    %c0_i32_0 = arith.constant 0 : i32
    return %arg0, %c0_i32 : i32, i32
  }
  func.func @transform_4(%arg0: i32) -> (i32, i32) {
    %c0_i32 = arith.constant 0 : i32
    %c0_i32_0 = arith.constant 0 : i32
    %c0_i32_1 = arith.constant 0 : i32
    return %c0_i32, %c0_i32_0 : i32, i32
  }
  func.func @transform_5(%arg0: i32) -> (i32, i32) {
    %c0_i32 = arith.constant 0 : i32
    %c0_i32_0 = arith.constant 0 : i32
    %c0_i32_1 = arith.constant 0 : i32
    return %c0_i32, %c0_i32_0 : i32, i32
  }
  func.func @transform_6(%arg0: i32) -> (i32, i32) {
    %c0_i32 = arith.constant 0 : i32
    %c0_i32_0 = arith.constant 0 : i32
    return %arg0, %c0_i32 : i32, i32
  }
  func.func @transform_7(%arg0: i32) -> (i32, i32) {
    %c0_i32 = arith.constant 0 : i32
    %c0_i32_0 = arith.constant 0 : i32
    return %arg0, %c0_i32 : i32, i32
  }
}

module attributes {stable_mosaic.version = 11 : i64} {
  func.func @_matmul_bias_act_kernel(%arg0: i32, %arg1: memref<344x576xbf16, #tpu.memory_space<vmem>>, %arg2: memref<576x128xbf16, #tpu.memory_space<vmem>>, %arg3: memref<1x128xf32, #tpu.memory_space<vmem>>, %arg4: memref<344x128xbf16, #tpu.memory_space<vmem>>) attributes {dimension_semantics = [#tpu.dimension_semantics<parallel>], iteration_bounds = array<i64: 1>, scalar_prefetch = 0 : i64, scratch_operands = 0 : i64, tpu.core_type = #tpu.core_type<tc>, window_params = [{transform_indices = @transform_0, window_bounds = array<i64: 344, 576>}, {pipeline_mode = #tpu.pipeline_mode<synchronous>, transform_indices = @transform_1, window_bounds = array<i64: 576, 128>}, {pipeline_mode = #tpu.pipeline_mode<synchronous>, transform_indices = @transform_2, window_bounds = array<i64: 1, 128>}, {transform_indices = @transform_3, window_bounds = array<i64: 344, 128>}]} {
    %c0 = arith.constant 0 : index
    %c0_0 = arith.constant 0 : index
    %0 = vector.load %arg1[%c0, %c0_0] : memref<344x576xbf16, #tpu.memory_space<vmem>>, vector<344x576xbf16>
    %c0_1 = arith.constant 0 : index
    %c0_2 = arith.constant 0 : index
    %1 = vector.load %arg2[%c0_1, %c0_2] : memref<576x128xbf16, #tpu.memory_space<vmem>>, vector<576x128xbf16>
    %cst = arith.constant dense<0.000000e+00> : vector<344x128xf32>
    %2 = tpu.matmul %0, %1, %cst {dimension_numbers = #tpu.dot_dimension_numbers<[1], [0], [0], [1], [0, 0, 1, 1], [], []>} : vector<344x576xbf16>, vector<576x128xbf16>, vector<344x128xf32> -> vector<344x128xf32>
    %c0_3 = arith.constant 0 : index
    %c0_4 = arith.constant 0 : index
    %3 = vector.load %arg3[%c0_3, %c0_4] : memref<1x128xf32, #tpu.memory_space<vmem>>, vector<1x128xf32>
    %4 = vector.broadcast %3 : vector<1x128xf32> to vector<344x128xf32>
    %5 = arith.addf %2, %4 : vector<344x128xf32>
    %cst_5 = arith.constant 0.000000e+00 : f32
    %6 = vector.broadcast %cst_5 : f32 to vector<344x128xf32>
    %7 = arith.maximumf %5, %6 : vector<344x128xf32>
    %8 = arith.truncf %7 : vector<344x128xf32> to vector<344x128xbf16>
    %c0_6 = arith.constant 0 : index
    %c0_7 = arith.constant 0 : index
    %9 = vector.load %arg4[%c0_6, %c0_7] : memref<344x128xbf16, #tpu.memory_space<vmem>>, vector<344x128xbf16>
    tpu.vector_store %arg4[%c0_6, %c0_7], %8 {strides = array<i32>} : memref<344x128xbf16, #tpu.memory_space<vmem>>, vector<344x128xbf16>,
    return
  }
  func.func @transform_0(%arg0: i32) -> (i32, i32) {
    %c0_i32 = arith.constant 0 : i32
    %c0_i32_0 = arith.constant 0 : i32
    return %arg0, %c0_i32 : i32, i32
  }
  func.func @transform_1(%arg0: i32) -> (i32, i32) {
    %c0_i32 = arith.constant 0 : i32
    %c0_i32_0 = arith.constant 0 : i32
    %c0_i32_1 = arith.constant 0 : i32
    return %c0_i32, %c0_i32_0 : i32, i32
  }
  func.func @transform_2(%arg0: i32) -> (i32, i32) {
    %c0_i32 = arith.constant 0 : i32
    %c0_i32_0 = arith.constant 0 : i32
    %c0_i32_1 = arith.constant 0 : i32
    return %c0_i32, %c0_i32_0 : i32, i32
  }
  func.func @transform_3(%arg0: i32) -> (i32, i32) {
    %c0_i32 = arith.constant 0 : i32
    %c0_i32_0 = arith.constant 0 : i32
    return %arg0, %c0_i32 : i32, i32
  }
}

module attributes {stable_mosaic.version = 11 : i64} {
  func.func @_matmul_bias_act_kernel(%arg0: i32, %arg1: memref<488x576xbf16, #tpu.memory_space<vmem>>, %arg2: memref<576x128xbf16, #tpu.memory_space<vmem>>, %arg3: memref<1x128xf32, #tpu.memory_space<vmem>>, %arg4: memref<488x128xbf16, #tpu.memory_space<vmem>>) attributes {dimension_semantics = [#tpu.dimension_semantics<parallel>], iteration_bounds = array<i64: 3>, scalar_prefetch = 0 : i64, scratch_operands = 0 : i64, tpu.core_type = #tpu.core_type<tc>, window_params = [{transform_indices = @transform_0, window_bounds = array<i64: 488, 576>}, {pipeline_mode = #tpu.pipeline_mode<synchronous>, transform_indices = @transform_1, window_bounds = array<i64: 576, 128>}, {pipeline_mode = #tpu.pipeline_mode<synchronous>, transform_indices = @transform_2, window_bounds = array<i64: 1, 128>}, {transform_indices = @transform_3, window_bounds = array<i64: 488, 128>}]} {
    %c0 = arith.constant 0 : index
    %c0_0 = arith.constant 0 : index
    %0 = vector.load %arg1[%c0, %c0_0] : memref<488x576xbf16, #tpu.memory_space<vmem>>, vector<488x576xbf16>
    %c0_1 = arith.constant 0 : index
    %c0_2 = arith.constant 0 : index
    %1 = vector.load %arg2[%c0_1, %c0_2] : memref<576x128xbf16, #tpu.memory_space<vmem>>, vector<576x128xbf16>
    %cst = arith.constant dense<0.000000e+00> : vector<488x128xf32>
    %2 = tpu.matmul %0, %1, %cst {dimension_numbers = #tpu.dot_dimension_numbers<[1], [0], [0], [1], [0, 0, 1, 1], [], []>} : vector<488x576xbf16>, vector<576x128xbf16>, vector<488x128xf32> -> vector<488x128xf32>
    %c0_3 = arith.constant 0 : index
    %c0_4 = arith.constant 0 : index
    %3 = vector.load %arg3[%c0_3, %c0_4] : memref<1x128xf32, #tpu.memory_space<vmem>>, vector<1x128xf32>
    %4 = vector.broadcast %3 : vector<1x128xf32> to vector<488x128xf32>
    %5 = arith.addf %2, %4 : vector<488x128xf32>
    %cst_5 = arith.constant 0.000000e+00 : f32
    %6 = vector.broadcast %cst_5 : f32 to vector<488x128xf32>
    %7 = arith.maximumf %5, %6 : vector<488x128xf32>
    %8 = arith.truncf %7 : vector<488x128xf32> to vector<488x128xbf16>
    %c0_6 = arith.constant 0 : index
    %c0_7 = arith.constant 0 : index
    %9 = vector.load %arg4[%c0_6, %c0_7] : memref<488x128xbf16, #tpu.memory_space<vmem>>, vector<488x128xbf16>
    tpu.vector_store %arg4[%c0_6, %c0_7], %8 {strides = array<i32>} : memref<488x128xbf16, #tpu.memory_space<vmem>>, vector<488x128xbf16>,
    return
  }
  func.func @transform_0(%arg0: i32) -> (i32, i32) {
    %c0_i32 = arith.constant 0 : i32
    %c0_i32_0 = arith.constant 0 : i32
    return %arg0, %c0_i32 : i32, i32
  }
  func.func @transform_1(%arg0: i32) -> (i32, i32) {
    %c0_i32 = arith.constant 0 : i32
    %c0_i32_0 = arith.constant 0 : i32
    %c0_i32_1 = arith.constant 0 : i32
    return %c0_i32, %c0_i32_0 : i32, i32
  }
  func.func @transform_2(%arg0: i32) -> (i32, i32) {
    %c0_i32 = arith.constant 0 : i32
    %c0_i32_0 = arith.constant 0 : i32
    %c0_i32_1 = arith.constant 0 : i32
    return %c0_i32, %c0_i32_0 : i32, i32
  }
  func.func @transform_3(%arg0: i32) -> (i32, i32) {
    %c0_i32 = arith.constant 0 : i32
    %c0_i32_0 = arith.constant 0 : i32
    return %arg0, %c0_i32 : i32, i32
  }
}

module attributes {stable_mosaic.version = 11 : i64} {
  func.func @_matmul_bias_act_kernel(%arg0: i32, %arg1: memref<424x288xbf16, #tpu.memory_space<vmem>>, %arg2: memref<288x128xbf16, #tpu.memory_space<vmem>>, %arg3: memref<1x128xf32, #tpu.memory_space<vmem>>, %arg4: memref<424x128xf32, #tpu.memory_space<vmem>>) attributes {dimension_semantics = [#tpu.dimension_semantics<parallel>], iteration_bounds = array<i64: 4>, scalar_prefetch = 0 : i64, scratch_operands = 0 : i64, tpu.core_type = #tpu.core_type<tc>, window_params = [{transform_indices = @transform_0, window_bounds = array<i64: 424, 288>}, {pipeline_mode = #tpu.pipeline_mode<synchronous>, transform_indices = @transform_1, window_bounds = array<i64: 288, 128>}, {pipeline_mode = #tpu.pipeline_mode<synchronous>, transform_indices = @transform_2, window_bounds = array<i64: 1, 128>}, {transform_indices = @transform_3, window_bounds = array<i64: 424, 128>}]} {
    %c0 = arith.constant 0 : index
    %c0_0 = arith.constant 0 : index
    %0 = vector.load %arg1[%c0, %c0_0] : memref<424x288xbf16, #tpu.memory_space<vmem>>, vector<424x288xbf16>
    %c0_1 = arith.constant 0 : index
    %c0_2 = arith.constant 0 : index
    %1 = vector.load %arg2[%c0_1, %c0_2] : memref<288x128xbf16, #tpu.memory_space<vmem>>, vector<288x128xbf16>
    %cst = arith.constant dense<0.000000e+00> : vector<424x128xf32>
    %2 = tpu.matmul %0, %1, %cst {dimension_numbers = #tpu.dot_dimension_numbers<[1], [0], [0], [1], [0, 0, 1, 1], [], []>} : vector<424x288xbf16>, vector<288x128xbf16>, vector<424x128xf32> -> vector<424x128xf32>
    %c0_3 = arith.constant 0 : index
    %c0_4 = arith.constant 0 : index
    %3 = vector.load %arg3[%c0_3, %c0_4] : memref<1x128xf32, #tpu.memory_space<vmem>>, vector<1x128xf32>
    %4 = vector.broadcast %3 : vector<1x128xf32> to vector<424x128xf32>
    %5 = arith.addf %2, %4 : vector<424x128xf32>
    %6 = arith.negf %5 : vector<424x128xf32>
    %7 = math.exp %6 : vector<424x128xf32>
    %cst_5 = arith.constant 1.000000e+00 : f32
    %8 = vector.broadcast %cst_5 : f32 to vector<424x128xf32>
    %9 = arith.addf %8, %7 : vector<424x128xf32>
    %10 = arith.divf %8, %9 : vector<424x128xf32>
    %c0_6 = arith.constant 0 : index
    %c0_7 = arith.constant 0 : index
    %11 = vector.load %arg4[%c0_6, %c0_7] : memref<424x128xf32, #tpu.memory_space<vmem>>, vector<424x128xf32>
    tpu.vector_store %arg4[%c0_6, %c0_7], %10 {strides = array<i32>} : memref<424x128xf32, #tpu.memory_space<vmem>>, vector<424x128xf32>,
    return
  }
  func.func @transform_0(%arg0: i32) -> (i32, i32) {
    %c0_i32 = arith.constant 0 : i32
    %c0_i32_0 = arith.constant 0 : i32
    return %arg0, %c0_i32 : i32, i32
  }
  func.func @transform_1(%arg0: i32) -> (i32, i32) {
    %c0_i32 = arith.constant 0 : i32
    %c0_i32_0 = arith.constant 0 : i32
    %c0_i32_1 = arith.constant 0 : i32
    return %c0_i32, %c0_i32_0 : i32, i32
  }
  func.func @transform_2(%arg0: i32) -> (i32, i32) {
    %c0_i32 = arith.constant 0 : i32
    %c0_i32_0 = arith.constant 0 : i32
    %c0_i32_1 = arith.constant 0 : i32
    return %c0_i32, %c0_i32_0 : i32, i32
  }
  func.func @transform_3(%arg0: i32) -> (i32, i32) {
    %c0_i32 = arith.constant 0 : i32
    %c0_i32_0 = arith.constant 0 : i32
    return %arg0, %c0_i32 : i32, i32
  }
}

</mosaic_0001>

<llo_original>
// kernel: vae_forward.9
$region0: #{vae_forward.9}
  #allocation0 [shape = 'u32[]', space=smem, size = 0x4, offset = 0x4, fixed_abs, tag = 'smem constant byte address 0x4 - core index']
  #allocation1 [shape = 'u32[144,128]{1,0:T(1,128)}', space=vmem, size = 0x12000, scoped, tag = 'internal scratch']
  %s0 = inlined_call_operand.vmem [shape: bf16[1568,16], index: 0, kind: input, shape index: {}]
  %s1 = inlined_call_operand.vmem [shape: bf16[16,128], index: 1, kind: input, shape index: {}]
  %s2 = inlined_call_operand.vmem [shape: f32[1,128], index: 2, kind: input, shape index: {}]
  %s3 = inlined_call_operand.vmem [shape: bf16[1568,128], index: 3, kind: output, shape index: {}]
  %s4 = sld [smem:[#allocation0]]
  $region45: #{vae_forward.9} parent=0
    _
  %s6 = ssub.s32 1, %s4
  %s7 = scalar_select 0, %s6, %s4
  loop: start=0, step=1, limit=6
  $region2: #{vae_forward.9} parent=0 // loop_pre_header
    _
  $region3: #{vae_forward.9} parent=0 // loop_header
    %s9 = sphi 0, %s13
    %p10 = scmp.ge.s32.totalorder %s9, 6
    %s19 = sphi 0, %s21
    %s22 = sphi 0, %s19
    %s23 = sphi 0, %s22
    %s39 = sphi 0, %s23
    %s43 = sphi 0, %s43
    %s45 = sphi 0, %s43
    %s46 = sphi 0, %s45
    %s60 = sphi 0, %s46
    %s64 = sphi 0, %s64
    %s66 = sphi 0, %s64
    %s67 = sphi 0, %s66
    %s81 = sphi 0, %s67
    %s87 = sphi 0, %s89
    %s90 = sphi 0, %s87
    %s91 = sphi 0, %s90
    %s107 = sphi 0, %s91
  $region4: #{vae_forward.9} parent=0 // loop_header_branch
    %12 = sbr.rel (%p10) target = $region8
  $region5: #{vae_forward.9} parent=0 // loop_body
    %s14 = ssub.s32 %s9, 1
    %s15 = ssub.s32 %s9, 2
    %s16 = sadd.s32 %s9, 1
    %s17 = ssub.s32 %s9, %s16
    %p18 = scmp.eq.s32.totalorder %s17, 0
    %s20 = sadd.s32 %s19, 1
    %s21 = scalar_select %p18, %s19, %s20
    %p24 = pneg %p18
    %p25 = scmp.eq.s32.totalorder %s9, 3
    %p26 = por %p24, %p25
    %p27 = scmp.ne.s32.totalorder %s19, %s22
    %p28 = scmp.eq.s32.totalorder %s9, 0
    %p29 = por %p27, %p28
    %p30 = scmp.ne.s32.totalorder %s19, %s22
    %p31 = scmp.eq.s32.totalorder %s14, 3
    %p32 = por %p30, %p31
    %p33 = scmp.ne.s32.totalorder %s22, %s23
    %p34 = scmp.eq.s32.totalorder %s14, 0
    %p35 = por %p33, %p34
    %p36 = scmp.ne.s32.totalorder %s22, %s23
    %p37 = scmp.eq.s32.totalorder %s15, 3
    %p38 = por %p36, %p37
    %p40 = scmp.ne.s32.totalorder %s23, %s39
    %p41 = scmp.eq.s32.totalorder %s15, 0
    %p42 = por %p40, %p41
    %s44 = sadd.s32 %s43, 1
    %p47 = scmp.eq.s32.totalorder %s9, 3
    %p48 = scmp.ne.s32.totalorder %s43, %s45
    %p49 = scmp.eq.s32.totalorder %s9, 0
    %p50 = por %p48, %p49
    %p51 = scmp.ne.s32.totalorder %s43, %s45
    %p52 = scmp.eq.s32.totalorder %s14, 3
    %p53 = por %p51, %p52
    %p54 = scmp.ne.s32.totalorder %s45, %s46
    %p55 = scmp.eq.s32.totalorder %s14, 0
    %p56 = por %p54, %p55
    %p57 = scmp.ne.s32.totalorder %s45, %s46
    %p58 = scmp.eq.s32.totalorder %s15, 3
    %p59 = por %p57, %p58
    %p61 = scmp.ne.s32.totalorder %s46, %s60
    %p62 = scmp.eq.s32.totalorder %s15, 0
    %p63 = por %p61, %p62
    %s65 = sadd.s32 %s64, 1
    %p68 = scmp.eq.s32.totalorder %s9, 3
    %p69 = scmp.ne.s32.totalorder %s64, %s66
    %p70 = scmp.eq.s32.totalorder %s9, 0
    %p71 = por %p69, %p70
    %p72 = scmp.ne.s32.totalorder %s64, %s66
    %p73 = scmp.eq.s32.totalorder %s14, 3
    %p74 = por %p72, %p73
    %p75 = scmp.ne.s32.totalorder %s66, %s67
    %p76 = scmp.eq.s32.totalorder %s14, 0
    %p77 = por %p75, %p76
    %p78 = scmp.ne.s32.totalorder %s66, %s67
    %p79 = scmp.eq.s32.totalorder %s15, 3
    %p80 = por %p78, %p79
    %p82 = scmp.ne.s32.totalorder %s67, %s81
    %p83 = scmp.eq.s32.totalorder %s15, 0
    %p84 = por %p82, %p83
    %s85 = ssub.s32 %s9, %s16
    %p86 = scmp.eq.s32.totalorder %s85, 0
    %s88 = sadd.s32 %s87, 1
    %s89 = scalar_select %p86, %s87, %s88
    %p92 = pneg %p86
    %p93 = scmp.eq.s32.totalorder %s9, 3
    %p94 = por %p92, %p93
    %p95 = scmp.ne.s32.totalorder %s87, %s90
    %p96 = scmp.eq.s32.totalorder %s9, 0
    %p97 = por %p95, %p96
    %p98 = scmp.ne.s32.totalorder %s87, %s90
    %p99 = scmp.eq.s32.totalorder %s14, 3
    %p100 = por %p98, %p99
    %p101 = scmp.ne.s32.totalorder %s90, %s91
    %p102 = scmp.eq.s32.totalorder %s14, 0
    %p103 = por %p101, %p102
    %p104 = scmp.ne.s32.totalorder %s90, %s91
    %p105 = scmp.eq.s32.totalorder %s15, 3
    %p106 = por %p104, %p105
    %p108 = scmp.ne.s32.totalorder %s91, %s107
    %p109 = scmp.eq.s32.totalorder %s15, 0
    %p110 = por %p108, %p109
    %p111 = scmp.le.s32.totalorder 1, %s9
    %p112 = scmp.lt.s32.totalorder %s9, 5
    %p113 = pnand %p111, %p112
    %p114 = pneg %p113
    // Predicated region
    $region9: #{vae_forward.9} parent=5 // pred_check
      _
    $region10: #{vae_forward.9} parent=5 // pred_check_branch
      %116 = sbr.rel (%p113) target = $region12
    $region11: #{vae_forward.9} parent=5 // pred_region
      %s117 = ssub.s32 %s9, 1
      // Predicated region
      $region13: #{vae_forward.9} parent=11 // pred_check
        %p118 = pneg %p56
      $region14: #{vae_forward.9} parent=11 // pred_check_branch
        %120 = sbr.rel (%p118) target = $region16
      $region15: #{vae_forward.9} parent=11 // pred_region
        _
      $region16: #{vae_forward.9} parent=11 // pred_fallthru
        _
      // Predicated region
      $region17: #{vae_forward.9} parent=11 // pred_check
        %p121 = pneg %p77
      $region18: #{vae_forward.9} parent=11 // pred_check_branch
        %123 = sbr.rel (%p121) target = $region20
      $region19: #{vae_forward.9} parent=11 // pred_region
        _
      $region20: #{vae_forward.9} parent=11 // pred_fallthru
        _
    $region12: #{vae_forward.9} parent=5 // pred_fallthru
      _
    %p124 = scmp.lt.s32.totalorder %s9, 4
    // Predicated region
    $region21: #{vae_forward.9} parent=5 // pred_check
      %p125 = pneg %p124
    $region22: #{vae_forward.9} parent=5 // pred_check_branch
      %127 = sbr.rel (%p125) target = $region24
    $region23: #{vae_forward.9} parent=5 // pred_region
      // Predicated region
      $region25: #{vae_forward.9} parent=23 // pred_check
        %p128 = pneg %p29
      $region26: #{vae_forward.9} parent=23 // pred_check_branch
        %130 = sbr.rel (%p128) target = $region28
      $region27: #{vae_forward.9} parent=23 // pred_region
        %s131 = smul.u32 49, %s9
        %p132 = scmp.lt.s32.totalorder %s131, 195
        %s133 = scalar_select %p132, %s131, 195
        %s134 = smul.addr %s133, 4
        %s135 = scalar_lea.vmem %s0, %s134
        %s136 = smul.u32 49, %s9
      $region28: #{vae_forward.9} parent=23 // pred_fallthru
        _
    $region24: #{vae_forward.9} parent=5 // pred_fallthru
      _
    %p137 = scmp.le.s32.totalorder 1, %s9
    %p138 = scmp.lt.s32.totalorder %s9, 5
    %p139 = pnand %p137, %p138
    %p140 = pneg %p139
    // Predicated region
    $region29: #{vae_forward.9} parent=5 // pred_check
      _
    $region30: #{vae_forward.9} parent=5 // pred_check_branch
      %142 = sbr.rel (%p139) target = $region32
    $region31: #{vae_forward.9} parent=5 // pred_region
      %s143 = ssub.s32 %s9, 1
      %s144 = smul.u32 49, %s14
      %p145 = scmp.lt.s32.totalorder %s144, 195
      %s146 = scalar_select %p145, %s144, 195
      %s147 = smul.addr %s146, 4
      %s148 = scalar_lea.vmem %s0, %s147
      %p149 = pneg %p35
      %p150 = pneg %p32
      %p151 = pneg %p56
      %p152 = pneg %p53
      %p153 = pneg %p77
      %p154 = pneg %p74
      %p155 = pneg %p103
      %p156 = pneg %p100
      %s157 = smul.u32 49, %s14
      %p158 = scmp.lt.s32.totalorder %s157, 195
      %s159 = scalar_select %p158, %s157, 195
      %s160 = smul.addr %s159, 4
      %s161 = scalar_lea.vmem %s3, %s160
      %s162 = smul.u32 49, %s14
      %p163 = scmp.lt.s32.totalorder %s162, 195
      %s164 = scalar_select %p163, %s162, 195
      %s165 = smul.addr %s164, 4
      %s166 = scalar_lea.vmem %s0, %s165
      %s167 = smul.u32 49, %s14
      %s168 = smul.u32 49, %s14
      %p169 = scmp.lt.s32.totalorder %s168, 195
      %s170 = scalar_select %p169, %s168, 195
      %s171 = smul.addr %s170, 4
      %s172 = scalar_lea.vmem %s3, %s171
      %s173 = smul.u32 49, %s14
      %v175 = vld [vmem:[%s166] sm:$0xf]
      %v176 = vld [vmem:[%s166 + $0x4] sm:$0xf]
      %v177 = vld [vmem:[%s166 + $0x8] sm:$0xf]
      %v178 = vld [vmem:[%s166 + $0xc] sm:$0xf]
      %v179 = vld [vmem:[%s166 + $0x10] sm:$0xf]
      %v180 = vld [vmem:[%s166 + $0x14] sm:$0xf]
      %v181 = vld [vmem:[%s166 + $0x18] sm:$0xf]
      %v182 = vld [vmem:[%s166 + $0x1c] sm:$0xf]
      %v183 = vld [vmem:[%s166 + $0x20] sm:$0xf]
      %v184 = vld [vmem:[%s166 + $0x24] sm:$0xf]
      %v185 = vld [vmem:[%s166 + $0x28] sm:$0xf]
      %v186 = vld [vmem:[%s166 + $0x2c] sm:$0xf]
      %v187 = vld [vmem:[%s166 + $0x30] sm:$0xf]
      %v188 = vld [vmem:[%s166 + $0x34] sm:$0xf]
      %v189 = vld [vmem:[%s166 + $0x38] sm:$0xf]
      %v190 = vld [vmem:[%s166 + $0x3c] sm:$0xf]
      %v191 = vld [vmem:[%s166 + $0x40] sm:$0xf]
      %v192 = vld [vmem:[%s166 + $0x44] sm:$0xf]
      %v193 = vld [vmem:[%s166 + $0x48] sm:$0xf]
      %v194 = vld [vmem:[%s166 + $0x4c] sm:$0xf]
      %v195 = vld [vmem:[%s166 + $0x50] sm:$0xf]
      %v196 = vld [vmem:[%s166 + $0x54] sm:$0xf]
      %v197 = vld [vmem:[%s166 + $0x58] sm:$0xf]
      %v198 = vld [vmem:[%s166 + $0x5c] sm:$0xf]
      %v199 = vld [vmem:[%s166 + $0x60] sm:$0xf]
      %v200 = vld [vmem:[%s166 + $0x64] sm:$0xf]
      %v201 = vld [vmem:[%s166 + $0x68] sm:$0xf]
      %v202 = vld [vmem:[%s166 + $0x6c] sm:$0xf]
      %v203 = vld [vmem:[%s166 + $0x70] sm:$0xf]
      %v204 = vld [vmem:[%s166 + $0x74] sm:$0xf]
      %v205 = vld [vmem:[%s166 + $0x78] sm:$0xf]
      %v206 = vld [vmem:[%s166 + $0x7c] sm:$0xf]
      %v207 = vld [vmem:[%s166 + $0x80] sm:$0xf]
      %v208 = vld [vmem:[%s166 + $0x84] sm:$0xf]
      %v209 = vld [vmem:[%s166 + $0x88] sm:$0xf]
      %v210 = vld [vmem:[%s166 + $0x8c] sm:$0xf]
      %v211 = vld [vmem:[%s166 + $0x90] sm:$0xf]
      %v212 = vld [vmem:[%s166 + $0x94] sm:$0xf]
      %v213 = vld [vmem:[%s166 + $0x98] sm:$0xf]
      %v214 = vld [vmem:[%s166 + $0x9c] sm:$0xf]
      %v215 = vld [vmem:[%s166 + $0xa0] sm:$0xf]
      %v216 = vld [vmem:[%s166 + $0xa4] sm:$0xf]
      %v217 = vld [vmem:[%s166 + $0xa8] sm:$0xf]
      %v218 = vld [vmem:[%s166 + $0xac] sm:$0xf]
      %v219 = vld [vmem:[%s166 + $0xb0] sm:$0xf]
      %v220 = vld [vmem:[%s166 + $0xb4] sm:$0xf]
      %v221 = vld [vmem:[%s166 + $0xb8] sm:$0xf]
      %v222 = vld [vmem:[%s166 + $0xbc] sm:$0xf]
      %v223 = vld [vmem:[%s166 + $0xc0] sm:$0xf]
      %v224 = vld [vmem:[%s1] sm:$0xf]
      %v225 = vld [vmem:[%s1 + $0x4] sm:$0xf]
      %v226 = vld [vmem:[%s2] sm:$0x1]
      %v228 = vlaneseq
      %v229 = vshrl.u32 %v228, 7
      %v230 = vsub.s32 0, %v229
      %v231 = vrot.slane %v226, %v230
      %v282 = vunpack.c.l.b16 %v175
      %v283 = vunpack.c.l.b16 %v176
      %v284 = vunpack.c.l.b16 %v177
      %v285 = vunpack.c.l.b16 %v178
      %v286 = vunpack.c.l.b16 %v179
      %v287 = vunpack.c.l.b16 %v180
      %v288 = vunpack.c.l.b16 %v181
      %v289 = vunpack.c.l.b16 %v182
      %v290 = vunpack.c.l.b16 %v183
      %v291 = vunpack.c.l.b16 %v184
      %v292 = vunpack.c.l.b16 %v185
      %v293 = vunpack.c.l.b16 %v186
      %v294 = vunpack.c.l.b16 %v187
      %v295 = vunpack.c.l.b16 %v188
      %v296 = vunpack.c.l.b16 %v189
      %v297 = vunpack.c.l.b16 %v190
      %v298 = vunpack.c.l.b16 %v191
      %v299 = vunpack.c.l.b16 %v192
      %v300 = vunpack.c.l.b16 %v193
      %v301 = vunpack.c.l.b16 %v194
      %v302 = vunpack.c.l.b16 %v195
      %v303 = vunpack.c.l.b16 %v196
      %v304 = vunpack.c.l.b16 %v197
      %v305 = vunpack.c.l.b16 %v198
      %v306 = vunpack.c.l.b16 %v199
      %v307 = vunpack.c.l.b16 %v200
      %v308 = vunpack.c.l.b16 %v201
      %v309 = vunpack.c.l.b16 %v202
      %v310 = vunpack.c.l.b16 %v203
      %v311 = vunpack.c.l.b16 %v204
      %v312 = vunpack.c.l.b16 %v205
      %v313 = vunpack.c.l.b16 %v206
      %v314 = vunpack.c.l.b16 %v207
      %v315 = vunpack.c.l.b16 %v208
      %v316 = vunpack.c.l.b16 %v209
      %v317 = vunpack.c.l.b16 %v210
      %v318 = vunpack.c.l.b16 %v211
      %v319 = vunpack.c.l.b16 %v212
      %v320 = vunpack.c.l.b16 %v213
      %v321 = vunpack.c.l.b16 %v214
      %v322 = vunpack.c.l.b16 %v215
      %v323 = vunpack.c.l.b16 %v216
      %v324 = vunpack.c.l.b16 %v217
      %v325 = vunpack.c.l.b16 %v218
      %v326 = vunpack.c.l.b16 %v219
      %v327 = vunpack.c.l.b16 %v220
      %v328 = vunpack.c.l.b16 %v221
      %v329 = vunpack.c.l.b16 %v222
      %v330 = vunpack.c.l.b16 %v223
      %v331 = vpack.c.b16 %v283, %v282
      %v332 = vpack.c.b16 %v285, %v284
      %v333 = vpack.c.b16 %v287, %v286
      %v334 = vpack.c.b16 %v289, %v288
      %v335 = vpack.c.b16 %v291, %v290
      %v336 = vpack.c.b16 %v293, %v292
      %v337 = vpack.c.b16 %v295, %v294
      %v338 = vpack.c.b16 %v297, %v296
      %v339 = vpack.c.b16 %v299, %v298
      %v340 = vpack.c.b16 %v301, %v300
      %v341 = vpack.c.b16 %v303, %v302
      %v342 = vpack.c.b16 %v305, %v304
      %v343 = vpack.c.b16 %v307, %v306
      %v344 = vpack.c.b16 %v309, %v308
      %v345 = vpack.c.b16 %v311, %v310
      %v346 = vpack.c.b16 %v313, %v312
      %v347 = vpack.c.b16 %v315, %v314
      %v348 = vpack.c.b16 %v317, %v316
      %v349 = vpack.c.b16 %v319, %v318
      %v350 = vpack.c.b16 %v321, %v320
      %v351 = vpack.c.b16 %v323, %v322
      %v352 = vpack.c.b16 %v325, %v324
      %v353 = vpack.c.b16 %v327, %v326
      %v354 = vpack.c.b16 %v329, %v328
      %v355 = vpack.c.b16 %v330, %v330
      %v358 = vunpack.c.l.b16 %v224
      %v359 = vunpack.c.l.b16 %v225
      %v360 = vpack.c.b16 %v359, %v358
      %vm362 = vcmask 130048
      %v364 = vsel %vm362, %v331, 0
      %v367 = vsel %vm362, %v332, 0
      %v370 = vsel %vm362, %v333, 0
      %v373 = vsel %vm362, %v334, 0
      %v376 = vsel %vm362, %v335, 0
      %v379 = vsel %vm362, %v336, 0
      %v382 = vsel %vm362, %v337, 0
      %v385 = vsel %vm362, %v338, 0
      %v388 = vsel %vm362, %v339, 0
      %v391 = vsel %vm362, %v340, 0
      %v394 = vsel %vm362, %v341, 0
      %v397 = vsel %vm362, %v342, 0
      %v400 = vsel %vm362, %v343, 0
      %v403 = vsel %vm362, %v344, 0
      %v406 = vsel %vm362, %v345, 0
      %v409 = vsel %vm362, %v346, 0
      %v412 = vsel %vm362, %v347, 0
      %v415 = vsel %vm362, %v348, 0
      %v418 = vsel %vm362, %v349, 0
      %v421 = vsel %vm362, %v350, 0
      %v424 = vsel %vm362, %v351, 0
      %v427 = vsel %vm362, %v352, 0
      %v430 = vsel %vm362, %v353, 0
      %v433 = vsel %vm362, %v354, 0
      %v436 = vsel %vm362, %v355, 0
      %438 = vmatprep.subr.bf16.mxu0 0
      %439 = vmatpush1.bf16.msra.mxu0 0
      %440 = vmatprep.subr.bf16.mxu0 0
      %441 = vmatpush1.bf16.msra.mxu0 0
      %442 = vmatprep.subr.bf16.mxu0 0
      %443 = vmatpush1.bf16.msra.mxu0 0
      %444 = vmatprep.subr.bf16.mxu0 0
      %445 = vmatpush1.bf16.msra.mxu0 0
      %446 = vmatprep.subr.bf16.mxu0 0
      %447 = vmatpush1.bf16.msra.mxu0 0
      %448 = vmatprep.subr.bf16.mxu0 0
      %449 = vmatpush1.bf16.msra.mxu0 0
      %450 = vmatprep.subr.bf16.mxu0 0
      %451 = vmatpush1.bf16.msra.mxu0 0
      %452 = vmatprep.subr.bf16.mxu0 0
      %453 = vmatpush1.bf16.msra.mxu0 %v360
      %454 = vmatprep.subr.bf16.mxu0 0
      %455 = vmatpush2.bf16.msra.mxu0 0
      %456 = vmatprep.subr.bf16.mxu0 0
      %457 = vmatpush2.bf16.msra.mxu0 0
      %458 = vmatprep.subr.bf16.mxu0 0
      %459 = vmatpush2.bf16.msra.mxu0 0
      %460 = vmatprep.subr.bf16.mxu0 0
      %461 = vmatpush2.bf16.msra.mxu0 0
      %462 = vmatprep.subr.bf16.mxu0 0
      %463 = vmatpush2.bf16.msra.mxu0 0
      %464 = vmatprep.subr.bf16.mxu0 0
      %465 = vmatpush2.bf16.msra.mxu0 0
      %466 = vmatprep.subr.bf16.mxu0 0
      %467 = vmatpush2.bf16.msra.mxu0 0
      %468 = vmatprep.subr.bf16.mxu0 0
      %469 = vmatpush2.bf16.msra.mxu0 0
      %470 = vmatprep.mubr.bf16.mxu0 0
      %471 = vmatmul.mubr.bf16.gmra.mxu0 %v364
      %v472 = vpop.f32.mrf.mxu0
      %v473 = vadd.f32 %v231, %v472
      %v474 = vpop.f32.mrf.mxu0
      %v475 = vpop.f32.mrf.mxu0
      %v476 = vadd.f32 %v231, %v475
      %v477 = vpop.f32.mrf.mxu0
      %478 = vmatprep.mubr.bf16.mxu0 0
      %479 = vmatmul.mubr.bf16.gmra.mxu0 %v367
      %v480 = vpop.f32.mrf.mxu0
      %v481 = vadd.f32 %v231, %v480
      %v482 = vpop.f32.mrf.mxu0
      %v483 = vpop.f32.mrf.mxu0
      %v484 = vadd.f32 %v231, %v483
      %v485 = vpop.f32.mrf.mxu0
      %486 = vmatprep.mubr.bf16.mxu0 0
      %487 = vmatmul.mubr.bf16.gmra.mxu0 %v370
      %v488 = vpop.f32.mrf.mxu0
      %v489 = vadd.f32 %v231, %v488
      %v490 = vpop.f32.mrf.mxu0
      %v491 = vpop.f32.mrf.mxu0
      %v492 = vadd.f32 %v231, %v491
      %v493 = vpop.f32.mrf.mxu0
      %494 = vmatprep.mubr.bf16.mxu0 0
      %495 = vmatmul.mubr.bf16.gmra.mxu0 %v373
      %v496 = vpop.f32.mrf.mxu0
      %v497 = vadd.f32 %v231, %v496
      %v498 = vpop.f32.mrf.mxu0
      %v499 = vpop.f32.mrf.mxu0
      %v500 = vadd.f32 %v231, %v499
      %v501 = vpop.f32.mrf.mxu0
      %502 = vmatprep.mubr.bf16.mxu0 0
      %503 = vmatmul.mubr.bf16.gmra.mxu0 %v376
      %v504 = vpop.f32.mrf.mxu0
      %v505 = vadd.f32 %v231, %v504
      %v506 = vpop.f32.mrf.mxu0
      %v507 = vpop.f32.mrf.mxu0
      %v508 = vadd.f32 %v231, %v507
      %v509 = vpop.f32.mrf.mxu0
      %510 = vmatprep.mubr.bf16.mxu0 0
      %511 = vmatmul.mubr.bf16.gmra.mxu0 %v379
      %v512 = vpop.f32.mrf.mxu0
      %v513 = vadd.f32 %v231, %v512
      %v514 = vpop.f32.mrf.mxu0
      %v515 = vpop.f32.mrf.mxu0
      %v516 = vadd.f32 %v231, %v515
      %v517 = vpop.f32.mrf.mxu0
      %518 = vmatprep.mubr.bf16.mxu0 0
      %519 = vmatmul.mubr.bf16.gmra.mxu0 %v382
      %v520 = vpop.f32.mrf.mxu0
      %v521 = vadd.f32 %v231, %v520
      %v522 = vpop.f32.mrf.mxu0
      %v523 = vpop.f32.mrf.mxu0
      %v524 = vadd.f32 %v231, %v523
      %v525 = vpop.f32.mrf.mxu0
      %526 = vmatprep.mubr.bf16.mxu0 0
      %527 = vmatmul.mubr.bf16.gmra.mxu0 %v385
      %v528 = vpop.f32.mrf.mxu0
      %v529 = vadd.f32 %v231, %v528
      %v530 = vpop.f32.mrf.mxu0
      %v531 = vpop.f32.mrf.mxu0
      %v532 = vadd.f32 %v231, %v531
      %v533 = vpop.f32.mrf.mxu0
      %534 = vmatprep.mubr.bf16.mxu0 0
      %535 = vmatmul.mubr.bf16.gmra.mxu0 %v388
      %v536 = vpop.f32.mrf.mxu0
      %v537 = vadd.f32 %v231, %v536
      %v538 = vpop.f32.mrf.mxu0
      %v539 = vpop.f32.mrf.mxu0
      %v540 = vadd.f32 %v231, %v539
      %v541 = vpop.f32.mrf.mxu0
      %542 = vmatprep.mubr.bf16.mxu0 0
      %543 = vmatmul.mubr.bf16.gmra.mxu0 %v391
      %v544 = vpop.f32.mrf.mxu0
      %v545 = vadd.f32 %v231, %v544
      %v546 = vpop.f32.mrf.mxu0
      %v547 = vpop.f32.mrf.mxu0
      %v548 = vadd.f32 %v231, %v547
      %v549 = vpop.f32.mrf.mxu0
      %550 = vmatprep.mubr.bf16.mxu0 0
      %551 = vmatmul.mubr.bf16.gmra.mxu0 %v394
      %v552 = vpop.f32.mrf.mxu0
      %v553 = vadd.f32 %v231, %v552
      %v554 = vpop.f32.mrf.mxu0
      %v555 = vpop.f32.mrf.mxu0
      %v556 = vadd.f32 %v231, %v555
      %v557 = vpop.f32.mrf.mxu0
      %558 = vmatprep.mubr.bf16.mxu0 0
      %559 = vmatmul.mubr.bf16.gmra.mxu0 %v397
      %v560 = vpop.f32.mrf.mxu0
      %v561 = vadd.f32 %v231, %v560
      %v562 = vpop.f32.mrf.mxu0
      %v563 = vpop.f32.mrf.mxu0
      %v564 = vadd.f32 %v231, %v563
      %v565 = vpop.f32.mrf.mxu0
      %566 = vmatprep.mubr.bf16.mxu0 0
      %567 = vmatmul.mubr.bf16.gmra.mxu0 %v400
      %v568 = vpop.f32.mrf.mxu0
      %v569 = vadd.f32 %v231, %v568
      %v570 = vpop.f32.mrf.mxu0
      %v571 = vpop.f32.mrf.mxu0
      %v572 = vadd.f32 %v231, %v571
      %v573 = vpop.f32.mrf.mxu0
      %574 = vmatprep.mubr.bf16.mxu0 0
      %575 = vmatmul.mubr.bf16.gmra.mxu0 %v403
      %v576 = vpop.f32.mrf.mxu0
      %v577 = vadd.f32 %v231, %v576
      %v578 = vpop.f32.mrf.mxu0
      %v579 = vpop.f32.mrf.mxu0
      %v580 = vadd.f32 %v231, %v579
      %v581 = vpop.f32.mrf.mxu0
      %582 = vmatprep.mubr.bf16.mxu0 0
      %583 = vmatmul.mubr.bf16.gmra.mxu0 %v406
      %v584 = vpop.f32.mrf.mxu0
      %v585 = vadd.f32 %v231, %v584
      %v586 = vpop.f32.mrf.mxu0
      %v587 = vpop.f32.mrf.mxu0
      %v588 = vadd.f32 %v231, %v587
      %v589 = vpop.f32.mrf.mxu0
      %590 = vmatprep.mubr.bf16.mxu0 0
      %591 = vmatmul.mubr.bf16.gmra.mxu0 %v409
      %v592 = vpop.f32.mrf.mxu0
      %v593 = vadd.f32 %v231, %v592
      %v594 = vpop.f32.mrf.mxu0
      %v595 = vpop.f32.mrf.mxu0
      %v596 = vadd.f32 %v231, %v595
      %v597 = vpop.f32.mrf.mxu0
      %598 = vmatprep.mubr.bf16.mxu0 0
      %599 = vmatmul.mubr.bf16.gmra.mxu0 %v412
      %v600 = vpop.f32.mrf.mxu0
      %v601 = vadd.f32 %v231, %v600
      %v602 = vpop.f32.mrf.mxu0
      %v603 = vpop.f32.mrf.mxu0
      %v604 = vadd.f32 %v231, %v603
      %v605 = vpop.f32.mrf.mxu0
      %606 = vmatprep.mubr.bf16.mxu0 0
      %607 = vmatmul.mubr.bf16.gmra.mxu0 %v415
      %v608 = vpop.f32.mrf.mxu0
      %v609 = vadd.f32 %v231, %v608
      %v610 = vpop.f32.mrf.mxu0
      %v611 = vpop.f32.mrf.mxu0
      %v612 = vadd.f32 %v231, %v611
      %v613 = vpop.f32.mrf.mxu0
      %614 = vmatprep.mubr.bf16.mxu0 0
      %615 = vmatmul.mubr.bf16.gmra.mxu0 %v418
      %v616 = vpop.f32.mrf.mxu0
      %v617 = vadd.f32 %v231, %v616
      %v618 = vpop.f32.mrf.mxu0
      %v619 = vpop.f32.mrf.mxu0
      %v620 = vadd.f32 %v231, %v619
      %v621 = vpop.f32.mrf.mxu0
      %622 = vmatprep.mubr.bf16.mxu0 0
      %623 = vmatmul.mubr.bf16.gmra.mxu0 %v421
      %v624 = vpop.f32.mrf.mxu0
      %v625 = vadd.f32 %v231, %v624
      %v626 = vpop.f32.mrf.mxu0
      %v627 = vpop.f32.mrf.mxu0
      %v628 = vadd.f32 %v231, %v627
      %v629 = vpop.f32.mrf.mxu0
      %630 = vmatprep.mubr.bf16.mxu0 0
      %631 = vmatmul.mubr.bf16.gmra.mxu0 %v424
      %v632 = vpop.f32.mrf.mxu0
      %v633 = vadd.f32 %v231, %v632
      %v634 = vpop.f32.mrf.mxu0
      %v635 = vpop.f32.mrf.mxu0
      %v636 = vadd.f32 %v231, %v635
      %v637 = vpop.f32.mrf.mxu0
      %638 = vmatprep.mubr.bf16.mxu0 0
      %639 = vmatmul.mubr.bf16.gmra.mxu0 %v427
      %v640 = vpop.f32.mrf.mxu0
      %v641 = vadd.f32 %v231, %v640
      %v642 = vpop.f32.mrf.mxu0
      %v643 = vpop.f32.mrf.mxu0
      %v644 = vadd.f32 %v231, %v643
      %v645 = vpop.f32.mrf.mxu0
      %646 = vmatprep.mubr.bf16.mxu0 0
      %647 = vmatmul.mubr.bf16.gmra.mxu0 %v430
      %v648 = vpop.f32.mrf.mxu0
      %v649 = vadd.f32 %v231, %v648
      %v650 = vpop.f32.mrf.mxu0
      %v651 = vpop.f32.mrf.mxu0
      %v652 = vadd.f32 %v231, %v651
      %v653 = vpop.f32.mrf.mxu0
      %654 = vmatprep.mubr.bf16.mxu0 0
      %655 = vmatmul.mubr.bf16.gmra.mxu0 %v433
      %v656 = vpop.f32.mrf.mxu0
      %v657 = vadd.f32 %v231, %v656
      %v658 = vpop.f32.mrf.mxu0
      %v659 = vpop.f32.mrf.mxu0
      %v660 = vadd.f32 %v231, %v659
      %v661 = vpop.f32.mrf.mxu0
      %662 = vmatprep.mubr.bf16.mxu0 0
      %663 = vmatmul.mubr.bf16.gmra.mxu0 %v436
      %v664 = vpop.f32.mrf.mxu0
      %v665 = vadd.f32 %v231, %v664
      %v666 = vpop.f32.mrf.mxu0
      %v667 = vpop.f32.mrf.mxu0
      %v668 = vpop.f32.mrf.mxu0
      %669 = vdwg.mxu0
      %v670 = vmax.f32 %v473, 0.0
      %v671 = vmax.f32 %v476, 0.0
      %v672 = vmax.f32 %v481, 0.0
      %v673 = vmax.f32 %v484, 0.0
      %v674 = vmax.f32 %v489, 0.0
      %v675 = vmax.f32 %v492, 0.0
      %v676 = vmax.f32 %v497, 0.0
      %v677 = vmax.f32 %v500, 0.0
      %v678 = vmax.f32 %v505, 0.0
      %v679 = vmax.f32 %v508, 0.0
      %v680 = vmax.f32 %v513, 0.0
      %v681 = vmax.f32 %v516, 0.0
      %v682 = vmax.f32 %v521, 0.0
      %v683 = vmax.f32 %v524, 0.0
      %v684 = vmax.f32 %v529, 0.0
      %v685 = vmax.f32 %v532, 0.0
      %v686 = vmax.f32 %v537, 0.0
      %v687 = vmax.f32 %v540, 0.0
      %v688 = vmax.f32 %v545, 0.0
      %v689 = vmax.f32 %v548, 0.0
      %v690 = vmax.f32 %v553, 0.0
      %v691 = vmax.f32 %v556, 0.0
      %v692 = vmax.f32 %v561, 0.0
      %v693 = vmax.f32 %v564, 0.0
      %v694 = vmax.f32 %v569, 0.0
      %v695 = vmax.f32 %v572, 0.0
      %v696 = vmax.f32 %v577, 0.0
      %v697 = vmax.f32 %v580, 0.0
      %v698 = vmax.f32 %v585, 0.0
      %v699 = vmax.f32 %v588, 0.0
      %v700 = vmax.f32 %v593, 0.0
      %v701 = vmax.f32 %v596, 0.0
      %v702 = vmax.f32 %v601, 0.0
      %v703 = vmax.f32 %v604, 0.0
      %v704 = vmax.f32 %v609, 0.0
      %v705 = vmax.f32 %v612, 0.0
      %v706 = vmax.f32 %v617, 0.0
      %v707 = vmax.f32 %v620, 0.0
      %v708 = vmax.f32 %v625, 0.0
      %v709 = vmax.f32 %v628, 0.0
      %v710 = vmax.f32 %v633, 0.0
      %v711 = vmax.f32 %v636, 0.0
      %v712 = vmax.f32 %v641, 0.0
      %v713 = vmax.f32 %v644, 0.0
      %v714 = vmax.f32 %v649, 0.0
      %v715 = vmax.f32 %v652, 0.0
      %v716 = vmax.f32 %v657, 0.0
      %v717 = vmax.f32 %v660, 0.0
      %v718 = vmax.f32 %v665, 0.0
      %v719 = vpack.c.bf16 %v671, %v670
      %v720 = vpack.c.bf16 %v673, %v672
      %v721 = vpack.c.bf16 %v675, %v674
      %v722 = vpack.c.bf16 %v677, %v676
      %v723 = vpack.c.bf16 %v679, %v678
      %v724 = vpack.c.bf16 %v681, %v680
      %v725 = vpack.c.bf16 %v683, %v682
      %v726 = vpack.c.bf16 %v685, %v684
      %v727 = vpack.c.bf16 %v687, %v686
      %v728 = vpack.c.bf16 %v689, %v688
      %v729 = vpack.c.bf16 %v691, %v690
      %v730 = vpack.c.bf16 %v693, %v692
      %v731 = vpack.c.bf16 %v695, %v694
      %v732 = vpack.c.bf16 %v697, %v696
      %v733 = vpack.c.bf16 %v699, %v698
      %v734 = vpack.c.bf16 %v701, %v700
      %v735 = vpack.c.bf16 %v703, %v702
      %v736 = vpack.c.bf16 %v705, %v704
      %v737 = vpack.c.bf16 %v707, %v706
      %v738 = vpack.c.bf16 %v709, %v708
      %v739 = vpack.c.bf16 %v711, %v710
      %v740 = vpack.c.bf16 %v713, %v712
      %v741 = vpack.c.bf16 %v715, %v714
      %v742 = vpack.c.bf16 %v717, %v716
      %v743 = vpack.c.bf16 %v718, %v718
      %v769 = vunpack.c.l.b16 %v719
      %v770 = vunpack.c.h.b16 %v719
      %v771 = vunpack.c.l.b16 %v720
      %v772 = vunpack.c.h.b16 %v720
      %v773 = vunpack.c.l.b16 %v721
      %v774 = vunpack.c.h.b16 %v721
      %v775 = vunpack.c.l.b16 %v722
      %v776 = vunpack.c.h.b16 %v722
      %v777 = vunpack.c.l.b16 %v723
      %v778 = vunpack.c.h.b16 %v723
      %v779 = vunpack.c.l.b16 %v724
      %v780 = vunpack.c.h.b16 %v724
      %v781 = vunpack.c.l.b16 %v725
      %v782 = vunpack.c.h.b16 %v725
      %v783 = vunpack.c.l.b16 %v726
      %v784 = vunpack.c.h.b16 %v726
      %v785 = vunpack.c.l.b16 %v727
      %v786 = vunpack.c.h.b16 %v727
      %v787 = vunpack.c.l.b16 %v728
      %v788 = vunpack.c.h.b16 %v728
      %v789 = vunpack.c.l.b16 %v729
      %v790 = vunpack.c.h.b16 %v729
      %v791 = vunpack.c.l.b16 %v730
      %v792 = vunpack.c.h.b16 %v730
      %v793 = vunpack.c.l.b16 %v731
      %v794 = vunpack.c.h.b16 %v731
      %v795 = vunpack.c.l.b16 %v732
      %v796 = vunpack.c.h.b16 %v732
      %v797 = vunpack.c.l.b16 %v733
      %v798 = vunpack.c.h.b16 %v733
      %v799 = vunpack.c.l.b16 %v734
      %v800 = vunpack.c.h.b16 %v734
      %v801 = vunpack.c.l.b16 %v735
      %v802 = vunpack.c.h.b16 %v735
      %v803 = vunpack.c.l.b16 %v736
      %v804 = vunpack.c.h.b16 %v736
      %v805 = vunpack.c.l.b16 %v737
      %v806 = vunpack.c.h.b16 %v737
      %v807 = vunpack.c.l.b16 %v738
      %v808 = vunpack.c.h.b16 %v738
      %v809 = vunpack.c.l.b16 %v739
      %v810 = vunpack.c.h.b16 %v739
      %v811 = vunpack.c.l.b16 %v740
      %v812 = vunpack.c.h.b16 %v740
      %v813 = vunpack.c.l.b16 %v741
      %v814 = vunpack.c.h.b16 %v741
      %v815 = vunpack.c.l.b16 %v742
      %v816 = vunpack.c.h.b16 %v742
      %v817 = vunpack.c.l.b16 %v743
      %v818 = vpack.c.b16 %v769, %v769
      %v819 = vpack.c.b16 %v770, %v770
      %v820 = vpack.c.b16 %v771, %v771
      %v821 = vpack.c.b16 %v772, %v772
      %v822 = vpack.c.b16 %v773, %v773
      %v823 = vpack.c.b16 %v774, %v774
      %v824 = vpack.c.b16 %v775, %v775
      %v825 = vpack.c.b16 %v776, %v776
      %v826 = vpack.c.b16 %v777, %v777
      %v827 = vpack.c.b16 %v778, %v778
      %v828 = vpack.c.b16 %v779, %v779
      %v829 = vpack.c.b16 %v780, %v780
      %v830 = vpack.c.b16 %v781, %v781
      %v831 = vpack.c.b16 %v782, %v782
      %v832 = vpack.c.b16 %v783, %v783
      %v833 = vpack.c.b16 %v784, %v784
      %v834 = vpack.c.b16 %v785, %v785
      %v835 = vpack.c.b16 %v786, %v786
      %v836 = vpack.c.b16 %v787, %v787
      %v837 = vpack.c.b16 %v788, %v788
      %v838 = vpack.c.b16 %v789, %v789
      %v839 = vpack.c.b16 %v790, %v790
      %v840 = vpack.c.b16 %v791, %v791
      %v841 = vpack.c.b16 %v792, %v792
      %v842 = vpack.c.b16 %v793, %v793
      %v843 = vpack.c.b16 %v794, %v794
      %v844 = vpack.c.b16 %v795, %v795
      %v845 = vpack.c.b16 %v796, %v796
      %v846 = vpack.c.b16 %v797, %v797
      %v847 = vpack.c.b16 %v798, %v798
      %v848 = vpack.c.b16 %v799, %v799
      %v849 = vpack.c.b16 %v800, %v800
      %v850 = vpack.c.b16 %v801, %v801
      %v851 = vpack.c.b16 %v802, %v802
      %v852 = vpack.c.b16 %v803, %v803
      %v853 = vpack.c.b16 %v804, %v804
      %v854 = vpack.c.b16 %v805, %v805
      %v855 = vpack.c.b16 %v806, %v806
      %v856 = vpack.c.b16 %v807, %v807
      %v857 = vpack.c.b16 %v808, %v808
      %v858 = vpack.c.b16 %v809, %v809
      %v859 = vpack.c.b16 %v810, %v810
      %v860 = vpack.c.b16 %v811, %v811
      %v861 = vpack.c.b16 %v812, %v812
      %v862 = vpack.c.b16 %v813, %v813
      %v863 = vpack.c.b16 %v814, %v814
      %v864 = vpack.c.b16 %v815, %v815
      %v865 = vpack.c.b16 %v816, %v816
      %v866 = vpack.c.b16 %v817, %v817
      %916 = vst [vmem:[%s172] sm:$0xf] %v818
      %917 = vst [vmem:[%s172 + $0x4] sm:$0xf] %v819
      %918 = vst [vmem:[%s172 + $0x8] sm:$0xf] %v820
      %919 = vst [vmem:[%s172 + $0xc] sm:$0xf] %v821
      %920 = vst [vmem:[%s172 + $0x10] sm:$0xf] %v822
      %921 = vst [vmem:[%s172 + $0x14] sm:$0xf] %v823
      %922 = vst [vmem:[%s172 + $0x18] sm:$0xf] %v824
      %923 = vst [vmem:[%s172 + $0x1c] sm:$0xf] %v825
      %924 = vst [vmem:[%s172 + $0x20] sm:$0xf] %v826
      %925 = vst [vmem:[%s172 + $0x24] sm:$0xf] %v827
      %926 = vst [vmem:[%s172 + $0x28] sm:$0xf] %v828
      %927 = vst [vmem:[%s172 + $0x2c] sm:$0xf] %v829
      %928 = vst [vmem:[%s172 + $0x30] sm:$0xf] %v830
      %929 = vst [vmem:[%s172 + $0x34] sm:$0xf] %v831
      %930 = vst [vmem:[%s172 + $0x38] sm:$0xf] %v832
      %931 = vst [vmem:[%s172 + $0x3c] sm:$0xf] %v833
      %932 = vst [vmem:[%s172 + $0x40] sm:$0xf] %v834
      %933 = vst [vmem:[%s172 + $0x44] sm:$0xf] %v835
      %934 = vst [vmem:[%s172 + $0x48] sm:$0xf] %v836
      %935 = vst [vmem:[%s172 + $0x4c] sm:$0xf] %v837
      %936 = vst [vmem:[%s172 + $0x50] sm:$0xf] %v838
      %937 = vst [vmem:[%s172 + $0x54] sm:$0xf] %v839
      %938 = vst [vmem:[%s172 + $0x58] sm:$0xf] %v840
      %939 = vst [vmem:[%s172 + $0x5c] sm:$0xf] %v841
      %940 = vst [vmem:[%s172 + $0x60] sm:$0xf] %v842
      %941 = vst [vmem:[%s172 + $0x64] sm:$0xf] %v843
      %942 = vst [vmem:[%s172 + $0x68] sm:$0xf] %v844
      %943 = vst [vmem:[%s172 + $0x6c] sm:$0xf] %v845
      %944 = vst [vmem:[%s172 + $0x70] sm:$0xf] %v846
      %945 = vst [vmem:[%s172 + $0x74] sm:$0xf] %v847
      %946 = vst [vmem:[%s172 + $0x78] sm:$0xf] %v848
      %947 = vst [vmem:[%s172 + $0x7c] sm:$0xf] %v849
      %948 = vst [vmem:[%s172 + $0x80] sm:$0xf] %v850
      %949 = vst [vmem:[%s172 + $0x84] sm:$0xf] %v851
      %950 = vst [vmem:[%s172 + $0x88] sm:$0xf] %v852
      %951 = vst [vmem:[%s172 + $0x8c] sm:$0xf] %v853
      %952 = vst [vmem:[%s172 + $0x90] sm:$0xf] %v854
      %953 = vst [vmem:[%s172 + $0x94] sm:$0xf] %v855
      %954 = vst [vmem:[%s172 + $0x98] sm:$0xf] %v856
      %955 = vst [vmem:[%s172 + $0x9c] sm:$0xf] %v857
      %956 = vst [vmem:[%s172 + $0xa0] sm:$0xf] %v858
      %957 = vst [vmem:[%s172 + $0xa4] sm:$0xf] %v859
      %958 = vst [vmem:[%s172 + $0xa8] sm:$0xf] %v860
      %959 = vst [vmem:[%s172 + $0xac] sm:$0xf] %v861
      %960 = vst [vmem:[%s172 + $0xb0] sm:$0xf] %v862
      %961 = vst [vmem:[%s172 + $0xb4] sm:$0xf] %v863
      %962 = vst [vmem:[%s172 + $0xb8] sm:$0xf] %v864
      %963 = vst [vmem:[%s172 + $0xbc] sm:$0xf] %v865
      %964 = vst [vmem:[%s172 + $0xc0] sm:$0xf] %v866
      %s965 = smul.u32 49, %s14
      %p966 = scmp.lt.s32.totalorder %s965, 195
      %s967 = scalar_select %p966, %s965, 195
      %s968 = smul.addr %s967, 4
      %s969 = scalar_lea.vmem %s3, %s968
      // Predicated region
      $region33: #{vae_forward.9} parent=31 // pred_check
        %p970 = pneg %p100
      $region34: #{vae_forward.9} parent=31 // pred_check_branch
        %972 = sbr.rel (%p970) target = $region36
      $region35: #{vae_forward.9} parent=31 // pred_region
        %s973 = smul.u32 49, %s14
      $region36: #{vae_forward.9} parent=31 // pred_fallthru
        _
    $region32: #{vae_forward.9} parent=5 // pred_fallthru
      _
    %p974 = scmp.le.s32.totalorder 2, %s9
    // Predicated region
    $region37: #{vae_forward.9} parent=5 // pred_check
      %p975 = pneg %p974
    $region38: #{vae_forward.9} parent=5 // pred_check_branch
      %977 = sbr.rel (%p975) target = $region40
    $region39: #{vae_forward.9} parent=5 // pred_region
      %s978 = ssub.s32 %s9, 2
      // Predicated region
      $region41: #{vae_forward.9} parent=39 // pred_check
        %p979 = pneg %p106
      $region42: #{vae_forward.9} parent=39 // pred_check_branch
        %981 = sbr.rel (%p979) target = $region44
      $region43: #{vae_forward.9} parent=39 // pred_region
        %s982 = smul.u32 49, %s15
        %p983 = scmp.lt.s32.totalorder %s982, 195
        %s984 = scalar_select %p983, %s982, 195
        %s985 = smul.addr %s984, 4
        %s986 = scalar_lea.vmem %s3, %s985
      $region44: #{vae_forward.9} parent=39 // pred_fallthru
        _
    $region40: #{vae_forward.9} parent=5 // pred_fallthru
      _
  $region6: #{vae_forward.9} parent=0 // loop_footer
    %s13 = sadd.s32 1, %s9
  $region7: #{vae_forward.9} parent=0 // loop_footer_branch
    %8 = sbr.rel target = $region3
  $region8: #{vae_forward.9} parent=0 // loop_exit
    _

// kernel: vae_forward.10
$region0: #{vae_forward.10}
  #allocation0 [shape = 'u32[]', space=smem, size = 0x4, offset = 0x4, fixed_abs, tag = 'smem constant byte address 0x4 - core index']
  #allocation1 [shape = 'u32[144,128]{1,0:T(1,128)}', space=vmem, size = 0x12000, scoped, tag = 'internal scratch']
  %s0 = inlined_call_operand.vmem [shape: bf16[392,288], index: 0, kind: input, shape index: {}]
  %s1 = inlined_call_operand.vmem [shape: bf16[288,128], index: 1, kind: input, shape index: {}]
  %s2 = inlined_call_operand.vmem [shape: f32[1,128], index: 2, kind: input, shape index: {}]
  %s3 = inlined_call_operand.vmem [shape: bf16[392,128], index: 3, kind: output, shape index: {}]
  %s4 = sld [smem:[#allocation0]]
  $region22: #{vae_forward.10} parent=0
    _
  %s6 = ssub.s32 1, %s4
  %s7 = scalar_select 0, %s6, %s4
  // Predicated region
  $region2: #{vae_forward.10} parent=0 // pred_check
    _
  $region3: #{vae_forward.10} parent=0 // pred_check_branch
    %9 = sbr.rel (0) target = $region5
  $region4: #{vae_forward.10} parent=0 // pred_region
    _
  $region5: #{vae_forward.10} parent=0 // pred_fallthru
    _
  // Predicated region
  $region6: #{vae_forward.10} parent=0 // pred_check
    _
  $region7: #{vae_forward.10} parent=0 // pred_check_branch
    %11 = sbr.rel (0) target = $region9
  $region8: #{vae_forward.10} parent=0 // pred_region
    _
  $region9: #{vae_forward.10} parent=0 // pred_fallthru
    _
  // Predicated region
  $region10: #{vae_forward.10} parent=0 // pred_check
    _
  $region11: #{vae_forward.10} parent=0 // pred_check_branch
    %13 = sbr.rel (0) target = $region13
  $region12: #{vae_forward.10} parent=0 // pred_region
    _
  $region13: #{vae_forward.10} parent=0 // pred_fallthru
    _
  %v15 = vld [vmem:[%s0] sm:$0xff]
  %v16 = vld [vmem:[%s0 + $0x8] sm:$0xf]
  %v17 = vld [vmem:[%s0 + $0xc] sm:$0xff]
  %v18 = vld [vmem:[%s0 + $0x14] sm:$0xf]
  %v19 = vld [vmem:[%s0 + $0x18] sm:$0xff]
  %v20 = vld [vmem:[%s0 + $0x20] sm:$0xf]
  %v21 = vld [vmem:[%s0 + $0x24] sm:$0xff]
  %v22 = vld [vmem:[%s0 + $0x2c] sm:$0xf]
  %v23 = vld [vmem:[%s0 + $0x30] sm:$0xff]
  %v24 = vld [vmem:[%s0 + $0x38] sm:$0xf]
  %v25 = vld [vmem:[%s0 + $0x3c] sm:$0xff]
  %v26 = vld [vmem:[%s0 + $0x44] sm:$0xf]
  %v27 = vld [vmem:[%s0 + $0x48] sm:$0xff]
  %v28 = vld [vmem:[%s0 + $0x50] sm:$0xf]
  %v29 = vld [vmem:[%s0 + $0x54] sm:$0xff]
  %v30 = vld [vmem:[%s0 + $0x5c] sm:$0xf]
  %v31 = vld [vmem:[%s0 + $0x60] sm:$0xff]
  %v32 = vld [vmem:[%s0 + $0x68] sm:$0xf]
  %v33 = vld [vmem:[%s0 + $0x6c] sm:$0xff]
  %v34 = vld [vmem:[%s0 + $0x74] sm:$0xf]
  %v35 = vld [vmem:[%s0 + $0x78] sm:$0xff]
  %v36 = vld [vmem:[%s0 + $0x80] sm:$0xf]
  %v37 = vld [vmem:[%s0 + $0x84] sm:$0xff]
  %v38 = vld [vmem:[%s0 + $0x8c] sm:$0xf]
  %v39 = vld [vmem:[%s0 + $0x90] sm:$0xff]
  %v40 = vld [vmem:[%s0 + $0x98] sm:$0xf]
  %v41 = vld [vmem:[%s0 + $0x9c] sm:$0xff]
  %v42 = vld [vmem:[%s0 + $0xa4] sm:$0xf]
  %v43 = vld [vmem:[%s0 + $0xa8] sm:$0xff]
  %v44 = vld [vmem:[%s0 + $0xb0] sm:$0xf]
  %v45 = vld [vmem:[%s0 + $0xb4] sm:$0xff]
  %v46 = vld [vmem:[%s0 + $0xbc] sm:$0xf]
  %v47 = vld [vmem:[%s0 + $0xc0] sm:$0xff]
  %v48 = vld [vmem:[%s0 + $0xc8] sm:$0xf]
  %v49 = vld [vmem:[%s0 + $0xcc] sm:$0xff]
  %v50 = vld [vmem:[%s0 + $0xd4] sm:$0xf]
  %v51 = vld [vmem:[%s0 + $0xd8] sm:$0xff]
  %v52 = vld [vmem:[%s0 + $0xe0] sm:$0xf]
  %v53 = vld [vmem:[%s0 + $0xe4] sm:$0xff]
  %v54 = vld [vmem:[%s0 + $0xec] sm:$0xf]
  %v55 = vld [vmem:[%s0 + $0xf0] sm:$0xff]
  %v56 = vld [vmem:[%s0 + $0xf8] sm:$0xf]
  %v57 = vld [vmem:[%s0 + $0xfc] sm:$0xff]
  %v58 = vld [vmem:[%s0 + $0x104] sm:$0xf]
  %v59 = vld [vmem:[%s0 + $0x108] sm:$0xff]
  %v60 = vld [vmem:[%s0 + $0x110] sm:$0xf]
  %v61 = vld [vmem:[%s0 + $0x114] sm:$0xff]
  %v62 = vld [vmem:[%s0 + $0x11c] sm:$0xf]
  %v63 = vld [vmem:[%s0 + $0x120] sm:$0xff]
  %v64 = vld [vmem:[%s0 + $0x128] sm:$0xf]
  %v65 = vld [vmem:[%s0 + $0x12c] sm:$0xff]
  %v66 = vld [vmem:[%s0 + $0x134] sm:$0xf]
  %v67 = vld [vmem:[%s0 + $0x138] sm:$0xff]
  %v68 = vld [vmem:[%s0 + $0x140] sm:$0xf]
  %v69 = vld [vmem:[%s0 + $0x144] sm:$0xff]
  %v70 = vld [vmem:[%s0 + $0x14c] sm:$0xf]
  %v71 = vld [vmem:[%s0 + $0x150] sm:$0xff]
  %v72 = vld [vmem:[%s0 + $0x158] sm:$0xf]
  %v73 = vld [vmem:[%s0 + $0x15c] sm:$0xff]
  %v74 = vld [vmem:[%s0 + $0x164] sm:$0xf]
  %v75 = vld [vmem:[%s0 + $0x168] sm:$0xff]
  %v76 = vld [vmem:[%s0 + $0x170] sm:$0xf]
  %v77 = vld [vmem:[%s0 + $0x174] sm:$0xff]
  %v78 = vld [vmem:[%s0 + $0x17c] sm:$0xf]
  %v79 = vld [vmem:[%s0 + $0x180] sm:$0xff]
  %v80 = vld [vmem:[%s0 + $0x188] sm:$0xf]
  %v81 = vld [vmem:[%s0 + $0x18c] sm:$0xff]
  %v82 = vld [vmem:[%s0 + $0x194] sm:$0xf]
  %v83 = vld [vmem:[%s0 + $0x198] sm:$0xff]
  %v84 = vld [vmem:[%s0 + $0x1a0] sm:$0xf]
  %v85 = vld [vmem:[%s0 + $0x1a4] sm:$0xff]
  %v86 = vld [vmem:[%s0 + $0x1ac] sm:$0xf]
  %v87 = vld [vmem:[%s0 + $0x1b0] sm:$0xff]
  %v88 = vld [vmem:[%s0 + $0x1b8] sm:$0xf]
  %v89 = vld [vmem:[%s0 + $0x1bc] sm:$0xff]
  %v90 = vld [vmem:[%s0 + $0x1c4] sm:$0xf]
  %v91 = vld [vmem:[%s0 + $0x1c8] sm:$0xff]
  %v92 = vld [vmem:[%s0 + $0x1d0] sm:$0xf]
  %v93 = vld [vmem:[%s0 + $0x1d4] sm:$0xff]
  %v94 = vld [vmem:[%s0 + $0x1dc] sm:$0xf]
  %v95 = vld [vmem:[%s0 + $0x1e0] sm:$0xff]
  %v96 = vld [vmem:[%s0 + $0x1e8] sm:$0xf]
  %v97 = vld [vmem:[%s0 + $0x1ec] sm:$0xff]
  %v98 = vld [vmem:[%s0 + $0x1f4] sm:$0xf]
  %v99 = vld [vmem:[%s0 + $0x1f8] sm:$0xff]
  %v100 = vld [vmem:[%s0 + $0x200] sm:$0xf]
  %v101 = vld [vmem:[%s0 + $0x204] sm:$0xff]
  %v102 = vld [vmem:[%s0 + $0x20c] sm:$0xf]
  %v103 = vld [vmem:[%s0 + $0x210] sm:$0xff]
  %v104 = vld [vmem:[%s0 + $0x218] sm:$0xf]
  %v105 = vld [vmem:[%s0 + $0x21c] sm:$0xff]
  %v106 = vld [vmem:[%s0 + $0x224] sm:$0xf]
  %v107 = vld [vmem:[%s0 + $0x228] sm:$0xff]
  %v108 = vld [vmem:[%s0 + $0x230] sm:$0xf]
  %v109 = vld [vmem:[%s0 + $0x234] sm:$0xff]
  %v110 = vld [vmem:[%s0 + $0x23c] sm:$0xf]
  %v111 = vld [vmem:[%s0 + $0x240] sm:$0xff]
  %v112 = vld [vmem:[%s0 + $0x248] sm:$0xf]
  %v113 = vld [vmem:[%s1] sm:$0xf]
  %v114 = vld [vmem:[%s1 + $0x4] sm:$0xf]
  %v115 = vld [vmem:[%s1 + $0x8] sm:$0xf]
  %v116 = vld [vmem:[%s1 + $0xc] sm:$0xf]
  %v117 = vld [vmem:[%s1 + $0x10] sm:$0xf]
  %v118 = vld [vmem:[%s1 + $0x14] sm:$0xf]
  %v119 = vld [vmem:[%s1 + $0x18] sm:$0xf]
  %v120 = vld [vmem:[%s1 + $0x1c] sm:$0xf]
  %v121 = vld [vmem:[%s1 + $0x20] sm:$0xf]
  %v122 = vld [vmem:[%s1 + $0x24] sm:$0xf]
  %v123 = vld [vmem:[%s1 + $0x28] sm:$0xf]
  %v124 = vld [vmem:[%s1 + $0x2c] sm:$0xf]
  %v125 = vld [vmem:[%s1 + $0x30] sm:$0xf]
  %v126 = vld [vmem:[%s1 + $0x34] sm:$0xf]
  %v127 = vld [vmem:[%s1 + $0x38] sm:$0xf]
  %v128 = vld [vmem:[%s1 + $0x3c] sm:$0xf]
  %v129 = vld [vmem:[%s1 + $0x40] sm:$0xf]
  %v130 = vld [vmem:[%s1 + $0x44] sm:$0xf]
  %v131 = vld [vmem:[%s1 + $0x48] sm:$0xf]
  %v132 = vld [vmem:[%s1 + $0x4c] sm:$0xf]
  %v133 = vld [vmem:[%s1 + $0x50] sm:$0xf]
  %v134 = vld [vmem:[%s1 + $0x54] sm:$0xf]
  %v135 = vld [vmem:[%s1 + $0x58] sm:$0xf]
  %v136 = vld [vmem:[%s1 + $0x5c] sm:$0xf]
  %v137 = vld [vmem:[%s1 + $0x60] sm:$0xf]
  %v138 = vld [vmem:[%s1 + $0x64] sm:$0xf]
  %v139 = vld [vmem:[%s1 + $0x68] sm:$0xf]
  %v140 = vld [vmem:[%s1 + $0x6c] sm:$0xf]
  %v141 = vld [vmem:[%s1 + $0x70] sm:$0xf]
  %v142 = vld [vmem:[%s1 + $0x74] sm:$0xf]
  %v143 = vld [vmem:[%s1 + $0x78] sm:$0xf]
  %v144 = vld [vmem:[%s1 + $0x7c] sm:$0xf]
  %v145 = vld [vmem:[%s1 + $0x80] sm:$0xf]
  %v146 = vld [vmem:[%s1 + $0x84] sm:$0xf]
  %v147 = vld [vmem:[%s1 + $0x88] sm:$0xf]
  %v148 = vld [vmem:[%s1 + $0x8c] sm:$0xf]
  %v149 = vld [vmem:[%s2] sm:$0x1]
  %v151 = vlaneseq
  %v152 = vshrl.u32 %v151, 7
  %v153 = vsub.s32 0, %v152
  %v154 = vrot.slane %v149, %v153
  %v254 = vunpack.c.l.b16 %v15
  %v255 = vunpack.c.h.b16 %v15
  %v256 = vunpack.c.l.b16 %v16
  %v257 = vunpack.c.l.b16 %v17
  %v258 = vunpack.c.h.b16 %v17
  %v259 = vunpack.c.l.b16 %v18
  %v260 = vunpack.c.l.b16 %v19
  %v261 = vunpack.c.h.b16 %v19
  %v262 = vunpack.c.l.b16 %v20
  %v263 = vunpack.c.l.b16 %v21
  %v264 = vunpack.c.h.b16 %v21
  %v265 = vunpack.c.l.b16 %v22
  %v266 = vunpack.c.l.b16 %v23
  %v267 = vunpack.c.h.b16 %v23
  %v268 = vunpack.c.l.b16 %v24
  %v269 = vunpack.c.l.b16 %v25
  %v270 = vunpack.c.h.b16 %v25
  %v271 = vunpack.c.l.b16 %v26
  %v272 = vunpack.c.l.b16 %v27
  %v273 = vunpack.c.h.b16 %v27
  %v274 = vunpack.c.l.b16 %v28
  %v275 = vunpack.c.l.b16 %v29
  %v276 = vunpack.c.h.b16 %v29
  %v277 = vunpack.c.l.b16 %v30
  %v278 = vunpack.c.l.b16 %v31
  %v279 = vunpack.c.h.b16 %v31
  %v280 = vunpack.c.l.b16 %v32
  %v281 = vunpack.c.l.b16 %v33
  %v282 = vunpack.c.h.b16 %v33
  %v283 = vunpack.c.l.b16 %v34
  %v284 = vunpack.c.l.b16 %v35
  %v285 = vunpack.c.h.b16 %v35
  %v286 = vunpack.c.l.b16 %v36
  %v287 = vunpack.c.l.b16 %v37
  %v288 = vunpack.c.h.b16 %v37
  %v289 = vunpack.c.l.b16 %v38
  %v290 = vunpack.c.l.b16 %v39
  %v291 = vunpack.c.h.b16 %v39
  %v292 = vunpack.c.l.b16 %v40
  %v293 = vunpack.c.l.b16 %v41
  %v294 = vunpack.c.h.b16 %v41
  %v295 = vunpack.c.l.b16 %v42
  %v296 = vunpack.c.l.b16 %v43
  %v297 = vunpack.c.h.b16 %v43
  %v298 = vunpack.c.l.b16 %v44
  %v299 = vunpack.c.l.b16 %v45
  %v300 = vunpack.c.h.b16 %v45
  %v301 = vunpack.c.l.b16 %v46
  %v302 = vunpack.c.l.b16 %v47
  %v303 = vunpack.c.h.b16 %v47
  %v304 = vunpack.c.l.b16 %v48
  %v305 = vunpack.c.l.b16 %v49
  %v306 = vunpack.c.h.b16 %v49
  %v307 = vunpack.c.l.b16 %v50
  %v308 = vunpack.c.l.b16 %v51
  %v309 = vunpack.c.h.b16 %v51
  %v310 = vunpack.c.l.b16 %v52
  %v311 = vunpack.c.l.b16 %v53
  %v312 = vunpack.c.h.b16 %v53
  %v313 = vunpack.c.l.b16 %v54
  %v314 = vunpack.c.l.b16 %v55
  %v315 = vunpack.c.h.b16 %v55
  %v316 = vunpack.c.l.b16 %v56
  %v317 = vunpack.c.l.b16 %v57
  %v318 = vunpack.c.h.b16 %v57
  %v319 = vunpack.c.l.b16 %v58
  %v320 = vunpack.c.l.b16 %v59
  %v321 = vunpack.c.h.b16 %v59
  %v322 = vunpack.c.l.b16 %v60
  %v323 = vunpack.c.l.b16 %v61
  %v324 = vunpack.c.h.b16 %v61
  %v325 = vunpack.c.l.b16 %v62
  %v326 = vunpack.c.l.b16 %v63
  %v327 = vunpack.c.h.b16 %v63
  %v328 = vunpack.c.l.b16 %v64
  %v329 = vunpack.c.l.b16 %v65
  %v330 = vunpack.c.h.b16 %v65
  %v331 = vunpack.c.l.b16 %v66
  %v332 = vunpack.c.l.b16 %v67
  %v333 = vunpack.c.h.b16 %v67
  %v334 = vunpack.c.l.b16 %v68
  %v335 = vunpack.c.l.b16 %v69
  %v336 = vunpack.c.h.b16 %v69
  %v337 = vunpack.c.l.b16 %v70
  %v338 = vunpack.c.l.b16 %v71
  %v339 = vunpack.c.h.b16 %v71
  %v340 = vunpack.c.l.b16 %v72
  %v341 = vunpack.c.l.b16 %v73
  %v342 = vunpack.c.h.b16 %v73
  %v343 = vunpack.c.l.b16 %v74
  %v344 = vunpack.c.l.b16 %v75
  %v345 = vunpack.c.h.b16 %v75
  %v346 = vunpack.c.l.b16 %v76
  %v347 = vunpack.c.l.b16 %v77
  %v348 = vunpack.c.h.b16 %v77
  %v349 = vunpack.c.l.b16 %v78
  %v350 = vunpack.c.l.b16 %v79
  %v351 = vunpack.c.h.b16 %v79
  %v352 = vunpack.c.l.b16 %v80
  %v353 = vunpack.c.l.b16 %v81
  %v354 = vunpack.c.h.b16 %v81
  %v355 = vunpack.c.l.b16 %v82
  %v356 = vunpack.c.l.b16 %v83
  %v357 = vunpack.c.h.b16 %v83
  %v358 = vunpack.c.l.b16 %v84
  %v359 = vunpack.c.l.b16 %v85
  %v360 = vunpack.c.h.b16 %v85
  %v361 = vunpack.c.l.b16 %v86
  %v362 = vunpack.c.l.b16 %v87
  %v363 = vunpack.c.h.b16 %v87
  %v364 = vunpack.c.l.b16 %v88
  %v365 = vunpack.c.l.b16 %v89
  %v366 = vunpack.c.h.b16 %v89
  %v367 = vunpack.c.l.b16 %v90
  %v368 = vunpack.c.l.b16 %v91
  %v369 = vunpack.c.h.b16 %v91
  %v370 = vunpack.c.l.b16 %v92
  %v371 = vunpack.c.l.b16 %v93
  %v372 = vunpack.c.h.b16 %v93
  %v373 = vunpack.c.l.b16 %v94
  %v374 = vunpack.c.l.b16 %v95
  %v375 = vunpack.c.h.b16 %v95
  %v376 = vunpack.c.l.b16 %v96
  %v377 = vunpack.c.l.b16 %v97
  %v378 = vunpack.c.h.b16 %v97
  %v379 = vunpack.c.l.b16 %v98
  %v380 = vunpack.c.l.b16 %v99
  %v381 = vunpack.c.h.b16 %v99
  %v382 = vunpack.c.l.b16 %v100
  %v383 = vunpack.c.l.b16 %v101
  %v384 = vunpack.c.h.b16 %v101
  %v385 = vunpack.c.l.b16 %v102
  %v386 = vunpack.c.l.b16 %v103
  %v387 = vunpack.c.h.b16 %v103
  %v388 = vunpack.c.l.b16 %v104
  %v389 = vunpack.c.l.b16 %v105
  %v390 = vunpack.c.h.b16 %v105
  %v391 = vunpack.c.l.b16 %v106
  %v392 = vunpack.c.l.b16 %v107
  %v393 = vunpack.c.h.b16 %v107
  %v394 = vunpack.c.l.b16 %v108
  %v395 = vunpack.c.l.b16 %v109
  %v396 = vunpack.c.h.b16 %v109
  %v397 = vunpack.c.l.b16 %v110
  %v398 = vunpack.c.l.b16 %v111
  %v399 = vunpack.c.h.b16 %v111
  %v400 = vunpack.c.l.b16 %v112
  %v401 = vpack.c.b16 %v257, %v254
  %v402 = vpack.c.b16 %v258, %v255
  %v403 = vpack.c.b16 %v259, %v256
  %v404 = vpack.c.b16 %v263, %v260
  %v405 = vpack.c.b16 %v264, %v261
  %v406 = vpack.c.b16 %v265, %v262
  %v407 = vpack.c.b16 %v269, %v266
  %v408 = vpack.c.b16 %v270, %v267
  %v409 = vpack.c.b16 %v271, %v268
  %v410 = vpack.c.b16 %v275, %v272
  %v411 = vpack.c.b16 %v276, %v273
  %v412 = vpack.c.b16 %v277, %v274
  %v413 = vpack.c.b16 %v281, %v278
  %v414 = vpack.c.b16 %v282, %v279
  %v415 = vpack.c.b16 %v283, %v280
  %v416 = vpack.c.b16 %v287, %v284
  %v417 = vpack.c.b16 %v288, %v285
  %v418 = vpack.c.b16 %v289, %v286
  %v419 = vpack.c.b16 %v293, %v290
  %v420 = vpack.c.b16 %v294, %v291
  %v421 = vpack.c.b16 %v295, %v292
  %v422 = vpack.c.b16 %v299, %v296
  %v423 = vpack.c.b16 %v300, %v297
  %v424 = vpack.c.b16 %v301, %v298
  %v425 = vpack.c.b16 %v305, %v302
  %v426 = vpack.c.b16 %v306, %v303
  %v427 = vpack.c.b16 %v307, %v304
  %v428 = vpack.c.b16 %v311, %v308
  %v429 = vpack.c.b16 %v312, %v309
  %v430 = vpack.c.b16 %v313, %v310
  %v431 = vpack.c.b16 %v317, %v314
  %v432 = vpack.c.b16 %v318, %v315
  %v433 = vpack.c.b16 %v319, %v316
  %v434 = vpack.c.b16 %v323, %v320
  %v435 = vpack.c.b16 %v324, %v321
  %v436 = vpack.c.b16 %v325, %v322
  %v437 = vpack.c.b16 %v329, %v326
  %v438 = vpack.c.b16 %v330, %v327
  %v439 = vpack.c.b16 %v331, %v328
  %v440 = vpack.c.b16 %v335, %v332
  %v441 = vpack.c.b16 %v336, %v333
  %v442 = vpack.c.b16 %v337, %v334
  %v443 = vpack.c.b16 %v341, %v338
  %v444 = vpack.c.b16 %v342, %v339
  %v445 = vpack.c.b16 %v343, %v340
  %v446 = vpack.c.b16 %v347, %v344
  %v447 = vpack.c.b16 %v348, %v345
  %v448 = vpack.c.b16 %v349, %v346
  %v449 = vpack.c.b16 %v353, %v350
  %v450 = vpack.c.b16 %v354, %v351
  %v451 = vpack.c.b16 %v355, %v352
  %v452 = vpack.c.b16 %v359, %v356
  %v453 = vpack.c.b16 %v360, %v357
  %v454 = vpack.c.b16 %v361, %v358
  %v455 = vpack.c.b16 %v365, %v362
  %v456 = vpack.c.b16 %v366, %v363
  %v457 = vpack.c.b16 %v367, %v364
  %v458 = vpack.c.b16 %v371, %v368
  %v459 = vpack.c.b16 %v372, %v369
  %v460 = vpack.c.b16 %v373, %v370
  %v461 = vpack.c.b16 %v377, %v374
  %v462 = vpack.c.b16 %v378, %v375
  %v463 = vpack.c.b16 %v379, %v376
  %v464 = vpack.c.b16 %v383, %v380
  %v465 = vpack.c.b16 %v384, %v381
  %v466 = vpack.c.b16 %v385, %v382
  %v467 = vpack.c.b16 %v389, %v386
  %v468 = vpack.c.b16 %v390, %v387
  %v469 = vpack.c.b16 %v391, %v388
  %v470 = vpack.c.b16 %v395, %v392
  %v471 = vpack.c.b16 %v396, %v393
  %v472 = vpack.c.b16 %v397, %v394
  %v473 = vpack.c.b16 %v398, %v398
  %v474 = vpack.c.b16 %v399, %v399
  %v475 = vpack.c.b16 %v400, %v400
  %v562 = vunpack.c.l.b16 %v113
  %v563 = vunpack.c.l.b16 %v114
  %v564 = vunpack.c.l.b16 %v115
  %v565 = vunpack.c.l.b16 %v116
  %v566 = vunpack.c.l.b16 %v117
  %v567 = vunpack.c.l.b16 %v118
  %v568 = vunpack.c.l.b16 %v119
  %v569 = vunpack.c.l.b16 %v120
  %v570 = vunpack.c.l.b16 %v121
  %v571 = vunpack.c.l.b16 %v122
  %v572 = vunpack.c.l.b16 %v123
  %v573 = vunpack.c.l.b16 %v124
  %v574 = vunpack.c.l.b16 %v125
  %v575 = vunpack.c.l.b16 %v126
  %v576 = vunpack.c.l.b16 %v127
  %v577 = vunpack.c.l.b16 %v128
  %v578 = vunpack.c.l.b16 %v129
  %v579 = vunpack.c.l.b16 %v130
  %v580 = vunpack.c.l.b16 %v131
  %v581 = vunpack.c.l.b16 %v132
  %v582 = vunpack.c.l.b16 %v133
  %v583 = vunpack.c.l.b16 %v134
  %v584 = vunpack.c.l.b16 %v135
  %v585 = vunpack.c.l.b16 %v136
  %v586 = vunpack.c.l.b16 %v137
  %v587 = vunpack.c.l.b16 %v138
  %v588 = vunpack.c.l.b16 %v139
  %v589 = vunpack.c.l.b16 %v140
  %v590 = vunpack.c.l.b16 %v141
  %v591 = vunpack.c.l.b16 %v142
  %v592 = vunpack.c.l.b16 %v143
  %v593 = vunpack.c.l.b16 %v144
  %v594 = vunpack.c.l.b16 %v145
  %v595 = vunpack.c.l.b16 %v146
  %v596 = vunpack.c.l.b16 %v147
  %v597 = vunpack.c.l.b16 %v148
  %v598 = vpack.c.b16 %v563, %v562
  %v599 = vpack.c.b16 %v565, %v564
  %v600 = vpack.c.b16 %v567, %v566
  %v601 = vpack.c.b16 %v569, %v568
  %v602 = vpack.c.b16 %v571, %v570
  %v603 = vpack.c.b16 %v573, %v572
  %v604 = vpack.c.b16 %v575, %v574
  %v605 = vpack.c.b16 %v577, %v576
  %v606 = vpack.c.b16 %v579, %v578
  %v607 = vpack.c.b16 %v581, %v580
  %v608 = vpack.c.b16 %v583, %v582
  %v609 = vpack.c.b16 %v585, %v584
  %v610 = vpack.c.b16 %v587, %v586
  %v611 = vpack.c.b16 %v589, %v588
  %v612 = vpack.c.b16 %v591, %v590
  %v613 = vpack.c.b16 %v593, %v592
  %v614 = vpack.c.b16 %v595, %v594
  %v615 = vpack.c.b16 %v597, %v596
  %vm634 = vcmask 261120
  %v636 = vsel %vm634, %v403, 0
  %v639 = vsel %vm634, %v406, 0
  %v642 = vsel %vm634, %v409, 0
  %v645 = vsel %vm634, %v412, 0
  %v648 = vsel %vm634, %v415, 0
  %v651 = vsel %vm634, %v418, 0
  %v654 = vsel %vm634, %v421, 0
  %v657 = vsel %vm634, %v424, 0
  %v660 = vsel %vm634, %v427, 0
  %v663 = vsel %vm634, %v430, 0
  %v666 = vsel %vm634, %v433, 0
  %v669 = vsel %vm634, %v436, 0
  %v672 = vsel %vm634, %v439, 0
  %v675 = vsel %vm634, %v442, 0
  %v678 = vsel %vm634, %v445, 0
  %v681 = vsel %vm634, %v448, 0
  %v684 = vsel %vm634, %v451, 0
  %v687 = vsel %vm634, %v454, 0
  %v690 = vsel %vm634, %v457, 0
  %v693 = vsel %vm634, %v460, 0
  %v696 = vsel %vm634, %v463, 0
  %v699 = vsel %vm634, %v466, 0
  %v702 = vsel %vm634, %v469, 0
  %v705 = vsel %vm634, %v472, 0
  %v708 = vsel %vm634, %v475, 0
  %710 = vmatprep.subr.bf16.mxu0 0
  %711 = vmatpush1.bf16.msra.mxu0 %v605
  %712 = vmatprep.subr.bf16.mxu0 0
  %713 = vmatpush1.bf16.msra.mxu0 %v604
  %714 = vmatprep.subr.bf16.mxu0 0
  %715 = vmatpush1.bf16.msra.mxu0 %v603
  %716 = vmatprep.subr.bf16.mxu0 0
  %717 = vmatpush1.bf16.msra.mxu0 %v602
  %718 = vmatprep.subr.bf16.mxu0 0
  %719 = vmatpush1.bf16.msra.mxu0 %v601
  %720 = vmatprep.subr.bf16.mxu0 0
  %721 = vmatpush1.bf16.msra.mxu0 %v600
  %722 = vmatprep.subr.bf16.mxu0 0
  %723 = vmatpush1.bf16.msra.mxu0 %v599
  %724 = vmatprep.subr.bf16.mxu0 0
  %725 = vmatpush1.bf16.msra.mxu0 %v598
  %726 = vmatprep.subr.bf16.mxu0 0
  %727 = vmatpush2.bf16.msra.mxu0 %v613
  %728 = vmatprep.subr.bf16.mxu0 0
  %729 = vmatpush2.bf16.msra.mxu0 %v612
  %730 = vmatprep.subr.bf16.mxu0 0
  %731 = vmatpush2.bf16.msra.mxu0 %v611
  %732 = vmatprep.subr.bf16.mxu0 0
  %733 = vmatpush2.bf16.msra.mxu0 %v610
  %734 = vmatprep.subr.bf16.mxu0 0
  %735 = vmatpush2.bf16.msra.mxu0 %v609
  %736 = vmatprep.subr.bf16.mxu0 0
  %737 = vmatpush2.bf16.msra.mxu0 %v608
  %738 = vmatprep.subr.bf16.mxu0 0
  %739 = vmatpush2.bf16.msra.mxu0 %v607
  %740 = vmatprep.subr.bf16.mxu0 0
  %741 = vmatpush2.bf16.msra.mxu0 %v606
  %742 = vmatprep.mubr.bf16.mxu0 %v402
  %743 = vmatmul.mubr.bf16.gmra.mxu0 %v401
  %v744 = vpop.f32.mrf.mxu0
  %v745 = vadd.f32 %v154, %v744
  %v746 = vpop.f32.mrf.mxu0
  %v747 = vpop.f32.mrf.mxu0
  %v748 = vadd.f32 %v154, %v747
  %v749 = vpop.f32.mrf.mxu0
  %750 = vmatprep.mubr.bf16.mxu0 %v405
  %751 = vmatmul.mubr.bf16.gmra.mxu0 %v404
  %v752 = vpop.f32.mrf.mxu0
  %v753 = vadd.f32 %v154, %v752
  %v754 = vpop.f32.mrf.mxu0
  %v755 = vpop.f32.mrf.mxu0
  %v756 = vadd.f32 %v154, %v755
  %v757 = vpop.f32.mrf.mxu0
  %758 = vmatprep.mubr.bf16.mxu0 %v408
  %759 = vmatmul.mubr.bf16.gmra.mxu0 %v407
  %v760 = vpop.f32.mrf.mxu0
  %v761 = vadd.f32 %v154, %v760
  %v762 = vpop.f32.mrf.mxu0
  %v763 = vpop.f32.mrf.mxu0
  %v764 = vadd.f32 %v154, %v763
  %v765 = vpop.f32.mrf.mxu0
  %766 = vmatprep.mubr.bf16.mxu0 %v411
  %767 = vmatmul.mubr.bf16.gmra.mxu0 %v410
  %v768 = vpop.f32.mrf.mxu0
  %v769 = vadd.f32 %v154, %v768
  %v770 = vpop.f32.mrf.mxu0
  %v771 = vpop.f32.mrf.mxu0
  %v772 = vadd.f32 %v154, %v771
  %v773 = vpop.f32.mrf.mxu0
  %774 = vmatprep.mubr.bf16.mxu0 %v414
  %775 = vmatmul.mubr.bf16.gmra.mxu0 %v413
  %v776 = vpop.f32.mrf.mxu0
  %v777 = vadd.f32 %v154, %v776
  %v778 = vpop.f32.mrf.mxu0
  %v779 = vpop.f32.mrf.mxu0
  %v780 = vadd.f32 %v154, %v779
  %v781 = vpop.f32.mrf.mxu0
  %782 = vmatprep.mubr.bf16.mxu0 %v417
  %783 = vmatmul.mubr.bf16.gmra.mxu0 %v416
  %v784 = vpop.f32.mrf.mxu0
  %v785 = vadd.f32 %v154, %v784
  %v786 = vpop.f32.mrf.mxu0
  %v787 = vpop.f32.mrf.mxu0
  %v788 = vadd.f32 %v154, %v787
  %v789 = vpop.f32.mrf.mxu0
  %790 = vmatprep.mubr.bf16.mxu0 %v420
  %791 = vmatmul.mubr.bf16.gmra.mxu0 %v419
  %v792 = vpop.f32.mrf.mxu0
  %v793 = vadd.f32 %v154, %v792
  %v794 = vpop.f32.mrf.mxu0
  %v795 = vpop.f32.mrf.mxu0
  %v796 = vadd.f32 %v154, %v795
  %v797 = vpop.f32.mrf.mxu0
  %798 = vmatprep.mubr.bf16.mxu0 %v423
  %799 = vmatmul.mubr.bf16.gmra.mxu0 %v422
  %v800 = vpop.f32.mrf.mxu0
  %v801 = vadd.f32 %v154, %v800
  %v802 = vpop.f32.mrf.mxu0
  %v803 = vpop.f32.mrf.mxu0
  %v804 = vadd.f32 %v154, %v803
  %v805 = vpop.f32.mrf.mxu0
  %806 = vmatprep.mubr.bf16.mxu0 %v426
  %807 = vmatmul.mubr.bf16.gmra.mxu0 %v425
  %v808 = vpop.f32.mrf.mxu0
  %v809 = vadd.f32 %v154, %v808
  %v810 = vpop.f32.mrf.mxu0
  %v811 = vpop.f32.mrf.mxu0
  %v812 = vadd.f32 %v154, %v811
  %v813 = vpop.f32.mrf.mxu0
  %814 = vmatprep.mubr.bf16.mxu0 %v429
  %815 = vmatmul.mubr.bf16.gmra.mxu0 %v428
  %v816 = vpop.f32.mrf.mxu0
  %v817 = vadd.f32 %v154, %v816
  %v818 = vpop.f32.mrf.mxu0
  %v819 = vpop.f32.mrf.mxu0
  %v820 = vadd.f32 %v154, %v819
  %v821 = vpop.f32.mrf.mxu0
  %822 = vmatprep.mubr.bf16.mxu0 %v432
  %823 = vmatmul.mubr.bf16.gmra.mxu0 %v431
  %v824 = vpop.f32.mrf.mxu0
  %v825 = vadd.f32 %v154, %v824
  %v826 = vpop.f32.mrf.mxu0
  %v827 = vpop.f32.mrf.mxu0
  %v828 = vadd.f32 %v154, %v827
  %v829 = vpop.f32.mrf.mxu0
  %830 = vmatprep.mubr.bf16.mxu0 %v435
  %831 = vmatmul.mubr.bf16.gmra.mxu0 %v434
  %v832 = vpop.f32.mrf.mxu0
  %v833 = vadd.f32 %v154, %v832
  %v834 = vpop.f32.mrf.mxu0
  %v835 = vpop.f32.mrf.mxu0
  %v836 = vadd.f32 %v154, %v835
  %v837 = vpop.f32.mrf.mxu0
  %838 = vmatprep.mubr.bf16.mxu0 %v438
  %839 = vmatmul.mubr.bf16.gmra.mxu0 %v437
  %v840 = vpop.f32.mrf.mxu0
  %v841 = vadd.f32 %v154, %v840
  %v842 = vpop.f32.mrf.mxu0
  %v843 = vpop.f32.mrf.mxu0
  %v844 = vadd.f32 %v154, %v843
  %v845 = vpop.f32.mrf.mxu0
  %846 = vmatprep.mubr.bf16.mxu0 %v441
  %847 = vmatmul.mubr.bf16.gmra.mxu0 %v440
  %v848 = vpop.f32.mrf.mxu0
  %v849 = vadd.f32 %v154, %v848
  %v850 = vpop.f32.mrf.mxu0
  %v851 = vpop.f32.mrf.mxu0
  %v852 = vadd.f32 %v154, %v851
  %v853 = vpop.f32.mrf.mxu0
  %854 = vmatprep.mubr.bf16.mxu0 %v444
  %855 = vmatmul.mubr.bf16.gmra.mxu0 %v443
  %v856 = vpop.f32.mrf.mxu0
  %v857 = vadd.f32 %v154, %v856
  %v858 = vpop.f32.mrf.mxu0
  %v859 = vpop.f32.mrf.mxu0
  %v860 = vadd.f32 %v154, %v859
  %v861 = vpop.f32.mrf.mxu0
  %862 = vmatprep.mubr.bf16.mxu0 %v447
  %863 = vmatmul.mubr.bf16.gmra.mxu0 %v446
  %v864 = vpop.f32.mrf.mxu0
  %v865 = vadd.f32 %v154, %v864
  %v866 = vpop.f32.mrf.mxu0
  %v867 = vpop.f32.mrf.mxu0
  %v868 = vadd.f32 %v154, %v867
  %v869 = vpop.f32.mrf.mxu0
  %870 = vmatprep.mubr.bf16.mxu0 %v450
  %871 = vmatmul.mubr.bf16.gmra.mxu0 %v449
  %v872 = vpop.f32.mrf.mxu0
  %v873 = vadd.f32 %v154, %v872
  %v874 = vpop.f32.mrf.mxu0
  %v875 = vpop.f32.mrf.mxu0
  %v876 = vadd.f32 %v154, %v875
  %v877 = vpop.f32.mrf.mxu0
  %878 = vmatprep.mubr.bf16.mxu0 %v453
  %879 = vmatmul.mubr.bf16.gmra.mxu0 %v452
  %v880 = vpop.f32.mrf.mxu0
  %v881 = vadd.f32 %v154, %v880
  %v882 = vpop.f32.mrf.mxu0
  %v883 = vpop.f32.mrf.mxu0
  %v884 = vadd.f32 %v154, %v883
  %v885 = vpop.f32.mrf.mxu0
  %886 = vmatprep.mubr.bf16.mxu0 %v456
  %887 = vmatmul.mubr.bf16.gmra.mxu0 %v455
  %v888 = vpop.f32.mrf.mxu0
  %v889 = vadd.f32 %v154, %v888
  %v890 = vpop.f32.mrf.mxu0
  %v891 = vpop.f32.mrf.mxu0
  %v892 = vadd.f32 %v154, %v891
  %v893 = vpop.f32.mrf.mxu0
  %894 = vmatprep.mubr.bf16.mxu0 %v459
  %895 = vmatmul.mubr.bf16.gmra.mxu0 %v458
  %v896 = vpop.f32.mrf.mxu0
  %v897 = vadd.f32 %v154, %v896
  %v898 = vpop.f32.mrf.mxu0
  %v899 = vpop.f32.mrf.mxu0
  %v900 = vadd.f32 %v154, %v899
  %v901 = vpop.f32.mrf.mxu0
  %902 = vmatprep.mubr.bf16.mxu0 %v462
  %903 = vmatmul.mubr.bf16.gmra.mxu0 %v461
  %v904 = vpop.f32.mrf.mxu0
  %v905 = vadd.f32 %v154, %v904
  %v906 = vpop.f32.mrf.mxu0
  %v907 = vpop.f32.mrf.mxu0
  %v908 = vadd.f32 %v154, %v907
  %v909 = vpop.f32.mrf.mxu0
  %910 = vmatprep.mubr.bf16.mxu0 %v465
  %911 = vmatmul.mubr.bf16.gmra.mxu0 %v464
  %v912 = vpop.f32.mrf.mxu0
  %v913 = vadd.f32 %v154, %v912
  %v914 = vpop.f32.mrf.mxu0
  %v915 = vpop.f32.mrf.mxu0
  %v916 = vadd.f32 %v154, %v915
  %v917 = vpop.f32.mrf.mxu0
  %918 = vmatprep.mubr.bf16.mxu0 %v468
  %919 = vmatmul.mubr.bf16.gmra.mxu0 %v467
  %v920 = vpop.f32.mrf.mxu0
  %v921 = vadd.f32 %v154, %v920
  %v922 = vpop.f32.mrf.mxu0
  %v923 = vpop.f32.mrf.mxu0
  %v924 = vadd.f32 %v154, %v923
  %v925 = vpop.f32.mrf.mxu0
  %926 = vmatprep.mubr.bf16.mxu0 %v471
  %927 = vmatmul.mubr.bf16.gmra.mxu0 %v470
  %v928 = vpop.f32.mrf.mxu0
  %v929 = vadd.f32 %v154, %v928
  %v930 = vpop.f32.mrf.mxu0
  %v931 = vpop.f32.mrf.mxu0
  %v932 = vadd.f32 %v154, %v931
  %v933 = vpop.f32.mrf.mxu0
  %934 = vmatprep.mubr.bf16.mxu0 %v474
  %935 = vmatmul.mubr.bf16.gmra.mxu0 %v473
  %v936 = vpop.f32.mrf.mxu0
  %v937 = vadd.f32 %v154, %v936
  %v938 = vpop.f32.mrf.mxu0
  %v939 = vpop.f32.mrf.mxu0
  %v940 = vpop.f32.mrf.mxu0
  %941 = vdwg.mxu0
  %942 = vmatprep.subr.bf16.mxu0 0
  %943 = vmatpush1.bf16.msra.mxu0 0
  %944 = vmatprep.subr.bf16.mxu0 0
  %945 = vmatpush1.bf16.msra.mxu0 0
  %946 = vmatprep.subr.bf16.mxu0 0
  %947 = vmatpush1.bf16.msra.mxu0 0
  %948 = vmatprep.subr.bf16.mxu0 0
  %949 = vmatpush1.bf16.msra.mxu0 0
  %950 = vmatprep.subr.bf16.mxu0 0
  %951 = vmatpush1.bf16.msra.mxu0 0
  %952 = vmatprep.subr.bf16.mxu0 0
  %953 = vmatpush1.bf16.msra.mxu0 0
  %954 = vmatprep.subr.bf16.mxu0 0
  %955 = vmatpush1.bf16.msra.mxu0 %v615
  %956 = vmatprep.subr.bf16.mxu0 0
  %957 = vmatpush1.bf16.msra.mxu0 %v614
  %958 = vmatprep.subr.bf16.mxu0 0
  %959 = vmatpush2.bf16.msra.mxu0 0
  %960 = vmatprep.subr.bf16.mxu0 0
  %961 = vmatpush2.bf16.msra.mxu0 0
  %962 = vmatprep.subr.bf16.mxu0 0
  %963 = vmatpush2.bf16.msra.mxu0 0
  %964 = vmatprep.subr.bf16.mxu0 0
  %965 = vmatpush2.bf16.msra.mxu0 0
  %966 = vmatprep.subr.bf16.mxu0 0
  %967 = vmatpush2.bf16.msra.mxu0 0
  %968 = vmatprep.subr.bf16.mxu0 0
  %969 = vmatpush2.bf16.msra.mxu0 0
  %970 = vmatprep.subr.bf16.mxu0 0
  %971 = vmatpush2.bf16.msra.mxu0 0
  %972 = vmatprep.subr.bf16.mxu0 0
  %973 = vmatpush2.bf16.msra.mxu0 0
  %974 = vmatprep.mubr.bf16.mxu0 0
  %975 = vmatmul.mubr.bf16.gmra.mxu0 %v636
  %v976 = vpop.f32.mrf.mxu0
  %v977 = vadd.f32 %v745, %v976
  %v978 = vpop.f32.mrf.mxu0
  %v979 = vpop.f32.mrf.mxu0
  %v980 = vadd.f32 %v748, %v979
  %v981 = vpop.f32.mrf.mxu0
  %982 = vmatprep.mubr.bf16.mxu0 0
  %983 = vmatmul.mubr.bf16.gmra.mxu0 %v639
  %v984 = vpop.f32.mrf.mxu0
  %v985 = vadd.f32 %v753, %v984
  %v986 = vpop.f32.mrf.mxu0
  %v987 = vpop.f32.mrf.mxu0
  %v988 = vadd.f32 %v756, %v987
  %v989 = vpop.f32.mrf.mxu0
  %990 = vmatprep.mubr.bf16.mxu0 0
  %991 = vmatmul.mubr.bf16.gmra.mxu0 %v642
  %v992 = vpop.f32.mrf.mxu0
  %v993 = vadd.f32 %v761, %v992
  %v994 = vpop.f32.mrf.mxu0
  %v995 = vpop.f32.mrf.mxu0
  %v996 = vadd.f32 %v764, %v995
  %v997 = vpop.f32.mrf.mxu0
  %998 = vmatprep.mubr.bf16.mxu0 0
  %999 = vmatmul.mubr.bf16.gmra.mxu0 %v645
  %v1000 = vpop.f32.mrf.mxu0
  %v1001 = vadd.f32 %v769, %v1000
  %v1002 = vpop.f32.mrf.mxu0
  %v1003 = vpop.f32.mrf.mxu0
  %v1004 = vadd.f32 %v772, %v1003
  %v1005 = vpop.f32.mrf.mxu0
  %1006 = vmatprep.mubr.bf16.mxu0 0
  %1007 = vmatmul.mubr.bf16.gmra.mxu0 %v648
  %v1008 = vpop.f32.mrf.mxu0
  %v1009 = vadd.f32 %v777, %v1008
  %v1010 = vpop.f32.mrf.mxu0
  %v1011 = vpop.f32.mrf.mxu0
  %v1012 = vadd.f32 %v780, %v1011
  %v1013 = vpop.f32.mrf.mxu0
  %1014 = vmatprep.mubr.bf16.mxu0 0
  %1015 = vmatmul.mubr.bf16.gmra.mxu0 %v651
  %v1016 = vpop.f32.mrf.mxu0
  %v1017 = vadd.f32 %v785, %v1016
  %v1018 = vpop.f32.mrf.mxu0
  %v1019 = vpop.f32.mrf.mxu0
  %v1020 = vadd.f32 %v788, %v1019
  %v1021 = vpop.f32.mrf.mxu0
  %1022 = vmatprep.mubr.bf16.mxu0 0
  %1023 = vmatmul.mubr.bf16.gmra.mxu0 %v654
  %v1024 = vpop.f32.mrf.mxu0
  %v1025 = vadd.f32 %v793, %v1024
  %v1026 = vpop.f32.mrf.mxu0
  %v1027 = vpop.f32.mrf.mxu0
  %v1028 = vadd.f32 %v796, %v1027
  %v1029 = vpop.f32.mrf.mxu0
  %1030 = vmatprep.mubr.bf16.mxu0 0
  %1031 = vmatmul.mubr.bf16.gmra.mxu0 %v657
  %v1032 = vpop.f32.mrf.mxu0
  %v1033 = vadd.f32 %v801, %v1032
  %v1034 = vpop.f32.mrf.mxu0
  %v1035 = vpop.f32.mrf.mxu0
  %v1036 = vadd.f32 %v804, %v1035
  %v1037 = vpop.f32.mrf.mxu0
  %1038 = vmatprep.mubr.bf16.mxu0 0
  %1039 = vmatmul.mubr.bf16.gmra.mxu0 %v660
  %v1040 = vpop.f32.mrf.mxu0
  %v1041 = vadd.f32 %v809, %v1040
  %v1042 = vpop.f32.mrf.mxu0
  %v1043 = vpop.f32.mrf.mxu0
  %v1044 = vadd.f32 %v812, %v1043
  %v1045 = vpop.f32.mrf.mxu0
  %1046 = vmatprep.mubr.bf16.mxu0 0
  %1047 = vmatmul.mubr.bf16.gmra.mxu0 %v663
  %v1048 = vpop.f32.mrf.mxu0
  %v1049 = vadd.f32 %v817, %v1048
  %v1050 = vpop.f32.mrf.mxu0
  %v1051 = vpop.f32.mrf.mxu0
  %v1052 = vadd.f32 %v820, %v1051
  %v1053 = vpop.f32.mrf.mxu0
  %1054 = vmatprep.mubr.bf16.mxu0 0
  %1055 = vmatmul.mubr.bf16.gmra.mxu0 %v666
  %v1056 = vpop.f32.mrf.mxu0
  %v1057 = vadd.f32 %v825, %v1056
  %v1058 = vpop.f32.mrf.mxu0
  %v1059 = vpop.f32.mrf.mxu0
  %v1060 = vadd.f32 %v828, %v1059
  %v1061 = vpop.f32.mrf.mxu0
  %1062 = vmatprep.mubr.bf16.mxu0 0
  %1063 = vmatmul.mubr.bf16.gmra.mxu0 %v669
  %v1064 = vpop.f32.mrf.mxu0
  %v1065 = vadd.f32 %v833, %v1064
  %v1066 = vpop.f32.mrf.mxu0
  %v1067 = vpop.f32.mrf.mxu0
  %v1068 = vadd.f32 %v836, %v1067
  %v1069 = vpop.f32.mrf.mxu0
  %1070 = vmatprep.mubr.bf16.mxu0 0
  %1071 = vmatmul.mubr.bf16.gmra.mxu0 %v672
  %v1072 = vpop.f32.mrf.mxu0
  %v1073 = vadd.f32 %v841, %v1072
  %v1074 = vpop.f32.mrf.mxu0
  %v1075 = vpop.f32.mrf.mxu0
  %v1076 = vadd.f32 %v844, %v1075
  %v1077 = vpop.f32.mrf.mxu0
  %1078 = vmatprep.mubr.bf16.mxu0 0
  %1079 = vmatmul.mubr.bf16.gmra.mxu0 %v675
  %v1080 = vpop.f32.mrf.mxu0
  %v1081 = vadd.f32 %v849, %v1080
  %v1082 = vpop.f32.mrf.mxu0
  %v1083 = vpop.f32.mrf.mxu0
  %v1084 = vadd.f32 %v852, %v1083
  %v1085 = vpop.f32.mrf.mxu0
  %1086 = vmatprep.mubr.bf16.mxu0 0
  %1087 = vmatmul.mubr.bf16.gmra.mxu0 %v678
  %v1088 = vpop.f32.mrf.mxu0
  %v1089 = vadd.f32 %v857, %v1088
  %v1090 = vpop.f32.mrf.mxu0
  %v1091 = vpop.f32.mrf.mxu0
  %v1092 = vadd.f32 %v860, %v1091
  %v1093 = vpop.f32.mrf.mxu0
  %1094 = vmatprep.mubr.bf16.mxu0 0
  %1095 = vmatmul.mubr.bf16.gmra.mxu0 %v681
  %v1096 = vpop.f32.mrf.mxu0
  %v1097 = vadd.f32 %v865, %v1096
  %v1098 = vpop.f32.mrf.mxu0
  %v1099 = vpop.f32.mrf.mxu0
  %v1100 = vadd.f32 %v868, %v1099
  %v1101 = vpop.f32.mrf.mxu0
  %1102 = vmatprep.mubr.bf16.mxu0 0
  %1103 = vmatmul.mubr.bf16.gmra.mxu0 %v684
  %v1104 = vpop.f32.mrf.mxu0
  %v1105 = vadd.f32 %v873, %v1104
  %v1106 = vpop.f32.mrf.mxu0
  %v1107 = vpop.f32.mrf.mxu0
  %v1108 = vadd.f32 %v876, %v1107
  %v1109 = vpop.f32.mrf.mxu0
  %1110 = vmatprep.mubr.bf16.mxu0 0
  %1111 = vmatmul.mubr.bf16.gmra.mxu0 %v687
  %v1112 = vpop.f32.mrf.mxu0
  %v1113 = vadd.f32 %v881, %v1112
  %v1114 = vpop.f32.mrf.mxu0
  %v1115 = vpop.f32.mrf.mxu0
  %v1116 = vadd.f32 %v884, %v1115
  %v1117 = vpop.f32.mrf.mxu0
  %1118 = vmatprep.mubr.bf16.mxu0 0
  %1119 = vmatmul.mubr.bf16.gmra.mxu0 %v690
  %v1120 = vpop.f32.mrf.mxu0
  %v1121 = vadd.f32 %v889, %v1120
  %v1122 = vpop.f32.mrf.mxu0
  %v1123 = vpop.f32.mrf.mxu0
  %v1124 = vadd.f32 %v892, %v1123
  %v1125 = vpop.f32.mrf.mxu0
  %1126 = vmatprep.mubr.bf16.mxu0 0
  %1127 = vmatmul.mubr.bf16.gmra.mxu0 %v693
  %v1128 = vpop.f32.mrf.mxu0
  %v1129 = vadd.f32 %v897, %v1128
  %v1130 = vpop.f32.mrf.mxu0
  %v1131 = vpop.f32.mrf.mxu0
  %v1132 = vadd.f32 %v900, %v1131
  %v1133 = vpop.f32.mrf.mxu0
  %1134 = vmatprep.mubr.bf16.mxu0 0
  %1135 = vmatmul.mubr.bf16.gmra.mxu0 %v696
  %v1136 = vpop.f32.mrf.mxu0
  %v1137 = vadd.f32 %v905, %v1136
  %v1138 = vpop.f32.mrf.mxu0
  %v1139 = vpop.f32.mrf.mxu0
  %v1140 = vadd.f32 %v908, %v1139
  %v1141 = vpop.f32.mrf.mxu0
  %1142 = vmatprep.mubr.bf16.mxu0 0
  %1143 = vmatmul.mubr.bf16.gmra.mxu0 %v699
  %v1144 = vpop.f32.mrf.mxu0
  %v1145 = vadd.f32 %v913, %v1144
  %v1146 = vpop.f32.mrf.mxu0
  %v1147 = vpop.f32.mrf.mxu0
  %v1148 = vadd.f32 %v916, %v1147
  %v1149 = vpop.f32.mrf.mxu0
  %1150 = vmatprep.mubr.bf16.mxu0 0
  %1151 = vmatmul.mubr.bf16.gmra.mxu0 %v702
  %v1152 = vpop.f32.mrf.mxu0
  %v1153 = vadd.f32 %v921, %v1152
  %v1154 = vpop.f32.mrf.mxu0
  %v1155 = vpop.f32.mrf.mxu0
  %v1156 = vadd.f32 %v924, %v1155
  %v1157 = vpop.f32.mrf.mxu0
  %1158 = vmatprep.mubr.bf16.mxu0 0
  %1159 = vmatmul.mubr.bf16.gmra.mxu0 %v705
  %v1160 = vpop.f32.mrf.mxu0
  %v1161 = vadd.f32 %v929, %v1160
  %v1162 = vpop.f32.mrf.mxu0
  %v1163 = vpop.f32.mrf.mxu0
  %v1164 = vadd.f32 %v932, %v1163
  %v1165 = vpop.f32.mrf.mxu0
  %1166 = vmatprep.mubr.bf16.mxu0 0
  %1167 = vmatmul.mubr.bf16.gmra.mxu0 %v708
  %v1168 = vpop.f32.mrf.mxu0
  %v1169 = vadd.f32 %v937, %v1168
  %v1170 = vpop.f32.mrf.mxu0
  %v1171 = vpop.f32.mrf.mxu0
  %v1172 = vpop.f32.mrf.mxu0
  %1173 = vdwg.mxu0
  %v1174 = vmax.f32 %v977, 0.0
  %v1175 = vmax.f32 %v980, 0.0
  %v1176 = vmax.f32 %v985, 0.0
  %v1177 = vmax.f32 %v988, 0.0
  %v1178 = vmax.f32 %v993, 0.0
  %v1179 = vmax.f32 %v996, 0.0
  %v1180 = vmax.f32 %v1001, 0.0
  %v1181 = vmax.f32 %v1004, 0.0
  %v1182 = vmax.f32 %v1009, 0.0
  %v1183 = vmax.f32 %v1012, 0.0
  %v1184 = vmax.f32 %v1017, 0.0
  %v1185 = vmax.f32 %v1020, 0.0
  %v1186 = vmax.f32 %v1025, 0.0
  %v1187 = vmax.f32 %v1028, 0.0
  %v1188 = vmax.f32 %v1033, 0.0
  %v1189 = vmax.f32 %v1036, 0.0
  %v1190 = vmax.f32 %v1041, 0.0
  %v1191 = vmax.f32 %v1044, 0.0
  %v1192 = vmax.f32 %v1049, 0.0
  %v1193 = vmax.f32 %v1052, 0.0
  %v1194 = vmax.f32 %v1057, 0.0
  %v1195 = vmax.f32 %v1060, 0.0
  %v1196 = vmax.f32 %v1065, 0.0
  %v1197 = vmax.f32 %v1068, 0.0
  %v1198 = vmax.f32 %v1073, 0.0
  %v1199 = vmax.f32 %v1076, 0.0
  %v1200 = vmax.f32 %v1081, 0.0
  %v1201 = vmax.f32 %v1084, 0.0
  %v1202 = vmax.f32 %v1089, 0.0
  %v1203 = vmax.f32 %v1092, 0.0
  %v1204 = vmax.f32 %v1097, 0.0
  %v1205 = vmax.f32 %v1100, 0.0
  %v1206 = vmax.f32 %v1105, 0.0
  %v1207 = vmax.f32 %v1108, 0.0
  %v1208 = vmax.f32 %v1113, 0.0
  %v1209 = vmax.f32 %v1116, 0.0
  %v1210 = vmax.f32 %v1121, 0.0
  %v1211 = vmax.f32 %v1124, 0.0
  %v1212 = vmax.f32 %v1129, 0.0
  %v1213 = vmax.f32 %v1132, 0.0
  %v1214 = vmax.f32 %v1137, 0.0
  %v1215 = vmax.f32 %v1140, 0.0
  %v1216 = vmax.f32 %v1145, 0.0
  %v1217 = vmax.f32 %v1148, 0.0
  %v1218 = vmax.f32 %v1153, 0.0
  %v1219 = vmax.f32 %v1156, 0.0
  %v1220 = vmax.f32 %v1161, 0.0
  %v1221 = vmax.f32 %v1164, 0.0
  %v1222 = vmax.f32 %v1169, 0.0
  %v1223 = vpack.c.bf16 %v1175, %v1174
  %v1224 = vpack.c.bf16 %v1177, %v1176
  %v1225 = vpack.c.bf16 %v1179, %v1178
  %v1226 = vpack.c.bf16 %v1181, %v1180
  %v1227 = vpack.c.bf16 %v1183, %v1182
  %v1228 = vpack.c.bf16 %v1185, %v1184
  %v1229 = vpack.c.bf16 %v1187, %v1186
  %v1230 = vpack.c.bf16 %v1189, %v1188
  %v1231 = vpack.c.bf16 %v1191, %v1190
  %v1232 = vpack.c.bf16 %v1193, %v1192
  %v1233 = vpack.c.bf16 %v1195, %v1194
  %v1234 = vpack.c.bf16 %v1197, %v1196
  %v1235 = vpack.c.bf16 %v1199, %v1198
  %v1236 = vpack.c.bf16 %v1201, %v1200
  %v1237 = vpack.c.bf16 %v1203, %v1202
  %v1238 = vpack.c.bf16 %v1205, %v1204
  %v1239 = vpack.c.bf16 %v1207, %v1206
  %v1240 = vpack.c.bf16 %v1209, %v1208
  %v1241 = vpack.c.bf16 %v1211, %v1210
  %v1242 = vpack.c.bf16 %v1213, %v1212
  %v1243 = vpack.c.bf16 %v1215, %v1214
  %v1244 = vpack.c.bf16 %v1217, %v1216
  %v1245 = vpack.c.bf16 %v1219, %v1218
  %v1246 = vpack.c.bf16 %v1221, %v1220
  %v1247 = vpack.c.bf16 %v1222, %v1222
  %v1273 = vunpack.c.l.b16 %v1223
  %v1274 = vunpack.c.h.b16 %v1223
  %v1275 = vunpack.c.l.b16 %v1224
  %v1276 = vunpack.c.h.b16 %v1224
  %v1277 = vunpack.c.l.b16 %v1225
  %v1278 = vunpack.c.h.b16 %v1225
  %v1279 = vunpack.c.l.b16 %v1226
  %v1280 = vunpack.c.h.b16 %v1226
  %v1281 = vunpack.c.l.b16 %v1227
  %v1282 = vunpack.c.h.b16 %v1227
  %v1283 = vunpack.c.l.b16 %v1228
  %v1284 = vunpack.c.h.b16 %v1228
  %v1285 = vunpack.c.l.b16 %v1229
  %v1286 = vunpack.c.h.b16 %v1229
  %v1287 = vunpack.c.l.b16 %v1230
  %v1288 = vunpack.c.h.b16 %v1230
  %v1289 = vunpack.c.l.b16 %v1231
  %v1290 = vunpack.c.h.b16 %v1231
  %v1291 = vunpack.c.l.b16 %v1232
  %v1292 = vunpack.c.h.b16 %v1232
  %v1293 = vunpack.c.l.b16 %v1233
  %v1294 = vunpack.c.h.b16 %v1233
  %v1295 = vunpack.c.l.b16 %v1234
  %v1296 = vunpack.c.h.b16 %v1234
  %v1297 = vunpack.c.l.b16 %v1235
  %v1298 = vunpack.c.h.b16 %v1235
  %v1299 = vunpack.c.l.b16 %v1236
  %v1300 = vunpack.c.h.b16 %v1236
  %v1301 = vunpack.c.l.b16 %v1237
  %v1302 = vunpack.c.h.b16 %v1237
  %v1303 = vunpack.c.l.b16 %v1238
  %v1304 = vunpack.c.h.b16 %v1238
  %v1305 = vunpack.c.l.b16 %v1239
  %v1306 = vunpack.c.h.b16 %v1239
  %v1307 = vunpack.c.l.b16 %v1240
  %v1308 = vunpack.c.h.b16 %v1240
  %v1309 = vunpack.c.l.b16 %v1241
  %v1310 = vunpack.c.h.b16 %v1241
  %v1311 = vunpack.c.l.b16 %v1242
  %v1312 = vunpack.c.h.b16 %v1242
  %v1313 = vunpack.c.l.b16 %v1243
  %v1314 = vunpack.c.h.b16 %v1243
  %v1315 = vunpack.c.l.b16 %v1244
  %v1316 = vunpack.c.h.b16 %v1244
  %v1317 = vunpack.c.l.b16 %v1245
  %v1318 = vunpack.c.h.b16 %v1245
  %v1319 = vunpack.c.l.b16 %v1246
  %v1320 = vunpack.c.h.b16 %v1246
  %v1321 = vunpack.c.l.b16 %v1247
  %v1322 = vpack.c.b16 %v1273, %v1273
  %v1323 = vpack.c.b16 %v1274, %v1274
  %v1324 = vpack.c.b16 %v1275, %v1275
  %v1325 = vpack.c.b16 %v1276, %v1276
  %v1326 = vpack.c.b16 %v1277, %v1277
  %v1327 = vpack.c.b16 %v1278, %v1278
  %v1328 = vpack.c.b16 %v1279, %v1279
  %v1329 = vpack.c.b16 %v1280, %v1280
  %v1330 = vpack.c.b16 %v1281, %v1281
  %v1331 = vpack.c.b16 %v1282, %v1282
  %v1332 = vpack.c.b16 %v1283, %v1283
  %v1333 = vpack.c.b16 %v1284, %v1284
  %v1334 = vpack.c.b16 %v1285, %v1285
  %v1335 = vpack.c.b16 %v1286, %v1286
  %v1336 = vpack.c.b16 %v1287, %v1287
  %v1337 = vpack.c.b16 %v1288, %v1288
  %v1338 = vpack.c.b16 %v1289, %v1289
  %v1339 = vpack.c.b16 %v1290, %v1290
  %v1340 = vpack.c.b16 %v1291, %v1291
  %v1341 = vpack.c.b16 %v1292, %v1292
  %v1342 = vpack.c.b16 %v1293, %v1293
  %v1343 = vpack.c.b16 %v1294, %v1294
  %v1344 = vpack.c.b16 %v1295, %v1295
  %v1345 = vpack.c.b16 %v1296, %v1296
  %v1346 = vpack.c.b16 %v1297, %v1297
  %v1347 = vpack.c.b16 %v1298, %v1298
  %v1348 = vpack.c.b16 %v1299, %v1299
  %v1349 = vpack.c.b16 %v1300, %v1300
  %v1350 = vpack.c.b16 %v1301, %v1301
  %v1351 = vpack.c.b16 %v1302, %v1302
  %v1352 = vpack.c.b16 %v1303, %v1303
  %v1353 = vpack.c.b16 %v1304, %v1304
  %v1354 = vpack.c.b16 %v1305, %v1305
  %v1355 = vpack.c.b16 %v1306, %v1306
  %v1356 = vpack.c.b16 %v1307, %v1307
  %v1357 = vpack.c.b16 %v1308, %v1308
  %v1358 = vpack.c.b16 %v1309, %v1309
  %v1359 = vpack.c.b16 %v1310, %v1310
  %v1360 = vpack.c.b16 %v1311, %v1311
  %v1361 = vpack.c.b16 %v1312, %v1312
  %v1362 = vpack.c.b16 %v1313, %v1313
  %v1363 = vpack.c.b16 %v1314, %v1314
  %v1364 = vpack.c.b16 %v1315, %v1315
  %v1365 = vpack.c.b16 %v1316, %v1316
  %v1366 = vpack.c.b16 %v1317, %v1317
  %v1367 = vpack.c.b16 %v1318, %v1318
  %v1368 = vpack.c.b16 %v1319, %v1319
  %v1369 = vpack.c.b16 %v1320, %v1320
  %v1370 = vpack.c.b16 %v1321, %v1321
  %1420 = vst [vmem:[%s3] sm:$0xf] %v1322
  %1421 = vst [vmem:[%s3 + $0x4] sm:$0xf] %v1323
  %1422 = vst [vmem:[%s3 + $0x8] sm:$0xf] %v1324
  %1423 = vst [vmem:[%s3 + $0xc] sm:$0xf] %v1325
  %1424 = vst [vmem:[%s3 + $0x10] sm:$0xf] %v1326
  %1425 = vst [vmem:[%s3 + $0x14] sm:$0xf] %v1327
  %1426 = vst [vmem:[%s3 + $0x18] sm:$0xf] %v1328
  %1427 = vst [vmem:[%s3 + $0x1c] sm:$0xf] %v1329
  %1428 = vst [vmem:[%s3 + $0x20] sm:$0xf] %v1330
  %1429 = vst [vmem:[%s3 + $0x24] sm:$0xf] %v1331
  %1430 = vst [vmem:[%s3 + $0x28] sm:$0xf] %v1332
  %1431 = vst [vmem:[%s3 + $0x2c] sm:$0xf] %v1333
  %1432 = vst [vmem:[%s3 + $0x30] sm:$0xf] %v1334
  %1433 = vst [vmem:[%s3 + $0x34] sm:$0xf] %v1335
  %1434 = vst [vmem:[%s3 + $0x38] sm:$0xf] %v1336
  %1435 = vst [vmem:[%s3 + $0x3c] sm:$0xf] %v1337
  %1436 = vst [vmem:[%s3 + $0x40] sm:$0xf] %v1338
  %1437 = vst [vmem:[%s3 + $0x44] sm:$0xf] %v1339
  %1438 = vst [vmem:[%s3 + $0x48] sm:$0xf] %v1340
  %1439 = vst [vmem:[%s3 + $0x4c] sm:$0xf] %v1341
  %1440 = vst [vmem:[%s3 + $0x50] sm:$0xf] %v1342
  %1441 = vst [vmem:[%s3 + $0x54] sm:$0xf] %v1343
  %1442 = vst [vmem:[%s3 + $0x58] sm:$0xf] %v1344
  %1443 = vst [vmem:[%s3 + $0x5c] sm:$0xf] %v1345
  %1444 = vst [vmem:[%s3 + $0x60] sm:$0xf] %v1346
  %1445 = vst [vmem:[%s3 + $0x64] sm:$0xf] %v1347
  %1446 = vst [vmem:[%s3 + $0x68] sm:$0xf] %v1348
  %1447 = vst [vmem:[%s3 + $0x6c] sm:$0xf] %v1349
  %1448 = vst [vmem:[%s3 + $0x70] sm:$0xf] %v1350
  %1449 = vst [vmem:[%s3 + $0x74] sm:$0xf] %v1351
  %1450 = vst [vmem:[%s3 + $0x78] sm:$0xf] %v1352
  %1451 = vst [vmem:[%s3 + $0x7c] sm:$0xf] %v1353
  %1452 = vst [vmem:[%s3 + $0x80] sm:$0xf] %v1354
  %1453 = vst [vmem:[%s3 + $0x84] sm:$0xf] %v1355
  %1454 = vst [vmem:[%s3 + $0x88] sm:$0xf] %v1356
  %1455 = vst [vmem:[%s3 + $0x8c] sm:$0xf] %v1357
  %1456 = vst [vmem:[%s3 + $0x90] sm:$0xf] %v1358
  %1457 = vst [vmem:[%s3 + $0x94] sm:$0xf] %v1359
  %1458 = vst [vmem:[%s3 + $0x98] sm:$0xf] %v1360
  %1459 = vst [vmem:[%s3 + $0x9c] sm:$0xf] %v1361
  %1460 = vst [vmem:[%s3 + $0xa0] sm:$0xf] %v1362
  %1461 = vst [vmem:[%s3 + $0xa4] sm:$0xf] %v1363
  %1462 = vst [vmem:[%s3 + $0xa8] sm:$0xf] %v1364
  %1463 = vst [vmem:[%s3 + $0xac] sm:$0xf] %v1365
  %1464 = vst [vmem:[%s3 + $0xb0] sm:$0xf] %v1366
  %1465 = vst [vmem:[%s3 + $0xb4] sm:$0xf] %v1367
  %1466 = vst [vmem:[%s3 + $0xb8] sm:$0xf] %v1368
  %1467 = vst [vmem:[%s3 + $0xbc] sm:$0xf] %v1369
  %1468 = vst [vmem:[%s3 + $0xc0] sm:$0xf] %v1370
  // Predicated region
  $region14: #{vae_forward.10} parent=0 // pred_check
    _
  $region15: #{vae_forward.10} parent=0 // pred_check_branch
    %1470 = sbr.rel (0) target = $region17
  $region16: #{vae_forward.10} parent=0 // pred_region
    _
  $region17: #{vae_forward.10} parent=0 // pred_fallthru
    _
  // Predicated region
  $region18: #{vae_forward.10} parent=0 // pred_check
    _
  $region19: #{vae_forward.10} parent=0 // pred_check_branch
    %1472 = sbr.rel (0) target = $region21
  $region20: #{vae_forward.10} parent=0 // pred_region
    _
  $region21: #{vae_forward.10} parent=0 // pred_fallthru
    _

// kernel: vae_forward.11
$region0: #{vae_forward.11}
  #allocation0 [shape = 'u32[]', space=smem, size = 0x4, offset = 0x4, fixed_abs, tag = 'smem constant byte address 0x4 - core index']
  #allocation1 [shape = 'u32[144,128]{1,0:T(1,128)}', space=vmem, size = 0x12000, scoped, tag = 'internal scratch']
  %s0 = inlined_call_operand.vmem [shape: bf16[104,576], index: 0, kind: input, shape index: {}]
  %s1 = inlined_call_operand.vmem [shape: bf16[576,128], index: 1, kind: input, shape index: {}]
  %s2 = inlined_call_operand.vmem [shape: f32[1,128], index: 2, kind: input, shape index: {}]
  %s3 = inlined_call_operand.vmem [shape: bf16[104,128], index: 3, kind: output, shape index: {}]
  %s4 = sld [smem:[#allocation0]]
  $region22: #{vae_forward.11} parent=0
    _
  %s6 = ssub.s32 1, %s4
  %s7 = scalar_select 0, %s6, %s4
  // Predicated region
  $region2: #{vae_forward.11} parent=0 // pred_check
    _
  $region3: #{vae_forward.11} parent=0 // pred_check_branch
    %9 = sbr.rel (0) target = $region5
  $region4: #{vae_forward.11} parent=0 // pred_region
    _
  $region5: #{vae_forward.11} parent=0 // pred_fallthru
    _
  // Predicated region
  $region6: #{vae_forward.11} parent=0 // pred_check
    _
  $region7: #{vae_forward.11} parent=0 // pred_check_branch
    %11 = sbr.rel (0) target = $region9
  $region8: #{vae_forward.11} parent=0 // pred_region
    _
  $region9: #{vae_forward.11} parent=0 // pred_fallthru
    _
  // Predicated region
  $region10: #{vae_forward.11} parent=0 // pred_check
    _
  $region11: #{vae_forward.11} parent=0 // pred_check_branch
    %13 = sbr.rel (0) target = $region13
  $region12: #{vae_forward.11} parent=0 // pred_region
    _
  $region13: #{vae_forward.11} parent=0 // pred_fallthru
    _
  %v15 = vld [vmem:[%s0] sm:$0xff]
  %v16 = vld [vmem:[%s0 + $0x8] sm:$0xff]
  %v17 = vld [vmem:[%s0 + $0x10] sm:$0xf]
  %v18 = vld [vmem:[%s0 + $0x14] sm:$0xff]
  %v19 = vld [vmem:[%s0 + $0x1c] sm:$0xff]
  %v20 = vld [vmem:[%s0 + $0x24] sm:$0xf]
  %v21 = vld [vmem:[%s0 + $0x28] sm:$0xff]
  %v22 = vld [vmem:[%s0 + $0x30] sm:$0xff]
  %v23 = vld [vmem:[%s0 + $0x38] sm:$0xf]
  %v24 = vld [vmem:[%s0 + $0x3c] sm:$0xff]
  %v25 = vld [vmem:[%s0 + $0x44] sm:$0xff]
  %v26 = vld [vmem:[%s0 + $0x4c] sm:$0xf]
  %v27 = vld [vmem:[%s0 + $0x50] sm:$0xff]
  %v28 = vld [vmem:[%s0 + $0x58] sm:$0xff]
  %v29 = vld [vmem:[%s0 + $0x60] sm:$0xf]
  %v30 = vld [vmem:[%s0 + $0x64] sm:$0xff]
  %v31 = vld [vmem:[%s0 + $0x6c] sm:$0xff]
  %v32 = vld [vmem:[%s0 + $0x74] sm:$0xf]
  %v33 = vld [vmem:[%s0 + $0x78] sm:$0xff]
  %v34 = vld [vmem:[%s0 + $0x80] sm:$0xff]
  %v35 = vld [vmem:[%s0 + $0x88] sm:$0xf]
  %v36 = vld [vmem:[%s0 + $0x8c] sm:$0xff]
  %v37 = vld [vmem:[%s0 + $0x94] sm:$0xff]
  %v38 = vld [vmem:[%s0 + $0x9c] sm:$0xf]
  %v39 = vld [vmem:[%s0 + $0xa0] sm:$0xff]
  %v40 = vld [vmem:[%s0 + $0xa8] sm:$0xff]
  %v41 = vld [vmem:[%s0 + $0xb0] sm:$0xf]
  %v42 = vld [vmem:[%s0 + $0xb4] sm:$0xff]
  %v43 = vld [vmem:[%s0 + $0xbc] sm:$0xff]
  %v44 = vld [vmem:[%s0 + $0xc4] sm:$0xf]
  %v45 = vld [vmem:[%s0 + $0xc8] sm:$0xff]
  %v46 = vld [vmem:[%s0 + $0xd0] sm:$0xff]
  %v47 = vld [vmem:[%s0 + $0xd8] sm:$0xf]
  %v48 = vld [vmem:[%s0 + $0xdc] sm:$0xff]
  %v49 = vld [vmem:[%s0 + $0xe4] sm:$0xff]
  %v50 = vld [vmem:[%s0 + $0xec] sm:$0xf]
  %v51 = vld [vmem:[%s0 + $0xf0] sm:$0xff]
  %v52 = vld [vmem:[%s0 + $0xf8] sm:$0xff]
  %v53 = vld [vmem:[%s0 + $0x100] sm:$0xf]
  %v54 = vld [vmem:[%s1] sm:$0xf]
  %v55 = vld [vmem:[%s1 + $0x4] sm:$0xf]
  %v56 = vld [vmem:[%s1 + $0x8] sm:$0xf]
  %v57 = vld [vmem:[%s1 + $0xc] sm:$0xf]
  %v58 = vld [vmem:[%s1 + $0x10] sm:$0xf]
  %v59 = vld [vmem:[%s1 + $0x14] sm:$0xf]
  %v60 = vld [vmem:[%s1 + $0x18] sm:$0xf]
  %v61 = vld [vmem:[%s1 + $0x1c] sm:$0xf]
  %v62 = vld [vmem:[%s1 + $0x20] sm:$0xf]
  %v63 = vld [vmem:[%s1 + $0x24] sm:$0xf]
  %v64 = vld [vmem:[%s1 + $0x28] sm:$0xf]
  %v65 = vld [vmem:[%s1 + $0x2c] sm:$0xf]
  %v66 = vld [vmem:[%s1 + $0x30] sm:$0xf]
  %v67 = vld [vmem:[%s1 + $0x34] sm:$0xf]
  %v68 = vld [vmem:[%s1 + $0x38] sm:$0xf]
  %v69 = vld [vmem:[%s1 + $0x3c] sm:$0xf]
  %v70 = vld [vmem:[%s1 + $0x40] sm:$0xf]
  %v71 = vld [vmem:[%s1 + $0x44] sm:$0xf]
  %v72 = vld [vmem:[%s1 + $0x48] sm:$0xf]
  %v73 = vld [vmem:[%s1 + $0x4c] sm:$0xf]
  %v74 = vld [vmem:[%s1 + $0x50] sm:$0xf]
  %v75 = vld [vmem:[%s1 + $0x54] sm:$0xf]
  %v76 = vld [vmem:[%s1 + $0x58] sm:$0xf]
  %v77 = vld [vmem:[%s1 + $0x5c] sm:$0xf]
  %v78 = vld [vmem:[%s1 + $0x60] sm:$0xf]
  %v79 = vld [vmem:[%s1 + $0x64] sm:$0xf]
  %v80 = vld [vmem:[%s1 + $0x68] sm:$0xf]
  %v81 = vld [vmem:[%s1 + $0x6c] sm:$0xf]
  %v82 = vld [vmem:[%s1 + $0x70] sm:$0xf]
  %v83 = vld [vmem:[%s1 + $0x74] sm:$0xf]
  %v84 = vld [vmem:[%s1 + $0x78] sm:$0xf]
  %v85 = vld [vmem:[%s1 + $0x7c] sm:$0xf]
  %v86 = vld [vmem:[%s1 + $0x80] sm:$0xf]
  %v87 = vld [vmem:[%s1 + $0x84] sm:$0xf]
  %v88 = vld [vmem:[%s1 + $0x88] sm:$0xf]
  %v89 = vld [vmem:[%s1 + $0x8c] sm:$0xf]
  %v90 = vld [vmem:[%s1 + $0x90] sm:$0xf]
  %v91 = vld [vmem:[%s1 + $0x94] sm:$0xf]
  %v92 = vld [vmem:[%s1 + $0x98] sm:$0xf]
  %v93 = vld [vmem:[%s1 + $0x9c] sm:$0xf]
  %v94 = vld [vmem:[%s1 + $0xa0] sm:$0xf]
  %v95 = vld [vmem:[%s1 + $0xa4] sm:$0xf]
  %v96 = vld [vmem:[%s1 + $0xa8] sm:$0xf]
  %v97 = vld [vmem:[%s1 + $0xac] sm:$0xf]
  %v98 = vld [vmem:[%s1 + $0xb0] sm:$0xf]
  %v99 = vld [vmem:[%s1 + $0xb4] sm:$0xf]
  %v100 = vld [vmem:[%s1 + $0xb8] sm:$0xf]
  %v101 = vld [vmem:[%s1 + $0xbc] sm:$0xf]
  %v102 = vld [vmem:[%s1 + $0xc0] sm:$0xf]
  %v103 = vld [vmem:[%s1 + $0xc4] sm:$0xf]
  %v104 = vld [vmem:[%s1 + $0xc8] sm:$0xf]
  %v105 = vld [vmem:[%s1 + $0xcc] sm:$0xf]
  %v106 = vld [vmem:[%s1 + $0xd0] sm:$0xf]
  %v107 = vld [vmem:[%s1 + $0xd4] sm:$0xf]
  %v108 = vld [vmem:[%s1 + $0xd8] sm:$0xf]
  %v109 = vld [vmem:[%s1 + $0xdc] sm:$0xf]
  %v110 = vld [vmem:[%s1 + $0xe0] sm:$0xf]
  %v111 = vld [vmem:[%s1 + $0xe4] sm:$0xf]
  %v112 = vld [vmem:[%s1 + $0xe8] sm:$0xf]
  %v113 = vld [vmem:[%s1 + $0xec] sm:$0xf]
  %v114 = vld [vmem:[%s1 + $0xf0] sm:$0xf]
  %v115 = vld [vmem:[%s1 + $0xf4] sm:$0xf]
  %v116 = vld [vmem:[%s1 + $0xf8] sm:$0xf]
  %v117 = vld [vmem:[%s1 + $0xfc] sm:$0xf]
  %v118 = vld [vmem:[%s1 + $0x100] sm:$0xf]
  %v119 = vld [vmem:[%s1 + $0x104] sm:$0xf]
  %v120 = vld [vmem:[%s1 + $0x108] sm:$0xf]
  %v121 = vld [vmem:[%s1 + $0x10c] sm:$0xf]
  %v122 = vld [vmem:[%s1 + $0x110] sm:$0xf]
  %v123 = vld [vmem:[%s1 + $0x114] sm:$0xf]
  %v124 = vld [vmem:[%s1 + $0x118] sm:$0xf]
  %v125 = vld [vmem:[%s1 + $0x11c] sm:$0xf]
  %v126 = vld [vmem:[%s2] sm:$0x1]
  %v128 = vlaneseq
  %v129 = vshrl.u32 %v128, 7
  %v130 = vsub.s32 0, %v129
  %v131 = vrot.slane %v126, %v130
  %v172 = vunpack.c.l.b16 %v15
  %v173 = vunpack.c.h.b16 %v15
  %v174 = vunpack.c.l.b16 %v16
  %v175 = vunpack.c.h.b16 %v16
  %v176 = vunpack.c.l.b16 %v17
  %v177 = vunpack.c.l.b16 %v18
  %v178 = vunpack.c.h.b16 %v18
  %v179 = vunpack.c.l.b16 %v19
  %v180 = vunpack.c.h.b16 %v19
  %v181 = vunpack.c.l.b16 %v20
  %v182 = vunpack.c.l.b16 %v21
  %v183 = vunpack.c.h.b16 %v21
  %v184 = vunpack.c.l.b16 %v22
  %v185 = vunpack.c.h.b16 %v22
  %v186 = vunpack.c.l.b16 %v23
  %v187 = vunpack.c.l.b16 %v24
  %v188 = vunpack.c.h.b16 %v24
  %v189 = vunpack.c.l.b16 %v25
  %v190 = vunpack.c.h.b16 %v25
  %v191 = vunpack.c.l.b16 %v26
  %v192 = vunpack.c.l.b16 %v27
  %v193 = vunpack.c.h.b16 %v27
  %v194 = vunpack.c.l.b16 %v28
  %v195 = vunpack.c.h.b16 %v28
  %v196 = vunpack.c.l.b16 %v29
  %v197 = vunpack.c.l.b16 %v30
  %v198 = vunpack.c.h.b16 %v30
  %v199 = vunpack.c.l.b16 %v31
  %v200 = vunpack.c.h.b16 %v31
  %v201 = vunpack.c.l.b16 %v32
  %v202 = vunpack.c.l.b16 %v33
  %v203 = vunpack.c.h.b16 %v33
  %v204 = vunpack.c.l.b16 %v34
  %v205 = vunpack.c.h.b16 %v34
  %v206 = vunpack.c.l.b16 %v35
  %v207 = vunpack.c.l.b16 %v36
  %v208 = vunpack.c.h.b16 %v36
  %v209 = vunpack.c.l.b16 %v37
  %v210 = vunpack.c.h.b16 %v37
  %v211 = vunpack.c.l.b16 %v38
  %v212 = vunpack.c.l.b16 %v39
  %v213 = vunpack.c.h.b16 %v39
  %v214 = vunpack.c.l.b16 %v40
  %v215 = vunpack.c.h.b16 %v40
  %v216 = vunpack.c.l.b16 %v41
  %v217 = vunpack.c.l.b16 %v42
  %v218 = vunpack.c.h.b16 %v42
  %v219 = vunpack.c.l.b16 %v43
  %v220 = vunpack.c.h.b16 %v43
  %v221 = vunpack.c.l.b16 %v44
  %v222 = vunpack.c.l.b16 %v45
  %v223 = vunpack.c.h.b16 %v45
  %v224 = vunpack.c.l.b16 %v46
  %v225 = vunpack.c.h.b16 %v46
  %v226 = vunpack.c.l.b16 %v47
  %v227 = vunpack.c.l.b16 %v48
  %v228 = vunpack.c.h.b16 %v48
  %v229 = vunpack.c.l.b16 %v49
  %v230 = vunpack.c.h.b16 %v49
  %v231 = vunpack.c.l.b16 %v50
  %v232 = vunpack.c.l.b16 %v51
  %v233 = vunpack.c.h.b16 %v51
  %v234 = vunpack.c.l.b16 %v52
  %v235 = vunpack.c.h.b16 %v52
  %v236 = vunpack.c.l.b16 %v53
  %v237 = vpack.c.b16 %v177, %v172
  %v238 = vpack.c.b16 %v178, %v173
  %v239 = vpack.c.b16 %v179, %v174
  %v240 = vpack.c.b16 %v180, %v175
  %v241 = vpack.c.b16 %v181, %v176
  %v242 = vpack.c.b16 %v187, %v182
  %v243 = vpack.c.b16 %v188, %v183
  %v244 = vpack.c.b16 %v189, %v184
  %v245 = vpack.c.b16 %v190, %v185
  %v246 = vpack.c.b16 %v191, %v186
  %v247 = vpack.c.b16 %v197, %v192
  %v248 = vpack.c.b16 %v198, %v193
  %v249 = vpack.c.b16 %v199, %v194
  %v250 = vpack.c.b16 %v200, %v195
  %v251 = vpack.c.b16 %v201, %v196
  %v252 = vpack.c.b16 %v207, %v202
  %v253 = vpack.c.b16 %v208, %v203
  %v254 = vpack.c.b16 %v209, %v204
  %v255 = vpack.c.b16 %v210, %v205
  %v256 = vpack.c.b16 %v211, %v206
  %v257 = vpack.c.b16 %v217, %v212
  %v258 = vpack.c.b16 %v218, %v213
  %v259 = vpack.c.b16 %v219, %v214
  %v260 = vpack.c.b16 %v220, %v215
  %v261 = vpack.c.b16 %v221, %v216
  %v262 = vpack.c.b16 %v227, %v222
  %v263 = vpack.c.b16 %v228, %v223
  %v264 = vpack.c.b16 %v229, %v224
  %v265 = vpack.c.b16 %v230, %v225
  %v266 = vpack.c.b16 %v231, %v226
  %v267 = vpack.c.b16 %v232, %v232
  %v268 = vpack.c.b16 %v233, %v233
  %v269 = vpack.c.b16 %v234, %v234
  %v270 = vpack.c.b16 %v235, %v235
  %v271 = vpack.c.b16 %v236, %v236
  %v372 = vunpack.c.l.b16 %v54
  %v373 = vunpack.c.l.b16 %v55
  %v374 = vunpack.c.l.b16 %v56
  %v375 = vunpack.c.l.b16 %v57
  %v376 = vunpack.c.l.b16 %v58
  %v377 = vunpack.c.l.b16 %v59
  %v378 = vunpack.c.l.b16 %v60
  %v379 = vunpack.c.l.b16 %v61
  %v380 = vunpack.c.l.b16 %v62
  %v381 = vunpack.c.l.b16 %v63
  %v382 = vunpack.c.l.b16 %v64
  %v383 = vunpack.c.l.b16 %v65
  %v384 = vunpack.c.l.b16 %v66
  %v385 = vunpack.c.l.b16 %v67
  %v386 = vunpack.c.l.b16 %v68
  %v387 = vunpack.c.l.b16 %v69
  %v388 = vunpack.c.l.b16 %v70
  %v389 = vunpack.c.l.b16 %v71
  %v390 = vunpack.c.l.b16 %v72
  %v391 = vunpack.c.l.b16 %v73
  %v392 = vunpack.c.l.b16 %v74
  %v393 = vunpack.c.l.b16 %v75
  %v394 = vunpack.c.l.b16 %v76
  %v395 = vunpack.c.l.b16 %v77
  %v396 = vunpack.c.l.b16 %v78
  %v397 = vunpack.c.l.b16 %v79
  %v398 = vunpack.c.l.b16 %v80
  %v399 = vunpack.c.l.b16 %v81
  %v400 = vunpack.c.l.b16 %v82
  %v401 = vunpack.c.l.b16 %v83
  %v402 = vunpack.c.l.b16 %v84
  %v403 = vunpack.c.l.b16 %v85
  %v404 = vunpack.c.l.b16 %v86
  %v405 = vunpack.c.l.b16 %v87
  %v406 = vunpack.c.l.b16 %v88
  %v407 = vunpack.c.l.b16 %v89
  %v408 = vunpack.c.l.b16 %v90
  %v409 = vunpack.c.l.b16 %v91
  %v410 = vunpack.c.l.b16 %v92
  %v411 = vunpack.c.l.b16 %v93
  %v412 = vunpack.c.l.b16 %v94
  %v413 = vunpack.c.l.b16 %v95
  %v414 = vunpack.c.l.b16 %v96
  %v415 = vunpack.c.l.b16 %v97
  %v416 = vunpack.c.l.b16 %v98
  %v417 = vunpack.c.l.b16 %v99
  %v418 = vunpack.c.l.b16 %v100
  %v419 = vunpack.c.l.b16 %v101
  %v420 = vunpack.c.l.b16 %v102
  %v421 = vunpack.c.l.b16 %v103
  %v422 = vunpack.c.l.b16 %v104
  %v423 = vunpack.c.l.b16 %v105
  %v424 = vunpack.c.l.b16 %v106
  %v425 = vunpack.c.l.b16 %v107
  %v426 = vunpack.c.l.b16 %v108
  %v427 = vunpack.c.l.b16 %v109
  %v428 = vunpack.c.l.b16 %v110
  %v429 = vunpack.c.l.b16 %v111
  %v430 = vunpack.c.l.b16 %v112
  %v431 = vunpack.c.l.b16 %v113
  %v432 = vunpack.c.l.b16 %v114
  %v433 = vunpack.c.l.b16 %v115
  %v434 = vunpack.c.l.b16 %v116
  %v435 = vunpack.c.l.b16 %v117
  %v436 = vunpack.c.l.b16 %v118
  %v437 = vunpack.c.l.b16 %v119
  %v438 = vunpack.c.l.b16 %v120
  %v439 = vunpack.c.l.b16 %v121
  %v440 = vunpack.c.l.b16 %v122
  %v441 = vunpack.c.l.b16 %v123
  %v442 = vunpack.c.l.b16 %v124
  %v443 = vunpack.c.l.b16 %v125
  %v444 = vpack.c.b16 %v373, %v372
  %v445 = vpack.c.b16 %v375, %v374
  %v446 = vpack.c.b16 %v377, %v376
  %v447 = vpack.c.b16 %v379, %v378
  %v448 = vpack.c.b16 %v381, %v380
  %v449 = vpack.c.b16 %v383, %v382
  %v450 = vpack.c.b16 %v385, %v384
  %v451 = vpack.c.b16 %v387, %v386
  %v452 = vpack.c.b16 %v389, %v388
  %v453 = vpack.c.b16 %v391, %v390
  %v454 = vpack.c.b16 %v393, %v392
  %v455 = vpack.c.b16 %v395, %v394
  %v456 = vpack.c.b16 %v397, %v396
  %v457 = vpack.c.b16 %v399, %v398
  %v458 = vpack.c.b16 %v401, %v400
  %v459 = vpack.c.b16 %v403, %v402
  %v460 = vpack.c.b16 %v405, %v404
  %v461 = vpack.c.b16 %v407, %v406
  %v462 = vpack.c.b16 %v409, %v408
  %v463 = vpack.c.b16 %v411, %v410
  %v464 = vpack.c.b16 %v413, %v412
  %v465 = vpack.c.b16 %v415, %v414
  %v466 = vpack.c.b16 %v417, %v416
  %v467 = vpack.c.b16 %v419, %v418
  %v468 = vpack.c.b16 %v421, %v420
  %v469 = vpack.c.b16 %v423, %v422
  %v470 = vpack.c.b16 %v425, %v424
  %v471 = vpack.c.b16 %v427, %v426
  %v472 = vpack.c.b16 %v429, %v428
  %v473 = vpack.c.b16 %v431, %v430
  %v474 = vpack.c.b16 %v433, %v432
  %v475 = vpack.c.b16 %v435, %v434
  %v476 = vpack.c.b16 %v437, %v436
  %v477 = vpack.c.b16 %v439, %v438
  %v478 = vpack.c.b16 %v441, %v440
  %v479 = vpack.c.b16 %v443, %v442
  %vm516 = vcmask 523264
  %v518 = vsel %vm516, %v241, 0
  %v521 = vsel %vm516, %v246, 0
  %v524 = vsel %vm516, %v251, 0
  %v527 = vsel %vm516, %v256, 0
  %v530 = vsel %vm516, %v261, 0
  %v533 = vsel %vm516, %v266, 0
  %v536 = vsel %vm516, %v271, 0
  %538 = vmatprep.subr.bf16.mxu0 0
  %539 = vmatpush1.bf16.msra.mxu0 %v451
  %540 = vmatprep.subr.bf16.mxu0 0
  %541 = vmatpush1.bf16.msra.mxu0 %v450
  %542 = vmatprep.subr.bf16.mxu0 0
  %543 = vmatpush1.bf16.msra.mxu0 %v449
  %544 = vmatprep.subr.bf16.mxu0 0
  %545 = vmatpush1.bf16.msra.mxu0 %v448
  %546 = vmatprep.subr.bf16.mxu0 0
  %547 = vmatpush1.bf16.msra.mxu0 %v447
  %548 = vmatprep.subr.bf16.mxu0 0
  %549 = vmatpush1.bf16.msra.mxu0 %v446
  %550 = vmatprep.subr.bf16.mxu0 0
  %551 = vmatpush1.bf16.msra.mxu0 %v445
  %552 = vmatprep.subr.bf16.mxu0 0
  %553 = vmatpush1.bf16.msra.mxu0 %v444
  %554 = vmatprep.subr.bf16.mxu0 0
  %555 = vmatpush2.bf16.msra.mxu0 %v459
  %556 = vmatprep.subr.bf16.mxu0 0
  %557 = vmatpush2.bf16.msra.mxu0 %v458
  %558 = vmatprep.subr.bf16.mxu0 0
  %559 = vmatpush2.bf16.msra.mxu0 %v457
  %560 = vmatprep.subr.bf16.mxu0 0
  %561 = vmatpush2.bf16.msra.mxu0 %v456
  %562 = vmatprep.subr.bf16.mxu0 0
  %563 = vmatpush2.bf16.msra.mxu0 %v455
  %564 = vmatprep.subr.bf16.mxu0 0
  %565 = vmatpush2.bf16.msra.mxu0 %v454
  %566 = vmatprep.subr.bf16.mxu0 0
  %567 = vmatpush2.bf16.msra.mxu0 %v453
  %568 = vmatprep.subr.bf16.mxu0 0
  %569 = vmatpush2.bf16.msra.mxu0 %v452
  %570 = vmatprep.mubr.bf16.mxu0 %v238
  %571 = vmatmul.mubr.bf16.gmra.mxu0 %v237
  %v572 = vpop.f32.mrf.mxu0
  %v573 = vadd.f32 %v131, %v572
  %v574 = vpop.f32.mrf.mxu0
  %v575 = vpop.f32.mrf.mxu0
  %v576 = vadd.f32 %v131, %v575
  %v577 = vpop.f32.mrf.mxu0
  %578 = vmatprep.mubr.bf16.mxu0 %v243
  %579 = vmatmul.mubr.bf16.gmra.mxu0 %v242
  %v580 = vpop.f32.mrf.mxu0
  %v581 = vadd.f32 %v131, %v580
  %v582 = vpop.f32.mrf.mxu0
  %v583 = vpop.f32.mrf.mxu0
  %v584 = vadd.f32 %v131, %v583
  %v585 = vpop.f32.mrf.mxu0
  %586 = vmatprep.mubr.bf16.mxu0 %v248
  %587 = vmatmul.mubr.bf16.gmra.mxu0 %v247
  %v588 = vpop.f32.mrf.mxu0
  %v589 = vadd.f32 %v131, %v588
  %v590 = vpop.f32.mrf.mxu0
  %v591 = vpop.f32.mrf.mxu0
  %v592 = vadd.f32 %v131, %v591
  %v593 = vpop.f32.mrf.mxu0
  %594 = vmatprep.mubr.bf16.mxu0 %v253
  %595 = vmatmul.mubr.bf16.gmra.mxu0 %v252
  %v596 = vpop.f32.mrf.mxu0
  %v597 = vadd.f32 %v131, %v596
  %v598 = vpop.f32.mrf.mxu0
  %v599 = vpop.f32.mrf.mxu0
  %v600 = vadd.f32 %v131, %v599
  %v601 = vpop.f32.mrf.mxu0
  %602 = vmatprep.mubr.bf16.mxu0 %v258
  %603 = vmatmul.mubr.bf16.gmra.mxu0 %v257
  %v604 = vpop.f32.mrf.mxu0
  %v605 = vadd.f32 %v131, %v604
  %v606 = vpop.f32.mrf.mxu0
  %v607 = vpop.f32.mrf.mxu0
  %v608 = vadd.f32 %v131, %v607
  %v609 = vpop.f32.mrf.mxu0
  %610 = vmatprep.mubr.bf16.mxu0 %v263
  %611 = vmatmul.mubr.bf16.gmra.mxu0 %v262
  %v612 = vpop.f32.mrf.mxu0
  %v613 = vadd.f32 %v131, %v612
  %v614 = vpop.f32.mrf.mxu0
  %v615 = vpop.f32.mrf.mxu0
  %v616 = vadd.f32 %v131, %v615
  %v617 = vpop.f32.mrf.mxu0
  %618 = vmatprep.mubr.bf16.mxu0 %v268
  %619 = vmatmul.mubr.bf16.gmra.mxu0 %v267
  %v620 = vpop.f32.mrf.mxu0
  %v621 = vadd.f32 %v131, %v620
  %v622 = vpop.f32.mrf.mxu0
  %v623 = vpop.f32.mrf.mxu0
  %v624 = vpop.f32.mrf.mxu0
  %625 = vdwg.mxu0
  %626 = vmatprep.subr.bf16.mxu0 0
  %627 = vmatpush1.bf16.msra.mxu0 %v467
  %628 = vmatprep.subr.bf16.mxu0 0
  %629 = vmatpush1.bf16.msra.mxu0 %v466
  %630 = vmatprep.subr.bf16.mxu0 0
  %631 = vmatpush1.bf16.msra.mxu0 %v465
  %632 = vmatprep.subr.bf16.mxu0 0
  %633 = vmatpush1.bf16.msra.mxu0 %v464
  %634 = vmatprep.subr.bf16.mxu0 0
  %635 = vmatpush1.bf16.msra.mxu0 %v463
  %636 = vmatprep.subr.bf16.mxu0 0
  %637 = vmatpush1.bf16.msra.mxu0 %v462
  %638 = vmatprep.subr.bf16.mxu0 0
  %639 = vmatpush1.bf16.msra.mxu0 %v461
  %640 = vmatprep.subr.bf16.mxu0 0
  %641 = vmatpush1.bf16.msra.mxu0 %v460
  %642 = vmatprep.subr.bf16.mxu0 0
  %643 = vmatpush2.bf16.msra.mxu0 %v475
  %644 = vmatprep.subr.bf16.mxu0 0
  %645 = vmatpush2.bf16.msra.mxu0 %v474
  %646 = vmatprep.subr.bf16.mxu0 0
  %647 = vmatpush2.bf16.msra.mxu0 %v473
  %648 = vmatprep.subr.bf16.mxu0 0
  %649 = vmatpush2.bf16.msra.mxu0 %v472
  %650 = vmatprep.subr.bf16.mxu0 0
  %651 = vmatpush2.bf16.msra.mxu0 %v471
  %652 = vmatprep.subr.bf16.mxu0 0
  %653 = vmatpush2.bf16.msra.mxu0 %v470
  %654 = vmatprep.subr.bf16.mxu0 0
  %655 = vmatpush2.bf16.msra.mxu0 %v469
  %656 = vmatprep.subr.bf16.mxu0 0
  %657 = vmatpush2.bf16.msra.mxu0 %v468
  %658 = vmatprep.mubr.bf16.mxu0 %v240
  %659 = vmatmul.mubr.bf16.gmra.mxu0 %v239
  %v660 = vpop.f32.mrf.mxu0
  %v661 = vadd.f32 %v573, %v660
  %v662 = vpop.f32.mrf.mxu0
  %v663 = vpop.f32.mrf.mxu0
  %v664 = vadd.f32 %v576, %v663
  %v665 = vpop.f32.mrf.mxu0
  %666 = vmatprep.mubr.bf16.mxu0 %v245
  %667 = vmatmul.mubr.bf16.gmra.mxu0 %v244
  %v668 = vpop.f32.mrf.mxu0
  %v669 = vadd.f32 %v581, %v668
  %v670 = vpop.f32.mrf.mxu0
  %v671 = vpop.f32.mrf.mxu0
  %v672 = vadd.f32 %v584, %v671
  %v673 = vpop.f32.mrf.mxu0
  %674 = vmatprep.mubr.bf16.mxu0 %v250
  %675 = vmatmul.mubr.bf16.gmra.mxu0 %v249
  %v676 = vpop.f32.mrf.mxu0
  %v677 = vadd.f32 %v589, %v676
  %v678 = vpop.f32.mrf.mxu0
  %v679 = vpop.f32.mrf.mxu0
  %v680 = vadd.f32 %v592, %v679
  %v681 = vpop.f32.mrf.mxu0
  %682 = vmatprep.mubr.bf16.mxu0 %v255
  %683 = vmatmul.mubr.bf16.gmra.mxu0 %v254
  %v684 = vpop.f32.mrf.mxu0
  %v685 = vadd.f32 %v597, %v684
  %v686 = vpop.f32.mrf.mxu0
  %v687 = vpop.f32.mrf.mxu0
  %v688 = vadd.f32 %v600, %v687
  %v689 = vpop.f32.mrf.mxu0
  %690 = vmatprep.mubr.bf16.mxu0 %v260
  %691 = vmatmul.mubr.bf16.gmra.mxu0 %v259
  %v692 = vpop.f32.mrf.mxu0
  %v693 = vadd.f32 %v605, %v692
  %v694 = vpop.f32.mrf.mxu0
  %v695 = vpop.f32.mrf.mxu0
  %v696 = vadd.f32 %v608, %v695
  %v697 = vpop.f32.mrf.mxu0
  %698 = vmatprep.mubr.bf16.mxu0 %v265
  %699 = vmatmul.mubr.bf16.gmra.mxu0 %v264
  %v700 = vpop.f32.mrf.mxu0
  %v701 = vadd.f32 %v613, %v700
  %v702 = vpop.f32.mrf.mxu0
  %v703 = vpop.f32.mrf.mxu0
  %v704 = vadd.f32 %v616, %v703
  %v705 = vpop.f32.mrf.mxu0
  %706 = vmatprep.mubr.bf16.mxu0 %v270
  %707 = vmatmul.mubr.bf16.gmra.mxu0 %v269
  %v708 = vpop.f32.mrf.mxu0
  %v709 = vadd.f32 %v621, %v708
  %v710 = vpop.f32.mrf.mxu0
  %v711 = vpop.f32.mrf.mxu0
  %v712 = vpop.f32.mrf.mxu0
  %713 = vdwg.mxu0
  %714 = vmatprep.subr.bf16.mxu0 0
  %715 = vmatpush1.bf16.msra.mxu0 0
  %716 = vmatprep.subr.bf16.mxu0 0
  %717 = vmatpush1.bf16.msra.mxu0 0
  %718 = vmatprep.subr.bf16.mxu0 0
  %719 = vmatpush1.bf16.msra.mxu0 0
  %720 = vmatprep.subr.bf16.mxu0 0
  %721 = vmatpush1.bf16.msra.mxu0 0
  %722 = vmatprep.subr.bf16.mxu0 0
  %723 = vmatpush1.bf16.msra.mxu0 %v479
  %724 = vmatprep.subr.bf16.mxu0 0
  %725 = vmatpush1.bf16.msra.mxu0 %v478
  %726 = vmatprep.subr.bf16.mxu0 0
  %727 = vmatpush1.bf16.msra.mxu0 %v477
  %728 = vmatprep.subr.bf16.mxu0 0
  %729 = vmatpush1.bf16.msra.mxu0 %v476
  %730 = vmatprep.subr.bf16.mxu0 0
  %731 = vmatpush2.bf16.msra.mxu0 0
  %732 = vmatprep.subr.bf16.mxu0 0
  %733 = vmatpush2.bf16.msra.mxu0 0
  %734 = vmatprep.subr.bf16.mxu0 0
  %735 = vmatpush2.bf16.msra.mxu0 0
  %736 = vmatprep.subr.bf16.mxu0 0
  %737 = vmatpush2.bf16.msra.mxu0 0
  %738 = vmatprep.subr.bf16.mxu0 0
  %739 = vmatpush2.bf16.msra.mxu0 0
  %740 = vmatprep.subr.bf16.mxu0 0
  %741 = vmatpush2.bf16.msra.mxu0 0
  %742 = vmatprep.subr.bf16.mxu0 0
  %743 = vmatpush2.bf16.msra.mxu0 0
  %744 = vmatprep.subr.bf16.mxu0 0
  %745 = vmatpush2.bf16.msra.mxu0 0
  %746 = vmatprep.mubr.bf16.mxu0 0
  %747 = vmatmul.mubr.bf16.gmra.mxu0 %v518
  %v748 = vpop.f32.mrf.mxu0
  %v749 = vadd.f32 %v661, %v748
  %v750 = vpop.f32.mrf.mxu0
  %v751 = vpop.f32.mrf.mxu0
  %v752 = vadd.f32 %v664, %v751
  %v753 = vpop.f32.mrf.mxu0
  %754 = vmatprep.mubr.bf16.mxu0 0
  %755 = vmatmul.mubr.bf16.gmra.mxu0 %v521
  %v756 = vpop.f32.mrf.mxu0
  %v757 = vadd.f32 %v669, %v756
  %v758 = vpop.f32.mrf.mxu0
  %v759 = vpop.f32.mrf.mxu0
  %v760 = vadd.f32 %v672, %v759
  %v761 = vpop.f32.mrf.mxu0
  %762 = vmatprep.mubr.bf16.mxu0 0
  %763 = vmatmul.mubr.bf16.gmra.mxu0 %v524
  %v764 = vpop.f32.mrf.mxu0
  %v765 = vadd.f32 %v677, %v764
  %v766 = vpop.f32.mrf.mxu0
  %v767 = vpop.f32.mrf.mxu0
  %v768 = vadd.f32 %v680, %v767
  %v769 = vpop.f32.mrf.mxu0
  %770 = vmatprep.mubr.bf16.mxu0 0
  %771 = vmatmul.mubr.bf16.gmra.mxu0 %v527
  %v772 = vpop.f32.mrf.mxu0
  %v773 = vadd.f32 %v685, %v772
  %v774 = vpop.f32.mrf.mxu0
  %v775 = vpop.f32.mrf.mxu0
  %v776 = vadd.f32 %v688, %v775
  %v777 = vpop.f32.mrf.mxu0
  %778 = vmatprep.mubr.bf16.mxu0 0
  %779 = vmatmul.mubr.bf16.gmra.mxu0 %v530
  %v780 = vpop.f32.mrf.mxu0
  %v781 = vadd.f32 %v693, %v780
  %v782 = vpop.f32.mrf.mxu0
  %v783 = vpop.f32.mrf.mxu0
  %v784 = vadd.f32 %v696, %v783
  %v785 = vpop.f32.mrf.mxu0
  %786 = vmatprep.mubr.bf16.mxu0 0
  %787 = vmatmul.mubr.bf16.gmra.mxu0 %v533
  %v788 = vpop.f32.mrf.mxu0
  %v789 = vadd.f32 %v701, %v788
  %v790 = vpop.f32.mrf.mxu0
  %v791 = vpop.f32.mrf.mxu0
  %v792 = vadd.f32 %v704, %v791
  %v793 = vpop.f32.mrf.mxu0
  %794 = vmatprep.mubr.bf16.mxu0 0
  %795 = vmatmul.mubr.bf16.gmra.mxu0 %v536
  %v796 = vpop.f32.mrf.mxu0
  %v797 = vadd.f32 %v709, %v796
  %v798 = vpop.f32.mrf.mxu0
  %v799 = vpop.f32.mrf.mxu0
  %v800 = vpop.f32.mrf.mxu0
  %801 = vdwg.mxu0
  %v802 = vmax.f32 %v749, 0.0
  %v803 = vmax.f32 %v752, 0.0
  %v804 = vmax.f32 %v757, 0.0
  %v805 = vmax.f32 %v760, 0.0
  %v806 = vmax.f32 %v765, 0.0
  %v807 = vmax.f32 %v768, 0.0
  %v808 = vmax.f32 %v773, 0.0
  %v809 = vmax.f32 %v776, 0.0
  %v810 = vmax.f32 %v781, 0.0
  %v811 = vmax.f32 %v784, 0.0
  %v812 = vmax.f32 %v789, 0.0
  %v813 = vmax.f32 %v792, 0.0
  %v814 = vmax.f32 %v797, 0.0
  %v815 = vpack.c.bf16 %v803, %v802
  %v816 = vpack.c.bf16 %v805, %v804
  %v817 = vpack.c.bf16 %v807, %v806
  %v818 = vpack.c.bf16 %v809, %v808
  %v819 = vpack.c.bf16 %v811, %v810
  %v820 = vpack.c.bf16 %v813, %v812
  %v821 = vpack.c.bf16 %v814, %v814
  %v829 = vunpack.c.l.b16 %v815
  %v830 = vunpack.c.h.b16 %v815
  %v831 = vunpack.c.l.b16 %v816
  %v832 = vunpack.c.h.b16 %v816
  %v833 = vunpack.c.l.b16 %v817
  %v834 = vunpack.c.h.b16 %v817
  %v835 = vunpack.c.l.b16 %v818
  %v836 = vunpack.c.h.b16 %v818
  %v837 = vunpack.c.l.b16 %v819
  %v838 = vunpack.c.h.b16 %v819
  %v839 = vunpack.c.l.b16 %v820
  %v840 = vunpack.c.h.b16 %v820
  %v841 = vunpack.c.l.b16 %v821
  %v842 = vpack.c.b16 %v829, %v829
  %v843 = vpack.c.b16 %v830, %v830
  %v844 = vpack.c.b16 %v831, %v831
  %v845 = vpack.c.b16 %v832, %v832
  %v846 = vpack.c.b16 %v833, %v833
  %v847 = vpack.c.b16 %v834, %v834
  %v848 = vpack.c.b16 %v835, %v835
  %v849 = vpack.c.b16 %v836, %v836
  %v850 = vpack.c.b16 %v837, %v837
  %v851 = vpack.c.b16 %v838, %v838
  %v852 = vpack.c.b16 %v839, %v839
  %v853 = vpack.c.b16 %v840, %v840
  %v854 = vpack.c.b16 %v841, %v841
  %868 = vst [vmem:[%s3] sm:$0xf] %v842
  %869 = vst [vmem:[%s3 + $0x4] sm:$0xf] %v843
  %870 = vst [vmem:[%s3 + $0x8] sm:$0xf] %v844
  %871 = vst [vmem:[%s3 + $0xc] sm:$0xf] %v845
  %872 = vst [vmem:[%s3 + $0x10] sm:$0xf] %v846
  %873 = vst [vmem:[%s3 + $0x14] sm:$0xf] %v847
  %874 = vst [vmem:[%s3 + $0x18] sm:$0xf] %v848
  %875 = vst [vmem:[%s3 + $0x1c] sm:$0xf] %v849
  %876 = vst [vmem:[%s3 + $0x20] sm:$0xf] %v850
  %877 = vst [vmem:[%s3 + $0x24] sm:$0xf] %v851
  %878 = vst [vmem:[%s3 + $0x28] sm:$0xf] %v852
  %879 = vst [vmem:[%s3 + $0x2c] sm:$0xf] %v853
  %880 = vst [vmem:[%s3 + $0x30] sm:$0xf] %v854
  // Predicated region
  $region14: #{vae_forward.11} parent=0 // pred_check
    _
  $region15: #{vae_forward.11} parent=0 // pred_check_branch
    %882 = sbr.rel (0) target = $region17
  $region16: #{vae_forward.11} parent=0 // pred_region
    _
  $region17: #{vae_forward.11} parent=0 // pred_fallthru
    _
  // Predicated region
  $region18: #{vae_forward.11} parent=0 // pred_check
    _
  $region19: #{vae_forward.11} parent=0 // pred_check_branch
    %884 = sbr.rel (0) target = $region21
  $region20: #{vae_forward.11} parent=0 // pred_region
    _
  $region21: #{vae_forward.11} parent=0 // pred_fallthru
    _

// kernel: vae_forward.12
$region0: #{vae_forward.12}
  #allocation0 [shape = 'u32[]', space=smem, size = 0x4, offset = 0x4, fixed_abs, tag = 'smem constant byte address 0x4 - core index']
  #allocation1 [shape = 'u32[144,128]{1,0:T(1,128)}', space=vmem, size = 0x12000, scoped, tag = 'internal scratch']
  %s0 = inlined_call_operand.vmem [shape: bf16[104,576], index: 0, kind: input, shape index: {}]
  %s1 = inlined_call_operand.vmem [shape: bf16[576,128], index: 1, kind: input, shape index: {}]
  %s2 = inlined_call_operand.vmem [shape: f32[1,128], index: 2, kind: input, shape index: {}]
  %s3 = inlined_call_operand.vmem [shape: bf16[104,128], index: 3, kind: output, shape index: {}]
  %s4 = sld [smem:[#allocation0]]
  $region22: #{vae_forward.12} parent=0
    _
  %s6 = ssub.s32 1, %s4
  %s7 = scalar_select 0, %s6, %s4
  // Predicated region
  $region2: #{vae_forward.12} parent=0 // pred_check
    _
  $region3: #{vae_forward.12} parent=0 // pred_check_branch
    %9 = sbr.rel (0) target = $region5
  $region4: #{vae_forward.12} parent=0 // pred_region
    _
  $region5: #{vae_forward.12} parent=0 // pred_fallthru
    _
  // Predicated region
  $region6: #{vae_forward.12} parent=0 // pred_check
    _
  $region7: #{vae_forward.12} parent=0 // pred_check_branch
    %11 = sbr.rel (0) target = $region9
  $region8: #{vae_forward.12} parent=0 // pred_region
    _
  $region9: #{vae_forward.12} parent=0 // pred_fallthru
    _
  // Predicated region
  $region10: #{vae_forward.12} parent=0 // pred_check
    _
  $region11: #{vae_forward.12} parent=0 // pred_check_branch
    %13 = sbr.rel (0) target = $region13
  $region12: #{vae_forward.12} parent=0 // pred_region
    _
  $region13: #{vae_forward.12} parent=0 // pred_fallthru
    _
  %v15 = vld [vmem:[%s0] sm:$0xff]
  %v16 = vld [vmem:[%s0 + $0x8] sm:$0xff]
  %v17 = vld [vmem:[%s0 + $0x10] sm:$0xf]
  %v18 = vld [vmem:[%s0 + $0x14] sm:$0xff]
  %v19 = vld [vmem:[%s0 + $0x1c] sm:$0xff]
  %v20 = vld [vmem:[%s0 + $0x24] sm:$0xf]
  %v21 = vld [vmem:[%s0 + $0x28] sm:$0xff]
  %v22 = vld [vmem:[%s0 + $0x30] sm:$0xff]
  %v23 = vld [vmem:[%s0 + $0x38] sm:$0xf]
  %v24 = vld [vmem:[%s0 + $0x3c] sm:$0xff]
  %v25 = vld [vmem:[%s0 + $0x44] sm:$0xff]
  %v26 = vld [vmem:[%s0 + $0x4c] sm:$0xf]
  %v27 = vld [vmem:[%s0 + $0x50] sm:$0xff]
  %v28 = vld [vmem:[%s0 + $0x58] sm:$0xff]
  %v29 = vld [vmem:[%s0 + $0x60] sm:$0xf]
  %v30 = vld [vmem:[%s0 + $0x64] sm:$0xff]
  %v31 = vld [vmem:[%s0 + $0x6c] sm:$0xff]
  %v32 = vld [vmem:[%s0 + $0x74] sm:$0xf]
  %v33 = vld [vmem:[%s0 + $0x78] sm:$0xff]
  %v34 = vld [vmem:[%s0 + $0x80] sm:$0xff]
  %v35 = vld [vmem:[%s0 + $0x88] sm:$0xf]
  %v36 = vld [vmem:[%s0 + $0x8c] sm:$0xff]
  %v37 = vld [vmem:[%s0 + $0x94] sm:$0xff]
  %v38 = vld [vmem:[%s0 + $0x9c] sm:$0xf]
  %v39 = vld [vmem:[%s0 + $0xa0] sm:$0xff]
  %v40 = vld [vmem:[%s0 + $0xa8] sm:$0xff]
  %v41 = vld [vmem:[%s0 + $0xb0] sm:$0xf]
  %v42 = vld [vmem:[%s0 + $0xb4] sm:$0xff]
  %v43 = vld [vmem:[%s0 + $0xbc] sm:$0xff]
  %v44 = vld [vmem:[%s0 + $0xc4] sm:$0xf]
  %v45 = vld [vmem:[%s0 + $0xc8] sm:$0xff]
  %v46 = vld [vmem:[%s0 + $0xd0] sm:$0xff]
  %v47 = vld [vmem:[%s0 + $0xd8] sm:$0xf]
  %v48 = vld [vmem:[%s0 + $0xdc] sm:$0xff]
  %v49 = vld [vmem:[%s0 + $0xe4] sm:$0xff]
  %v50 = vld [vmem:[%s0 + $0xec] sm:$0xf]
  %v51 = vld [vmem:[%s0 + $0xf0] sm:$0xff]
  %v52 = vld [vmem:[%s0 + $0xf8] sm:$0xff]
  %v53 = vld [vmem:[%s0 + $0x100] sm:$0xf]
  %v54 = vld [vmem:[%s1] sm:$0xf]
  %v55 = vld [vmem:[%s1 + $0x4] sm:$0xf]
  %v56 = vld [vmem:[%s1 + $0x8] sm:$0xf]
  %v57 = vld [vmem:[%s1 + $0xc] sm:$0xf]
  %v58 = vld [vmem:[%s1 + $0x10] sm:$0xf]
  %v59 = vld [vmem:[%s1 + $0x14] sm:$0xf]
  %v60 = vld [vmem:[%s1 + $0x18] sm:$0xf]
  %v61 = vld [vmem:[%s1 + $0x1c] sm:$0xf]
  %v62 = vld [vmem:[%s1 + $0x20] sm:$0xf]
  %v63 = vld [vmem:[%s1 + $0x24] sm:$0xf]
  %v64 = vld [vmem:[%s1 + $0x28] sm:$0xf]
  %v65 = vld [vmem:[%s1 + $0x2c] sm:$0xf]
  %v66 = vld [vmem:[%s1 + $0x30] sm:$0xf]
  %v67 = vld [vmem:[%s1 + $0x34] sm:$0xf]
  %v68 = vld [vmem:[%s1 + $0x38] sm:$0xf]
  %v69 = vld [vmem:[%s1 + $0x3c] sm:$0xf]
  %v70 = vld [vmem:[%s1 + $0x40] sm:$0xf]
  %v71 = vld [vmem:[%s1 + $0x44] sm:$0xf]
  %v72 = vld [vmem:[%s1 + $0x48] sm:$0xf]
  %v73 = vld [vmem:[%s1 + $0x4c] sm:$0xf]
  %v74 = vld [vmem:[%s1 + $0x50] sm:$0xf]
  %v75 = vld [vmem:[%s1 + $0x54] sm:$0xf]
  %v76 = vld [vmem:[%s1 + $0x58] sm:$0xf]
  %v77 = vld [vmem:[%s1 + $0x5c] sm:$0xf]
  %v78 = vld [vmem:[%s1 + $0x60] sm:$0xf]
  %v79 = vld [vmem:[%s1 + $0x64] sm:$0xf]
  %v80 = vld [vmem:[%s1 + $0x68] sm:$0xf]
  %v81 = vld [vmem:[%s1 + $0x6c] sm:$0xf]
  %v82 = vld [vmem:[%s1 + $0x70] sm:$0xf]
  %v83 = vld [vmem:[%s1 + $0x74] sm:$0xf]
  %v84 = vld [vmem:[%s1 + $0x78] sm:$0xf]
  %v85 = vld [vmem:[%s1 + $0x7c] sm:$0xf]
  %v86 = vld [vmem:[%s1 + $0x80] sm:$0xf]
  %v87 = vld [vmem:[%s1 + $0x84] sm:$0xf]
  %v88 = vld [vmem:[%s1 + $0x88] sm:$0xf]
  %v89 = vld [vmem:[%s1 + $0x8c] sm:$0xf]
  %v90 = vld [vmem:[%s1 + $0x90] sm:$0xf]
  %v91 = vld [vmem:[%s1 + $0x94] sm:$0xf]
  %v92 = vld [vmem:[%s1 + $0x98] sm:$0xf]
  %v93 = vld [vmem:[%s1 + $0x9c] sm:$0xf]
  %v94 = vld [vmem:[%s1 + $0xa0] sm:$0xf]
  %v95 = vld [vmem:[%s1 + $0xa4] sm:$0xf]
  %v96 = vld [vmem:[%s1 + $0xa8] sm:$0xf]
  %v97 = vld [vmem:[%s1 + $0xac] sm:$0xf]
  %v98 = vld [vmem:[%s1 + $0xb0] sm:$0xf]
  %v99 = vld [vmem:[%s1 + $0xb4] sm:$0xf]
  %v100 = vld [vmem:[%s1 + $0xb8] sm:$0xf]
  %v101 = vld [vmem:[%s1 + $0xbc] sm:$0xf]
  %v102 = vld [vmem:[%s1 + $0xc0] sm:$0xf]
  %v103 = vld [vmem:[%s1 + $0xc4] sm:$0xf]
  %v104 = vld [vmem:[%s1 + $0xc8] sm:$0xf]
  %v105 = vld [vmem:[%s1 + $0xcc] sm:$0xf]
  %v106 = vld [vmem:[%s1 + $0xd0] sm:$0xf]
  %v107 = vld [vmem:[%s1 + $0xd4] sm:$0xf]
  %v108 = vld [vmem:[%s1 + $0xd8] sm:$0xf]
  %v109 = vld [vmem:[%s1 + $0xdc] sm:$0xf]
  %v110 = vld [vmem:[%s1 + $0xe0] sm:$0xf]
  %v111 = vld [vmem:[%s1 + $0xe4] sm:$0xf]
  %v112 = vld [vmem:[%s1 + $0xe8] sm:$0xf]
  %v113 = vld [vmem:[%s1 + $0xec] sm:$0xf]
  %v114 = vld [vmem:[%s1 + $0xf0] sm:$0xf]
  %v115 = vld [vmem:[%s1 + $0xf4] sm:$0xf]
  %v116 = vld [vmem:[%s1 + $0xf8] sm:$0xf]
  %v117 = vld [vmem:[%s1 + $0xfc] sm:$0xf]
  %v118 = vld [vmem:[%s1 + $0x100] sm:$0xf]
  %v119 = vld [vmem:[%s1 + $0x104] sm:$0xf]
  %v120 = vld [vmem:[%s1 + $0x108] sm:$0xf]
  %v121 = vld [vmem:[%s1 + $0x10c] sm:$0xf]
  %v122 = vld [vmem:[%s1 + $0x110] sm:$0xf]
  %v123 = vld [vmem:[%s1 + $0x114] sm:$0xf]
  %v124 = vld [vmem:[%s1 + $0x118] sm:$0xf]
  %v125 = vld [vmem:[%s1 + $0x11c] sm:$0xf]
  %v126 = vld [vmem:[%s2] sm:$0x1]
  %v128 = vlaneseq
  %v129 = vshrl.u32 %v128, 7
  %v130 = vsub.s32 0, %v129
  %v131 = vrot.slane %v126, %v130
  %v172 = vunpack.c.l.b16 %v15
  %v173 = vunpack.c.h.b16 %v15
  %v174 = vunpack.c.l.b16 %v16
  %v175 = vunpack.c.h.b16 %v16
  %v176 = vunpack.c.l.b16 %v17
  %v177 = vunpack.c.l.b16 %v18
  %v178 = vunpack.c.h.b16 %v18
  %v179 = vunpack.c.l.b16 %v19
  %v180 = vunpack.c.h.b16 %v19
  %v181 = vunpack.c.l.b16 %v20
  %v182 = vunpack.c.l.b16 %v21
  %v183 = vunpack.c.h.b16 %v21
  %v184 = vunpack.c.l.b16 %v22
  %v185 = vunpack.c.h.b16 %v22
  %v186 = vunpack.c.l.b16 %v23
  %v187 = vunpack.c.l.b16 %v24
  %v188 = vunpack.c.h.b16 %v24
  %v189 = vunpack.c.l.b16 %v25
  %v190 = vunpack.c.h.b16 %v25
  %v191 = vunpack.c.l.b16 %v26
  %v192 = vunpack.c.l.b16 %v27
  %v193 = vunpack.c.h.b16 %v27
  %v194 = vunpack.c.l.b16 %v28
  %v195 = vunpack.c.h.b16 %v28
  %v196 = vunpack.c.l.b16 %v29
  %v197 = vunpack.c.l.b16 %v30
  %v198 = vunpack.c.h.b16 %v30
  %v199 = vunpack.c.l.b16 %v31
  %v200 = vunpack.c.h.b16 %v31
  %v201 = vunpack.c.l.b16 %v32
  %v202 = vunpack.c.l.b16 %v33
  %v203 = vunpack.c.h.b16 %v33
  %v204 = vunpack.c.l.b16 %v34
  %v205 = vunpack.c.h.b16 %v34
  %v206 = vunpack.c.l.b16 %v35
  %v207 = vunpack.c.l.b16 %v36
  %v208 = vunpack.c.h.b16 %v36
  %v209 = vunpack.c.l.b16 %v37
  %v210 = vunpack.c.h.b16 %v37
  %v211 = vunpack.c.l.b16 %v38
  %v212 = vunpack.c.l.b16 %v39
  %v213 = vunpack.c.h.b16 %v39
  %v214 = vunpack.c.l.b16 %v40
  %v215 = vunpack.c.h.b16 %v40
  %v216 = vunpack.c.l.b16 %v41
  %v217 = vunpack.c.l.b16 %v42
  %v218 = vunpack.c.h.b16 %v42
  %v219 = vunpack.c.l.b16 %v43
  %v220 = vunpack.c.h.b16 %v43
  %v221 = vunpack.c.l.b16 %v44
  %v222 = vunpack.c.l.b16 %v45
  %v223 = vunpack.c.h.b16 %v45
  %v224 = vunpack.c.l.b16 %v46
  %v225 = vunpack.c.h.b16 %v46
  %v226 = vunpack.c.l.b16 %v47
  %v227 = vunpack.c.l.b16 %v48
  %v228 = vunpack.c.h.b16 %v48
  %v229 = vunpack.c.l.b16 %v49
  %v230 = vunpack.c.h.b16 %v49
  %v231 = vunpack.c.l.b16 %v50
  %v232 = vunpack.c.l.b16 %v51
  %v233 = vunpack.c.h.b16 %v51
  %v234 = vunpack.c.l.b16 %v52
  %v235 = vunpack.c.h.b16 %v52
  %v236 = vunpack.c.l.b16 %v53
  %v237 = vpack.c.b16 %v177, %v172
  %v238 = vpack.c.b16 %v178, %v173
  %v239 = vpack.c.b16 %v179, %v174
  %v240 = vpack.c.b16 %v180, %v175
  %v241 = vpack.c.b16 %v181, %v176
  %v242 = vpack.c.b16 %v187, %v182
  %v243 = vpack.c.b16 %v188, %v183
  %v244 = vpack.c.b16 %v189, %v184
  %v245 = vpack.c.b16 %v190, %v185
  %v246 = vpack.c.b16 %v191, %v186
  %v247 = vpack.c.b16 %v197, %v192
  %v248 = vpack.c.b16 %v198, %v193
  %v249 = vpack.c.b16 %v199, %v194
  %v250 = vpack.c.b16 %v200, %v195
  %v251 = vpack.c.b16 %v201, %v196
  %v252 = vpack.c.b16 %v207, %v202
  %v253 = vpack.c.b16 %v208, %v203
  %v254 = vpack.c.b16 %v209, %v204
  %v255 = vpack.c.b16 %v210, %v205
  %v256 = vpack.c.b16 %v211, %v206
  %v257 = vpack.c.b16 %v217, %v212
  %v258 = vpack.c.b16 %v218, %v213
  %v259 = vpack.c.b16 %v219, %v214
  %v260 = vpack.c.b16 %v220, %v215
  %v261 = vpack.c.b16 %v221, %v216
  %v262 = vpack.c.b16 %v227, %v222
  %v263 = vpack.c.b16 %v228, %v223
  %v264 = vpack.c.b16 %v229, %v224
  %v265 = vpack.c.b16 %v230, %v225
  %v266 = vpack.c.b16 %v231, %v226
  %v267 = vpack.c.b16 %v232, %v232
  %v268 = vpack.c.b16 %v233, %v233
  %v269 = vpack.c.b16 %v234, %v234
  %v270 = vpack.c.b16 %v235, %v235
  %v271 = vpack.c.b16 %v236, %v236
  %v372 = vunpack.c.l.b16 %v54
  %v373 = vunpack.c.l.b16 %v55
  %v374 = vunpack.c.l.b16 %v56
  %v375 = vunpack.c.l.b16 %v57
  %v376 = vunpack.c.l.b16 %v58
  %v377 = vunpack.c.l.b16 %v59
  %v378 = vunpack.c.l.b16 %v60
  %v379 = vunpack.c.l.b16 %v61
  %v380 = vunpack.c.l.b16 %v62
  %v381 = vunpack.c.l.b16 %v63
  %v382 = vunpack.c.l.b16 %v64
  %v383 = vunpack.c.l.b16 %v65
  %v384 = vunpack.c.l.b16 %v66
  %v385 = vunpack.c.l.b16 %v67
  %v386 = vunpack.c.l.b16 %v68
  %v387 = vunpack.c.l.b16 %v69
  %v388 = vunpack.c.l.b16 %v70
  %v389 = vunpack.c.l.b16 %v71
  %v390 = vunpack.c.l.b16 %v72
  %v391 = vunpack.c.l.b16 %v73
  %v392 = vunpack.c.l.b16 %v74
  %v393 = vunpack.c.l.b16 %v75
  %v394 = vunpack.c.l.b16 %v76
  %v395 = vunpack.c.l.b16 %v77
  %v396 = vunpack.c.l.b16 %v78
  %v397 = vunpack.c.l.b16 %v79
  %v398 = vunpack.c.l.b16 %v80
  %v399 = vunpack.c.l.b16 %v81
  %v400 = vunpack.c.l.b16 %v82
  %v401 = vunpack.c.l.b16 %v83
  %v402 = vunpack.c.l.b16 %v84
  %v403 = vunpack.c.l.b16 %v85
  %v404 = vunpack.c.l.b16 %v86
  %v405 = vunpack.c.l.b16 %v87
  %v406 = vunpack.c.l.b16 %v88
  %v407 = vunpack.c.l.b16 %v89
  %v408 = vunpack.c.l.b16 %v90
  %v409 = vunpack.c.l.b16 %v91
  %v410 = vunpack.c.l.b16 %v92
  %v411 = vunpack.c.l.b16 %v93
  %v412 = vunpack.c.l.b16 %v94
  %v413 = vunpack.c.l.b16 %v95
  %v414 = vunpack.c.l.b16 %v96
  %v415 = vunpack.c.l.b16 %v97
  %v416 = vunpack.c.l.b16 %v98
  %v417 = vunpack.c.l.b16 %v99
  %v418 = vunpack.c.l.b16 %v100
  %v419 = vunpack.c.l.b16 %v101
  %v420 = vunpack.c.l.b16 %v102
  %v421 = vunpack.c.l.b16 %v103
  %v422 = vunpack.c.l.b16 %v104
  %v423 = vunpack.c.l.b16 %v105
  %v424 = vunpack.c.l.b16 %v106
  %v425 = vunpack.c.l.b16 %v107
  %v426 = vunpack.c.l.b16 %v108
  %v427 = vunpack.c.l.b16 %v109
  %v428 = vunpack.c.l.b16 %v110
  %v429 = vunpack.c.l.b16 %v111
  %v430 = vunpack.c.l.b16 %v112
  %v431 = vunpack.c.l.b16 %v113
  %v432 = vunpack.c.l.b16 %v114
  %v433 = vunpack.c.l.b16 %v115
  %v434 = vunpack.c.l.b16 %v116
  %v435 = vunpack.c.l.b16 %v117
  %v436 = vunpack.c.l.b16 %v118
  %v437 = vunpack.c.l.b16 %v119
  %v438 = vunpack.c.l.b16 %v120
  %v439 = vunpack.c.l.b16 %v121
  %v440 = vunpack.c.l.b16 %v122
  %v441 = vunpack.c.l.b16 %v123
  %v442 = vunpack.c.l.b16 %v124
  %v443 = vunpack.c.l.b16 %v125
  %v444 = vpack.c.b16 %v373, %v372
  %v445 = vpack.c.b16 %v375, %v374
  %v446 = vpack.c.b16 %v377, %v376
  %v447 = vpack.c.b16 %v379, %v378
  %v448 = vpack.c.b16 %v381, %v380
  %v449 = vpack.c.b16 %v383, %v382
  %v450 = vpack.c.b16 %v385, %v384
  %v451 = vpack.c.b16 %v387, %v386
  %v452 = vpack.c.b16 %v389, %v388
  %v453 = vpack.c.b16 %v391, %v390
  %v454 = vpack.c.b16 %v393, %v392
  %v455 = vpack.c.b16 %v395, %v394
  %v456 = vpack.c.b16 %v397, %v396
  %v457 = vpack.c.b16 %v399, %v398
  %v458 = vpack.c.b16 %v401, %v400
  %v459 = vpack.c.b16 %v403, %v402
  %v460 = vpack.c.b16 %v405, %v404
  %v461 = vpack.c.b16 %v407, %v406
  %v462 = vpack.c.b16 %v409, %v408
  %v463 = vpack.c.b16 %v411, %v410
  %v464 = vpack.c.b16 %v413, %v412
  %v465 = vpack.c.b16 %v415, %v414
  %v466 = vpack.c.b16 %v417, %v416
  %v467 = vpack.c.b16 %v419, %v418
  %v468 = vpack.c.b16 %v421, %v420
  %v469 = vpack.c.b16 %v423, %v422
  %v470 = vpack.c.b16 %v425, %v424
  %v471 = vpack.c.b16 %v427, %v426
  %v472 = vpack.c.b16 %v429, %v428
  %v473 = vpack.c.b16 %v431, %v430
  %v474 = vpack.c.b16 %v433, %v432
  %v475 = vpack.c.b16 %v435, %v434
  %v476 = vpack.c.b16 %v437, %v436
  %v477 = vpack.c.b16 %v439, %v438
  %v478 = vpack.c.b16 %v441, %v440
  %v479 = vpack.c.b16 %v443, %v442
  %vm516 = vcmask 523264
  %v518 = vsel %vm516, %v241, 0
  %v521 = vsel %vm516, %v246, 0
  %v524 = vsel %vm516, %v251, 0
  %v527 = vsel %vm516, %v256, 0
  %v530 = vsel %vm516, %v261, 0
  %v533 = vsel %vm516, %v266, 0
  %v536 = vsel %vm516, %v271, 0
  %538 = vmatprep.subr.bf16.mxu0 0
  %539 = vmatpush1.bf16.msra.mxu0 %v451
  %540 = vmatprep.subr.bf16.mxu0 0
  %541 = vmatpush1.bf16.msra.mxu0 %v450
  %542 = vmatprep.subr.bf16.mxu0 0
  %543 = vmatpush1.bf16.msra.mxu0 %v449
  %544 = vmatprep.subr.bf16.mxu0 0
  %545 = vmatpush1.bf16.msra.mxu0 %v448
  %546 = vmatprep.subr.bf16.mxu0 0
  %547 = vmatpush1.bf16.msra.mxu0 %v447
  %548 = vmatprep.subr.bf16.mxu0 0
  %549 = vmatpush1.bf16.msra.mxu0 %v446
  %550 = vmatprep.subr.bf16.mxu0 0
  %551 = vmatpush1.bf16.msra.mxu0 %v445
  %552 = vmatprep.subr.bf16.mxu0 0
  %553 = vmatpush1.bf16.msra.mxu0 %v444
  %554 = vmatprep.subr.bf16.mxu0 0
  %555 = vmatpush2.bf16.msra.mxu0 %v459
  %556 = vmatprep.subr.bf16.mxu0 0
  %557 = vmatpush2.bf16.msra.mxu0 %v458
  %558 = vmatprep.subr.bf16.mxu0 0
  %559 = vmatpush2.bf16.msra.mxu0 %v457
  %560 = vmatprep.subr.bf16.mxu0 0
  %561 = vmatpush2.bf16.msra.mxu0 %v456
  %562 = vmatprep.subr.bf16.mxu0 0
  %563 = vmatpush2.bf16.msra.mxu0 %v455
  %564 = vmatprep.subr.bf16.mxu0 0
  %565 = vmatpush2.bf16.msra.mxu0 %v454
  %566 = vmatprep.subr.bf16.mxu0 0
  %567 = vmatpush2.bf16.msra.mxu0 %v453
  %568 = vmatprep.subr.bf16.mxu0 0
  %569 = vmatpush2.bf16.msra.mxu0 %v452
  %570 = vmatprep.mubr.bf16.mxu0 %v238
  %571 = vmatmul.mubr.bf16.gmra.mxu0 %v237
  %v572 = vpop.f32.mrf.mxu0
  %v573 = vadd.f32 %v131, %v572
  %v574 = vpop.f32.mrf.mxu0
  %v575 = vpop.f32.mrf.mxu0
  %v576 = vadd.f32 %v131, %v575
  %v577 = vpop.f32.mrf.mxu0
  %578 = vmatprep.mubr.bf16.mxu0 %v243
  %579 = vmatmul.mubr.bf16.gmra.mxu0 %v242
  %v580 = vpop.f32.mrf.mxu0
  %v581 = vadd.f32 %v131, %v580
  %v582 = vpop.f32.mrf.mxu0
  %v583 = vpop.f32.mrf.mxu0
  %v584 = vadd.f32 %v131, %v583
  %v585 = vpop.f32.mrf.mxu0
  %586 = vmatprep.mubr.bf16.mxu0 %v248
  %587 = vmatmul.mubr.bf16.gmra.mxu0 %v247
  %v588 = vpop.f32.mrf.mxu0
  %v589 = vadd.f32 %v131, %v588
  %v590 = vpop.f32.mrf.mxu0
  %v591 = vpop.f32.mrf.mxu0
  %v592 = vadd.f32 %v131, %v591
  %v593 = vpop.f32.mrf.mxu0
  %594 = vmatprep.mubr.bf16.mxu0 %v253
  %595 = vmatmul.mubr.bf16.gmra.mxu0 %v252
  %v596 = vpop.f32.mrf.mxu0
  %v597 = vadd.f32 %v131, %v596
  %v598 = vpop.f32.mrf.mxu0
  %v599 = vpop.f32.mrf.mxu0
  %v600 = vadd.f32 %v131, %v599
  %v601 = vpop.f32.mrf.mxu0
  %602 = vmatprep.mubr.bf16.mxu0 %v258
  %603 = vmatmul.mubr.bf16.gmra.mxu0 %v257
  %v604 = vpop.f32.mrf.mxu0
  %v605 = vadd.f32 %v131, %v604
  %v606 = vpop.f32.mrf.mxu0
  %v607 = vpop.f32.mrf.mxu0
  %v608 = vadd.f32 %v131, %v607
  %v609 = vpop.f32.mrf.mxu0
  %610 = vmatprep.mubr.bf16.mxu0 %v263
  %611 = vmatmul.mubr.bf16.gmra.mxu0 %v262
  %v612 = vpop.f32.mrf.mxu0
  %v613 = vadd.f32 %v131, %v612
  %v614 = vpop.f32.mrf.mxu0
  %v615 = vpop.f32.mrf.mxu0
  %v616 = vadd.f32 %v131, %v615
  %v617 = vpop.f32.mrf.mxu0
  %618 = vmatprep.mubr.bf16.mxu0 %v268
  %619 = vmatmul.mubr.bf16.gmra.mxu0 %v267
  %v620 = vpop.f32.mrf.mxu0
  %v621 = vadd.f32 %v131, %v620
  %v622 = vpop.f32.mrf.mxu0
  %v623 = vpop.f32.mrf.mxu0
  %v624 = vpop.f32.mrf.mxu0
  %625 = vdwg.mxu0
  %626 = vmatprep.subr.bf16.mxu0 0
  %627 = vmatpush1.bf16.msra.mxu0 %v467
  %628 = vmatprep.subr.bf16.mxu0 0
  %629 = vmatpush1.bf16.msra.mxu0 %v466
  %630 = vmatprep.subr.bf16.mxu0 0
  %631 = vmatpush1.bf16.msra.mxu0 %v465
  %632 = vmatprep.subr.bf16.mxu0 0
  %633 = vmatpush1.bf16.msra.mxu0 %v464
  %634 = vmatprep.subr.bf16.mxu0 0
  %635 = vmatpush1.bf16.msra.mxu0 %v463
  %636 = vmatprep.subr.bf16.mxu0 0
  %637 = vmatpush1.bf16.msra.mxu0 %v462
  %638 = vmatprep.subr.bf16.mxu0 0
  %639 = vmatpush1.bf16.msra.mxu0 %v461
  %640 = vmatprep.subr.bf16.mxu0 0
  %641 = vmatpush1.bf16.msra.mxu0 %v460
  %642 = vmatprep.subr.bf16.mxu0 0
  %643 = vmatpush2.bf16.msra.mxu0 %v475
  %644 = vmatprep.subr.bf16.mxu0 0
  %645 = vmatpush2.bf16.msra.mxu0 %v474
  %646 = vmatprep.subr.bf16.mxu0 0
  %647 = vmatpush2.bf16.msra.mxu0 %v473
  %648 = vmatprep.subr.bf16.mxu0 0
  %649 = vmatpush2.bf16.msra.mxu0 %v472
  %650 = vmatprep.subr.bf16.mxu0 0
  %651 = vmatpush2.bf16.msra.mxu0 %v471
  %652 = vmatprep.subr.bf16.mxu0 0
  %653 = vmatpush2.bf16.msra.mxu0 %v470
  %654 = vmatprep.subr.bf16.mxu0 0
  %655 = vmatpush2.bf16.msra.mxu0 %v469
  %656 = vmatprep.subr.bf16.mxu0 0
  %657 = vmatpush2.bf16.msra.mxu0 %v468
  %658 = vmatprep.mubr.bf16.mxu0 %v240
  %659 = vmatmul.mubr.bf16.gmra.mxu0 %v239
  %v660 = vpop.f32.mrf.mxu0
  %v661 = vadd.f32 %v573, %v660
  %v662 = vpop.f32.mrf.mxu0
  %v663 = vpop.f32.mrf.mxu0
  %v664 = vadd.f32 %v576, %v663
  %v665 = vpop.f32.mrf.mxu0
  %666 = vmatprep.mubr.bf16.mxu0 %v245
  %667 = vmatmul.mubr.bf16.gmra.mxu0 %v244
  %v668 = vpop.f32.mrf.mxu0
  %v669 = vadd.f32 %v581, %v668
  %v670 = vpop.f32.mrf.mxu0
  %v671 = vpop.f32.mrf.mxu0
  %v672 = vadd.f32 %v584, %v671
  %v673 = vpop.f32.mrf.mxu0
  %674 = vmatprep.mubr.bf16.mxu0 %v250
  %675 = vmatmul.mubr.bf16.gmra.mxu0 %v249
  %v676 = vpop.f32.mrf.mxu0
  %v677 = vadd.f32 %v589, %v676
  %v678 = vpop.f32.mrf.mxu0
  %v679 = vpop.f32.mrf.mxu0
  %v680 = vadd.f32 %v592, %v679
  %v681 = vpop.f32.mrf.mxu0
  %682 = vmatprep.mubr.bf16.mxu0 %v255
  %683 = vmatmul.mubr.bf16.gmra.mxu0 %v254
  %v684 = vpop.f32.mrf.mxu0
  %v685 = vadd.f32 %v597, %v684
  %v686 = vpop.f32.mrf.mxu0
  %v687 = vpop.f32.mrf.mxu0
  %v688 = vadd.f32 %v600, %v687
  %v689 = vpop.f32.mrf.mxu0
  %690 = vmatprep.mubr.bf16.mxu0 %v260
  %691 = vmatmul.mubr.bf16.gmra.mxu0 %v259
  %v692 = vpop.f32.mrf.mxu0
  %v693 = vadd.f32 %v605, %v692
  %v694 = vpop.f32.mrf.mxu0
  %v695 = vpop.f32.mrf.mxu0
  %v696 = vadd.f32 %v608, %v695
  %v697 = vpop.f32.mrf.mxu0
  %698 = vmatprep.mubr.bf16.mxu0 %v265
  %699 = vmatmul.mubr.bf16.gmra.mxu0 %v264
  %v700 = vpop.f32.mrf.mxu0
  %v701 = vadd.f32 %v613, %v700
  %v702 = vpop.f32.mrf.mxu0
  %v703 = vpop.f32.mrf.mxu0
  %v704 = vadd.f32 %v616, %v703
  %v705 = vpop.f32.mrf.mxu0
  %706 = vmatprep.mubr.bf16.mxu0 %v270
  %707 = vmatmul.mubr.bf16.gmra.mxu0 %v269
  %v708 = vpop.f32.mrf.mxu0
  %v709 = vadd.f32 %v621, %v708
  %v710 = vpop.f32.mrf.mxu0
  %v711 = vpop.f32.mrf.mxu0
  %v712 = vpop.f32.mrf.mxu0
  %713 = vdwg.mxu0
  %714 = vmatprep.subr.bf16.mxu0 0
  %715 = vmatpush1.bf16.msra.mxu0 0
  %716 = vmatprep.subr.bf16.mxu0 0
  %717 = vmatpush1.bf16.msra.mxu0 0
  %718 = vmatprep.subr.bf16.mxu0 0
  %719 = vmatpush1.bf16.msra.mxu0 0
  %720 = vmatprep.subr.bf16.mxu0 0
  %721 = vmatpush1.bf16.msra.mxu0 0
  %722 = vmatprep.subr.bf16.mxu0 0
  %723 = vmatpush1.bf16.msra.mxu0 %v479
  %724 = vmatprep.subr.bf16.mxu0 0
  %725 = vmatpush1.bf16.msra.mxu0 %v478
  %726 = vmatprep.subr.bf16.mxu0 0
  %727 = vmatpush1.bf16.msra.mxu0 %v477
  %728 = vmatprep.subr.bf16.mxu0 0
  %729 = vmatpush1.bf16.msra.mxu0 %v476
  %730 = vmatprep.subr.bf16.mxu0 0
  %731 = vmatpush2.bf16.msra.mxu0 0
  %732 = vmatprep.subr.bf16.mxu0 0
  %733 = vmatpush2.bf16.msra.mxu0 0
  %734 = vmatprep.subr.bf16.mxu0 0
  %735 = vmatpush2.bf16.msra.mxu0 0
  %736 = vmatprep.subr.bf16.mxu0 0
  %737 = vmatpush2.bf16.msra.mxu0 0
  %738 = vmatprep.subr.bf16.mxu0 0
  %739 = vmatpush2.bf16.msra.mxu0 0
  %740 = vmatprep.subr.bf16.mxu0 0
  %741 = vmatpush2.bf16.msra.mxu0 0
  %742 = vmatprep.subr.bf16.mxu0 0
  %743 = vmatpush2.bf16.msra.mxu0 0
  %744 = vmatprep.subr.bf16.mxu0 0
  %745 = vmatpush2.bf16.msra.mxu0 0
  %746 = vmatprep.mubr.bf16.mxu0 0
  %747 = vmatmul.mubr.bf16.gmra.mxu0 %v518
  %v748 = vpop.f32.mrf.mxu0
  %v749 = vadd.f32 %v661, %v748
  %v750 = vpop.f32.mrf.mxu0
  %v751 = vpop.f32.mrf.mxu0
  %v752 = vadd.f32 %v664, %v751
  %v753 = vpop.f32.mrf.mxu0
  %754 = vmatprep.mubr.bf16.mxu0 0
  %755 = vmatmul.mubr.bf16.gmra.mxu0 %v521
  %v756 = vpop.f32.mrf.mxu0
  %v757 = vadd.f32 %v669, %v756
  %v758 = vpop.f32.mrf.mxu0
  %v759 = vpop.f32.mrf.mxu0
  %v760 = vadd.f32 %v672, %v759
  %v761 = vpop.f32.mrf.mxu0
  %762 = vmatprep.mubr.bf16.mxu0 0
  %763 = vmatmul.mubr.bf16.gmra.mxu0 %v524
  %v764 = vpop.f32.mrf.mxu0
  %v765 = vadd.f32 %v677, %v764
  %v766 = vpop.f32.mrf.mxu0
  %v767 = vpop.f32.mrf.mxu0
  %v768 = vadd.f32 %v680, %v767
  %v769 = vpop.f32.mrf.mxu0
  %770 = vmatprep.mubr.bf16.mxu0 0
  %771 = vmatmul.mubr.bf16.gmra.mxu0 %v527
  %v772 = vpop.f32.mrf.mxu0
  %v773 = vadd.f32 %v685, %v772
  %v774 = vpop.f32.mrf.mxu0
  %v775 = vpop.f32.mrf.mxu0
  %v776 = vadd.f32 %v688, %v775
  %v777 = vpop.f32.mrf.mxu0
  %778 = vmatprep.mubr.bf16.mxu0 0
  %779 = vmatmul.mubr.bf16.gmra.mxu0 %v530
  %v780 = vpop.f32.mrf.mxu0
  %v781 = vadd.f32 %v693, %v780
  %v782 = vpop.f32.mrf.mxu0
  %v783 = vpop.f32.mrf.mxu0
  %v784 = vadd.f32 %v696, %v783
  %v785 = vpop.f32.mrf.mxu0
  %786 = vmatprep.mubr.bf16.mxu0 0
  %787 = vmatmul.mubr.bf16.gmra.mxu0 %v533
  %v788 = vpop.f32.mrf.mxu0
  %v789 = vadd.f32 %v701, %v788
  %v790 = vpop.f32.mrf.mxu0
  %v791 = vpop.f32.mrf.mxu0
  %v792 = vadd.f32 %v704, %v791
  %v793 = vpop.f32.mrf.mxu0
  %794 = vmatprep.mubr.bf16.mxu0 0
  %795 = vmatmul.mubr.bf16.gmra.mxu0 %v536
  %v796 = vpop.f32.mrf.mxu0
  %v797 = vadd.f32 %v709, %v796
  %v798 = vpop.f32.mrf.mxu0
  %v799 = vpop.f32.mrf.mxu0
  %v800 = vpop.f32.mrf.mxu0
  %801 = vdwg.mxu0
  %v802 = vpack.c.bf16 %v752, %v749
  %v803 = vpack.c.bf16 %v760, %v757
  %v804 = vpack.c.bf16 %v768, %v765
  %v805 = vpack.c.bf16 %v776, %v773
  %v806 = vpack.c.bf16 %v784, %v781
  %v807 = vpack.c.bf16 %v792, %v789
  %v808 = vpack.c.bf16 %v797, %v797
  %v816 = vunpack.c.l.b16 %v802
  %v817 = vunpack.c.h.b16 %v802
  %v818 = vunpack.c.l.b16 %v803
  %v819 = vunpack.c.h.b16 %v803
  %v820 = vunpack.c.l.b16 %v804
  %v821 = vunpack.c.h.b16 %v804
  %v822 = vunpack.c.l.b16 %v805
  %v823 = vunpack.c.h.b16 %v805
  %v824 = vunpack.c.l.b16 %v806
  %v825 = vunpack.c.h.b16 %v806
  %v826 = vunpack.c.l.b16 %v807
  %v827 = vunpack.c.h.b16 %v807
  %v828 = vunpack.c.l.b16 %v808
  %v829 = vpack.c.b16 %v816, %v816
  %v830 = vpack.c.b16 %v817, %v817
  %v831 = vpack.c.b16 %v818, %v818
  %v832 = vpack.c.b16 %v819, %v819
  %v833 = vpack.c.b16 %v820, %v820
  %v834 = vpack.c.b16 %v821, %v821
  %v835 = vpack.c.b16 %v822, %v822
  %v836 = vpack.c.b16 %v823, %v823
  %v837 = vpack.c.b16 %v824, %v824
  %v838 = vpack.c.b16 %v825, %v825
  %v839 = vpack.c.b16 %v826, %v826
  %v840 = vpack.c.b16 %v827, %v827
  %v841 = vpack.c.b16 %v828, %v828
  %855 = vst [vmem:[%s3] sm:$0xf] %v829
  %856 = vst [vmem:[%s3 + $0x4] sm:$0xf] %v830
  %857 = vst [vmem:[%s3 + $0x8] sm:$0xf] %v831
  %858 = vst [vmem:[%s3 + $0xc] sm:$0xf] %v832
  %859 = vst [vmem:[%s3 + $0x10] sm:$0xf] %v833
  %860 = vst [vmem:[%s3 + $0x14] sm:$0xf] %v834
  %861 = vst [vmem:[%s3 + $0x18] sm:$0xf] %v835
  %862 = vst [vmem:[%s3 + $0x1c] sm:$0xf] %v836
  %863 = vst [vmem:[%s3 + $0x20] sm:$0xf] %v837
  %864 = vst [vmem:[%s3 + $0x24] sm:$0xf] %v838
  %865 = vst [vmem:[%s3 + $0x28] sm:$0xf] %v839
  %866 = vst [vmem:[%s3 + $0x2c] sm:$0xf] %v840
  %867 = vst [vmem:[%s3 + $0x30] sm:$0xf] %v841
  // Predicated region
  $region14: #{vae_forward.12} parent=0 // pred_check
    _
  $region15: #{vae_forward.12} parent=0 // pred_check_branch
    %869 = sbr.rel (0) target = $region17
  $region16: #{vae_forward.12} parent=0 // pred_region
    _
  $region17: #{vae_forward.12} parent=0 // pred_fallthru
    _
  // Predicated region
  $region18: #{vae_forward.12} parent=0 // pred_check
    _
  $region19: #{vae_forward.12} parent=0 // pred_check_branch
    %871 = sbr.rel (0) target = $region21
  $region20: #{vae_forward.12} parent=0 // pred_region
    _
  $region21: #{vae_forward.12} parent=0 // pred_fallthru
    _

// kernel: vae_forward.13
$region0: #{vae_forward.13}
  #allocation0 [shape = 'u32[]', space=smem, size = 0x4, offset = 0x4, fixed_abs, tag = 'smem constant byte address 0x4 - core index']
  #allocation1 [shape = 'u32[144,128]{1,0:T(1,128)}', space=vmem, size = 0x12000, scoped, tag = 'internal scratch']
  %s0 = inlined_call_operand.vmem [shape: bf16[8,3136], index: 0, kind: input, shape index: {}]
  %s1 = inlined_call_operand.vmem [shape: bf16[3136,128], index: 1, kind: input, shape index: {}]
  %s2 = inlined_call_operand.vmem [shape: f32[1,128], index: 2, kind: input, shape index: {}]
  %s3 = inlined_call_operand.vmem [shape: f32[8,32], index: 3, kind: input, shape index: {}]
  %s4 = inlined_call_operand.vmem [shape: bf16[32,3136], index: 4, kind: input, shape index: {}]
  %s5 = inlined_call_operand.vmem [shape: f32[1,3136], index: 5, kind: input, shape index: {}]
  %s6 = inlined_call_operand.vmem [shape: f32[8,128], index: 6, kind: output, shape index: {0}]
  %s7 = inlined_call_operand.vmem [shape: bf16[8,3136], index: 7, kind: output, shape index: {1}]
  %8 = xla_tuple %s6, %s7
  %s9 = sld [smem:[#allocation0]]
  $region42: #{vae_forward.13} parent=0
    _
  %s11 = ssub.s32 1, %s9
  %s12 = scalar_select 0, %s11, %s9
  // Predicated region
  $region2: #{vae_forward.13} parent=0 // pred_check
    _
  $region3: #{vae_forward.13} parent=0 // pred_check_branch
    %14 = sbr.rel (0) target = $region5
  $region4: #{vae_forward.13} parent=0 // pred_region
    _
  $region5: #{vae_forward.13} parent=0 // pred_fallthru
    _
  // Predicated region
  $region6: #{vae_forward.13} parent=0 // pred_check
    _
  $region7: #{vae_forward.13} parent=0 // pred_check_branch
    %16 = sbr.rel (0) target = $region9
  $region8: #{vae_forward.13} parent=0 // pred_region
    _
  $region9: #{vae_forward.13} parent=0 // pred_fallthru
    _
  // Predicated region
  $region10: #{vae_forward.13} parent=0 // pred_check
    _
  $region11: #{vae_forward.13} parent=0 // pred_check_branch
    %18 = sbr.rel (0) target = $region13
  $region12: #{vae_forward.13} parent=0 // pred_region
    _
  $region13: #{vae_forward.13} parent=0 // pred_fallthru
    _
  // Predicated region
  $region14: #{vae_forward.13} parent=0 // pred_check
    _
  $region15: #{vae_forward.13} parent=0 // pred_check_branch
    %20 = sbr.rel (0) target = $region17
  $region16: #{vae_forward.13} parent=0 // pred_region
    _
  $region17: #{vae_forward.13} parent=0 // pred_fallthru
    _
  // Predicated region
  $region18: #{vae_forward.13} parent=0 // pred_check
    _
  $region19: #{vae_forward.13} parent=0 // pred_check_branch
    %22 = sbr.rel (0) target = $region21
  $region20: #{vae_forward.13} parent=0 // pred_region
    _
  $region21: #{vae_forward.13} parent=0 // pred_fallthru
    _
  // Predicated region
  $region22: #{vae_forward.13} parent=0 // pred_check
    _
  $region23: #{vae_forward.13} parent=0 // pred_check_branch
    %24 = sbr.rel (0) target = $region25
  $region24: #{vae_forward.13} parent=0 // pred_region
    _
  $region25: #{vae_forward.13} parent=0 // pred_fallthru
    _
  %v26 = vld [vmem:[%s0] sm:$0xff]
  %v27 = vld [vmem:[%s0 + $0x8] sm:$0xff]
  %v28 = vld [vmem:[%s0 + $0x10] sm:$0xff]
  %v29 = vld [vmem:[%s0 + $0x18] sm:$0xff]
  %v30 = vld [vmem:[%s0 + $0x20] sm:$0xff]
  %v31 = vld [vmem:[%s0 + $0x28] sm:$0xff]
  %v32 = vld [vmem:[%s0 + $0x30] sm:$0xff]
  %v33 = vld [vmem:[%s0 + $0x38] sm:$0xff]
  %v34 = vld [vmem:[%s0 + $0x40] sm:$0xff]
  %v35 = vld [vmem:[%s0 + $0x48] sm:$0xff]
  %v36 = vld [vmem:[%s0 + $0x50] sm:$0xff]
  %v37 = vld [vmem:[%s0 + $0x58] sm:$0xff]
  %v38 = vld [vmem:[%s0 + $0x60] sm:$0xf]
  %v39 = vld [vmem:[%s1] sm:$0xf]
  %v40 = vld [vmem:[%s1 + $0x4] sm:$0xf]
  %v41 = vld [vmem:[%s1 + $0x8] sm:$0xf]
  %v42 = vld [vmem:[%s1 + $0xc] sm:$0xf]
  %v43 = vld [vmem:[%s1 + $0x10] sm:$0xf]
  %v44 = vld [vmem:[%s1 + $0x14] sm:$0xf]
  %v45 = vld [vmem:[%s1 + $0x18] sm:$0xf]
  %v46 = vld [vmem:[%s1 + $0x1c] sm:$0xf]
  %v47 = vld [vmem:[%s1 + $0x20] sm:$0xf]
  %v48 = vld [vmem:[%s1 + $0x24] sm:$0xf]
  %v49 = vld [vmem:[%s1 + $0x28] sm:$0xf]
  %v50 = vld [vmem:[%s1 + $0x2c] sm:$0xf]
  %v51 = vld [vmem:[%s1 + $0x30] sm:$0xf]
  %v52 = vld [vmem:[%s1 + $0x34] sm:$0xf]
  %v53 = vld [vmem:[%s1 + $0x38] sm:$0xf]
  %v54 = vld [vmem:[%s1 + $0x3c] sm:$0xf]
  %v55 = vld [vmem:[%s1 + $0x40] sm:$0xf]
  %v56 = vld [vmem:[%s1 + $0x44] sm:$0xf]
  %v57 = vld [vmem:[%s1 + $0x48] sm:$0xf]
  %v58 = vld [vmem:[%s1 + $0x4c] sm:$0xf]
  %v59 = vld [vmem:[%s1 + $0x50] sm:$0xf]
  %v60 = vld [vmem:[%s1 + $0x54] sm:$0xf]
  %v61 = vld [vmem:[%s1 + $0x58] sm:$0xf]
  %v62 = vld [vmem:[%s1 + $0x5c] sm:$0xf]
  %v63 = vld [vmem:[%s1 + $0x60] sm:$0xf]
  %v64 = vld [vmem:[%s1 + $0x64] sm:$0xf]
  %v65 = vld [vmem:[%s1 + $0x68] sm:$0xf]
  %v66 = vld [vmem:[%s1 + $0x6c] sm:$0xf]
  %v67 = vld [vmem:[%s1 + $0x70] sm:$0xf]
  %v68 = vld [vmem:[%s1 + $0x74] sm:$0xf]
  %v69 = vld [vmem:[%s1 + $0x78] sm:$0xf]
  %v70 = vld [vmem:[%s1 + $0x7c] sm:$0xf]
  %v71 = vld [vmem:[%s1 + $0x80] sm:$0xf]
  %v72 = vld [vmem:[%s1 + $0x84] sm:$0xf]
  %v73 = vld [vmem:[%s1 + $0x88] sm:$0xf]
  %v74 = vld [vmem:[%s1 + $0x8c] sm:$0xf]
  %v75 = vld [vmem:[%s1 + $0x90] sm:$0xf]
  %v76 = vld [vmem:[%s1 + $0x94] sm:$0xf]
  %v77 = vld [vmem:[%s1 + $0x98] sm:$0xf]
  %v78 = vld [vmem:[%s1 + $0x9c] sm:$0xf]
  %v79 = vld [vmem:[%s1 + $0xa0] sm:$0xf]
  %v80 = vld [vmem:[%s1 + $0xa4] sm:$0xf]
  %v81 = vld [vmem:[%s1 + $0xa8] sm:$0xf]
  %v82 = vld [vmem:[%s1 + $0xac] sm:$0xf]
  %v83 = vld [vmem:[%s1 + $0xb0] sm:$0xf]
  %v84 = vld [vmem:[%s1 + $0xb4] sm:$0xf]
  %v85 = vld [vmem:[%s1 + $0xb8] sm:$0xf]
  %v86 = vld [vmem:[%s1 + $0xbc] sm:$0xf]
  %v87 = vld [vmem:[%s1 + $0xc0] sm:$0xf]
  %v88 = vld [vmem:[%s1 + $0xc4] sm:$0xf]
  %v89 = vld [vmem:[%s1 + $0xc8] sm:$0xf]
  %v90 = vld [vmem:[%s1 + $0xcc] sm:$0xf]
  %v91 = vld [vmem:[%s1 + $0xd0] sm:$0xf]
  %v92 = vld [vmem:[%s1 + $0xd4] sm:$0xf]
  %v93 = vld [vmem:[%s1 + $0xd8] sm:$0xf]
  %v94 = vld [vmem:[%s1 + $0xdc] sm:$0xf]
  %v95 = vld [vmem:[%s1 + $0xe0] sm:$0xf]
  %v96 = vld [vmem:[%s1 + $0xe4] sm:$0xf]
  %v97 = vld [vmem:[%s1 + $0xe8] sm:$0xf]
  %v98 = vld [vmem:[%s1 + $0xec] sm:$0xf]
  %v99 = vld [vmem:[%s1 + $0xf0] sm:$0xf]
  %v100 = vld [vmem:[%s1 + $0xf4] sm:$0xf]
  %v101 = vld [vmem:[%s1 + $0xf8] sm:$0xf]
  %v102 = vld [vmem:[%s1 + $0xfc] sm:$0xf]
  %v103 = vld [vmem:[%s1 + $0x100] sm:$0xf]
  %v104 = vld [vmem:[%s1 + $0x104] sm:$0xf]
  %v105 = vld [vmem:[%s1 + $0x108] sm:$0xf]
  %v106 = vld [vmem:[%s1 + $0x10c] sm:$0xf]
  %v107 = vld [vmem:[%s1 + $0x110] sm:$0xf]
  %v108 = vld [vmem:[%s1 + $0x114] sm:$0xf]
  %v109 = vld [vmem:[%s1 + $0x118] sm:$0xf]
  %v110 = vld [vmem:[%s1 + $0x11c] sm:$0xf]
  %v111 = vld [vmem:[%s1 + $0x120] sm:$0xf]
  %v112 = vld [vmem:[%s1 + $0x124] sm:$0xf]
  %v113 = vld [vmem:[%s1 + $0x128] sm:$0xf]
  %v114 = vld [vmem:[%s1 + $0x12c] sm:$0xf]
  %v115 = vld [vmem:[%s1 + $0x130] sm:$0xf]
  %v116 = vld [vmem:[%s1 + $0x134] sm:$0xf]
  %v117 = vld [vmem:[%s1 + $0x138] sm:$0xf]
  %v118 = vld [vmem:[%s1 + $0x13c] sm:$0xf]
  %v119 = vld [vmem:[%s1 + $0x140] sm:$0xf]
  %v120 = vld [vmem:[%s1 + $0x144] sm:$0xf]
  %v121 = vld [vmem:[%s1 + $0x148] sm:$0xf]
  %v122 = vld [vmem:[%s1 + $0x14c] sm:$0xf]
  %v123 = vld [vmem:[%s1 + $0x150] sm:$0xf]
  %v124 = vld [vmem:[%s1 + $0x154] sm:$0xf]
  %v125 = vld [vmem:[%s1 + $0x158] sm:$0xf]
  %v126 = vld [vmem:[%s1 + $0x15c] sm:$0xf]
  %v127 = vld [vmem:[%s1 + $0x160] sm:$0xf]
  %v128 = vld [vmem:[%s1 + $0x164] sm:$0xf]
  %v129 = vld [vmem:[%s1 + $0x168] sm:$0xf]
  %v130 = vld [vmem:[%s1 + $0x16c] sm:$0xf]
  %v131 = vld [vmem:[%s1 + $0x170] sm:$0xf]
  %v132 = vld [vmem:[%s1 + $0x174] sm:$0xf]
  %v133 = vld [vmem:[%s1 + $0x178] sm:$0xf]
  %v134 = vld [vmem:[%s1 + $0x17c] sm:$0xf]
  %v135 = vld [vmem:[%s1 + $0x180] sm:$0xf]
  %v136 = vld [vmem:[%s1 + $0x184] sm:$0xf]
  %v137 = vld [vmem:[%s1 + $0x188] sm:$0xf]
  %v138 = vld [vmem:[%s1 + $0x18c] sm:$0xf]
  %v139 = vld [vmem:[%s1 + $0x190] sm:$0xf]
  %v140 = vld [vmem:[%s1 + $0x194] sm:$0xf]
  %v141 = vld [vmem:[%s1 + $0x198] sm:$0xf]
  %v142 = vld [vmem:[%s1 + $0x19c] sm:$0xf]
  %v143 = vld [vmem:[%s1 + $0x1a0] sm:$0xf]
  %v144 = vld [vmem:[%s1 + $0x1a4] sm:$0xf]
  %v145 = vld [vmem:[%s1 + $0x1a8] sm:$0xf]
  %v146 = vld [vmem:[%s1 + $0x1ac] sm:$0xf]
  %v147 = vld [vmem:[%s1 + $0x1b0] sm:$0xf]
  %v148 = vld [vmem:[%s1 + $0x1b4] sm:$0xf]
  %v149 = vld [vmem:[%s1 + $0x1b8] sm:$0xf]
  %v150 = vld [vmem:[%s1 + $0x1bc] sm:$0xf]
  %v151 = vld [vmem:[%s1 + $0x1c0] sm:$0xf]
  %v152 = vld [vmem:[%s1 + $0x1c4] sm:$0xf]
  %v153 = vld [vmem:[%s1 + $0x1c8] sm:$0xf]
  %v154 = vld [vmem:[%s1 + $0x1cc] sm:$0xf]
  %v155 = vld [vmem:[%s1 + $0x1d0] sm:$0xf]
  %v156 = vld [vmem:[%s1 + $0x1d4] sm:$0xf]
  %v157 = vld [vmem:[%s1 + $0x1d8] sm:$0xf]
  %v158 = vld [vmem:[%s1 + $0x1dc] sm:$0xf]
  %v159 = vld [vmem:[%s1 + $0x1e0] sm:$0xf]
  %v160 = vld [vmem:[%s1 + $0x1e4] sm:$0xf]
  %v161 = vld [vmem:[%s1 + $0x1e8] sm:$0xf]
  %v162 = vld [vmem:[%s1 + $0x1ec] sm:$0xf]
  %v163 = vld [vmem:[%s1 + $0x1f0] sm:$0xf]
  %v164 = vld [vmem:[%s1 + $0x1f4] sm:$0xf]
  %v165 = vld [vmem:[%s1 + $0x1f8] sm:$0xf]
  %v166 = vld [vmem:[%s1 + $0x1fc] sm:$0xf]
  %v167 = vld [vmem:[%s1 + $0x200] sm:$0xf]
  %v168 = vld [vmem:[%s1 + $0x204] sm:$0xf]
  %v169 = vld [vmem:[%s1 + $0x208] sm:$0xf]
  %v170 = vld [vmem:[%s1 + $0x20c] sm:$0xf]
  %v171 = vld [vmem:[%s1 + $0x210] sm:$0xf]
  %v172 = vld [vmem:[%s1 + $0x214] sm:$0xf]
  %v173 = vld [vmem:[%s1 + $0x218] sm:$0xf]
  %v174 = vld [vmem:[%s1 + $0x21c] sm:$0xf]
  %v175 = vld [vmem:[%s1 + $0x220] sm:$0xf]
  %v176 = vld [vmem:[%s1 + $0x224] sm:$0xf]
  %v177 = vld [vmem:[%s1 + $0x228] sm:$0xf]
  %v178 = vld [vmem:[%s1 + $0x22c] sm:$0xf]
  %v179 = vld [vmem:[%s1 + $0x230] sm:$0xf]
  %v180 = vld [vmem:[%s1 + $0x234] sm:$0xf]
  %v181 = vld [vmem:[%s1 + $0x238] sm:$0xf]
  %v182 = vld [vmem:[%s1 + $0x23c] sm:$0xf]
  %v183 = vld [vmem:[%s1 + $0x240] sm:$0xf]
  %v184 = vld [vmem:[%s1 + $0x244] sm:$0xf]
  %v185 = vld [vmem:[%s1 + $0x248] sm:$0xf]
  %v186 = vld [vmem:[%s1 + $0x24c] sm:$0xf]
  %v187 = vld [vmem:[%s1 + $0x250] sm:$0xf]
  %v188 = vld [vmem:[%s1 + $0x254] sm:$0xf]
  %v189 = vld [vmem:[%s1 + $0x258] sm:$0xf]
  %v190 = vld [vmem:[%s1 + $0x25c] sm:$0xf]
  %v191 = vld [vmem:[%s1 + $0x260] sm:$0xf]
  %v192 = vld [vmem:[%s1 + $0x264] sm:$0xf]
  %v193 = vld [vmem:[%s1 + $0x268] sm:$0xf]
  %v194 = vld [vmem:[%s1 + $0x26c] sm:$0xf]
  %v195 = vld [vmem:[%s1 + $0x270] sm:$0xf]
  %v196 = vld [vmem:[%s1 + $0x274] sm:$0xf]
  %v197 = vld [vmem:[%s1 + $0x278] sm:$0xf]
  %v198 = vld [vmem:[%s1 + $0x27c] sm:$0xf]
  %v199 = vld [vmem:[%s1 + $0x280] sm:$0xf]
  %v200 = vld [vmem:[%s1 + $0x284] sm:$0xf]
  %v201 = vld [vmem:[%s1 + $0x288] sm:$0xf]
  %v202 = vld [vmem:[%s1 + $0x28c] sm:$0xf]
  %v203 = vld [vmem:[%s1 + $0x290] sm:$0xf]
  %v204 = vld [vmem:[%s1 + $0x294] sm:$0xf]
  %v205 = vld [vmem:[%s1 + $0x298] sm:$0xf]
  %v206 = vld [vmem:[%s1 + $0x29c] sm:$0xf]
  %v207 = vld [vmem:[%s1 + $0x2a0] sm:$0xf]
  %v208 = vld [vmem:[%s1 + $0x2a4] sm:$0xf]
  %v209 = vld [vmem:[%s1 + $0x2a8] sm:$0xf]
  %v210 = vld [vmem:[%s1 + $0x2ac] sm:$0xf]
  %v211 = vld [vmem:[%s1 + $0x2b0] sm:$0xf]
  %v212 = vld [vmem:[%s1 + $0x2b4] sm:$0xf]
  %v213 = vld [vmem:[%s1 + $0x2b8] sm:$0xf]
  %v214 = vld [vmem:[%s1 + $0x2bc] sm:$0xf]
  %v215 = vld [vmem:[%s1 + $0x2c0] sm:$0xf]
  %v216 = vld [vmem:[%s1 + $0x2c4] sm:$0xf]
  %v217 = vld [vmem:[%s1 + $0x2c8] sm:$0xf]
  %v218 = vld [vmem:[%s1 + $0x2cc] sm:$0xf]
  %v219 = vld [vmem:[%s1 + $0x2d0] sm:$0xf]
  %v220 = vld [vmem:[%s1 + $0x2d4] sm:$0xf]
  %v221 = vld [vmem:[%s1 + $0x2d8] sm:$0xf]
  %v222 = vld [vmem:[%s1 + $0x2dc] sm:$0xf]
  %v223 = vld [vmem:[%s1 + $0x2e0] sm:$0xf]
  %v224 = vld [vmem:[%s1 + $0x2e4] sm:$0xf]
  %v225 = vld [vmem:[%s1 + $0x2e8] sm:$0xf]
  %v226 = vld [vmem:[%s1 + $0x2ec] sm:$0xf]
  %v227 = vld [vmem:[%s1 + $0x2f0] sm:$0xf]
  %v228 = vld [vmem:[%s1 + $0x2f4] sm:$0xf]
  %v229 = vld [vmem:[%s1 + $0x2f8] sm:$0xf]
  %v230 = vld [vmem:[%s1 + $0x2fc] sm:$0xf]
  %v231 = vld [vmem:[%s1 + $0x300] sm:$0xf]
  %v232 = vld [vmem:[%s1 + $0x304] sm:$0xf]
  %v233 = vld [vmem:[%s1 + $0x308] sm:$0xf]
  %v234 = vld [vmem:[%s1 + $0x30c] sm:$0xf]
  %v235 = vld [vmem:[%s1 + $0x310] sm:$0xf]
  %v236 = vld [vmem:[%s1 + $0x314] sm:$0xf]
  %v237 = vld [vmem:[%s1 + $0x318] sm:$0xf]
  %v238 = vld [vmem:[%s1 + $0x31c] sm:$0xf]
  %v239 = vld [vmem:[%s1 + $0x320] sm:$0xf]
  %v240 = vld [vmem:[%s1 + $0x324] sm:$0xf]
  %v241 = vld [vmem:[%s1 + $0x328] sm:$0xf]
  %v242 = vld [vmem:[%s1 + $0x32c] sm:$0xf]
  %v243 = vld [vmem:[%s1 + $0x330] sm:$0xf]
  %v244 = vld [vmem:[%s1 + $0x334] sm:$0xf]
  %v245 = vld [vmem:[%s1 + $0x338] sm:$0xf]
  %v246 = vld [vmem:[%s1 + $0x33c] sm:$0xf]
  %v247 = vld [vmem:[%s1 + $0x340] sm:$0xf]
  %v248 = vld [vmem:[%s1 + $0x344] sm:$0xf]
  %v249 = vld [vmem:[%s1 + $0x348] sm:$0xf]
  %v250 = vld [vmem:[%s1 + $0x34c] sm:$0xf]
  %v251 = vld [vmem:[%s1 + $0x350] sm:$0xf]
  %v252 = vld [vmem:[%s1 + $0x354] sm:$0xf]
  %v253 = vld [vmem:[%s1 + $0x358] sm:$0xf]
  %v254 = vld [vmem:[%s1 + $0x35c] sm:$0xf]
  %v255 = vld [vmem:[%s1 + $0x360] sm:$0xf]
  %v256 = vld [vmem:[%s1 + $0x364] sm:$0xf]
  %v257 = vld [vmem:[%s1 + $0x368] sm:$0xf]
  %v258 = vld [vmem:[%s1 + $0x36c] sm:$0xf]
  %v259 = vld [vmem:[%s1 + $0x370] sm:$0xf]
  %v260 = vld [vmem:[%s1 + $0x374] sm:$0xf]
  %v261 = vld [vmem:[%s1 + $0x378] sm:$0xf]
  %v262 = vld [vmem:[%s1 + $0x37c] sm:$0xf]
  %v263 = vld [vmem:[%s1 + $0x380] sm:$0xf]
  %v264 = vld [vmem:[%s1 + $0x384] sm:$0xf]
  %v265 = vld [vmem:[%s1 + $0x388] sm:$0xf]
  %v266 = vld [vmem:[%s1 + $0x38c] sm:$0xf]
  %v267 = vld [vmem:[%s1 + $0x390] sm:$0xf]
  %v268 = vld [vmem:[%s1 + $0x394] sm:$0xf]
  %v269 = vld [vmem:[%s1 + $0x398] sm:$0xf]
  %v270 = vld [vmem:[%s1 + $0x39c] sm:$0xf]
  %v271 = vld [vmem:[%s1 + $0x3a0] sm:$0xf]
  %v272 = vld [vmem:[%s1 + $0x3a4] sm:$0xf]
  %v273 = vld [vmem:[%s1 + $0x3a8] sm:$0xf]
  %v274 = vld [vmem:[%s1 + $0x3ac] sm:$0xf]
  %v275 = vld [vmem:[%s1 + $0x3b0] sm:$0xf]
  %v276 = vld [vmem:[%s1 + $0x3b4] sm:$0xf]
  %v277 = vld [vmem:[%s1 + $0x3b8] sm:$0xf]
  %v278 = vld [vmem:[%s1 + $0x3bc] sm:$0xf]
  %v279 = vld [vmem:[%s1 + $0x3c0] sm:$0xf]
  %v280 = vld [vmem:[%s1 + $0x3c4] sm:$0xf]
  %v281 = vld [vmem:[%s1 + $0x3c8] sm:$0xf]
  %v282 = vld [vmem:[%s1 + $0x3cc] sm:$0xf]
  %v283 = vld [vmem:[%s1 + $0x3d0] sm:$0xf]
  %v284 = vld [vmem:[%s1 + $0x3d4] sm:$0xf]
  %v285 = vld [vmem:[%s1 + $0x3d8] sm:$0xf]
  %v286 = vld [vmem:[%s1 + $0x3dc] sm:$0xf]
  %v287 = vld [vmem:[%s1 + $0x3e0] sm:$0xf]
  %v288 = vld [vmem:[%s1 + $0x3e4] sm:$0xf]
  %v289 = vld [vmem:[%s1 + $0x3e8] sm:$0xf]
  %v290 = vld [vmem:[%s1 + $0x3ec] sm:$0xf]
  %v291 = vld [vmem:[%s1 + $0x3f0] sm:$0xf]
  %v292 = vld [vmem:[%s1 + $0x3f4] sm:$0xf]
  %v293 = vld [vmem:[%s1 + $0x3f8] sm:$0xf]
  %v294 = vld [vmem:[%s1 + $0x3fc] sm:$0xf]
  %v295 = vld [vmem:[%s1 + $0x400] sm:$0xf]
  %v296 = vld [vmem:[%s1 + $0x404] sm:$0xf]
  %v297 = vld [vmem:[%s1 + $0x408] sm:$0xf]
  %v298 = vld [vmem:[%s1 + $0x40c] sm:$0xf]
  %v299 = vld [vmem:[%s1 + $0x410] sm:$0xf]
  %v300 = vld [vmem:[%s1 + $0x414] sm:$0xf]
  %v301 = vld [vmem:[%s1 + $0x418] sm:$0xf]
  %v302 = vld [vmem:[%s1 + $0x41c] sm:$0xf]
  %v303 = vld [vmem:[%s1 + $0x420] sm:$0xf]
  %v304 = vld [vmem:[%s1 + $0x424] sm:$0xf]
  %v305 = vld [vmem:[%s1 + $0x428] sm:$0xf]
  %v306 = vld [vmem:[%s1 + $0x42c] sm:$0xf]
  %v307 = vld [vmem:[%s1 + $0x430] sm:$0xf]
  %v308 = vld [vmem:[%s1 + $0x434] sm:$0xf]
  %v309 = vld [vmem:[%s1 + $0x438] sm:$0xf]
  %v310 = vld [vmem:[%s1 + $0x43c] sm:$0xf]
  %v311 = vld [vmem:[%s1 + $0x440] sm:$0xf]
  %v312 = vld [vmem:[%s1 + $0x444] sm:$0xf]
  %v313 = vld [vmem:[%s1 + $0x448] sm:$0xf]
  %v314 = vld [vmem:[%s1 + $0x44c] sm:$0xf]
  %v315 = vld [vmem:[%s1 + $0x450] sm:$0xf]
  %v316 = vld [vmem:[%s1 + $0x454] sm:$0xf]
  %v317 = vld [vmem:[%s1 + $0x458] sm:$0xf]
  %v318 = vld [vmem:[%s1 + $0x45c] sm:$0xf]
  %v319 = vld [vmem:[%s1 + $0x460] sm:$0xf]
  %v320 = vld [vmem:[%s1 + $0x464] sm:$0xf]
  %v321 = vld [vmem:[%s1 + $0x468] sm:$0xf]
  %v322 = vld [vmem:[%s1 + $0x46c] sm:$0xf]
  %v323 = vld [vmem:[%s1 + $0x470] sm:$0xf]
  %v324 = vld [vmem:[%s1 + $0x474] sm:$0xf]
  %v325 = vld [vmem:[%s1 + $0x478] sm:$0xf]
  %v326 = vld [vmem:[%s1 + $0x47c] sm:$0xf]
  %v327 = vld [vmem:[%s1 + $0x480] sm:$0xf]
  %v328 = vld [vmem:[%s1 + $0x484] sm:$0xf]
  %v329 = vld [vmem:[%s1 + $0x488] sm:$0xf]
  %v330 = vld [vmem:[%s1 + $0x48c] sm:$0xf]
  %v331 = vld [vmem:[%s1 + $0x490] sm:$0xf]
  %v332 = vld [vmem:[%s1 + $0x494] sm:$0xf]
  %v333 = vld [vmem:[%s1 + $0x498] sm:$0xf]
  %v334 = vld [vmem:[%s1 + $0x49c] sm:$0xf]
  %v335 = vld [vmem:[%s1 + $0x4a0] sm:$0xf]
  %v336 = vld [vmem:[%s1 + $0x4a4] sm:$0xf]
  %v337 = vld [vmem:[%s1 + $0x4a8] sm:$0xf]
  %v338 = vld [vmem:[%s1 + $0x4ac] sm:$0xf]
  %v339 = vld [vmem:[%s1 + $0x4b0] sm:$0xf]
  %v340 = vld [vmem:[%s1 + $0x4b4] sm:$0xf]
  %v341 = vld [vmem:[%s1 + $0x4b8] sm:$0xf]
  %v342 = vld [vmem:[%s1 + $0x4bc] sm:$0xf]
  %v343 = vld [vmem:[%s1 + $0x4c0] sm:$0xf]
  %v344 = vld [vmem:[%s1 + $0x4c4] sm:$0xf]
  %v345 = vld [vmem:[%s1 + $0x4c8] sm:$0xf]
  %v346 = vld [vmem:[%s1 + $0x4cc] sm:$0xf]
  %v347 = vld [vmem:[%s1 + $0x4d0] sm:$0xf]
  %v348 = vld [vmem:[%s1 + $0x4d4] sm:$0xf]
  %v349 = vld [vmem:[%s1 + $0x4d8] sm:$0xf]
  %v350 = vld [vmem:[%s1 + $0x4dc] sm:$0xf]
  %v351 = vld [vmem:[%s1 + $0x4e0] sm:$0xf]
  %v352 = vld [vmem:[%s1 + $0x4e4] sm:$0xf]
  %v353 = vld [vmem:[%s1 + $0x4e8] sm:$0xf]
  %v354 = vld [vmem:[%s1 + $0x4ec] sm:$0xf]
  %v355 = vld [vmem:[%s1 + $0x4f0] sm:$0xf]
  %v356 = vld [vmem:[%s1 + $0x4f4] sm:$0xf]
  %v357 = vld [vmem:[%s1 + $0x4f8] sm:$0xf]
  %v358 = vld [vmem:[%s1 + $0x4fc] sm:$0xf]
  %v359 = vld [vmem:[%s1 + $0x500] sm:$0xf]
  %v360 = vld [vmem:[%s1 + $0x504] sm:$0xf]
  %v361 = vld [vmem:[%s1 + $0x508] sm:$0xf]
  %v362 = vld [vmem:[%s1 + $0x50c] sm:$0xf]
  %v363 = vld [vmem:[%s1 + $0x510] sm:$0xf]
  %v364 = vld [vmem:[%s1 + $0x514] sm:$0xf]
  %v365 = vld [vmem:[%s1 + $0x518] sm:$0xf]
  %v366 = vld [vmem:[%s1 + $0x51c] sm:$0xf]
  %v367 = vld [vmem:[%s1 + $0x520] sm:$0xf]
  %v368 = vld [vmem:[%s1 + $0x524] sm:$0xf]
  %v369 = vld [vmem:[%s1 + $0x528] sm:$0xf]
  %v370 = vld [vmem:[%s1 + $0x52c] sm:$0xf]
  %v371 = vld [vmem:[%s1 + $0x530] sm:$0xf]
  %v372 = vld [vmem:[%s1 + $0x534] sm:$0xf]
  %v373 = vld [vmem:[%s1 + $0x538] sm:$0xf]
  %v374 = vld [vmem:[%s1 + $0x53c] sm:$0xf]
  %v375 = vld [vmem:[%s1 + $0x540] sm:$0xf]
  %v376 = vld [vmem:[%s1 + $0x544] sm:$0xf]
  %v377 = vld [vmem:[%s1 + $0x548] sm:$0xf]
  %v378 = vld [vmem:[%s1 + $0x54c] sm:$0xf]
  %v379 = vld [vmem:[%s1 + $0x550] sm:$0xf]
  %v380 = vld [vmem:[%s1 + $0x554] sm:$0xf]
  %v381 = vld [vmem:[%s1 + $0x558] sm:$0xf]
  %v382 = vld [vmem:[%s1 + $0x55c] sm:$0xf]
  %v383 = vld [vmem:[%s1 + $0x560] sm:$0xf]
  %v384 = vld [vmem:[%s1 + $0x564] sm:$0xf]
  %v385 = vld [vmem:[%s1 + $0x568] sm:$0xf]
  %v386 = vld [vmem:[%s1 + $0x56c] sm:$0xf]
  %v387 = vld [vmem:[%s1 + $0x570] sm:$0xf]
  %v388 = vld [vmem:[%s1 + $0x574] sm:$0xf]
  %v389 = vld [vmem:[%s1 + $0x578] sm:$0xf]
  %v390 = vld [vmem:[%s1 + $0x57c] sm:$0xf]
  %v391 = vld [vmem:[%s1 + $0x580] sm:$0xf]
  %v392 = vld [vmem:[%s1 + $0x584] sm:$0xf]
  %v393 = vld [vmem:[%s1 + $0x588] sm:$0xf]
  %v394 = vld [vmem:[%s1 + $0x58c] sm:$0xf]
  %v395 = vld [vmem:[%s1 + $0x590] sm:$0xf]
  %v396 = vld [vmem:[%s1 + $0x594] sm:$0xf]
  %v397 = vld [vmem:[%s1 + $0x598] sm:$0xf]
  %v398 = vld [vmem:[%s1 + $0x59c] sm:$0xf]
  %v399 = vld [vmem:[%s1 + $0x5a0] sm:$0xf]
  %v400 = vld [vmem:[%s1 + $0x5a4] sm:$0xf]
  %v401 = vld [vmem:[%s1 + $0x5a8] sm:$0xf]
  %v402 = vld [vmem:[%s1 + $0x5ac] sm:$0xf]
  %v403 = vld [vmem:[%s1 + $0x5b0] sm:$0xf]
  %v404 = vld [vmem:[%s1 + $0x5b4] sm:$0xf]
  %v405 = vld [vmem:[%s1 + $0x5b8] sm:$0xf]
  %v406 = vld [vmem:[%s1 + $0x5bc] sm:$0xf]
  %v407 = vld [vmem:[%s1 + $0x5c0] sm:$0xf]
  %v408 = vld [vmem:[%s1 + $0x5c4] sm:$0xf]
  %v409 = vld [vmem:[%s1 + $0x5c8] sm:$0xf]
  %v410 = vld [vmem:[%s1 + $0x5cc] sm:$0xf]
  %v411 = vld [vmem:[%s1 + $0x5d0] sm:$0xf]
  %v412 = vld [vmem:[%s1 + $0x5d4] sm:$0xf]
  %v413 = vld [vmem:[%s1 + $0x5d8] sm:$0xf]
  %v414 = vld [vmem:[%s1 + $0x5dc] sm:$0xf]
  %v415 = vld [vmem:[%s1 + $0x5e0] sm:$0xf]
  %v416 = vld [vmem:[%s1 + $0x5e4] sm:$0xf]
  %v417 = vld [vmem:[%s1 + $0x5e8] sm:$0xf]
  %v418 = vld [vmem:[%s1 + $0x5ec] sm:$0xf]
  %v419 = vld [vmem:[%s1 + $0x5f0] sm:$0xf]
  %v420 = vld [vmem:[%s1 + $0x5f4] sm:$0xf]
  %v421 = vld [vmem:[%s1 + $0x5f8] sm:$0xf]
  %v422 = vld [vmem:[%s1 + $0x5fc] sm:$0xf]
  %v423 = vld [vmem:[%s1 + $0x600] sm:$0xf]
  %v424 = vld [vmem:[%s1 + $0x604] sm:$0xf]
  %v425 = vld [vmem:[%s1 + $0x608] sm:$0xf]
  %v426 = vld [vmem:[%s1 + $0x60c] sm:$0xf]
  %v427 = vld [vmem:[%s1 + $0x610] sm:$0xf]
  %v428 = vld [vmem:[%s1 + $0x614] sm:$0xf]
  %v429 = vld [vmem:[%s1 + $0x618] sm:$0xf]
  %v430 = vld [vmem:[%s1 + $0x61c] sm:$0xf]
  %v431 = vld [vmem:[%s2] sm:$0x1]
  %v433 = vlaneseq
  %v434 = vshrl.u32 %v433, 7
  %v435 = vsub.s32 0, %v434
  %v436 = vrot.slane %v431, %v435
  %v451 = vunpack.c.l.b16 %v26
  %v452 = vunpack.c.h.b16 %v26
  %v453 = vunpack.c.l.b16 %v27
  %v454 = vunpack.c.h.b16 %v27
  %v455 = vunpack.c.l.b16 %v28
  %v456 = vunpack.c.h.b16 %v28
  %v457 = vunpack.c.l.b16 %v29
  %v458 = vunpack.c.h.b16 %v29
  %v459 = vunpack.c.l.b16 %v30
  %v460 = vunpack.c.h.b16 %v30
  %v461 = vunpack.c.l.b16 %v31
  %v462 = vunpack.c.h.b16 %v31
  %v463 = vunpack.c.l.b16 %v32
  %v464 = vunpack.c.h.b16 %v32
  %v465 = vunpack.c.l.b16 %v33
  %v466 = vunpack.c.h.b16 %v33
  %v467 = vunpack.c.l.b16 %v34
  %v468 = vunpack.c.h.b16 %v34
  %v469 = vunpack.c.l.b16 %v35
  %v470 = vunpack.c.h.b16 %v35
  %v471 = vunpack.c.l.b16 %v36
  %v472 = vunpack.c.h.b16 %v36
  %v473 = vunpack.c.l.b16 %v37
  %v474 = vunpack.c.h.b16 %v37
  %v475 = vunpack.c.l.b16 %v38
  %v476 = vpack.c.b16 %v451, %v451
  %v477 = vpack.c.b16 %v452, %v452
  %v478 = vpack.c.b16 %v453, %v453
  %v479 = vpack.c.b16 %v454, %v454
  %v480 = vpack.c.b16 %v455, %v455
  %v481 = vpack.c.b16 %v456, %v456
  %v482 = vpack.c.b16 %v457, %v457
  %v483 = vpack.c.b16 %v458, %v458
  %v484 = vpack.c.b16 %v459, %v459
  %v485 = vpack.c.b16 %v460, %v460
  %v486 = vpack.c.b16 %v461, %v461
  %v487 = vpack.c.b16 %v462, %v462
  %v488 = vpack.c.b16 %v463, %v463
  %v489 = vpack.c.b16 %v464, %v464
  %v490 = vpack.c.b16 %v465, %v465
  %v491 = vpack.c.b16 %v466, %v466
  %v492 = vpack.c.b16 %v467, %v467
  %v493 = vpack.c.b16 %v468, %v468
  %v494 = vpack.c.b16 %v469, %v469
  %v495 = vpack.c.b16 %v470, %v470
  %v496 = vpack.c.b16 %v471, %v471
  %v497 = vpack.c.b16 %v472, %v472
  %v498 = vpack.c.b16 %v473, %v473
  %v499 = vpack.c.b16 %v474, %v474
  %v500 = vpack.c.b16 %v475, %v475
  %v917 = vunpack.c.l.b16 %v39
  %v918 = vunpack.c.l.b16 %v40
  %v919 = vunpack.c.l.b16 %v41
  %v920 = vunpack.c.l.b16 %v42
  %v921 = vunpack.c.l.b16 %v43
  %v922 = vunpack.c.l.b16 %v44
  %v923 = vunpack.c.l.b16 %v45
  %v924 = vunpack.c.l.b16 %v46
  %v925 = vunpack.c.l.b16 %v47
  %v926 = vunpack.c.l.b16 %v48
  %v927 = vunpack.c.l.b16 %v49
  %v928 = vunpack.c.l.b16 %v50
  %v929 = vunpack.c.l.b16 %v51
  %v930 = vunpack.c.l.b16 %v52
  %v931 = vunpack.c.l.b16 %v53
  %v932 = vunpack.c.l.b16 %v54
  %v933 = vunpack.c.l.b16 %v55
  %v934 = vunpack.c.l.b16 %v56
  %v935 = vunpack.c.l.b16 %v57
  %v936 = vunpack.c.l.b16 %v58
  %v937 = vunpack.c.l.b16 %v59
  %v938 = vunpack.c.l.b16 %v60
  %v939 = vunpack.c.l.b16 %v61
  %v940 = vunpack.c.l.b16 %v62
  %v941 = vunpack.c.l.b16 %v63
  %v942 = vunpack.c.l.b16 %v64
  %v943 = vunpack.c.l.b16 %v65
  %v944 = vunpack.c.l.b16 %v66
  %v945 = vunpack.c.l.b16 %v67
  %v946 = vunpack.c.l.b16 %v68
  %v947 = vunpack.c.l.b16 %v69
  %v948 = vunpack.c.l.b16 %v70
  %v949 = vunpack.c.l.b16 %v71
  %v950 = vunpack.c.l.b16 %v72
  %v951 = vunpack.c.l.b16 %v73
  %v952 = vunpack.c.l.b16 %v74
  %v953 = vunpack.c.l.b16 %v75
  %v954 = vunpack.c.l.b16 %v76
  %v955 = vunpack.c.l.b16 %v77
  %v956 = vunpack.c.l.b16 %v78
  %v957 = vunpack.c.l.b16 %v79
  %v958 = vunpack.c.l.b16 %v80
  %v959 = vunpack.c.l.b16 %v81
  %v960 = vunpack.c.l.b16 %v82
  %v961 = vunpack.c.l.b16 %v83
  %v962 = vunpack.c.l.b16 %v84
  %v963 = vunpack.c.l.b16 %v85
  %v964 = vunpack.c.l.b16 %v86
  %v965 = vunpack.c.l.b16 %v87
  %v966 = vunpack.c.l.b16 %v88
  %v967 = vunpack.c.l.b16 %v89
  %v968 = vunpack.c.l.b16 %v90
  %v969 = vunpack.c.l.b16 %v91
  %v970 = vunpack.c.l.b16 %v92
  %v971 = vunpack.c.l.b16 %v93
  %v972 = vunpack.c.l.b16 %v94
  %v973 = vunpack.c.l.b16 %v95
  %v974 = vunpack.c.l.b16 %v96
  %v975 = vunpack.c.l.b16 %v97
  %v976 = vunpack.c.l.b16 %v98
  %v977 = vunpack.c.l.b16 %v99
  %v978 = vunpack.c.l.b16 %v100
  %v979 = vunpack.c.l.b16 %v101
  %v980 = vunpack.c.l.b16 %v102
  %v981 = vunpack.c.l.b16 %v103
  %v982 = vunpack.c.l.b16 %v104
  %v983 = vunpack.c.l.b16 %v105
  %v984 = vunpack.c.l.b16 %v106
  %v985 = vunpack.c.l.b16 %v107
  %v986 = vunpack.c.l.b16 %v108
  %v987 = vunpack.c.l.b16 %v109
  %v988 = vunpack.c.l.b16 %v110
  %v989 = vunpack.c.l.b16 %v111
  %v990 = vunpack.c.l.b16 %v112
  %v991 = vunpack.c.l.b16 %v113
  %v992 = vunpack.c.l.b16 %v114
  %v993 = vunpack.c.l.b16 %v115
  %v994 = vunpack.c.l.b16 %v116
  %v995 = vunpack.c.l.b16 %v117
  %v996 = vunpack.c.l.b16 %v118
  %v997 = vunpack.c.l.b16 %v119
  %v998 = vunpack.c.l.b16 %v120
  %v999 = vunpack.c.l.b16 %v121
  %v1000 = vunpack.c.l.b16 %v122
  %v1001 = vunpack.c.l.b16 %v123
  %v1002 = vunpack.c.l.b16 %v124
  %v1003 = vunpack.c.l.b16 %v125
  %v1004 = vunpack.c.l.b16 %v126
  %v1005 = vunpack.c.l.b16 %v127
  %v1006 = vunpack.c.l.b16 %v128
  %v1007 = vunpack.c.l.b16 %v129
  %v1008 = vunpack.c.l.b16 %v130
  %v1009 = vunpack.c.l.b16 %v131
  %v1010 = vunpack.c.l.b16 %v132
  %v1011 = vunpack.c.l.b16 %v133
  %v1012 = vunpack.c.l.b16 %v134
  %v1013 = vunpack.c.l.b16 %v135
  %v1014 = vunpack.c.l.b16 %v136
  %v1015 = vunpack.c.l.b16 %v137
  %v1016 = vunpack.c.l.b16 %v138
  %v1017 = vunpack.c.l.b16 %v139
  %v1018 = vunpack.c.l.b16 %v140
  %v1019 = vunpack.c.l.b16 %v141
  %v1020 = vunpack.c.l.b16 %v142
  %v1021 = vunpack.c.l.b16 %v143
  %v1022 = vunpack.c.l.b16 %v144
  %v1023 = vunpack.c.l.b16 %v145
  %v1024 = vunpack.c.l.b16 %v146
  %v1025 = vunpack.c.l.b16 %v147
  %v1026 = vunpack.c.l.b16 %v148
  %v1027 = vunpack.c.l.b16 %v149
  %v1028 = vunpack.c.l.b16 %v150
  %v1029 = vunpack.c.l.b16 %v151
  %v1030 = vunpack.c.l.b16 %v152
  %v1031 = vunpack.c.l.b16 %v153
  %v1032 = vunpack.c.l.b16 %v154
  %v1033 = vunpack.c.l.b16 %v155
  %v1034 = vunpack.c.l.b16 %v156
  %v1035 = vunpack.c.l.b16 %v157
  %v1036 = vunpack.c.l.b16 %v158
  %v1037 = vunpack.c.l.b16 %v159
  %v1038 = vunpack.c.l.b16 %v160
  %v1039 = vunpack.c.l.b16 %v161
  %v1040 = vunpack.c.l.b16 %v162
  %v1041 = vunpack.c.l.b16 %v163
  %v1042 = vunpack.c.l.b16 %v164
  %v1043 = vunpack.c.l.b16 %v165
  %v1044 = vunpack.c.l.b16 %v166
  %v1045 = vunpack.c.l.b16 %v167
  %v1046 = vunpack.c.l.b16 %v168
  %v1047 = vunpack.c.l.b16 %v169
  %v1048 = vunpack.c.l.b16 %v170
  %v1049 = vunpack.c.l.b16 %v171
  %v1050 = vunpack.c.l.b16 %v172
  %v1051 = vunpack.c.l.b16 %v173
  %v1052 = vunpack.c.l.b16 %v174
  %v1053 = vunpack.c.l.b16 %v175
  %v1054 = vunpack.c.l.b16 %v176
  %v1055 = vunpack.c.l.b16 %v177
  %v1056 = vunpack.c.l.b16 %v178
  %v1057 = vunpack.c.l.b16 %v179
  %v1058 = vunpack.c.l.b16 %v180
  %v1059 = vunpack.c.l.b16 %v181
  %v1060 = vunpack.c.l.b16 %v182
  %v1061 = vunpack.c.l.b16 %v183
  %v1062 = vunpack.c.l.b16 %v184
  %v1063 = vunpack.c.l.b16 %v185
  %v1064 = vunpack.c.l.b16 %v186
  %v1065 = vunpack.c.l.b16 %v187
  %v1066 = vunpack.c.l.b16 %v188
  %v1067 = vunpack.c.l.b16 %v189
  %v1068 = vunpack.c.l.b16 %v190
  %v1069 = vunpack.c.l.b16 %v191
  %v1070 = vunpack.c.l.b16 %v192
  %v1071 = vunpack.c.l.b16 %v193
  %v1072 = vunpack.c.l.b16 %v194
  %v1073 = vunpack.c.l.b16 %v195
  %v1074 = vunpack.c.l.b16 %v196
  %v1075 = vunpack.c.l.b16 %v197
  %v1076 = vunpack.c.l.b16 %v198
  %v1077 = vunpack.c.l.b16 %v199
  %v1078 = vunpack.c.l.b16 %v200
  %v1079 = vunpack.c.l.b16 %v201
  %v1080 = vunpack.c.l.b16 %v202
  %v1081 = vunpack.c.l.b16 %v203
  %v1082 = vunpack.c.l.b16 %v204
  %v1083 = vunpack.c.l.b16 %v205
  %v1084 = vunpack.c.l.b16 %v206
  %v1085 = vunpack.c.l.b16 %v207
  %v1086 = vunpack.c.l.b16 %v208
  %v1087 = vunpack.c.l.b16 %v209
  %v1088 = vunpack.c.l.b16 %v210
  %v1089 = vunpack.c.l.b16 %v211
  %v1090 = vunpack.c.l.b16 %v212
  %v1091 = vunpack.c.l.b16 %v213
  %v1092 = vunpack.c.l.b16 %v214
  %v1093 = vunpack.c.l.b16 %v215
  %v1094 = vunpack.c.l.b16 %v216
  %v1095 = vunpack.c.l.b16 %v217
  %v1096 = vunpack.c.l.b16 %v218
  %v1097 = vunpack.c.l.b16 %v219
  %v1098 = vunpack.c.l.b16 %v220
  %v1099 = vunpack.c.l.b16 %v221
  %v1100 = vunpack.c.l.b16 %v222
  %v1101 = vunpack.c.l.b16 %v223
  %v1102 = vunpack.c.l.b16 %v224
  %v1103 = vunpack.c.l.b16 %v225
  %v1104 = vunpack.c.l.b16 %v226
  %v1105 = vunpack.c.l.b16 %v227
  %v1106 = vunpack.c.l.b16 %v228
  %v1107 = vunpack.c.l.b16 %v229
  %v1108 = vunpack.c.l.b16 %v230
  %v1109 = vunpack.c.l.b16 %v231
  %v1110 = vunpack.c.l.b16 %v232
  %v1111 = vunpack.c.l.b16 %v233
  %v1112 = vunpack.c.l.b16 %v234
  %v1113 = vunpack.c.l.b16 %v235
  %v1114 = vunpack.c.l.b16 %v236
  %v1115 = vunpack.c.l.b16 %v237
  %v1116 = vunpack.c.l.b16 %v238
  %v1117 = vunpack.c.l.b16 %v239
  %v1118 = vunpack.c.l.b16 %v240
  %v1119 = vunpack.c.l.b16 %v241
  %v1120 = vunpack.c.l.b16 %v242
  %v1121 = vunpack.c.l.b16 %v243
  %v1122 = vunpack.c.l.b16 %v244
  %v1123 = vunpack.c.l.b16 %v245
  %v1124 = vunpack.c.l.b16 %v246
  %v1125 = vunpack.c.l.b16 %v247
  %v1126 = vunpack.c.l.b16 %v248
  %v1127 = vunpack.c.l.b16 %v249
  %v1128 = vunpack.c.l.b16 %v250
  %v1129 = vunpack.c.l.b16 %v251
  %v1130 = vunpack.c.l.b16 %v252
  %v1131 = vunpack.c.l.b16 %v253
  %v1132 = vunpack.c.l.b16 %v254
  %v1133 = vunpack.c.l.b16 %v255
  %v1134 = vunpack.c.l.b16 %v256
  %v1135 = vunpack.c.l.b16 %v257
  %v1136 = vunpack.c.l.b16 %v258
  %v1137 = vunpack.c.l.b16 %v259
  %v1138 = vunpack.c.l.b16 %v260
  %v1139 = vunpack.c.l.b16 %v261
  %v1140 = vunpack.c.l.b16 %v262
  %v1141 = vunpack.c.l.b16 %v263
  %v1142 = vunpack.c.l.b16 %v264
  %v1143 = vunpack.c.l.b16 %v265
  %v1144 = vunpack.c.l.b16 %v266
  %v1145 = vunpack.c.l.b16 %v267
  %v1146 = vunpack.c.l.b16 %v268
  %v1147 = vunpack.c.l.b16 %v269
  %v1148 = vunpack.c.l.b16 %v270
  %v1149 = vunpack.c.l.b16 %v271
  %v1150 = vunpack.c.l.b16 %v272
  %v1151 = vunpack.c.l.b16 %v273
  %v1152 = vunpack.c.l.b16 %v274
  %v1153 = vunpack.c.l.b16 %v275
  %v1154 = vunpack.c.l.b16 %v276
  %v1155 = vunpack.c.l.b16 %v277
  %v1156 = vunpack.c.l.b16 %v278
  %v1157 = vunpack.c.l.b16 %v279
  %v1158 = vunpack.c.l.b16 %v280
  %v1159 = vunpack.c.l.b16 %v281
  %v1160 = vunpack.c.l.b16 %v282
  %v1161 = vunpack.c.l.b16 %v283
  %v1162 = vunpack.c.l.b16 %v284
  %v1163 = vunpack.c.l.b16 %v285
  %v1164 = vunpack.c.l.b16 %v286
  %v1165 = vunpack.c.l.b16 %v287
  %v1166 = vunpack.c.l.b16 %v288
  %v1167 = vunpack.c.l.b16 %v289
  %v1168 = vunpack.c.l.b16 %v290
  %v1169 = vunpack.c.l.b16 %v291
  %v1170 = vunpack.c.l.b16 %v292
  %v1171 = vunpack.c.l.b16 %v293
  %v1172 = vunpack.c.l.b16 %v294
  %v1173 = vunpack.c.l.b16 %v295
  %v1174 = vunpack.c.l.b16 %v296
  %v1175 = vunpack.c.l.b16 %v297
  %v1176 = vunpack.c.l.b16 %v298
  %v1177 = vunpack.c.l.b16 %v299
  %v1178 = vunpack.c.l.b16 %v300
  %v1179 = vunpack.c.l.b16 %v301
  %v1180 = vunpack.c.l.b16 %v302
  %v1181 = vunpack.c.l.b16 %v303
  %v1182 = vunpack.c.l.b16 %v304
  %v1183 = vunpack.c.l.b16 %v305
  %v1184 = vunpack.c.l.b16 %v306
  %v1185 = vunpack.c.l.b16 %v307
  %v1186 = vunpack.c.l.b16 %v308
  %v1187 = vunpack.c.l.b16 %v309
  %v1188 = vunpack.c.l.b16 %v310
  %v1189 = vunpack.c.l.b16 %v311
  %v1190 = vunpack.c.l.b16 %v312
  %v1191 = vunpack.c.l.b16 %v313
  %v1192 = vunpack.c.l.b16 %v314
  %v1193 = vunpack.c.l.b16 %v315
  %v1194 = vunpack.c.l.b16 %v316
  %v1195 = vunpack.c.l.b16 %v317
  %v1196 = vunpack.c.l.b16 %v318
  %v1197 = vunpack.c.l.b16 %v319
  %v1198 = vunpack.c.l.b16 %v320
  %v1199 = vunpack.c.l.b16 %v321
  %v1200 = vunpack.c.l.b16 %v322
  %v1201 = vunpack.c.l.b16 %v323
  %v1202 = vunpack.c.l.b16 %v324
  %v1203 = vunpack.c.l.b16 %v325
  %v1204 = vunpack.c.l.b16 %v326
  %v1205 = vunpack.c.l.b16 %v327
  %v1206 = vunpack.c.l.b16 %v328
  %v1207 = vunpack.c.l.b16 %v329
  %v1208 = vunpack.c.l.b16 %v330
  %v1209 = vunpack.c.l.b16 %v331
  %v1210 = vunpack.c.l.b16 %v332
  %v1211 = vunpack.c.l.b16 %v333
  %v1212 = vunpack.c.l.b16 %v334
  %v1213 = vunpack.c.l.b16 %v335
  %v1214 = vunpack.c.l.b16 %v336
  %v1215 = vunpack.c.l.b16 %v337
  %v1216 = vunpack.c.l.b16 %v338
  %v1217 = vunpack.c.l.b16 %v339
  %v1218 = vunpack.c.l.b16 %v340
  %v1219 = vunpack.c.l.b16 %v341
  %v1220 = vunpack.c.l.b16 %v342
  %v1221 = vunpack.c.l.b16 %v343
  %v1222 = vunpack.c.l.b16 %v344
  %v1223 = vunpack.c.l.b16 %v345
  %v1224 = vunpack.c.l.b16 %v346
  %v1225 = vunpack.c.l.b16 %v347
  %v1226 = vunpack.c.l.b16 %v348
  %v1227 = vunpack.c.l.b16 %v349
  %v1228 = vunpack.c.l.b16 %v350
  %v1229 = vunpack.c.l.b16 %v351
  %v1230 = vunpack.c.l.b16 %v352
  %v1231 = vunpack.c.l.b16 %v353
  %v1232 = vunpack.c.l.b16 %v354
  %v1233 = vunpack.c.l.b16 %v355
  %v1234 = vunpack.c.l.b16 %v356
  %v1235 = vunpack.c.l.b16 %v357
  %v1236 = vunpack.c.l.b16 %v358
  %v1237 = vunpack.c.l.b16 %v359
  %v1238 = vunpack.c.l.b16 %v360
  %v1239 = vunpack.c.l.b16 %v361
  %v1240 = vunpack.c.l.b16 %v362
  %v1241 = vunpack.c.l.b16 %v363
  %v1242 = vunpack.c.l.b16 %v364
  %v1243 = vunpack.c.l.b16 %v365
  %v1244 = vunpack.c.l.b16 %v366
  %v1245 = vunpack.c.l.b16 %v367
  %v1246 = vunpack.c.l.b16 %v368
  %v1247 = vunpack.c.l.b16 %v369
  %v1248 = vunpack.c.l.b16 %v370
  %v1249 = vunpack.c.l.b16 %v371
  %v1250 = vunpack.c.l.b16 %v372
  %v1251 = vunpack.c.l.b16 %v373
  %v1252 = vunpack.c.l.b16 %v374
  %v1253 = vunpack.c.l.b16 %v375
  %v1254 = vunpack.c.l.b16 %v376
  %v1255 = vunpack.c.l.b16 %v377
  %v1256 = vunpack.c.l.b16 %v378
  %v1257 = vunpack.c.l.b16 %v379
  %v1258 = vunpack.c.l.b16 %v380
  %v1259 = vunpack.c.l.b16 %v381
  %v1260 = vunpack.c.l.b16 %v382
  %v1261 = vunpack.c.l.b16 %v383
  %v1262 = vunpack.c.l.b16 %v384
  %v1263 = vunpack.c.l.b16 %v385
  %v1264 = vunpack.c.l.b16 %v386
  %v1265 = vunpack.c.l.b16 %v387
  %v1266 = vunpack.c.l.b16 %v388
  %v1267 = vunpack.c.l.b16 %v389
  %v1268 = vunpack.c.l.b16 %v390
  %v1269 = vunpack.c.l.b16 %v391
  %v1270 = vunpack.c.l.b16 %v392
  %v1271 = vunpack.c.l.b16 %v393
  %v1272 = vunpack.c.l.b16 %v394
  %v1273 = vunpack.c.l.b16 %v395
  %v1274 = vunpack.c.l.b16 %v396
  %v1275 = vunpack.c.l.b16 %v397
  %v1276 = vunpack.c.l.b16 %v398
  %v1277 = vunpack.c.l.b16 %v399
  %v1278 = vunpack.c.l.b16 %v400
  %v1279 = vunpack.c.l.b16 %v401
  %v1280 = vunpack.c.l.b16 %v402
  %v1281 = vunpack.c.l.b16 %v403
  %v1282 = vunpack.c.l.b16 %v404
  %v1283 = vunpack.c.l.b16 %v405
  %v1284 = vunpack.c.l.b16 %v406
  %v1285 = vunpack.c.l.b16 %v407
  %v1286 = vunpack.c.l.b16 %v408
  %v1287 = vunpack.c.l.b16 %v409
  %v1288 = vunpack.c.l.b16 %v410
  %v1289 = vunpack.c.l.b16 %v411
  %v1290 = vunpack.c.l.b16 %v412
  %v1291 = vunpack.c.l.b16 %v413
  %v1292 = vunpack.c.l.b16 %v414
  %v1293 = vunpack.c.l.b16 %v415
  %v1294 = vunpack.c.l.b16 %v416
  %v1295 = vunpack.c.l.b16 %v417
  %v1296 = vunpack.c.l.b16 %v418
  %v1297 = vunpack.c.l.b16 %v419
  %v1298 = vunpack.c.l.b16 %v420
  %v1299 = vunpack.c.l.b16 %v421
  %v1300 = vunpack.c.l.b16 %v422
  %v1301 = vunpack.c.l.b16 %v423
  %v1302 = vunpack.c.l.b16 %v424
  %v1303 = vunpack.c.l.b16 %v425
  %v1304 = vunpack.c.l.b16 %v426
  %v1305 = vunpack.c.l.b16 %v427
  %v1306 = vunpack.c.l.b16 %v428
  %v1307 = vunpack.c.l.b16 %v429
  %v1308 = vunpack.c.l.b16 %v430
  %v1309 = vpack.c.b16 %v918, %v917
  %v1310 = vpack.c.b16 %v920, %v919
  %v1311 = vpack.c.b16 %v922, %v921
  %v1312 = vpack.c.b16 %v924, %v923
  %v1313 = vpack.c.b16 %v926, %v925
  %v1314 = vpack.c.b16 %v928, %v927
  %v1315 = vpack.c.b16 %v930, %v929
  %v1316 = vpack.c.b16 %v932, %v931
  %v1317 = vpack.c.b16 %v934, %v933
  %v1318 = vpack.c.b16 %v936, %v935
  %v1319 = vpack.c.b16 %v938, %v937
  %v1320 = vpack.c.b16 %v940, %v939
  %v1321 = vpack.c.b16 %v942, %v941
  %v1322 = vpack.c.b16 %v944, %v943
  %v1323 = vpack.c.b16 %v946, %v945
  %v1324 = vpack.c.b16 %v948, %v947
  %v1325 = vpack.c.b16 %v950, %v949
  %v1326 = vpack.c.b16 %v952, %v951
  %v1327 = vpack.c.b16 %v954, %v953
  %v1328 = vpack.c.b16 %v956, %v955
  %v1329 = vpack.c.b16 %v958, %v957
  %v1330 = vpack.c.b16 %v960, %v959
  %v1331 = vpack.c.b16 %v962, %v961
  %v1332 = vpack.c.b16 %v964, %v963
  %v1333 = vpack.c.b16 %v966, %v965
  %v1334 = vpack.c.b16 %v968, %v967
  %v1335 = vpack.c.b16 %v970, %v969
  %v1336 = vpack.c.b16 %v972, %v971
  %v1337 = vpack.c.b16 %v974, %v973
  %v1338 = vpack.c.b16 %v976, %v975
  %v1339 = vpack.c.b16 %v978, %v977
  %v1340 = vpack.c.b16 %v980, %v979
  %v1341 = vpack.c.b16 %v982, %v981
  %v1342 = vpack.c.b16 %v984, %v983
  %v1343 = vpack.c.b16 %v986, %v985
  %v1344 = vpack.c.b16 %v988, %v987
  %v1345 = vpack.c.b16 %v990, %v989
  %v1346 = vpack.c.b16 %v992, %v991
  %v1347 = vpack.c.b16 %v994, %v993
  %v1348 = vpack.c.b16 %v996, %v995
  %v1349 = vpack.c.b16 %v998, %v997
  %v1350 = vpack.c.b16 %v1000, %v999
  %v1351 = vpack.c.b16 %v1002, %v1001
  %v1352 = vpack.c.b16 %v1004, %v1003
  %v1353 = vpack.c.b16 %v1006, %v1005
  %v1354 = vpack.c.b16 %v1008, %v1007
  %v1355 = vpack.c.b16 %v1010, %v1009
  %v1356 = vpack.c.b16 %v1012, %v1011
  %v1357 = vpack.c.b16 %v1014, %v1013
  %v1358 = vpack.c.b16 %v1016, %v1015
  %v1359 = vpack.c.b16 %v1018, %v1017
  %v1360 = vpack.c.b16 %v1020, %v1019
  %v1361 = vpack.c.b16 %v1022, %v1021
  %v1362 = vpack.c.b16 %v1024, %v1023
  %v1363 = vpack.c.b16 %v1026, %v1025
  %v1364 = vpack.c.b16 %v1028, %v1027
  %v1365 = vpack.c.b16 %v1030, %v1029
  %v1366 = vpack.c.b16 %v1032, %v1031
  %v1367 = vpack.c.b16 %v1034, %v1033
  %v1368 = vpack.c.b16 %v1036, %v1035
  %v1369 = vpack.c.b16 %v1038, %v1037
  %v1370 = vpack.c.b16 %v1040, %v1039
  %v1371 = vpack.c.b16 %v1042, %v1041
  %v1372 = vpack.c.b16 %v1044, %v1043
  %v1373 = vpack.c.b16 %v1046, %v1045
  %v1374 = vpack.c.b16 %v1048, %v1047
  %v1375 = vpack.c.b16 %v1050, %v1049
  %v1376 = vpack.c.b16 %v1052, %v1051
  %v1377 = vpack.c.b16 %v1054, %v1053
  %v1378 = vpack.c.b16 %v1056, %v1055
  %v1379 = vpack.c.b16 %v1058, %v1057
  %v1380 = vpack.c.b16 %v1060, %v1059
  %v1381 = vpack.c.b16 %v1062, %v1061
  %v1382 = vpack.c.b16 %v1064, %v1063
  %v1383 = vpack.c.b16 %v1066, %v1065
  %v1384 = vpack.c.b16 %v1068, %v1067
  %v1385 = vpack.c.b16 %v1070, %v1069
  %v1386 = vpack.c.b16 %v1072, %v1071
  %v1387 = vpack.c.b16 %v1074, %v1073
  %v1388 = vpack.c.b16 %v1076, %v1075
  %v1389 = vpack.c.b16 %v1078, %v1077
  %v1390 = vpack.c.b16 %v1080, %v1079
  %v1391 = vpack.c.b16 %v1082, %v1081
  %v1392 = vpack.c.b16 %v1084, %v1083
  %v1393 = vpack.c.b16 %v1086, %v1085
  %v1394 = vpack.c.b16 %v1088, %v1087
  %v1395 = vpack.c.b16 %v1090, %v1089
  %v1396 = vpack.c.b16 %v1092, %v1091
  %v1397 = vpack.c.b16 %v1094, %v1093
  %v1398 = vpack.c.b16 %v1096, %v1095
  %v1399 = vpack.c.b16 %v1098, %v1097
  %v1400 = vpack.c.b16 %v1100, %v1099
  %v1401 = vpack.c.b16 %v1102, %v1101
  %v1402 = vpack.c.b16 %v1104, %v1103
  %v1403 = vpack.c.b16 %v1106, %v1105
  %v1404 = vpack.c.b16 %v1108, %v1107
  %v1405 = vpack.c.b16 %v1110, %v1109
  %v1406 = vpack.c.b16 %v1112, %v1111
  %v1407 = vpack.c.b16 %v1114, %v1113
  %v1408 = vpack.c.b16 %v1116, %v1115
  %v1409 = vpack.c.b16 %v1118, %v1117
  %v1410 = vpack.c.b16 %v1120, %v1119
  %v1411 = vpack.c.b16 %v1122, %v1121
  %v1412 = vpack.c.b16 %v1124, %v1123
  %v1413 = vpack.c.b16 %v1126, %v1125
  %v1414 = vpack.c.b16 %v1128, %v1127
  %v1415 = vpack.c.b16 %v1130, %v1129
  %v1416 = vpack.c.b16 %v1132, %v1131
  %v1417 = vpack.c.b16 %v1134, %v1133
  %v1418 = vpack.c.b16 %v1136, %v1135
  %v1419 = vpack.c.b16 %v1138, %v1137
  %v1420 = vpack.c.b16 %v1140, %v1139
  %v1421 = vpack.c.b16 %v1142, %v1141
  %v1422 = vpack.c.b16 %v1144, %v1143
  %v1423 = vpack.c.b16 %v1146, %v1145
  %v1424 = vpack.c.b16 %v1148, %v1147
  %v1425 = vpack.c.b16 %v1150, %v1149
  %v1426 = vpack.c.b16 %v1152, %v1151
  %v1427 = vpack.c.b16 %v1154, %v1153
  %v1428 = vpack.c.b16 %v1156, %v1155
  %v1429 = vpack.c.b16 %v1158, %v1157
  %v1430 = vpack.c.b16 %v1160, %v1159
  %v1431 = vpack.c.b16 %v1162, %v1161
  %v1432 = vpack.c.b16 %v1164, %v1163
  %v1433 = vpack.c.b16 %v1166, %v1165
  %v1434 = vpack.c.b16 %v1168, %v1167
  %v1435 = vpack.c.b16 %v1170, %v1169
  %v1436 = vpack.c.b16 %v1172, %v1171
  %v1437 = vpack.c.b16 %v1174, %v1173
  %v1438 = vpack.c.b16 %v1176, %v1175
  %v1439 = vpack.c.b16 %v1178, %v1177
  %v1440 = vpack.c.b16 %v1180, %v1179
  %v1441 = vpack.c.b16 %v1182, %v1181
  %v1442 = vpack.c.b16 %v1184, %v1183
  %v1443 = vpack.c.b16 %v1186, %v1185
  %v1444 = vpack.c.b16 %v1188, %v1187
  %v1445 = vpack.c.b16 %v1190, %v1189
  %v1446 = vpack.c.b16 %v1192, %v1191
  %v1447 = vpack.c.b16 %v1194, %v1193
  %v1448 = vpack.c.b16 %v1196, %v1195
  %v1449 = vpack.c.b16 %v1198, %v1197
  %v1450 = vpack.c.b16 %v1200, %v1199
  %v1451 = vpack.c.b16 %v1202, %v1201
  %v1452 = vpack.c.b16 %v1204, %v1203
  %v1453 = vpack.c.b16 %v1206, %v1205
  %v1454 = vpack.c.b16 %v1208, %v1207
  %v1455 = vpack.c.b16 %v1210, %v1209
  %v1456 = vpack.c.b16 %v1212, %v1211
  %v1457 = vpack.c.b16 %v1214, %v1213
  %v1458 = vpack.c.b16 %v1216, %v1215
  %v1459 = vpack.c.b16 %v1218, %v1217
  %v1460 = vpack.c.b16 %v1220, %v1219
  %v1461 = vpack.c.b16 %v1222, %v1221
  %v1462 = vpack.c.b16 %v1224, %v1223
  %v1463 = vpack.c.b16 %v1226, %v1225
  %v1464 = vpack.c.b16 %v1228, %v1227
  %v1465 = vpack.c.b16 %v1230, %v1229
  %v1466 = vpack.c.b16 %v1232, %v1231
  %v1467 = vpack.c.b16 %v1234, %v1233
  %v1468 = vpack.c.b16 %v1236, %v1235
  %v1469 = vpack.c.b16 %v1238, %v1237
  %v1470 = vpack.c.b16 %v1240, %v1239
  %v1471 = vpack.c.b16 %v1242, %v1241
  %v1472 = vpack.c.b16 %v1244, %v1243
  %v1473 = vpack.c.b16 %v1246, %v1245
  %v1474 = vpack.c.b16 %v1248, %v1247
  %v1475 = vpack.c.b16 %v1250, %v1249
  %v1476 = vpack.c.b16 %v1252, %v1251
  %v1477 = vpack.c.b16 %v1254, %v1253
  %v1478 = vpack.c.b16 %v1256, %v1255
  %v1479 = vpack.c.b16 %v1258, %v1257
  %v1480 = vpack.c.b16 %v1260, %v1259
  %v1481 = vpack.c.b16 %v1262, %v1261
  %v1482 = vpack.c.b16 %v1264, %v1263
  %v1483 = vpack.c.b16 %v1266, %v1265
  %v1484 = vpack.c.b16 %v1268, %v1267
  %v1485 = vpack.c.b16 %v1270, %v1269
  %v1486 = vpack.c.b16 %v1272, %v1271
  %v1487 = vpack.c.b16 %v1274, %v1273
  %v1488 = vpack.c.b16 %v1276, %v1275
  %v1489 = vpack.c.b16 %v1278, %v1277
  %v1490 = vpack.c.b16 %v1280, %v1279
  %v1491 = vpack.c.b16 %v1282, %v1281
  %v1492 = vpack.c.b16 %v1284, %v1283
  %v1493 = vpack.c.b16 %v1286, %v1285
  %v1494 = vpack.c.b16 %v1288, %v1287
  %v1495 = vpack.c.b16 %v1290, %v1289
  %v1496 = vpack.c.b16 %v1292, %v1291
  %v1497 = vpack.c.b16 %v1294, %v1293
  %v1498 = vpack.c.b16 %v1296, %v1295
  %v1499 = vpack.c.b16 %v1298, %v1297
  %v1500 = vpack.c.b16 %v1300, %v1299
  %v1501 = vpack.c.b16 %v1302, %v1301
  %v1502 = vpack.c.b16 %v1304, %v1303
  %v1503 = vpack.c.b16 %v1306, %v1305
  %v1504 = vpack.c.b16 %v1308, %v1307
  %vm1701 = vcmask 523264
  %v1703 = vsel %vm1701, %v500, 0
  %1705 = vmatprep.subr.bf16.mxu0 0
  %1706 = vmatpush1.bf16.msra.mxu0 %v1316
  %1707 = vmatprep.subr.bf16.mxu0 0
  %1708 = vmatpush1.bf16.msra.mxu0 %v1315
  %1709 = vmatprep.subr.bf16.mxu0 0
  %1710 = vmatpush1.bf16.msra.mxu0 %v1314
  %1711 = vmatprep.subr.bf16.mxu0 0
  %1712 = vmatpush1.bf16.msra.mxu0 %v1313
  %1713 = vmatprep.subr.bf16.mxu0 0
  %1714 = vmatpush1.bf16.msra.mxu0 %v1312
  %1715 = vmatprep.subr.bf16.mxu0 0
  %1716 = vmatpush1.bf16.msra.mxu0 %v1311
  %1717 = vmatprep.subr.bf16.mxu0 0
  %1718 = vmatpush1.bf16.msra.mxu0 %v1310
  %1719 = vmatprep.subr.bf16.mxu0 0
  %1720 = vmatpush1.bf16.msra.mxu0 %v1309
  %1721 = vmatprep.subr.bf16.mxu0 0
  %1722 = vmatpush2.bf16.msra.mxu0 %v1324
  %1723 = vmatprep.subr.bf16.mxu0 0
  %1724 = vmatpush2.bf16.msra.mxu0 %v1323
  %1725 = vmatprep.subr.bf16.mxu0 0
  %1726 = vmatpush2.bf16.msra.mxu0 %v1322
  %1727 = vmatprep.subr.bf16.mxu0 0
  %1728 = vmatpush2.bf16.msra.mxu0 %v1321
  %1729 = vmatprep.subr.bf16.mxu0 0
  %1730 = vmatpush2.bf16.msra.mxu0 %v1320
  %1731 = vmatprep.subr.bf16.mxu0 0
  %1732 = vmatpush2.bf16.msra.mxu0 %v1319
  %1733 = vmatprep.subr.bf16.mxu0 0
  %1734 = vmatpush2.bf16.msra.mxu0 %v1318
  %1735 = vmatprep.subr.bf16.mxu0 0
  %1736 = vmatpush2.bf16.msra.mxu0 %v1317
  %1737 = vmatprep.mubr.bf16.mxu0 %v477
  %1738 = vmatmul.mubr.bf16.gmra.mxu0 %v476
  %v1739 = vpop.f32.mrf.mxu0
  %v1740 = vadd.f32 %v436, %v1739
  %v1741 = vpop.f32.mrf.mxu0
  %v1742 = vpop.f32.mrf.mxu0
  %v1743 = vpop.f32.mrf.mxu0
  %1744 = vdwg.mxu0
  %1745 = vmatprep.subr.bf16.mxu0 0
  %1746 = vmatpush1.bf16.msra.mxu0 %v1332
  %1747 = vmatprep.subr.bf16.mxu0 0
  %1748 = vmatpush1.bf16.msra.mxu0 %v1331
  %1749 = vmatprep.subr.bf16.mxu0 0
  %1750 = vmatpush1.bf16.msra.mxu0 %v1330
  %1751 = vmatprep.subr.bf16.mxu0 0
  %1752 = vmatpush1.bf16.msra.mxu0 %v1329
  %1753 = vmatprep.subr.bf16.mxu0 0
  %1754 = vmatpush1.bf16.msra.mxu0 %v1328
  %1755 = vmatprep.subr.bf16.mxu0 0
  %1756 = vmatpush1.bf16.msra.mxu0 %v1327
  %1757 = vmatprep.subr.bf16.mxu0 0
  %1758 = vmatpush1.bf16.msra.mxu0 %v1326
  %1759 = vmatprep.subr.bf16.mxu0 0
  %1760 = vmatpush1.bf16.msra.mxu0 %v1325
  %1761 = vmatprep.subr.bf16.mxu0 0
  %1762 = vmatpush2.bf16.msra.mxu0 %v1340
  %1763 = vmatprep.subr.bf16.mxu0 0
  %1764 = vmatpush2.bf16.msra.mxu0 %v1339
  %1765 = vmatprep.subr.bf16.mxu0 0
  %1766 = vmatpush2.bf16.msra.mxu0 %v1338
  %1767 = vmatprep.subr.bf16.mxu0 0
  %1768 = vmatpush2.bf16.msra.mxu0 %v1337
  %1769 = vmatprep.subr.bf16.mxu0 0
  %1770 = vmatpush2.bf16.msra.mxu0 %v1336
  %1771 = vmatprep.subr.bf16.mxu0 0
  %1772 = vmatpush2.bf16.msra.mxu0 %v1335
  %1773 = vmatprep.subr.bf16.mxu0 0
  %1774 = vmatpush2.bf16.msra.mxu0 %v1334
  %1775 = vmatprep.subr.bf16.mxu0 0
  %1776 = vmatpush2.bf16.msra.mxu0 %v1333
  %1777 = vmatprep.mubr.bf16.mxu0 %v479
  %1778 = vmatmul.mubr.bf16.gmra.mxu0 %v478
  %v1779 = vpop.f32.mrf.mxu0
  %v1780 = vadd.f32 %v1740, %v1779
  %v1781 = vpop.f32.mrf.mxu0
  %v1782 = vpop.f32.mrf.mxu0
  %v1783 = vpop.f32.mrf.mxu0
  %1784 = vdwg.mxu0
  %1785 = vmatprep.subr.bf16.mxu0 0
  %1786 = vmatpush1.bf16.msra.mxu0 %v1348
  %1787 = vmatprep.subr.bf16.mxu0 0
  %1788 = vmatpush1.bf16.msra.mxu0 %v1347
  %1789 = vmatprep.subr.bf16.mxu0 0
  %1790 = vmatpush1.bf16.msra.mxu0 %v1346
  %1791 = vmatprep.subr.bf16.mxu0 0
  %1792 = vmatpush1.bf16.msra.mxu0 %v1345
  %1793 = vmatprep.subr.bf16.mxu0 0
  %1794 = vmatpush1.bf16.msra.mxu0 %v1344
  %1795 = vmatprep.subr.bf16.mxu0 0
  %1796 = vmatpush1.bf16.msra.mxu0 %v1343
  %1797 = vmatprep.subr.bf16.mxu0 0
  %1798 = vmatpush1.bf16.msra.mxu0 %v1342
  %1799 = vmatprep.subr.bf16.mxu0 0
  %1800 = vmatpush1.bf16.msra.mxu0 %v1341
  %1801 = vmatprep.subr.bf16.mxu0 0
  %1802 = vmatpush2.bf16.msra.mxu0 %v1356
  %1803 = vmatprep.subr.bf16.mxu0 0
  %1804 = vmatpush2.bf16.msra.mxu0 %v1355
  %1805 = vmatprep.subr.bf16.mxu0 0
  %1806 = vmatpush2.bf16.msra.mxu0 %v1354
  %1807 = vmatprep.subr.bf16.mxu0 0
  %1808 = vmatpush2.bf16.msra.mxu0 %v1353
  %1809 = vmatprep.subr.bf16.mxu0 0
  %1810 = vmatpush2.bf16.msra.mxu0 %v1352
  %1811 = vmatprep.subr.bf16.mxu0 0
  %1812 = vmatpush2.bf16.msra.mxu0 %v1351
  %1813 = vmatprep.subr.bf16.mxu0 0
  %1814 = vmatpush2.bf16.msra.mxu0 %v1350
  %1815 = vmatprep.subr.bf16.mxu0 0
  %1816 = vmatpush2.bf16.msra.mxu0 %v1349
  %1817 = vmatprep.mubr.bf16.mxu0 %v481
  %1818 = vmatmul.mubr.bf16.gmra.mxu0 %v480
  %v1819 = vpop.f32.mrf.mxu0
  %v1820 = vadd.f32 %v1780, %v1819
  %v1821 = vpop.f32.mrf.mxu0
  %v1822 = vpop.f32.mrf.mxu0
  %v1823 = vpop.f32.mrf.mxu0
  %1824 = vdwg.mxu0
  %1825 = vmatprep.subr.bf16.mxu0 0
  %1826 = vmatpush1.bf16.msra.mxu0 %v1364
  %1827 = vmatprep.subr.bf16.mxu0 0
  %1828 = vmatpush1.bf16.msra.mxu0 %v1363
  %1829 = vmatprep.subr.bf16.mxu0 0
  %1830 = vmatpush1.bf16.msra.mxu0 %v1362
  %1831 = vmatprep.subr.bf16.mxu0 0
  %1832 = vmatpush1.bf16.msra.mxu0 %v1361
  %1833 = vmatprep.subr.bf16.mxu0 0
  %1834 = vmatpush1.bf16.msra.mxu0 %v1360
  %1835 = vmatprep.subr.bf16.mxu0 0
  %1836 = vmatpush1.bf16.msra.mxu0 %v1359
  %1837 = vmatprep.subr.bf16.mxu0 0
  %1838 = vmatpush1.bf16.msra.mxu0 %v1358
  %1839 = vmatprep.subr.bf16.mxu0 0
  %1840 = vmatpush1.bf16.msra.mxu0 %v1357
  %1841 = vmatprep.subr.bf16.mxu0 0
  %1842 = vmatpush2.bf16.msra.mxu0 %v1372
  %1843 = vmatprep.subr.bf16.mxu0 0
  %1844 = vmatpush2.bf16.msra.mxu0 %v1371
  %1845 = vmatprep.subr.bf16.mxu0 0
  %1846 = vmatpush2.bf16.msra.mxu0 %v1370
  %1847 = vmatprep.subr.bf16.mxu0 0
  %1848 = vmatpush2.bf16.msra.mxu0 %v1369
  %1849 = vmatprep.subr.bf16.mxu0 0
  %1850 = vmatpush2.bf16.msra.mxu0 %v1368
  %1851 = vmatprep.subr.bf16.mxu0 0
  %1852 = vmatpush2.bf16.msra.mxu0 %v1367
  %1853 = vmatprep.subr.bf16.mxu0 0
  %1854 = vmatpush2.bf16.msra.mxu0 %v1366
  %1855 = vmatprep.subr.bf16.mxu0 0
  %1856 = vmatpush2.bf16.msra.mxu0 %v1365
  %1857 = vmatprep.mubr.bf16.mxu0 %v483
  %1858 = vmatmul.mubr.bf16.gmra.mxu0 %v482
  %v1859 = vpop.f32.mrf.mxu0
  %v1860 = vadd.f32 %v1820, %v1859
  %v1861 = vpop.f32.mrf.mxu0
  %v1862 = vpop.f32.mrf.mxu0
  %v1863 = vpop.f32.mrf.mxu0
  %1864 = vdwg.mxu0
  %1865 = vmatprep.subr.bf16.mxu0 0
  %1866 = vmatpush1.bf16.msra.mxu0 %v1380
  %1867 = vmatprep.subr.bf16.mxu0 0
  %1868 = vmatpush1.bf16.msra.mxu0 %v1379
  %1869 = vmatprep.subr.bf16.mxu0 0
  %1870 = vmatpush1.bf16.msra.mxu0 %v1378
  %1871 = vmatprep.subr.bf16.mxu0 0
  %1872 = vmatpush1.bf16.msra.mxu0 %v1377
  %1873 = vmatprep.subr.bf16.mxu0 0
  %1874 = vmatpush1.bf16.msra.mxu0 %v1376
  %1875 = vmatprep.subr.bf16.mxu0 0
  %1876 = vmatpush1.bf16.msra.mxu0 %v1375
  %1877 = vmatprep.subr.bf16.mxu0 0
  %1878 = vmatpush1.bf16.msra.mxu0 %v1374
  %1879 = vmatprep.subr.bf16.mxu0 0
  %1880 = vmatpush1.bf16.msra.mxu0 %v1373
  %1881 = vmatprep.subr.bf16.mxu0 0
  %1882 = vmatpush2.bf16.msra.mxu0 %v1388
  %1883 = vmatprep.subr.bf16.mxu0 0
  %1884 = vmatpush2.bf16.msra.mxu0 %v1387
  %1885 = vmatprep.subr.bf16.mxu0 0
  %1886 = vmatpush2.bf16.msra.mxu0 %v1386
  %1887 = vmatprep.subr.bf16.mxu0 0
  %1888 = vmatpush2.bf16.msra.mxu0 %v1385
  %1889 = vmatprep.subr.bf16.mxu0 0
  %1890 = vmatpush2.bf16.msra.mxu0 %v1384
  %1891 = vmatprep.subr.bf16.mxu0 0
  %1892 = vmatpush2.bf16.msra.mxu0 %v1383
  %1893 = vmatprep.subr.bf16.mxu0 0
  %1894 = vmatpush2.bf16.msra.mxu0 %v1382
  %1895 = vmatprep.subr.bf16.mxu0 0
  %1896 = vmatpush2.bf16.msra.mxu0 %v1381
  %1897 = vmatprep.mubr.bf16.mxu0 %v485
  %1898 = vmatmul.mubr.bf16.gmra.mxu0 %v484
  %v1899 = vpop.f32.mrf.mxu0
  %v1900 = vadd.f32 %v1860, %v1899
  %v1901 = vpop.f32.mrf.mxu0
  %v1902 = vpop.f32.mrf.mxu0
  %v1903 = vpop.f32.mrf.mxu0
  %1904 = vdwg.mxu0
  %1905 = vmatprep.subr.bf16.mxu0 0
  %1906 = vmatpush1.bf16.msra.mxu0 %v1396
  %1907 = vmatprep.subr.bf16.mxu0 0
  %1908 = vmatpush1.bf16.msra.mxu0 %v1395
  %1909 = vmatprep.subr.bf16.mxu0 0
  %1910 = vmatpush1.bf16.msra.mxu0 %v1394
  %1911 = vmatprep.subr.bf16.mxu0 0
  %1912 = vmatpush1.bf16.msra.mxu0 %v1393
  %1913 = vmatprep.subr.bf16.mxu0 0
  %1914 = vmatpush1.bf16.msra.mxu0 %v1392
  %1915 = vmatprep.subr.bf16.mxu0 0
  %1916 = vmatpush1.bf16.msra.mxu0 %v1391
  %1917 = vmatprep.subr.bf16.mxu0 0
  %1918 = vmatpush1.bf16.msra.mxu0 %v1390
  %1919 = vmatprep.subr.bf16.mxu0 0
  %1920 = vmatpush1.bf16.msra.mxu0 %v1389
  %1921 = vmatprep.subr.bf16.mxu0 0
  %1922 = vmatpush2.bf16.msra.mxu0 %v1404
  %1923 = vmatprep.subr.bf16.mxu0 0
  %1924 = vmatpush2.bf16.msra.mxu0 %v1403
  %1925 = vmatprep.subr.bf16.mxu0 0
  %1926 = vmatpush2.bf16.msra.mxu0 %v1402
  %1927 = vmatprep.subr.bf16.mxu0 0
  %1928 = vmatpush2.bf16.msra.mxu0 %v1401
  %1929 = vmatprep.subr.bf16.mxu0 0
  %1930 = vmatpush2.bf16.msra.mxu0 %v1400
  %1931 = vmatprep.subr.bf16.mxu0 0
  %1932 = vmatpush2.bf16.msra.mxu0 %v1399
  %1933 = vmatprep.subr.bf16.mxu0 0
  %1934 = vmatpush2.bf16.msra.mxu0 %v1398
  %1935 = vmatprep.subr.bf16.mxu0 0
  %1936 = vmatpush2.bf16.msra.mxu0 %v1397
  %1937 = vmatprep.mubr.bf16.mxu0 %v487
  %1938 = vmatmul.mubr.bf16.gmra.mxu0 %v486
  %v1939 = vpop.f32.mrf.mxu0
  %v1940 = vadd.f32 %v1900, %v1939
  %v1941 = vpop.f32.mrf.mxu0
  %v1942 = vpop.f32.mrf.mxu0
  %v1943 = vpop.f32.mrf.mxu0
  %1944 = vdwg.mxu0
  %1945 = vmatprep.subr.bf16.mxu0 0
  %1946 = vmatpush1.bf16.msra.mxu0 %v1412
  %1947 = vmatprep.subr.bf16.mxu0 0
  %1948 = vmatpush1.bf16.msra.mxu0 %v1411
  %1949 = vmatprep.subr.bf16.mxu0 0
  %1950 = vmatpush1.bf16.msra.mxu0 %v1410
  %1951 = vmatprep.subr.bf16.mxu0 0
  %1952 = vmatpush1.bf16.msra.mxu0 %v1409
  %1953 = vmatprep.subr.bf16.mxu0 0
  %1954 = vmatpush1.bf16.msra.mxu0 %v1408
  %1955 = vmatprep.subr.bf16.mxu0 0
  %1956 = vmatpush1.bf16.msra.mxu0 %v1407
  %1957 = vmatprep.subr.bf16.mxu0 0
  %1958 = vmatpush1.bf16.msra.mxu0 %v1406
  %1959 = vmatprep.subr.bf16.mxu0 0
  %1960 = vmatpush1.bf16.msra.mxu0 %v1405
  %1961 = vmatprep.subr.bf16.mxu0 0
  %1962 = vmatpush2.bf16.msra.mxu0 %v1420
  %1963 = vmatprep.subr.bf16.mxu0 0
  %1964 = vmatpush2.bf16.msra.mxu0 %v1419
  %1965 = vmatprep.subr.bf16.mxu0 0
  %1966 = vmatpush2.bf16.msra.mxu0 %v1418
  %1967 = vmatprep.subr.bf16.mxu0 0
  %1968 = vmatpush2.bf16.msra.mxu0 %v1417
  %1969 = vmatprep.subr.bf16.mxu0 0
  %1970 = vmatpush2.bf16.msra.mxu0 %v1416
  %1971 = vmatprep.subr.bf16.mxu0 0
  %1972 = vmatpush2.bf16.msra.mxu0 %v1415
  %1973 = vmatprep.subr.bf16.mxu0 0
  %1974 = vmatpush2.bf16.msra.mxu0 %v1414
  %1975 = vmatprep.subr.bf16.mxu0 0
  %1976 = vmatpush2.bf16.msra.mxu0 %v1413
  %1977 = vmatprep.mubr.bf16.mxu0 %v489
  %1978 = vmatmul.mubr.bf16.gmra.mxu0 %v488
  %v1979 = vpop.f32.mrf.mxu0
  %v1980 = vadd.f32 %v1940, %v1979
  %v1981 = vpop.f32.mrf.mxu0
  %v1982 = vpop.f32.mrf.mxu0
  %v1983 = vpop.f32.mrf.mxu0
  %1984 = vdwg.mxu0
  %1985 = vmatprep.subr.bf16.mxu0 0
  %1986 = vmatpush1.bf16.msra.mxu0 %v1428
  %1987 = vmatprep.subr.bf16.mxu0 0
  %1988 = vmatpush1.bf16.msra.mxu0 %v1427
  %1989 = vmatprep.subr.bf16.mxu0 0
  %1990 = vmatpush1.bf16.msra.mxu0 %v1426
  %1991 = vmatprep.subr.bf16.mxu0 0
  %1992 = vmatpush1.bf16.msra.mxu0 %v1425
  %1993 = vmatprep.subr.bf16.mxu0 0
  %1994 = vmatpush1.bf16.msra.mxu0 %v1424
  %1995 = vmatprep.subr.bf16.mxu0 0
  %1996 = vmatpush1.bf16.msra.mxu0 %v1423
  %1997 = vmatprep.subr.bf16.mxu0 0
  %1998 = vmatpush1.bf16.msra.mxu0 %v1422
  %1999 = vmatprep.subr.bf16.mxu0 0
  %2000 = vmatpush1.bf16.msra.mxu0 %v1421
  %2001 = vmatprep.subr.bf16.mxu0 0
  %2002 = vmatpush2.bf16.msra.mxu0 %v1436
  %2003 = vmatprep.subr.bf16.mxu0 0
  %2004 = vmatpush2.bf16.msra.mxu0 %v1435
  %2005 = vmatprep.subr.bf16.mxu0 0
  %2006 = vmatpush2.bf16.msra.mxu0 %v1434
  %2007 = vmatprep.subr.bf16.mxu0 0
  %2008 = vmatpush2.bf16.msra.mxu0 %v1433
  %2009 = vmatprep.subr.bf16.mxu0 0
  %2010 = vmatpush2.bf16.msra.mxu0 %v1432
  %2011 = vmatprep.subr.bf16.mxu0 0
  %2012 = vmatpush2.bf16.msra.mxu0 %v1431
  %2013 = vmatprep.subr.bf16.mxu0 0
  %2014 = vmatpush2.bf16.msra.mxu0 %v1430
  %2015 = vmatprep.subr.bf16.mxu0 0
  %2016 = vmatpush2.bf16.msra.mxu0 %v1429
  %2017 = vmatprep.mubr.bf16.mxu0 %v491
  %2018 = vmatmul.mubr.bf16.gmra.mxu0 %v490
  %v2019 = vpop.f32.mrf.mxu0
  %v2020 = vadd.f32 %v1980, %v2019
  %v2021 = vpop.f32.mrf.mxu0
  %v2022 = vpop.f32.mrf.mxu0
  %v2023 = vpop.f32.mrf.mxu0
  %2024 = vdwg.mxu0
  %2025 = vmatprep.subr.bf16.mxu0 0
  %2026 = vmatpush1.bf16.msra.mxu0 %v1444
  %2027 = vmatprep.subr.bf16.mxu0 0
  %2028 = vmatpush1.bf16.msra.mxu0 %v1443
  %2029 = vmatprep.subr.bf16.mxu0 0
  %2030 = vmatpush1.bf16.msra.mxu0 %v1442
  %2031 = vmatprep.subr.bf16.mxu0 0
  %2032 = vmatpush1.bf16.msra.mxu0 %v1441
  %2033 = vmatprep.subr.bf16.mxu0 0
  %2034 = vmatpush1.bf16.msra.mxu0 %v1440
  %2035 = vmatprep.subr.bf16.mxu0 0
  %2036 = vmatpush1.bf16.msra.mxu0 %v1439
  %2037 = vmatprep.subr.bf16.mxu0 0
  %2038 = vmatpush1.bf16.msra.mxu0 %v1438
  %2039 = vmatprep.subr.bf16.mxu0 0
  %2040 = vmatpush1.bf16.msra.mxu0 %v1437
  %2041 = vmatprep.subr.bf16.mxu0 0
  %2042 = vmatpush2.bf16.msra.mxu0 %v1452
  %2043 = vmatprep.subr.bf16.mxu0 0
  %2044 = vmatpush2.bf16.msra.mxu0 %v1451
  %2045 = vmatprep.subr.bf16.mxu0 0
  %2046 = vmatpush2.bf16.msra.mxu0 %v1450
  %2047 = vmatprep.subr.bf16.mxu0 0
  %2048 = vmatpush2.bf16.msra.mxu0 %v1449
  %2049 = vmatprep.subr.bf16.mxu0 0
  %2050 = vmatpush2.bf16.msra.mxu0 %v1448
  %2051 = vmatprep.subr.bf16.mxu0 0
  %2052 = vmatpush2.bf16.msra.mxu0 %v1447
  %2053 = vmatprep.subr.bf16.mxu0 0
  %2054 = vmatpush2.bf16.msra.mxu0 %v1446
  %2055 = vmatprep.subr.bf16.mxu0 0
  %2056 = vmatpush2.bf16.msra.mxu0 %v1445
  %2057 = vmatprep.mubr.bf16.mxu0 %v493
  %2058 = vmatmul.mubr.bf16.gmra.mxu0 %v492
  %v2059 = vpop.f32.mrf.mxu0
  %v2060 = vadd.f32 %v2020, %v2059
  %v2061 = vpop.f32.mrf.mxu0
  %v2062 = vpop.f32.mrf.mxu0
  %v2063 = vpop.f32.mrf.mxu0
  %2064 = vdwg.mxu0
  %2065 = vmatprep.subr.bf16.mxu0 0
  %2066 = vmatpush1.bf16.msra.mxu0 %v1460
  %2067 = vmatprep.subr.bf16.mxu0 0
  %2068 = vmatpush1.bf16.msra.mxu0 %v1459
  %2069 = vmatprep.subr.bf16.mxu0 0
  %2070 = vmatpush1.bf16.msra.mxu0 %v1458
  %2071 = vmatprep.subr.bf16.mxu0 0
  %2072 = vmatpush1.bf16.msra.mxu0 %v1457
  %2073 = vmatprep.subr.bf16.mxu0 0
  %2074 = vmatpush1.bf16.msra.mxu0 %v1456
  %2075 = vmatprep.subr.bf16.mxu0 0
  %2076 = vmatpush1.bf16.msra.mxu0 %v1455
  %2077 = vmatprep.subr.bf16.mxu0 0
  %2078 = vmatpush1.bf16.msra.mxu0 %v1454
  %2079 = vmatprep.subr.bf16.mxu0 0
  %2080 = vmatpush1.bf16.msra.mxu0 %v1453
  %2081 = vmatprep.subr.bf16.mxu0 0
  %2082 = vmatpush2.bf16.msra.mxu0 %v1468
  %2083 = vmatprep.subr.bf16.mxu0 0
  %2084 = vmatpush2.bf16.msra.mxu0 %v1467
  %2085 = vmatprep.subr.bf16.mxu0 0
  %2086 = vmatpush2.bf16.msra.mxu0 %v1466
  %2087 = vmatprep.subr.bf16.mxu0 0
  %2088 = vmatpush2.bf16.msra.mxu0 %v1465
  %2089 = vmatprep.subr.bf16.mxu0 0
  %2090 = vmatpush2.bf16.msra.mxu0 %v1464
  %2091 = vmatprep.subr.bf16.mxu0 0
  %2092 = vmatpush2.bf16.msra.mxu0 %v1463
  %2093 = vmatprep.subr.bf16.mxu0 0
  %2094 = vmatpush2.bf16.msra.mxu0 %v1462
  %2095 = vmatprep.subr.bf16.mxu0 0
  %2096 = vmatpush2.bf16.msra.mxu0 %v1461
  %2097 = vmatprep.mubr.bf16.mxu0 %v495
  %2098 = vmatmul.mubr.bf16.gmra.mxu0 %v494
  %v2099 = vpop.f32.mrf.mxu0
  %v2100 = vadd.f32 %v2060, %v2099
  %v2101 = vpop.f32.mrf.mxu0
  %v2102 = vpop.f32.mrf.mxu0
  %v2103 = vpop.f32.mrf.mxu0
  %2104 = vdwg.mxu0
  %2105 = vmatprep.subr.bf16.mxu0 0
  %2106 = vmatpush1.bf16.msra.mxu0 %v1476
  %2107 = vmatprep.subr.bf16.mxu0 0
  %2108 = vmatpush1.bf16.msra.mxu0 %v1475
  %2109 = vmatprep.subr.bf16.mxu0 0
  %2110 = vmatpush1.bf16.msra.mxu0 %v1474
  %2111 = vmatprep.subr.bf16.mxu0 0
  %2112 = vmatpush1.bf16.msra.mxu0 %v1473
  %2113 = vmatprep.subr.bf16.mxu0 0
  %2114 = vmatpush1.bf16.msra.mxu0 %v1472
  %2115 = vmatprep.subr.bf16.mxu0 0
  %2116 = vmatpush1.bf16.msra.mxu0 %v1471
  %2117 = vmatprep.subr.bf16.mxu0 0
  %2118 = vmatpush1.bf16.msra.mxu0 %v1470
  %2119 = vmatprep.subr.bf16.mxu0 0
  %2120 = vmatpush1.bf16.msra.mxu0 %v1469
  %2121 = vmatprep.subr.bf16.mxu0 0
  %2122 = vmatpush2.bf16.msra.mxu0 %v1484
  %2123 = vmatprep.subr.bf16.mxu0 0
  %2124 = vmatpush2.bf16.msra.mxu0 %v1483
  %2125 = vmatprep.subr.bf16.mxu0 0
  %2126 = vmatpush2.bf16.msra.mxu0 %v1482
  %2127 = vmatprep.subr.bf16.mxu0 0
  %2128 = vmatpush2.bf16.msra.mxu0 %v1481
  %2129 = vmatprep.subr.bf16.mxu0 0
  %2130 = vmatpush2.bf16.msra.mxu0 %v1480
  %2131 = vmatprep.subr.bf16.mxu0 0
  %2132 = vmatpush2.bf16.msra.mxu0 %v1479
  %2133 = vmatprep.subr.bf16.mxu0 0
  %2134 = vmatpush2.bf16.msra.mxu0 %v1478
  %2135 = vmatprep.subr.bf16.mxu0 0
  %2136 = vmatpush2.bf16.msra.mxu0 %v1477
  %2137 = vmatprep.mubr.bf16.mxu0 %v497
  %2138 = vmatmul.mubr.bf16.gmra.mxu0 %v496
  %v2139 = vpop.f32.mrf.mxu0
  %v2140 = vadd.f32 %v2100, %v2139
  %v2141 = vpop.f32.mrf.mxu0
  %v2142 = vpop.f32.mrf.mxu0
  %v2143 = vpop.f32.mrf.mxu0
  %2144 = vdwg.mxu0
  %2145 = vmatprep.subr.bf16.mxu0 0
  %2146 = vmatpush1.bf16.msra.mxu0 %v1492
  %2147 = vmatprep.subr.bf16.mxu0 0
  %2148 = vmatpush1.bf16.msra.mxu0 %v1491
  %2149 = vmatprep.subr.bf16.mxu0 0
  %2150 = vmatpush1.bf16.msra.mxu0 %v1490
  %2151 = vmatprep.subr.bf16.mxu0 0
  %2152 = vmatpush1.bf16.msra.mxu0 %v1489
  %2153 = vmatprep.subr.bf16.mxu0 0
  %2154 = vmatpush1.bf16.msra.mxu0 %v1488
  %2155 = vmatprep.subr.bf16.mxu0 0
  %2156 = vmatpush1.bf16.msra.mxu0 %v1487
  %2157 = vmatprep.subr.bf16.mxu0 0
  %2158 = vmatpush1.bf16.msra.mxu0 %v1486
  %2159 = vmatprep.subr.bf16.mxu0 0
  %2160 = vmatpush1.bf16.msra.mxu0 %v1485
  %2161 = vmatprep.subr.bf16.mxu0 0
  %2162 = vmatpush2.bf16.msra.mxu0 %v1500
  %2163 = vmatprep.subr.bf16.mxu0 0
  %2164 = vmatpush2.bf16.msra.mxu0 %v1499
  %2165 = vmatprep.subr.bf16.mxu0 0
  %2166 = vmatpush2.bf16.msra.mxu0 %v1498
  %2167 = vmatprep.subr.bf16.mxu0 0
  %2168 = vmatpush2.bf16.msra.mxu0 %v1497
  %2169 = vmatprep.subr.bf16.mxu0 0
  %2170 = vmatpush2.bf16.msra.mxu0 %v1496
  %2171 = vmatprep.subr.bf16.mxu0 0
  %2172 = vmatpush2.bf16.msra.mxu0 %v1495
  %2173 = vmatprep.subr.bf16.mxu0 0
  %2174 = vmatpush2.bf16.msra.mxu0 %v1494
  %2175 = vmatprep.subr.bf16.mxu0 0
  %2176 = vmatpush2.bf16.msra.mxu0 %v1493
  %2177 = vmatprep.mubr.bf16.mxu0 %v499
  %2178 = vmatmul.mubr.bf16.gmra.mxu0 %v498
  %v2179 = vpop.f32.mrf.mxu0
  %v2180 = vadd.f32 %v2140, %v2179
  %v2181 = vpop.f32.mrf.mxu0
  %v2182 = vpop.f32.mrf.mxu0
  %v2183 = vpop.f32.mrf.mxu0
  %2184 = vdwg.mxu0
  %2185 = vmatprep.subr.bf16.mxu0 0
  %2186 = vmatpush1.bf16.msra.mxu0 0
  %2187 = vmatprep.subr.bf16.mxu0 0
  %2188 = vmatpush1.bf16.msra.mxu0 0
  %2189 = vmatprep.subr.bf16.mxu0 0
  %2190 = vmatpush1.bf16.msra.mxu0 0
  %2191 = vmatprep.subr.bf16.mxu0 0
  %2192 = vmatpush1.bf16.msra.mxu0 0
  %2193 = vmatprep.subr.bf16.mxu0 0
  %2194 = vmatpush1.bf16.msra.mxu0 %v1504
  %2195 = vmatprep.subr.bf16.mxu0 0
  %2196 = vmatpush1.bf16.msra.mxu0 %v1503
  %2197 = vmatprep.subr.bf16.mxu0 0
  %2198 = vmatpush1.bf16.msra.mxu0 %v1502
  %2199 = vmatprep.subr.bf16.mxu0 0
  %2200 = vmatpush1.bf16.msra.mxu0 %v1501
  %2201 = vmatprep.subr.bf16.mxu0 0
  %2202 = vmatpush2.bf16.msra.mxu0 0
  %2203 = vmatprep.subr.bf16.mxu0 0
  %2204 = vmatpush2.bf16.msra.mxu0 0
  %2205 = vmatprep.subr.bf16.mxu0 0
  %2206 = vmatpush2.bf16.msra.mxu0 0
  %2207 = vmatprep.subr.bf16.mxu0 0
  %2208 = vmatpush2.bf16.msra.mxu0 0
  %2209 = vmatprep.subr.bf16.mxu0 0
  %2210 = vmatpush2.bf16.msra.mxu0 0
  %2211 = vmatprep.subr.bf16.mxu0 0
  %2212 = vmatpush2.bf16.msra.mxu0 0
  %2213 = vmatprep.subr.bf16.mxu0 0
  %2214 = vmatpush2.bf16.msra.mxu0 0
  %2215 = vmatprep.subr.bf16.mxu0 0
  %2216 = vmatpush2.bf16.msra.mxu0 0
  %2217 = vmatprep.mubr.bf16.mxu0 0
  %2218 = vmatmul.mubr.bf16.gmra.mxu0 %v1703
  %v2219 = vpop.f32.mrf.mxu0
  %v2220 = vadd.f32 %v2180, %v2219
  %v2221 = vpop.f32.mrf.mxu0
  %v2222 = vpop.f32.mrf.mxu0
  %v2223 = vpop.f32.mrf.mxu0
  %2224 = vdwg.mxu0
  %v2225 = vld [vmem:[%s3] sm:$0xff]
  %v2226 = vmul.f32 %v2220, 0.5
  %v2227 = vmul.f32 %v2226, 1.442695
  %v2228 = vpow.pop %v2227
  %2230 = vrot.lane.b32.xlu0 %v2228, 96
  %v2231 = vpop.permute.xlu0 %2230
  %v2233 = vmul.f32 %v2225, %v2231
  %v2234 = vadd.f32 %v2220, %v2233
  %2236 = vrot.lane.b32.xlu0 %v2234, 64
  %v2237 = vpop.permute.xlu0 %2236
  %v2239 = vsel %vm1701, %v2220, %v2237
  %vm2240 = vcmask 785408
  %v2241 = vsel %vm2240, %v2239, 0.0
  %2242 = vst [vmem:[%s6] sm:$0xff] %v2241
  %v2243 = vpack.c.bf16 %v2234, %v2234
  %v2244 = vld [vmem:[%s4] sm:$0xff]
  %v2245 = vld [vmem:[%s4 + $0x8] sm:$0xff]
  %v2246 = vld [vmem:[%s4 + $0x10] sm:$0xff]
  %v2247 = vld [vmem:[%s4 + $0x18] sm:$0xff]
  %v2248 = vld [vmem:[%s4 + $0x20] sm:$0xff]
  %v2249 = vld [vmem:[%s4 + $0x28] sm:$0xff]
  %v2250 = vld [vmem:[%s4 + $0x30] sm:$0xff]
  %v2251 = vld [vmem:[%s4 + $0x38] sm:$0xff]
  %v2252 = vld [vmem:[%s4 + $0x40] sm:$0xff]
  %v2253 = vld [vmem:[%s4 + $0x48] sm:$0xff]
  %v2254 = vld [vmem:[%s4 + $0x50] sm:$0xff]
  %v2255 = vld [vmem:[%s4 + $0x58] sm:$0xff]
  %v2256 = vld [vmem:[%s4 + $0x60] sm:$0xf]
  %v2257 = vld [vmem:[%s4 + $0x64] sm:$0xff]
  %v2258 = vld [vmem:[%s4 + $0x6c] sm:$0xff]
  %v2259 = vld [vmem:[%s4 + $0x74] sm:$0xff]
  %v2260 = vld [vmem:[%s4 + $0x7c] sm:$0xff]
  %v2261 = vld [vmem:[%s4 + $0x84] sm:$0xff]
  %v2262 = vld [vmem:[%s4 + $0x8c] sm:$0xff]
  %v2263 = vld [vmem:[%s4 + $0x94] sm:$0xff]
  %v2264 = vld [vmem:[%s4 + $0x9c] sm:$0xff]
  %v2265 = vld [vmem:[%s4 + $0xa4] sm:$0xff]
  %v2266 = vld [vmem:[%s4 + $0xac] sm:$0xff]
  %v2267 = vld [vmem:[%s4 + $0xb4] sm:$0xff]
  %v2268 = vld [vmem:[%s4 + $0xbc] sm:$0xff]
  %v2269 = vld [vmem:[%s4 + $0xc4] sm:$0xf]
  %v2270 = vld [vmem:[%s4 + $0xc8] sm:$0xff]
  %v2271 = vld [vmem:[%s4 + $0xd0] sm:$0xff]
  %v2272 = vld [vmem:[%s4 + $0xd8] sm:$0xff]
  %v2273 = vld [vmem:[%s4 + $0xe0] sm:$0xff]
  %v2274 = vld [vmem:[%s4 + $0xe8] sm:$0xff]
  %v2275 = vld [vmem:[%s4 + $0xf0] sm:$0xff]
  %v2276 = vld [vmem:[%s4 + $0xf8] sm:$0xff]
  %v2277 = vld [vmem:[%s4 + $0x100] sm:$0xff]
  %v2278 = vld [vmem:[%s4 + $0x108] sm:$0xff]
  %v2279 = vld [vmem:[%s4 + $0x110] sm:$0xff]
  %v2280 = vld [vmem:[%s4 + $0x118] sm:$0xff]
  %v2281 = vld [vmem:[%s4 + $0x120] sm:$0xff]
  %v2282 = vld [vmem:[%s4 + $0x128] sm:$0xf]
  %v2283 = vld [vmem:[%s4 + $0x12c] sm:$0xff]
  %v2284 = vld [vmem:[%s4 + $0x134] sm:$0xff]
  %v2285 = vld [vmem:[%s4 + $0x13c] sm:$0xff]
  %v2286 = vld [vmem:[%s4 + $0x144] sm:$0xff]
  %v2287 = vld [vmem:[%s4 + $0x14c] sm:$0xff]
  %v2288 = vld [vmem:[%s4 + $0x154] sm:$0xff]
  %v2289 = vld [vmem:[%s4 + $0x15c] sm:$0xff]
  %v2290 = vld [vmem:[%s4 + $0x164] sm:$0xff]
  %v2291 = vld [vmem:[%s4 + $0x16c] sm:$0xff]
  %v2292 = vld [vmem:[%s4 + $0x174] sm:$0xff]
  %v2293 = vld [vmem:[%s4 + $0x17c] sm:$0xff]
  %v2294 = vld [vmem:[%s4 + $0x184] sm:$0xff]
  %v2295 = vld [vmem:[%s4 + $0x18c] sm:$0xf]
  %v2296 = vld [vmem:[%s5] sm:$0xff]
  %v2297 = vld [vmem:[%s5 + $0x8] sm:$0xff]
  %v2298 = vld [vmem:[%s5 + $0x10] sm:$0xff]
  %v2299 = vld [vmem:[%s5 + $0x18] sm:$0x1]
  %v2304 = vlaneseq
  %v2305 = vshrl.u32 %v2304, 7
  %v2306 = vsub.s32 0, %v2305
  %v2307 = vrot.slane %v2296, %v2306
  %v2308 = vlaneseq
  %v2309 = vshrl.u32 %v2308, 7
  %v2310 = vsub.s32 1, %v2309
  %v2311 = vrot.slane %v2296, %v2310
  %v2312 = vlaneseq
  %v2313 = vshrl.u32 %v2312, 7
  %v2314 = vsub.s32 2, %v2313
  %v2315 = vrot.slane %v2296, %v2314
  %v2316 = vlaneseq
  %v2317 = vshrl.u32 %v2316, 7
  %v2318 = vsub.s32 3, %v2317
  %v2319 = vrot.slane %v2296, %v2318
  %v2320 = vlaneseq
  %v2321 = vshrl.u32 %v2320, 7
  %v2322 = vsub.s32 4, %v2321
  %v2323 = vrot.slane %v2296, %v2322
  %v2324 = vlaneseq
  %v2325 = vshrl.u32 %v2324, 7
  %v2326 = vsub.s32 5, %v2325
  %v2327 = vrot.slane %v2296, %v2326
  %v2328 = vlaneseq
  %v2329 = vshrl.u32 %v2328, 7
  %v2330 = vsub.s32 6, %v2329
  %v2331 = vrot.slane %v2296, %v2330
  %v2332 = vlaneseq
  %v2333 = vshrl.u32 %v2332, 7
  %v2334 = vsub.s32 7, %v2333
  %v2335 = vrot.slane %v2296, %v2334
  %v2336 = vlaneseq
  %v2337 = vshrl.u32 %v2336, 7
  %v2338 = vsub.s32 0, %v2337
  %v2339 = vrot.slane %v2297, %v2338
  %v2340 = vlaneseq
  %v2341 = vshrl.u32 %v2340, 7
  %v2342 = vsub.s32 1, %v2341
  %v2343 = vrot.slane %v2297, %v2342
  %v2344 = vlaneseq
  %v2345 = vshrl.u32 %v2344, 7
  %v2346 = vsub.s32 2, %v2345
  %v2347 = vrot.slane %v2297, %v2346
  %v2348 = vlaneseq
  %v2349 = vshrl.u32 %v2348, 7
  %v2350 = vsub.s32 3, %v2349
  %v2351 = vrot.slane %v2297, %v2350
  %v2352 = vlaneseq
  %v2353 = vshrl.u32 %v2352, 7
  %v2354 = vsub.s32 4, %v2353
  %v2355 = vrot.slane %v2297, %v2354
  %v2356 = vlaneseq
  %v2357 = vshrl.u32 %v2356, 7
  %v2358 = vsub.s32 5, %v2357
  %v2359 = vrot.slane %v2297, %v2358
  %v2360 = vlaneseq
  %v2361 = vshrl.u32 %v2360, 7
  %v2362 = vsub.s32 6, %v2361
  %v2363 = vrot.slane %v2297, %v2362
  %v2364 = vlaneseq
  %v2365 = vshrl.u32 %v2364, 7
  %v2366 = vsub.s32 7, %v2365
  %v2367 = vrot.slane %v2297, %v2366
  %v2368 = vlaneseq
  %v2369 = vshrl.u32 %v2368, 7
  %v2370 = vsub.s32 0, %v2369
  %v2371 = vrot.slane %v2298, %v2370
  %v2372 = vlaneseq
  %v2373 = vshrl.u32 %v2372, 7
  %v2374 = vsub.s32 1, %v2373
  %v2375 = vrot.slane %v2298, %v2374
  %v2376 = vlaneseq
  %v2377 = vshrl.u32 %v2376, 7
  %v2378 = vsub.s32 2, %v2377
  %v2379 = vrot.slane %v2298, %v2378
  %v2380 = vlaneseq
  %v2381 = vshrl.u32 %v2380, 7
  %v2382 = vsub.s32 3, %v2381
  %v2383 = vrot.slane %v2298, %v2382
  %v2384 = vlaneseq
  %v2385 = vshrl.u32 %v2384, 7
  %v2386 = vsub.s32 4, %v2385
  %v2387 = vrot.slane %v2298, %v2386
  %v2388 = vlaneseq
  %v2389 = vshrl.u32 %v2388, 7
  %v2390 = vsub.s32 5, %v2389
  %v2391 = vrot.slane %v2298, %v2390
  %v2392 = vlaneseq
  %v2393 = vshrl.u32 %v2392, 7
  %v2394 = vsub.s32 6, %v2393
  %v2395 = vrot.slane %v2298, %v2394
  %v2396 = vlaneseq
  %v2397 = vshrl.u32 %v2396, 7
  %v2398 = vsub.s32 7, %v2397
  %v2399 = vrot.slane %v2298, %v2398
  %v2400 = vlaneseq
  %v2401 = vshrl.u32 %v2400, 7
  %v2402 = vsub.s32 0, %v2401
  %v2403 = vrot.slane %v2299, %v2402
  %v2481 = vunpack.c.l.b16 %v2244
  %v2482 = vunpack.c.h.b16 %v2244
  %v2483 = vunpack.c.l.b16 %v2245
  %v2484 = vunpack.c.h.b16 %v2245
  %v2485 = vunpack.c.l.b16 %v2246
  %v2486 = vunpack.c.h.b16 %v2246
  %v2487 = vunpack.c.l.b16 %v2247
  %v2488 = vunpack.c.h.b16 %v2247
  %v2489 = vunpack.c.l.b16 %v2248
  %v2490 = vunpack.c.h.b16 %v2248
  %v2491 = vunpack.c.l.b16 %v2249
  %v2492 = vunpack.c.h.b16 %v2249
  %v2493 = vunpack.c.l.b16 %v2250
  %v2494 = vunpack.c.h.b16 %v2250
  %v2495 = vunpack.c.l.b16 %v2251
  %v2496 = vunpack.c.h.b16 %v2251
  %v2497 = vunpack.c.l.b16 %v2252
  %v2498 = vunpack.c.h.b16 %v2252
  %v2499 = vunpack.c.l.b16 %v2253
  %v2500 = vunpack.c.h.b16 %v2253
  %v2501 = vunpack.c.l.b16 %v2254
  %v2502 = vunpack.c.h.b16 %v2254
  %v2503 = vunpack.c.l.b16 %v2255
  %v2504 = vunpack.c.h.b16 %v2255
  %v2505 = vunpack.c.l.b16 %v2256
  %v2506 = vunpack.c.l.b16 %v2257
  %v2507 = vunpack.c.h.b16 %v2257
  %v2508 = vunpack.c.l.b16 %v2258
  %v2509 = vunpack.c.h.b16 %v2258
  %v2510 = vunpack.c.l.b16 %v2259
  %v2511 = vunpack.c.h.b16 %v2259
  %v2512 = vunpack.c.l.b16 %v2260
  %v2513 = vunpack.c.h.b16 %v2260
  %v2514 = vunpack.c.l.b16 %v2261
  %v2515 = vunpack.c.h.b16 %v2261
  %v2516 = vunpack.c.l.b16 %v2262
  %v2517 = vunpack.c.h.b16 %v2262
  %v2518 = vunpack.c.l.b16 %v2263
  %v2519 = vunpack.c.h.b16 %v2263
  %v2520 = vunpack.c.l.b16 %v2264
  %v2521 = vunpack.c.h.b16 %v2264
  %v2522 = vunpack.c.l.b16 %v2265
  %v2523 = vunpack.c.h.b16 %v2265
  %v2524 = vunpack.c.l.b16 %v2266
  %v2525 = vunpack.c.h.b16 %v2266
  %v2526 = vunpack.c.l.b16 %v2267
  %v2527 = vunpack.c.h.b16 %v2267
  %v2528 = vunpack.c.l.b16 %v2268
  %v2529 = vunpack.c.h.b16 %v2268
  %v2530 = vunpack.c.l.b16 %v2269
  %v2531 = vunpack.c.l.b16 %v2270
  %v2532 = vunpack.c.h.b16 %v2270
  %v2533 = vunpack.c.l.b16 %v2271
  %v2534 = vunpack.c.h.b16 %v2271
  %v2535 = vunpack.c.l.b16 %v2272
  %v2536 = vunpack.c.h.b16 %v2272
  %v2537 = vunpack.c.l.b16 %v2273
  %v2538 = vunpack.c.h.b16 %v2273
  %v2539 = vunpack.c.l.b16 %v2274
  %v2540 = vunpack.c.h.b16 %v2274
  %v2541 = vunpack.c.l.b16 %v2275
  %v2542 = vunpack.c.h.b16 %v2275
  %v2543 = vunpack.c.l.b16 %v2276
  %v2544 = vunpack.c.h.b16 %v2276
  %v2545 = vunpack.c.l.b16 %v2277
  %v2546 = vunpack.c.h.b16 %v2277
  %v2547 = vunpack.c.l.b16 %v2278
  %v2548 = vunpack.c.h.b16 %v2278
  %v2549 = vunpack.c.l.b16 %v2279
  %v2550 = vunpack.c.h.b16 %v2279
  %v2551 = vunpack.c.l.b16 %v2280
  %v2552 = vunpack.c.h.b16 %v2280
  %v2553 = vunpack.c.l.b16 %v2281
  %v2554 = vunpack.c.h.b16 %v2281
  %v2555 = vunpack.c.l.b16 %v2282
  %v2556 = vunpack.c.l.b16 %v2283
  %v2557 = vunpack.c.h.b16 %v2283
  %v2558 = vunpack.c.l.b16 %v2284
  %v2559 = vunpack.c.h.b16 %v2284
  %v2560 = vunpack.c.l.b16 %v2285
  %v2561 = vunpack.c.h.b16 %v2285
  %v2562 = vunpack.c.l.b16 %v2286
  %v2563 = vunpack.c.h.b16 %v2286
  %v2564 = vunpack.c.l.b16 %v2287
  %v2565 = vunpack.c.h.b16 %v2287
  %v2566 = vunpack.c.l.b16 %v2288
  %v2567 = vunpack.c.h.b16 %v2288
  %v2568 = vunpack.c.l.b16 %v2289
  %v2569 = vunpack.c.h.b16 %v2289
  %v2570 = vunpack.c.l.b16 %v2290
  %v2571 = vunpack.c.h.b16 %v2290
  %v2572 = vunpack.c.l.b16 %v2291
  %v2573 = vunpack.c.h.b16 %v2291
  %v2574 = vunpack.c.l.b16 %v2292
  %v2575 = vunpack.c.h.b16 %v2292
  %v2576 = vunpack.c.l.b16 %v2293
  %v2577 = vunpack.c.h.b16 %v2293
  %v2578 = vunpack.c.l.b16 %v2294
  %v2579 = vunpack.c.h.b16 %v2294
  %v2580 = vunpack.c.l.b16 %v2295
  %v2581 = vpack.c.b16 %v2506, %v2481
  %v2582 = vpack.c.b16 %v2507, %v2482
  %v2583 = vpack.c.b16 %v2508, %v2483
  %v2584 = vpack.c.b16 %v2509, %v2484
  %v2585 = vpack.c.b16 %v2510, %v2485
  %v2586 = vpack.c.b16 %v2511, %v2486
  %v2587 = vpack.c.b16 %v2512, %v2487
  %v2588 = vpack.c.b16 %v2513, %v2488
  %v2589 = vpack.c.b16 %v2514, %v2489
  %v2590 = vpack.c.b16 %v2515, %v2490
  %v2591 = vpack.c.b16 %v2516, %v2491
  %v2592 = vpack.c.b16 %v2517, %v2492
  %v2593 = vpack.c.b16 %v2518, %v2493
  %v2594 = vpack.c.b16 %v2519, %v2494
  %v2595 = vpack.c.b16 %v2520, %v2495
  %v2596 = vpack.c.b16 %v2521, %v2496
  %v2597 = vpack.c.b16 %v2522, %v2497
  %v2598 = vpack.c.b16 %v2523, %v2498
  %v2599 = vpack.c.b16 %v2524, %v2499
  %v2600 = vpack.c.b16 %v2525, %v2500
  %v2601 = vpack.c.b16 %v2526, %v2501
  %v2602 = vpack.c.b16 %v2527, %v2502
  %v2603 = vpack.c.b16 %v2528, %v2503
  %v2604 = vpack.c.b16 %v2529, %v2504
  %v2605 = vpack.c.b16 %v2530, %v2505
  %v2606 = vpack.c.b16 %v2556, %v2531
  %v2607 = vpack.c.b16 %v2557, %v2532
  %v2608 = vpack.c.b16 %v2558, %v2533
  %v2609 = vpack.c.b16 %v2559, %v2534
  %v2610 = vpack.c.b16 %v2560, %v2535
  %v2611 = vpack.c.b16 %v2561, %v2536
  %v2612 = vpack.c.b16 %v2562, %v2537
  %v2613 = vpack.c.b16 %v2563, %v2538
  %v2614 = vpack.c.b16 %v2564, %v2539
  %v2615 = vpack.c.b16 %v2565, %v2540
  %v2616 = vpack.c.b16 %v2566, %v2541
  %v2617 = vpack.c.b16 %v2567, %v2542
  %v2618 = vpack.c.b16 %v2568, %v2543
  %v2619 = vpack.c.b16 %v2569, %v2544
  %v2620 = vpack.c.b16 %v2570, %v2545
  %v2621 = vpack.c.b16 %v2571, %v2546
  %v2622 = vpack.c.b16 %v2572, %v2547
  %v2623 = vpack.c.b16 %v2573, %v2548
  %v2624 = vpack.c.b16 %v2574, %v2549
  %v2625 = vpack.c.b16 %v2575, %v2550
  %v2626 = vpack.c.b16 %v2576, %v2551
  %v2627 = vpack.c.b16 %v2577, %v2552
  %v2628 = vpack.c.b16 %v2578, %v2553
  %v2629 = vpack.c.b16 %v2579, %v2554
  %v2630 = vpack.c.b16 %v2580, %v2555
  %vm2681 = vcmask 261120
  %v2683 = vsel %vm2681, %v2243, 0
  %2685 = vmatprep.subr.bf16.mxu0 0
  %2686 = vmatpush1.bf16.msra.mxu0 0
  %2687 = vmatprep.subr.bf16.mxu0 0
  %2688 = vmatpush1.bf16.msra.mxu0 0
  %2689 = vmatprep.subr.bf16.mxu0 0
  %2690 = vmatpush1.bf16.msra.mxu0 0
  %2691 = vmatprep.subr.bf16.mxu0 0
  %2692 = vmatpush1.bf16.msra.mxu0 0
  %2693 = vmatprep.subr.bf16.mxu0 0
  %2694 = vmatpush1.bf16.msra.mxu0 0
  %2695 = vmatprep.subr.bf16.mxu0 0
  %2696 = vmatpush1.bf16.msra.mxu0 0
  %2697 = vmatprep.subr.bf16.mxu0 %v2607
  %2698 = vmatpush1.bf16.msra.mxu0 %v2606
  %2699 = vmatprep.subr.bf16.mxu0 %v2582
  %2700 = vmatpush1.bf16.msra.mxu0 %v2581
  %2701 = vmatprep.subr.bf16.mxu0 0
  %2702 = vmatpush2.bf16.msra.mxu0 0
  %2703 = vmatprep.subr.bf16.mxu0 0
  %2704 = vmatpush2.bf16.msra.mxu0 0
  %2705 = vmatprep.subr.bf16.mxu0 0
  %2706 = vmatpush2.bf16.msra.mxu0 0
  %2707 = vmatprep.subr.bf16.mxu0 0
  %2708 = vmatpush2.bf16.msra.mxu0 0
  %2709 = vmatprep.subr.bf16.mxu0 0
  %2710 = vmatpush2.bf16.msra.mxu0 0
  %2711 = vmatprep.subr.bf16.mxu0 0
  %2712 = vmatpush2.bf16.msra.mxu0 0
  %2713 = vmatprep.subr.bf16.mxu0 0
  %2714 = vmatpush2.bf16.msra.mxu0 0
  %2715 = vmatprep.subr.bf16.mxu0 0
  %2716 = vmatpush2.bf16.msra.mxu0 0
  %2717 = vmatprep.mubr.bf16.mxu0 0
  %2718 = vmatmul.mubr.bf16.gmra.mxu0 %v2683
  %v2719 = vpop.f32.mrf.mxu0
  %v2720 = vadd.f32 %v2307, %v2719
  %v2721 = vpop.f32.mrf.mxu0
  %v2722 = vadd.f32 %v2311, %v2721
  %v2723 = vpop.f32.mrf.mxu0
  %v2724 = vpop.f32.mrf.mxu0
  %2725 = vdwg.mxu0
  %2726 = vmatprep.subr.bf16.mxu0 0
  %2727 = vmatpush1.bf16.msra.mxu0 0
  %2728 = vmatprep.subr.bf16.mxu0 0
  %2729 = vmatpush1.bf16.msra.mxu0 0
  %2730 = vmatprep.subr.bf16.mxu0 0
  %2731 = vmatpush1.bf16.msra.mxu0 0
  %2732 = vmatprep.subr.bf16.mxu0 0
  %2733 = vmatpush1.bf16.msra.mxu0 0
  %2734 = vmatprep.subr.bf16.mxu0 0
  %2735 = vmatpush1.bf16.msra.mxu0 0
  %2736 = vmatprep.subr.bf16.mxu0 0
  %2737 = vmatpush1.bf16.msra.mxu0 0
  %2738 = vmatprep.subr.bf16.mxu0 %v2609
  %2739 = vmatpush1.bf16.msra.mxu0 %v2608
  %2740 = vmatprep.subr.bf16.mxu0 %v2584
  %2741 = vmatpush1.bf16.msra.mxu0 %v2583
  %2742 = vmatprep.subr.bf16.mxu0 0
  %2743 = vmatpush2.bf16.msra.mxu0 0
  %2744 = vmatprep.subr.bf16.mxu0 0
  %2745 = vmatpush2.bf16.msra.mxu0 0
  %2746 = vmatprep.subr.bf16.mxu0 0
  %2747 = vmatpush2.bf16.msra.mxu0 0
  %2748 = vmatprep.subr.bf16.mxu0 0
  %2749 = vmatpush2.bf16.msra.mxu0 0
  %2750 = vmatprep.subr.bf16.mxu0 0
  %2751 = vmatpush2.bf16.msra.mxu0 0
  %2752 = vmatprep.subr.bf16.mxu0 0
  %2753 = vmatpush2.bf16.msra.mxu0 0
  %2754 = vmatprep.subr.bf16.mxu0 0
  %2755 = vmatpush2.bf16.msra.mxu0 0
  %2756 = vmatprep.subr.bf16.mxu0 0
  %2757 = vmatpush2.bf16.msra.mxu0 0
  %2758 = vmatprep.mubr.bf16.mxu0 0
  %2759 = vmatmul.mubr.bf16.gmra.mxu0 %v2683
  %v2760 = vpop.f32.mrf.mxu0
  %v2761 = vadd.f32 %v2315, %v2760
  %v2762 = vpop.f32.mrf.mxu0
  %v2763 = vadd.f32 %v2319, %v2762
  %v2764 = vpop.f32.mrf.mxu0
  %v2765 = vpop.f32.mrf.mxu0
  %2766 = vdwg.mxu0
  %2767 = vmatprep.subr.bf16.mxu0 0
  %2768 = vmatpush1.bf16.msra.mxu0 0
  %2769 = vmatprep.subr.bf16.mxu0 0
  %2770 = vmatpush1.bf16.msra.mxu0 0
  %2771 = vmatprep.subr.bf16.mxu0 0
  %2772 = vmatpush1.bf16.msra.mxu0 0
  %2773 = vmatprep.subr.bf16.mxu0 0
  %2774 = vmatpush1.bf16.msra.mxu0 0
  %2775 = vmatprep.subr.bf16.mxu0 0
  %2776 = vmatpush1.bf16.msra.mxu0 0
  %2777 = vmatprep.subr.bf16.mxu0 0
  %2778 = vmatpush1.bf16.msra.mxu0 0
  %2779 = vmatprep.subr.bf16.mxu0 %v2611
  %2780 = vmatpush1.bf16.msra.mxu0 %v2610
  %2781 = vmatprep.subr.bf16.mxu0 %v2586
  %2782 = vmatpush1.bf16.msra.mxu0 %v2585
  %2783 = vmatprep.subr.bf16.mxu0 0
  %2784 = vmatpush2.bf16.msra.mxu0 0
  %2785 = vmatprep.subr.bf16.mxu0 0
  %2786 = vmatpush2.bf16.msra.mxu0 0
  %2787 = vmatprep.subr.bf16.mxu0 0
  %2788 = vmatpush2.bf16.msra.mxu0 0
  %2789 = vmatprep.subr.bf16.mxu0 0
  %2790 = vmatpush2.bf16.msra.mxu0 0
  %2791 = vmatprep.subr.bf16.mxu0 0
  %2792 = vmatpush2.bf16.msra.mxu0 0
  %2793 = vmatprep.subr.bf16.mxu0 0
  %2794 = vmatpush2.bf16.msra.mxu0 0
  %2795 = vmatprep.subr.bf16.mxu0 0
  %2796 = vmatpush2.bf16.msra.mxu0 0
  %2797 = vmatprep.subr.bf16.mxu0 0
  %2798 = vmatpush2.bf16.msra.mxu0 0
  %2799 = vmatprep.mubr.bf16.mxu0 0
  %2800 = vmatmul.mubr.bf16.gmra.mxu0 %v2683
  %v2801 = vpop.f32.mrf.mxu0
  %v2802 = vadd.f32 %v2323, %v2801
  %v2803 = vpop.f32.mrf.mxu0
  %v2804 = vadd.f32 %v2327, %v2803
  %v2805 = vpop.f32.mrf.mxu0
  %v2806 = vpop.f32.mrf.mxu0
  %2807 = vdwg.mxu0
  %2808 = vmatprep.subr.bf16.mxu0 0
  %2809 = vmatpush1.bf16.msra.mxu0 0
  %2810 = vmatprep.subr.bf16.mxu0 0
  %2811 = vmatpush1.bf16.msra.mxu0 0
  %2812 = vmatprep.subr.bf16.mxu0 0
  %2813 = vmatpush1.bf16.msra.mxu0 0
  %2814 = vmatprep.subr.bf16.mxu0 0
  %2815 = vmatpush1.bf16.msra.mxu0 0
  %2816 = vmatprep.subr.bf16.mxu0 0
  %2817 = vmatpush1.bf16.msra.mxu0 0
  %2818 = vmatprep.subr.bf16.mxu0 0
  %2819 = vmatpush1.bf16.msra.mxu0 0
  %2820 = vmatprep.subr.bf16.mxu0 %v2613
  %2821 = vmatpush1.bf16.msra.mxu0 %v2612
  %2822 = vmatprep.subr.bf16.mxu0 %v2588
  %2823 = vmatpush1.bf16.msra.mxu0 %v2587
  %2824 = vmatprep.subr.bf16.mxu0 0
  %2825 = vmatpush2.bf16.msra.mxu0 0
  %2826 = vmatprep.subr.bf16.mxu0 0
  %2827 = vmatpush2.bf16.msra.mxu0 0
  %2828 = vmatprep.subr.bf16.mxu0 0
  %2829 = vmatpush2.bf16.msra.mxu0 0
  %2830 = vmatprep.subr.bf16.mxu0 0
  %2831 = vmatpush2.bf16.msra.mxu0 0
  %2832 = vmatprep.subr.bf16.mxu0 0
  %2833 = vmatpush2.bf16.msra.mxu0 0
  %2834 = vmatprep.subr.bf16.mxu0 0
  %2835 = vmatpush2.bf16.msra.mxu0 0
  %2836 = vmatprep.subr.bf16.mxu0 0
  %2837 = vmatpush2.bf16.msra.mxu0 0
  %2838 = vmatprep.subr.bf16.mxu0 0
  %2839 = vmatpush2.bf16.msra.mxu0 0
  %2840 = vmatprep.mubr.bf16.mxu0 0
  %2841 = vmatmul.mubr.bf16.gmra.mxu0 %v2683
  %v2842 = vpop.f32.mrf.mxu0
  %v2843 = vadd.f32 %v2331, %v2842
  %v2844 = vpop.f32.mrf.mxu0
  %v2845 = vadd.f32 %v2335, %v2844
  %v2846 = vpop.f32.mrf.mxu0
  %v2847 = vpop.f32.mrf.mxu0
  %2848 = vdwg.mxu0
  %2849 = vmatprep.subr.bf16.mxu0 0
  %2850 = vmatpush1.bf16.msra.mxu0 0
  %2851 = vmatprep.subr.bf16.mxu0 0
  %2852 = vmatpush1.bf16.msra.mxu0 0
  %2853 = vmatprep.subr.bf16.mxu0 0
  %2854 = vmatpush1.bf16.msra.mxu0 0
  %2855 = vmatprep.subr.bf16.mxu0 0
  %2856 = vmatpush1.bf16.msra.mxu0 0
  %2857 = vmatprep.subr.bf16.mxu0 0
  %2858 = vmatpush1.bf16.msra.mxu0 0
  %2859 = vmatprep.subr.bf16.mxu0 0
  %2860 = vmatpush1.bf16.msra.mxu0 0
  %2861 = vmatprep.subr.bf16.mxu0 %v2615
  %2862 = vmatpush1.bf16.msra.mxu0 %v2614
  %2863 = vmatprep.subr.bf16.mxu0 %v2590
  %2864 = vmatpush1.bf16.msra.mxu0 %v2589
  %2865 = vmatprep.subr.bf16.mxu0 0
  %2866 = vmatpush2.bf16.msra.mxu0 0
  %2867 = vmatprep.subr.bf16.mxu0 0
  %2868 = vmatpush2.bf16.msra.mxu0 0
  %2869 = vmatprep.subr.bf16.mxu0 0
  %2870 = vmatpush2.bf16.msra.mxu0 0
  %2871 = vmatprep.subr.bf16.mxu0 0
  %2872 = vmatpush2.bf16.msra.mxu0 0
  %2873 = vmatprep.subr.bf16.mxu0 0
  %2874 = vmatpush2.bf16.msra.mxu0 0
  %2875 = vmatprep.subr.bf16.mxu0 0
  %2876 = vmatpush2.bf16.msra.mxu0 0
  %2877 = vmatprep.subr.bf16.mxu0 0
  %2878 = vmatpush2.bf16.msra.mxu0 0
  %2879 = vmatprep.subr.bf16.mxu0 0
  %2880 = vmatpush2.bf16.msra.mxu0 0
  %2881 = vmatprep.mubr.bf16.mxu0 0
  %2882 = vmatmul.mubr.bf16.gmra.mxu0 %v2683
  %v2883 = vpop.f32.mrf.mxu0
  %v2884 = vadd.f32 %v2339, %v2883
  %v2885 = vpop.f32.mrf.mxu0
  %v2886 = vadd.f32 %v2343, %v2885
  %v2887 = vpop.f32.mrf.mxu0
  %v2888 = vpop.f32.mrf.mxu0
  %2889 = vdwg.mxu0
  %2890 = vmatprep.subr.bf16.mxu0 0
  %2891 = vmatpush1.bf16.msra.mxu0 0
  %2892 = vmatprep.subr.bf16.mxu0 0
  %2893 = vmatpush1.bf16.msra.mxu0 0
  %2894 = vmatprep.subr.bf16.mxu0 0
  %2895 = vmatpush1.bf16.msra.mxu0 0
  %2896 = vmatprep.subr.bf16.mxu0 0
  %2897 = vmatpush1.bf16.msra.mxu0 0
  %2898 = vmatprep.subr.bf16.mxu0 0
  %2899 = vmatpush1.bf16.msra.mxu0 0
  %2900 = vmatprep.subr.bf16.mxu0 0
  %2901 = vmatpush1.bf16.msra.mxu0 0
  %2902 = vmatprep.subr.bf16.mxu0 %v2617
  %2903 = vmatpush1.bf16.msra.mxu0 %v2616
  %2904 = vmatprep.subr.bf16.mxu0 %v2592
  %2905 = vmatpush1.bf16.msra.mxu0 %v2591
  %2906 = vmatprep.subr.bf16.mxu0 0
  %2907 = vmatpush2.bf16.msra.mxu0 0
  %2908 = vmatprep.subr.bf16.mxu0 0
  %2909 = vmatpush2.bf16.msra.mxu0 0
  %2910 = vmatprep.subr.bf16.mxu0 0
  %2911 = vmatpush2.bf16.msra.mxu0 0
  %2912 = vmatprep.subr.bf16.mxu0 0
  %2913 = vmatpush2.bf16.msra.mxu0 0
  %2914 = vmatprep.subr.bf16.mxu0 0
  %2915 = vmatpush2.bf16.msra.mxu0 0
  %2916 = vmatprep.subr.bf16.mxu0 0
  %2917 = vmatpush2.bf16.msra.mxu0 0
  %2918 = vmatprep.subr.bf16.mxu0 0
  %2919 = vmatpush2.bf16.msra.mxu0 0
  %2920 = vmatprep.subr.bf16.mxu0 0
  %2921 = vmatpush2.bf16.msra.mxu0 0
  %2922 = vmatprep.mubr.bf16.mxu0 0
  %2923 = vmatmul.mubr.bf16.gmra.mxu0 %v2683
  %v2924 = vpop.f32.mrf.mxu0
  %v2925 = vadd.f32 %v2347, %v2924
  %v2926 = vpop.f32.mrf.mxu0
  %v2927 = vadd.f32 %v2351, %v2926
  %v2928 = vpop.f32.mrf.mxu0
  %v2929 = vpop.f32.mrf.mxu0
  %2930 = vdwg.mxu0
  %2931 = vmatprep.subr.bf16.mxu0 0
  %2932 = vmatpush1.bf16.msra.mxu0 0
  %2933 = vmatprep.subr.bf16.mxu0 0
  %2934 = vmatpush1.bf16.msra.mxu0 0
  %2935 = vmatprep.subr.bf16.mxu0 0
  %2936 = vmatpush1.bf16.msra.mxu0 0
  %2937 = vmatprep.subr.bf16.mxu0 0
  %2938 = vmatpush1.bf16.msra.mxu0 0
  %2939 = vmatprep.subr.bf16.mxu0 0
  %2940 = vmatpush1.bf16.msra.mxu0 0
  %2941 = vmatprep.subr.bf16.mxu0 0
  %2942 = vmatpush1.bf16.msra.mxu0 0
  %2943 = vmatprep.subr.bf16.mxu0 %v2619
  %2944 = vmatpush1.bf16.msra.mxu0 %v2618
  %2945 = vmatprep.subr.bf16.mxu0 %v2594
  %2946 = vmatpush1.bf16.msra.mxu0 %v2593
  %2947 = vmatprep.subr.bf16.mxu0 0
  %2948 = vmatpush2.bf16.msra.mxu0 0
  %2949 = vmatprep.subr.bf16.mxu0 0
  %2950 = vmatpush2.bf16.msra.mxu0 0
  %2951 = vmatprep.subr.bf16.mxu0 0
  %2952 = vmatpush2.bf16.msra.mxu0 0
  %2953 = vmatprep.subr.bf16.mxu0 0
  %2954 = vmatpush2.bf16.msra.mxu0 0
  %2955 = vmatprep.subr.bf16.mxu0 0
  %2956 = vmatpush2.bf16.msra.mxu0 0
  %2957 = vmatprep.subr.bf16.mxu0 0
  %2958 = vmatpush2.bf16.msra.mxu0 0
  %2959 = vmatprep.subr.bf16.mxu0 0
  %2960 = vmatpush2.bf16.msra.mxu0 0
  %2961 = vmatprep.subr.bf16.mxu0 0
  %2962 = vmatpush2.bf16.msra.mxu0 0
  %2963 = vmatprep.mubr.bf16.mxu0 0
  %2964 = vmatmul.mubr.bf16.gmra.mxu0 %v2683
  %v2965 = vpop.f32.mrf.mxu0
  %v2966 = vadd.f32 %v2355, %v2965
  %v2967 = vpop.f32.mrf.mxu0
  %v2968 = vadd.f32 %v2359, %v2967
  %v2969 = vpop.f32.mrf.mxu0
  %v2970 = vpop.f32.mrf.mxu0
  %2971 = vdwg.mxu0
  %2972 = vmatprep.subr.bf16.mxu0 0
  %2973 = vmatpush1.bf16.msra.mxu0 0
  %2974 = vmatprep.subr.bf16.mxu0 0
  %2975 = vmatpush1.bf16.msra.mxu0 0
  %2976 = vmatprep.subr.bf16.mxu0 0
  %2977 = vmatpush1.bf16.msra.mxu0 0
  %2978 = vmatprep.subr.bf16.mxu0 0
  %2979 = vmatpush1.bf16.msra.mxu0 0
  %2980 = vmatprep.subr.bf16.mxu0 0
  %2981 = vmatpush1.bf16.msra.mxu0 0
  %2982 = vmatprep.subr.bf16.mxu0 0
  %2983 = vmatpush1.bf16.msra.mxu0 0
  %2984 = vmatprep.subr.bf16.mxu0 %v2621
  %2985 = vmatpush1.bf16.msra.mxu0 %v2620
  %2986 = vmatprep.subr.bf16.mxu0 %v2596
  %2987 = vmatpush1.bf16.msra.mxu0 %v2595
  %2988 = vmatprep.subr.bf16.mxu0 0
  %2989 = vmatpush2.bf16.msra.mxu0 0
  %2990 = vmatprep.subr.bf16.mxu0 0
  %2991 = vmatpush2.bf16.msra.mxu0 0
  %2992 = vmatprep.subr.bf16.mxu0 0
  %2993 = vmatpush2.bf16.msra.mxu0 0
  %2994 = vmatprep.subr.bf16.mxu0 0
  %2995 = vmatpush2.bf16.msra.mxu0 0
  %2996 = vmatprep.subr.bf16.mxu0 0
  %2997 = vmatpush2.bf16.msra.mxu0 0
  %2998 = vmatprep.subr.bf16.mxu0 0
  %2999 = vmatpush2.bf16.msra.mxu0 0
  %3000 = vmatprep.subr.bf16.mxu0 0
  %3001 = vmatpush2.bf16.msra.mxu0 0
  %3002 = vmatprep.subr.bf16.mxu0 0
  %3003 = vmatpush2.bf16.msra.mxu0 0
  %3004 = vmatprep.mubr.bf16.mxu0 0
  %3005 = vmatmul.mubr.bf16.gmra.mxu0 %v2683
  %v3006 = vpop.f32.mrf.mxu0
  %v3007 = vadd.f32 %v2363, %v3006
  %v3008 = vpop.f32.mrf.mxu0
  %v3009 = vadd.f32 %v2367, %v3008
  %v3010 = vpop.f32.mrf.mxu0
  %v3011 = vpop.f32.mrf.mxu0
  %3012 = vdwg.mxu0
  %3013 = vmatprep.subr.bf16.mxu0 0
  %3014 = vmatpush1.bf16.msra.mxu0 0
  %3015 = vmatprep.subr.bf16.mxu0 0
  %3016 = vmatpush1.bf16.msra.mxu0 0
  %3017 = vmatprep.subr.bf16.mxu0 0
  %3018 = vmatpush1.bf16.msra.mxu0 0
  %3019 = vmatprep.subr.bf16.mxu0 0
  %3020 = vmatpush1.bf16.msra.mxu0 0
  %3021 = vmatprep.subr.bf16.mxu0 0
  %3022 = vmatpush1.bf16.msra.mxu0 0
  %3023 = vmatprep.subr.bf16.mxu0 0
  %3024 = vmatpush1.bf16.msra.mxu0 0
  %3025 = vmatprep.subr.bf16.mxu0 %v2623
  %3026 = vmatpush1.bf16.msra.mxu0 %v2622
  %3027 = vmatprep.subr.bf16.mxu0 %v2598
  %3028 = vmatpush1.bf16.msra.mxu0 %v2597
  %3029 = vmatprep.subr.bf16.mxu0 0
  %3030 = vmatpush2.bf16.msra.mxu0 0
  %3031 = vmatprep.subr.bf16.mxu0 0
  %3032 = vmatpush2.bf16.msra.mxu0 0
  %3033 = vmatprep.subr.bf16.mxu0 0
  %3034 = vmatpush2.bf16.msra.mxu0 0
  %3035 = vmatprep.subr.bf16.mxu0 0
  %3036 = vmatpush2.bf16.msra.mxu0 0
  %3037 = vmatprep.subr.bf16.mxu0 0
  %3038 = vmatpush2.bf16.msra.mxu0 0
  %3039 = vmatprep.subr.bf16.mxu0 0
  %3040 = vmatpush2.bf16.msra.mxu0 0
  %3041 = vmatprep.subr.bf16.mxu0 0
  %3042 = vmatpush2.bf16.msra.mxu0 0
  %3043 = vmatprep.subr.bf16.mxu0 0
  %3044 = vmatpush2.bf16.msra.mxu0 0
  %3045 = vmatprep.mubr.bf16.mxu0 0
  %3046 = vmatmul.mubr.bf16.gmra.mxu0 %v2683
  %v3047 = vpop.f32.mrf.mxu0
  %v3048 = vadd.f32 %v2371, %v3047
  %v3049 = vpop.f32.mrf.mxu0
  %v3050 = vadd.f32 %v2375, %v3049
  %v3051 = vpop.f32.mrf.mxu0
  %v3052 = vpop.f32.mrf.mxu0
  %3053 = vdwg.mxu0
  %3054 = vmatprep.subr.bf16.mxu0 0
  %3055 = vmatpush1.bf16.msra.mxu0 0
  %3056 = vmatprep.subr.bf16.mxu0 0
  %3057 = vmatpush1.bf16.msra.mxu0 0
  %3058 = vmatprep.subr.bf16.mxu0 0
  %3059 = vmatpush1.bf16.msra.mxu0 0
  %3060 = vmatprep.subr.bf16.mxu0 0
  %3061 = vmatpush1.bf16.msra.mxu0 0
  %3062 = vmatprep.subr.bf16.mxu0 0
  %3063 = vmatpush1.bf16.msra.mxu0 0
  %3064 = vmatprep.subr.bf16.mxu0 0
  %3065 = vmatpush1.bf16.msra.mxu0 0
  %3066 = vmatprep.subr.bf16.mxu0 %v2625
  %3067 = vmatpush1.bf16.msra.mxu0 %v2624
  %3068 = vmatprep.subr.bf16.mxu0 %v2600
  %3069 = vmatpush1.bf16.msra.mxu0 %v2599
  %3070 = vmatprep.subr.bf16.mxu0 0
  %3071 = vmatpush2.bf16.msra.mxu0 0
  %3072 = vmatprep.subr.bf16.mxu0 0
  %3073 = vmatpush2.bf16.msra.mxu0 0
  %3074 = vmatprep.subr.bf16.mxu0 0
  %3075 = vmatpush2.bf16.msra.mxu0 0
  %3076 = vmatprep.subr.bf16.mxu0 0
  %3077 = vmatpush2.bf16.msra.mxu0 0
  %3078 = vmatprep.subr.bf16.mxu0 0
  %3079 = vmatpush2.bf16.msra.mxu0 0
  %3080 = vmatprep.subr.bf16.mxu0 0
  %3081 = vmatpush2.bf16.msra.mxu0 0
  %3082 = vmatprep.subr.bf16.mxu0 0
  %3083 = vmatpush2.bf16.msra.mxu0 0
  %3084 = vmatprep.subr.bf16.mxu0 0
  %3085 = vmatpush2.bf16.msra.mxu0 0
  %3086 = vmatprep.mubr.bf16.mxu0 0
  %3087 = vmatmul.mubr.bf16.gmra.mxu0 %v2683
  %v3088 = vpop.f32.mrf.mxu0
  %v3089 = vadd.f32 %v2379, %v3088
  %v3090 = vpop.f32.mrf.mxu0
  %v3091 = vadd.f32 %v2383, %v3090
  %v3092 = vpop.f32.mrf.mxu0
  %v3093 = vpop.f32.mrf.mxu0
  %3094 = vdwg.mxu0
  %3095 = vmatprep.subr.bf16.mxu0 0
  %3096 = vmatpush1.bf16.msra.mxu0 0
  %3097 = vmatprep.subr.bf16.mxu0 0
  %3098 = vmatpush1.bf16.msra.mxu0 0
  %3099 = vmatprep.subr.bf16.mxu0 0
  %3100 = vmatpush1.bf16.msra.mxu0 0
  %3101 = vmatprep.subr.bf16.mxu0 0
  %3102 = vmatpush1.bf16.msra.mxu0 0
  %3103 = vmatprep.subr.bf16.mxu0 0
  %3104 = vmatpush1.bf16.msra.mxu0 0
  %3105 = vmatprep.subr.bf16.mxu0 0
  %3106 = vmatpush1.bf16.msra.mxu0 0
  %3107 = vmatprep.subr.bf16.mxu0 %v2627
  %3108 = vmatpush1.bf16.msra.mxu0 %v2626
  %3109 = vmatprep.subr.bf16.mxu0 %v2602
  %3110 = vmatpush1.bf16.msra.mxu0 %v2601
  %3111 = vmatprep.subr.bf16.mxu0 0
  %3112 = vmatpush2.bf16.msra.mxu0 0
  %3113 = vmatprep.subr.bf16.mxu0 0
  %3114 = vmatpush2.bf16.msra.mxu0 0
  %3115 = vmatprep.subr.bf16.mxu0 0
  %3116 = vmatpush2.bf16.msra.mxu0 0
  %3117 = vmatprep.subr.bf16.mxu0 0
  %3118 = vmatpush2.bf16.msra.mxu0 0
  %3119 = vmatprep.subr.bf16.mxu0 0
  %3120 = vmatpush2.bf16.msra.mxu0 0
  %3121 = vmatprep.subr.bf16.mxu0 0
  %3122 = vmatpush2.bf16.msra.mxu0 0
  %3123 = vmatprep.subr.bf16.mxu0 0
  %3124 = vmatpush2.bf16.msra.mxu0 0
  %3125 = vmatprep.subr.bf16.mxu0 0
  %3126 = vmatpush2.bf16.msra.mxu0 0
  %3127 = vmatprep.mubr.bf16.mxu0 0
  %3128 = vmatmul.mubr.bf16.gmra.mxu0 %v2683
  %v3129 = vpop.f32.mrf.mxu0
  %v3130 = vadd.f32 %v2387, %v3129
  %v3131 = vpop.f32.mrf.mxu0
  %v3132 = vadd.f32 %v2391, %v3131
  %v3133 = vpop.f32.mrf.mxu0
  %v3134 = vpop.f32.mrf.mxu0
  %3135 = vdwg.mxu0
  %3136 = vmatprep.subr.bf16.mxu0 0
  %3137 = vmatpush1.bf16.msra.mxu0 0
  %3138 = vmatprep.subr.bf16.mxu0 0
  %3139 = vmatpush1.bf16.msra.mxu0 0
  %3140 = vmatprep.subr.bf16.mxu0 0
  %3141 = vmatpush1.bf16.msra.mxu0 0
  %3142 = vmatprep.subr.bf16.mxu0 0
  %3143 = vmatpush1.bf16.msra.mxu0 0
  %3144 = vmatprep.subr.bf16.mxu0 0
  %3145 = vmatpush1.bf16.msra.mxu0 0
  %3146 = vmatprep.subr.bf16.mxu0 0
  %3147 = vmatpush1.bf16.msra.mxu0 0
  %3148 = vmatprep.subr.bf16.mxu0 %v2629
  %3149 = vmatpush1.bf16.msra.mxu0 %v2628
  %3150 = vmatprep.subr.bf16.mxu0 %v2604
  %3151 = vmatpush1.bf16.msra.mxu0 %v2603
  %3152 = vmatprep.subr.bf16.mxu0 0
  %3153 = vmatpush2.bf16.msra.mxu0 0
  %3154 = vmatprep.subr.bf16.mxu0 0
  %3155 = vmatpush2.bf16.msra.mxu0 0
  %3156 = vmatprep.subr.bf16.mxu0 0
  %3157 = vmatpush2.bf16.msra.mxu0 0
  %3158 = vmatprep.subr.bf16.mxu0 0
  %3159 = vmatpush2.bf16.msra.mxu0 0
  %3160 = vmatprep.subr.bf16.mxu0 0
  %3161 = vmatpush2.bf16.msra.mxu0 0
  %3162 = vmatprep.subr.bf16.mxu0 0
  %3163 = vmatpush2.bf16.msra.mxu0 0
  %3164 = vmatprep.subr.bf16.mxu0 0
  %3165 = vmatpush2.bf16.msra.mxu0 0
  %3166 = vmatprep.subr.bf16.mxu0 0
  %3167 = vmatpush2.bf16.msra.mxu0 0
  %3168 = vmatprep.mubr.bf16.mxu0 0
  %3169 = vmatmul.mubr.bf16.gmra.mxu0 %v2683
  %v3170 = vpop.f32.mrf.mxu0
  %v3171 = vadd.f32 %v2395, %v3170
  %v3172 = vpop.f32.mrf.mxu0
  %v3173 = vadd.f32 %v2399, %v3172
  %v3174 = vpop.f32.mrf.mxu0
  %v3175 = vpop.f32.mrf.mxu0
  %3176 = vdwg.mxu0
  %3177 = vmatprep.subr.bf16.mxu0 0
  %3178 = vmatpush1.bf16.msra.mxu0 0
  %3179 = vmatprep.subr.bf16.mxu0 0
  %3180 = vmatpush1.bf16.msra.mxu0 0
  %3181 = vmatprep.subr.bf16.mxu0 0
  %3182 = vmatpush1.bf16.msra.mxu0 0
  %3183 = vmatprep.subr.bf16.mxu0 0
  %3184 = vmatpush1.bf16.msra.mxu0 0
  %3185 = vmatprep.subr.bf16.mxu0 0
  %3186 = vmatpush1.bf16.msra.mxu0 0
  %3187 = vmatprep.subr.bf16.mxu0 0
  %3188 = vmatpush1.bf16.msra.mxu0 0
  %3189 = vmatprep.subr.bf16.mxu0 0
  %3190 = vmatpush1.bf16.msra.mxu0 %v2630
  %3191 = vmatprep.subr.bf16.mxu0 0
  %3192 = vmatpush1.bf16.msra.mxu0 %v2605
  %3193 = vmatprep.subr.bf16.mxu0 0
  %3194 = vmatpush2.bf16.msra.mxu0 0
  %3195 = vmatprep.subr.bf16.mxu0 0
  %3196 = vmatpush2.bf16.msra.mxu0 0
  %3197 = vmatprep.subr.bf16.mxu0 0
  %3198 = vmatpush2.bf16.msra.mxu0 0
  %3199 = vmatprep.subr.bf16.mxu0 0
  %3200 = vmatpush2.bf16.msra.mxu0 0
  %3201 = vmatprep.subr.bf16.mxu0 0
  %3202 = vmatpush2.bf16.msra.mxu0 0
  %3203 = vmatprep.subr.bf16.mxu0 0
  %3204 = vmatpush2.bf16.msra.mxu0 0
  %3205 = vmatprep.subr.bf16.mxu0 0
  %3206 = vmatpush2.bf16.msra.mxu0 0
  %3207 = vmatprep.subr.bf16.mxu0 0
  %3208 = vmatpush2.bf16.msra.mxu0 0
  %3209 = vmatprep.mubr.bf16.mxu0 0
  %3210 = vmatmul.mubr.bf16.gmra.mxu0 %v2683
  %v3211 = vpop.f32.mrf.mxu0
  %v3212 = vadd.f32 %v2403, %v3211
  %v3213 = vpop.f32.mrf.mxu0
  %v3214 = vpop.f32.mrf.mxu0
  %v3215 = vpop.f32.mrf.mxu0
  %3216 = vdwg.mxu0
  %v3217 = vpack.c.bf16 %v2720, %v2720
  %v3218 = vpack.c.bf16 %v2722, %v2722
  %v3219 = vpack.c.bf16 %v2761, %v2761
  %v3220 = vpack.c.bf16 %v2763, %v2763
  %v3221 = vpack.c.bf16 %v2802, %v2802
  %v3222 = vpack.c.bf16 %v2804, %v2804
  %v3223 = vpack.c.bf16 %v2843, %v2843
  %v3224 = vpack.c.bf16 %v2845, %v2845
  %v3225 = vpack.c.bf16 %v2884, %v2884
  %v3226 = vpack.c.bf16 %v2886, %v2886
  %v3227 = vpack.c.bf16 %v2925, %v2925
  %v3228 = vpack.c.bf16 %v2927, %v2927
  %v3229 = vpack.c.bf16 %v2966, %v2966
  %v3230 = vpack.c.bf16 %v2968, %v2968
  %v3231 = vpack.c.bf16 %v3007, %v3007
  %v3232 = vpack.c.bf16 %v3009, %v3009
  %v3233 = vpack.c.bf16 %v3048, %v3048
  %v3234 = vpack.c.bf16 %v3050, %v3050
  %v3235 = vpack.c.bf16 %v3089, %v3089
  %v3236 = vpack.c.bf16 %v3091, %v3091
  %v3237 = vpack.c.bf16 %v3130, %v3130
  %v3238 = vpack.c.bf16 %v3132, %v3132
  %v3239 = vpack.c.bf16 %v3171, %v3171
  %v3240 = vpack.c.bf16 %v3173, %v3173
  %v3241 = vpack.c.bf16 %v3212, %v3212
  %v3267 = vunpack.c.l.b16 %v3217
  %v3268 = vunpack.c.l.b16 %v3218
  %v3269 = vunpack.c.l.b16 %v3219
  %v3270 = vunpack.c.l.b16 %v3220
  %v3271 = vunpack.c.l.b16 %v3221
  %v3272 = vunpack.c.l.b16 %v3222
  %v3273 = vunpack.c.l.b16 %v3223
  %v3274 = vunpack.c.l.b16 %v3224
  %v3275 = vunpack.c.l.b16 %v3225
  %v3276 = vunpack.c.l.b16 %v3226
  %v3277 = vunpack.c.l.b16 %v3227
  %v3278 = vunpack.c.l.b16 %v3228
  %v3279 = vunpack.c.l.b16 %v3229
  %v3280 = vunpack.c.l.b16 %v3230
  %v3281 = vunpack.c.l.b16 %v3231
  %v3282 = vunpack.c.l.b16 %v3232
  %v3283 = vunpack.c.l.b16 %v3233
  %v3284 = vunpack.c.l.b16 %v3234
  %v3285 = vunpack.c.l.b16 %v3235
  %v3286 = vunpack.c.l.b16 %v3236
  %v3287 = vunpack.c.l.b16 %v3237
  %v3288 = vunpack.c.l.b16 %v3238
  %v3289 = vunpack.c.l.b16 %v3239
  %v3290 = vunpack.c.l.b16 %v3240
  %v3291 = vunpack.c.l.b16 %v3241
  %v3292 = vpack.c.b16 %v3268, %v3267
  %v3293 = vpack.c.b16 %v3270, %v3269
  %v3294 = vpack.c.b16 %v3272, %v3271
  %v3295 = vpack.c.b16 %v3274, %v3273
  %v3296 = vpack.c.b16 %v3276, %v3275
  %v3297 = vpack.c.b16 %v3278, %v3277
  %v3298 = vpack.c.b16 %v3280, %v3279
  %v3299 = vpack.c.b16 %v3282, %v3281
  %v3300 = vpack.c.b16 %v3284, %v3283
  %v3301 = vpack.c.b16 %v3286, %v3285
  %v3302 = vpack.c.b16 %v3288, %v3287
  %v3303 = vpack.c.b16 %v3290, %v3289
  %v3304 = vpack.c.b16 %v3291, %v3291
  %3318 = vst [vmem:[%s7] sm:$0xff] %v3292
  %3319 = vst [vmem:[%s7 + $0x8] sm:$0xff] %v3293
  %3320 = vst [vmem:[%s7 + $0x10] sm:$0xff] %v3294
  %3321 = vst [vmem:[%s7 + $0x18] sm:$0xff] %v3295
  %3322 = vst [vmem:[%s7 + $0x20] sm:$0xff] %v3296
  %3323 = vst [vmem:[%s7 + $0x28] sm:$0xff] %v3297
  %3324 = vst [vmem:[%s7 + $0x30] sm:$0xff] %v3298
  %3325 = vst [vmem:[%s7 + $0x38] sm:$0xff] %v3299
  %3326 = vst [vmem:[%s7 + $0x40] sm:$0xff] %v3300
  %3327 = vst [vmem:[%s7 + $0x48] sm:$0xff] %v3301
  %3328 = vst [vmem:[%s7 + $0x50] sm:$0xff] %v3302
  %3329 = vst [vmem:[%s7 + $0x58] sm:$0xff] %v3303
  %vm3330 = vcmask 519168
  %3331 = vst.msk [vmem:[%s7 + $0x60] sm:$0xf] %vm3330, %v3304
  // Predicated region
  $region26: #{vae_forward.13} parent=0 // pred_check
    _
  $region27: #{vae_forward.13} parent=0 // pred_check_branch
    %3333 = sbr.rel (0) target = $region29
  $region28: #{vae_forward.13} parent=0 // pred_region
    _
  $region29: #{vae_forward.13} parent=0 // pred_fallthru
    _
  // Predicated region
  $region30: #{vae_forward.13} parent=0 // pred_check
    _
  $region31: #{vae_forward.13} parent=0 // pred_check_branch
    %3335 = sbr.rel (0) target = $region33
  $region32: #{vae_forward.13} parent=0 // pred_region
    _
  $region33: #{vae_forward.13} parent=0 // pred_fallthru
    _
  // Predicated region
  $region34: #{vae_forward.13} parent=0 // pred_check
    _
  $region35: #{vae_forward.13} parent=0 // pred_check_branch
    %3337 = sbr.rel (0) target = $region37
  $region36: #{vae_forward.13} parent=0 // pred_region
    _
  $region37: #{vae_forward.13} parent=0 // pred_fallthru
    _
  // Predicated region
  $region38: #{vae_forward.13} parent=0 // pred_check
    _
  $region39: #{vae_forward.13} parent=0 // pred_check_branch
    %3339 = sbr.rel (0) target = $region41
  $region40: #{vae_forward.13} parent=0 // pred_region
    _
  $region41: #{vae_forward.13} parent=0 // pred_fallthru
    _

// kernel: vae_forward.15
$region0: #{vae_forward.15}
  #allocation0 [shape = 'u32[]', space=smem, size = 0x4, offset = 0x4, fixed_abs, tag = 'smem constant byte address 0x4 - core index']
  #allocation1 [shape = 'u32[144,128]{1,0:T(1,128)}', space=vmem, size = 0x12000, scoped, tag = 'internal scratch']
  %s0 = inlined_call_operand.vmem [shape: bf16[344,576], index: 0, kind: input, shape index: {}]
  %s1 = inlined_call_operand.vmem [shape: bf16[576,128], index: 1, kind: input, shape index: {}]
  %s2 = inlined_call_operand.vmem [shape: f32[1,128], index: 2, kind: input, shape index: {}]
  %s3 = inlined_call_operand.vmem [shape: bf16[344,128], index: 3, kind: output, shape index: {}]
  %s4 = sld [smem:[#allocation0]]
  $region22: #{vae_forward.15} parent=0
    _
  %s6 = ssub.s32 1, %s4
  %s7 = scalar_select 0, %s6, %s4
  // Predicated region
  $region2: #{vae_forward.15} parent=0 // pred_check
    _
  $region3: #{vae_forward.15} parent=0 // pred_check_branch
    %9 = sbr.rel (0) target = $region5
  $region4: #{vae_forward.15} parent=0 // pred_region
    _
  $region5: #{vae_forward.15} parent=0 // pred_fallthru
    _
  // Predicated region
  $region6: #{vae_forward.15} parent=0 // pred_check
    _
  $region7: #{vae_forward.15} parent=0 // pred_check_branch
    %11 = sbr.rel (0) target = $region9
  $region8: #{vae_forward.15} parent=0 // pred_region
    _
  $region9: #{vae_forward.15} parent=0 // pred_fallthru
    _
  // Predicated region
  $region10: #{vae_forward.15} parent=0 // pred_check
    _
  $region11: #{vae_forward.15} parent=0 // pred_check_branch
    %13 = sbr.rel (0) target = $region13
  $region12: #{vae_forward.15} parent=0 // pred_region
    _
  $region13: #{vae_forward.15} parent=0 // pred_fallthru
    _
  %v15 = vld [vmem:[%s0] sm:$0xff]
  %v16 = vld [vmem:[%s0 + $0x8] sm:$0xff]
  %v17 = vld [vmem:[%s0 + $0x10] sm:$0xf]
  %v18 = vld [vmem:[%s0 + $0x14] sm:$0xff]
  %v19 = vld [vmem:[%s0 + $0x1c] sm:$0xff]
  %v20 = vld [vmem:[%s0 + $0x24] sm:$0xf]
  %v21 = vld [vmem:[%s0 + $0x28] sm:$0xff]
  %v22 = vld [vmem:[%s0 + $0x30] sm:$0xff]
  %v23 = vld [vmem:[%s0 + $0x38] sm:$0xf]
  %v24 = vld [vmem:[%s0 + $0x3c] sm:$0xff]
  %v25 = vld [vmem:[%s0 + $0x44] sm:$0xff]
  %v26 = vld [vmem:[%s0 + $0x4c] sm:$0xf]
  %v27 = vld [vmem:[%s0 + $0x50] sm:$0xff]
  %v28 = vld [vmem:[%s0 + $0x58] sm:$0xff]
  %v29 = vld [vmem:[%s0 + $0x60] sm:$0xf]
  %v30 = vld [vmem:[%s0 + $0x64] sm:$0xff]
  %v31 = vld [vmem:[%s0 + $0x6c] sm:$0xff]
  %v32 = vld [vmem:[%s0 + $0x74] sm:$0xf]
  %v33 = vld [vmem:[%s0 + $0x78] sm:$0xff]
  %v34 = vld [vmem:[%s0 + $0x80] sm:$0xff]
  %v35 = vld [vmem:[%s0 + $0x88] sm:$0xf]
  %v36 = vld [vmem:[%s0 + $0x8c] sm:$0xff]
  %v37 = vld [vmem:[%s0 + $0x94] sm:$0xff]
  %v38 = vld [vmem:[%s0 + $0x9c] sm:$0xf]
  %v39 = vld [vmem:[%s0 + $0xa0] sm:$0xff]
  %v40 = vld [vmem:[%s0 + $0xa8] sm:$0xff]
  %v41 = vld [vmem:[%s0 + $0xb0] sm:$0xf]
  %v42 = vld [vmem:[%s0 + $0xb4] sm:$0xff]
  %v43 = vld [vmem:[%s0 + $0xbc] sm:$0xff]
  %v44 = vld [vmem:[%s0 + $0xc4] sm:$0xf]
  %v45 = vld [vmem:[%s0 + $0xc8] sm:$0xff]
  %v46 = vld [vmem:[%s0 + $0xd0] sm:$0xff]
  %v47 = vld [vmem:[%s0 + $0xd8] sm:$0xf]
  %v48 = vld [vmem:[%s0 + $0xdc] sm:$0xff]
  %v49 = vld [vmem:[%s0 + $0xe4] sm:$0xff]
  %v50 = vld [vmem:[%s0 + $0xec] sm:$0xf]
  %v51 = vld [vmem:[%s0 + $0xf0] sm:$0xff]
  %v52 = vld [vmem:[%s0 + $0xf8] sm:$0xff]
  %v53 = vld [vmem:[%s0 + $0x100] sm:$0xf]
  %v54 = vld [vmem:[%s0 + $0x104] sm:$0xff]
  %v55 = vld [vmem:[%s0 + $0x10c] sm:$0xff]
  %v56 = vld [vmem:[%s0 + $0x114] sm:$0xf]
  %v57 = vld [vmem:[%s0 + $0x118] sm:$0xff]
  %v58 = vld [vmem:[%s0 + $0x120] sm:$0xff]
  %v59 = vld [vmem:[%s0 + $0x128] sm:$0xf]
  %v60 = vld [vmem:[%s0 + $0x12c] sm:$0xff]
  %v61 = vld [vmem:[%s0 + $0x134] sm:$0xff]
  %v62 = vld [vmem:[%s0 + $0x13c] sm:$0xf]
  %v63 = vld [vmem:[%s0 + $0x140] sm:$0xff]
  %v64 = vld [vmem:[%s0 + $0x148] sm:$0xff]
  %v65 = vld [vmem:[%s0 + $0x150] sm:$0xf]
  %v66 = vld [vmem:[%s0 + $0x154] sm:$0xff]
  %v67 = vld [vmem:[%s0 + $0x15c] sm:$0xff]
  %v68 = vld [vmem:[%s0 + $0x164] sm:$0xf]
  %v69 = vld [vmem:[%s0 + $0x168] sm:$0xff]
  %v70 = vld [vmem:[%s0 + $0x170] sm:$0xff]
  %v71 = vld [vmem:[%s0 + $0x178] sm:$0xf]
  %v72 = vld [vmem:[%s0 + $0x17c] sm:$0xff]
  %v73 = vld [vmem:[%s0 + $0x184] sm:$0xff]
  %v74 = vld [vmem:[%s0 + $0x18c] sm:$0xf]
  %v75 = vld [vmem:[%s0 + $0x190] sm:$0xff]
  %v76 = vld [vmem:[%s0 + $0x198] sm:$0xff]
  %v77 = vld [vmem:[%s0 + $0x1a0] sm:$0xf]
  %v78 = vld [vmem:[%s0 + $0x1a4] sm:$0xff]
  %v79 = vld [vmem:[%s0 + $0x1ac] sm:$0xff]
  %v80 = vld [vmem:[%s0 + $0x1b4] sm:$0xf]
  %v81 = vld [vmem:[%s0 + $0x1b8] sm:$0xff]
  %v82 = vld [vmem:[%s0 + $0x1c0] sm:$0xff]
  %v83 = vld [vmem:[%s0 + $0x1c8] sm:$0xf]
  %v84 = vld [vmem:[%s0 + $0x1cc] sm:$0xff]
  %v85 = vld [vmem:[%s0 + $0x1d4] sm:$0xff]
  %v86 = vld [vmem:[%s0 + $0x1dc] sm:$0xf]
  %v87 = vld [vmem:[%s0 + $0x1e0] sm:$0xff]
  %v88 = vld [vmem:[%s0 + $0x1e8] sm:$0xff]
  %v89 = vld [vmem:[%s0 + $0x1f0] sm:$0xf]
  %v90 = vld [vmem:[%s0 + $0x1f4] sm:$0xff]
  %v91 = vld [vmem:[%s0 + $0x1fc] sm:$0xff]
  %v92 = vld [vmem:[%s0 + $0x204] sm:$0xf]
  %v93 = vld [vmem:[%s0 + $0x208] sm:$0xff]
  %v94 = vld [vmem:[%s0 + $0x210] sm:$0xff]
  %v95 = vld [vmem:[%s0 + $0x218] sm:$0xf]
  %v96 = vld [vmem:[%s0 + $0x21c] sm:$0xff]
  %v97 = vld [vmem:[%s0 + $0x224] sm:$0xff]
  %v98 = vld [vmem:[%s0 + $0x22c] sm:$0xf]
  %v99 = vld [vmem:[%s0 + $0x230] sm:$0xff]
  %v100 = vld [vmem:[%s0 + $0x238] sm:$0xff]
  %v101 = vld [vmem:[%s0 + $0x240] sm:$0xf]
  %v102 = vld [vmem:[%s0 + $0x244] sm:$0xff]
  %v103 = vld [vmem:[%s0 + $0x24c] sm:$0xff]
  %v104 = vld [vmem:[%s0 + $0x254] sm:$0xf]
  %v105 = vld [vmem:[%s0 + $0x258] sm:$0xff]
  %v106 = vld [vmem:[%s0 + $0x260] sm:$0xff]
  %v107 = vld [vmem:[%s0 + $0x268] sm:$0xf]
  %v108 = vld [vmem:[%s0 + $0x26c] sm:$0xff]
  %v109 = vld [vmem:[%s0 + $0x274] sm:$0xff]
  %v110 = vld [vmem:[%s0 + $0x27c] sm:$0xf]
  %v111 = vld [vmem:[%s0 + $0x280] sm:$0xff]
  %v112 = vld [vmem:[%s0 + $0x288] sm:$0xff]
  %v113 = vld [vmem:[%s0 + $0x290] sm:$0xf]
  %v114 = vld [vmem:[%s0 + $0x294] sm:$0xff]
  %v115 = vld [vmem:[%s0 + $0x29c] sm:$0xff]
  %v116 = vld [vmem:[%s0 + $0x2a4] sm:$0xf]
  %v117 = vld [vmem:[%s0 + $0x2a8] sm:$0xff]
  %v118 = vld [vmem:[%s0 + $0x2b0] sm:$0xff]
  %v119 = vld [vmem:[%s0 + $0x2b8] sm:$0xf]
  %v120 = vld [vmem:[%s0 + $0x2bc] sm:$0xff]
  %v121 = vld [vmem:[%s0 + $0x2c4] sm:$0xff]
  %v122 = vld [vmem:[%s0 + $0x2cc] sm:$0xf]
  %v123 = vld [vmem:[%s0 + $0x2d0] sm:$0xff]
  %v124 = vld [vmem:[%s0 + $0x2d8] sm:$0xff]
  %v125 = vld [vmem:[%s0 + $0x2e0] sm:$0xf]
  %v126 = vld [vmem:[%s0 + $0x2e4] sm:$0xff]
  %v127 = vld [vmem:[%s0 + $0x2ec] sm:$0xff]
  %v128 = vld [vmem:[%s0 + $0x2f4] sm:$0xf]
  %v129 = vld [vmem:[%s0 + $0x2f8] sm:$0xff]
  %v130 = vld [vmem:[%s0 + $0x300] sm:$0xff]
  %v131 = vld [vmem:[%s0 + $0x308] sm:$0xf]
  %v132 = vld [vmem:[%s0 + $0x30c] sm:$0xff]
  %v133 = vld [vmem:[%s0 + $0x314] sm:$0xff]
  %v134 = vld [vmem:[%s0 + $0x31c] sm:$0xf]
  %v135 = vld [vmem:[%s0 + $0x320] sm:$0xff]
  %v136 = vld [vmem:[%s0 + $0x328] sm:$0xff]
  %v137 = vld [vmem:[%s0 + $0x330] sm:$0xf]
  %v138 = vld [vmem:[%s0 + $0x334] sm:$0xff]
  %v139 = vld [vmem:[%s0 + $0x33c] sm:$0xff]
  %v140 = vld [vmem:[%s0 + $0x344] sm:$0xf]
  %v141 = vld [vmem:[%s0 + $0x348] sm:$0xff]
  %v142 = vld [vmem:[%s0 + $0x350] sm:$0xff]
  %v143 = vld [vmem:[%s0 + $0x358] sm:$0xf]
  %v144 = vld [vmem:[%s1] sm:$0xf]
  %v145 = vld [vmem:[%s1 + $0x4] sm:$0xf]
  %v146 = vld [vmem:[%s1 + $0x8] sm:$0xf]
  %v147 = vld [vmem:[%s1 + $0xc] sm:$0xf]
  %v148 = vld [vmem:[%s1 + $0x10] sm:$0xf]
  %v149 = vld [vmem:[%s1 + $0x14] sm:$0xf]
  %v150 = vld [vmem:[%s1 + $0x18] sm:$0xf]
  %v151 = vld [vmem:[%s1 + $0x1c] sm:$0xf]
  %v152 = vld [vmem:[%s1 + $0x20] sm:$0xf]
  %v153 = vld [vmem:[%s1 + $0x24] sm:$0xf]
  %v154 = vld [vmem:[%s1 + $0x28] sm:$0xf]
  %v155 = vld [vmem:[%s1 + $0x2c] sm:$0xf]
  %v156 = vld [vmem:[%s1 + $0x30] sm:$0xf]
  %v157 = vld [vmem:[%s1 + $0x34] sm:$0xf]
  %v158 = vld [vmem:[%s1 + $0x38] sm:$0xf]
  %v159 = vld [vmem:[%s1 + $0x3c] sm:$0xf]
  %v160 = vld [vmem:[%s1 + $0x40] sm:$0xf]
  %v161 = vld [vmem:[%s1 + $0x44] sm:$0xf]
  %v162 = vld [vmem:[%s1 + $0x48] sm:$0xf]
  %v163 = vld [vmem:[%s1 + $0x4c] sm:$0xf]
  %v164 = vld [vmem:[%s1 + $0x50] sm:$0xf]
  %v165 = vld [vmem:[%s1 + $0x54] sm:$0xf]
  %v166 = vld [vmem:[%s1 + $0x58] sm:$0xf]
  %v167 = vld [vmem:[%s1 + $0x5c] sm:$0xf]
  %v168 = vld [vmem:[%s1 + $0x60] sm:$0xf]
  %v169 = vld [vmem:[%s1 + $0x64] sm:$0xf]
  %v170 = vld [vmem:[%s1 + $0x68] sm:$0xf]
  %v171 = vld [vmem:[%s1 + $0x6c] sm:$0xf]
  %v172 = vld [vmem:[%s1 + $0x70] sm:$0xf]
  %v173 = vld [vmem:[%s1 + $0x74] sm:$0xf]
  %v174 = vld [vmem:[%s1 + $0x78] sm:$0xf]
  %v175 = vld [vmem:[%s1 + $0x7c] sm:$0xf]
  %v176 = vld [vmem:[%s1 + $0x80] sm:$0xf]
  %v177 = vld [vmem:[%s1 + $0x84] sm:$0xf]
  %v178 = vld [vmem:[%s1 + $0x88] sm:$0xf]
  %v179 = vld [vmem:[%s1 + $0x8c] sm:$0xf]
  %v180 = vld [vmem:[%s1 + $0x90] sm:$0xf]
  %v181 = vld [vmem:[%s1 + $0x94] sm:$0xf]
  %v182 = vld [vmem:[%s1 + $0x98] sm:$0xf]
  %v183 = vld [vmem:[%s1 + $0x9c] sm:$0xf]
  %v184 = vld [vmem:[%s1 + $0xa0] sm:$0xf]
  %v185 = vld [vmem:[%s1 + $0xa4] sm:$0xf]
  %v186 = vld [vmem:[%s1 + $0xa8] sm:$0xf]
  %v187 = vld [vmem:[%s1 + $0xac] sm:$0xf]
  %v188 = vld [vmem:[%s1 + $0xb0] sm:$0xf]
  %v189 = vld [vmem:[%s1 + $0xb4] sm:$0xf]
  %v190 = vld [vmem:[%s1 + $0xb8] sm:$0xf]
  %v191 = vld [vmem:[%s1 + $0xbc] sm:$0xf]
  %v192 = vld [vmem:[%s1 + $0xc0] sm:$0xf]
  %v193 = vld [vmem:[%s1 + $0xc4] sm:$0xf]
  %v194 = vld [vmem:[%s1 + $0xc8] sm:$0xf]
  %v195 = vld [vmem:[%s1 + $0xcc] sm:$0xf]
  %v196 = vld [vmem:[%s1 + $0xd0] sm:$0xf]
  %v197 = vld [vmem:[%s1 + $0xd4] sm:$0xf]
  %v198 = vld [vmem:[%s1 + $0xd8] sm:$0xf]
  %v199 = vld [vmem:[%s1 + $0xdc] sm:$0xf]
  %v200 = vld [vmem:[%s1 + $0xe0] sm:$0xf]
  %v201 = vld [vmem:[%s1 + $0xe4] sm:$0xf]
  %v202 = vld [vmem:[%s1 + $0xe8] sm:$0xf]
  %v203 = vld [vmem:[%s1 + $0xec] sm:$0xf]
  %v204 = vld [vmem:[%s1 + $0xf0] sm:$0xf]
  %v205 = vld [vmem:[%s1 + $0xf4] sm:$0xf]
  %v206 = vld [vmem:[%s1 + $0xf8] sm:$0xf]
  %v207 = vld [vmem:[%s1 + $0xfc] sm:$0xf]
  %v208 = vld [vmem:[%s1 + $0x100] sm:$0xf]
  %v209 = vld [vmem:[%s1 + $0x104] sm:$0xf]
  %v210 = vld [vmem:[%s1 + $0x108] sm:$0xf]
  %v211 = vld [vmem:[%s1 + $0x10c] sm:$0xf]
  %v212 = vld [vmem:[%s1 + $0x110] sm:$0xf]
  %v213 = vld [vmem:[%s1 + $0x114] sm:$0xf]
  %v214 = vld [vmem:[%s1 + $0x118] sm:$0xf]
  %v215 = vld [vmem:[%s1 + $0x11c] sm:$0xf]
  %v216 = vld [vmem:[%s2] sm:$0x1]
  %v218 = vlaneseq
  %v219 = vshrl.u32 %v218, 7
  %v220 = vsub.s32 0, %v219
  %v221 = vrot.slane %v216, %v220
  %v352 = vunpack.c.l.b16 %v15
  %v353 = vunpack.c.h.b16 %v15
  %v354 = vunpack.c.l.b16 %v16
  %v355 = vunpack.c.h.b16 %v16
  %v356 = vunpack.c.l.b16 %v17
  %v357 = vunpack.c.l.b16 %v18
  %v358 = vunpack.c.h.b16 %v18
  %v359 = vunpack.c.l.b16 %v19
  %v360 = vunpack.c.h.b16 %v19
  %v361 = vunpack.c.l.b16 %v20
  %v362 = vunpack.c.l.b16 %v21
  %v363 = vunpack.c.h.b16 %v21
  %v364 = vunpack.c.l.b16 %v22
  %v365 = vunpack.c.h.b16 %v22
  %v366 = vunpack.c.l.b16 %v23
  %v367 = vunpack.c.l.b16 %v24
  %v368 = vunpack.c.h.b16 %v24
  %v369 = vunpack.c.l.b16 %v25
  %v370 = vunpack.c.h.b16 %v25
  %v371 = vunpack.c.l.b16 %v26
  %v372 = vunpack.c.l.b16 %v27
  %v373 = vunpack.c.h.b16 %v27
  %v374 = vunpack.c.l.b16 %v28
  %v375 = vunpack.c.h.b16 %v28
  %v376 = vunpack.c.l.b16 %v29
  %v377 = vunpack.c.l.b16 %v30
  %v378 = vunpack.c.h.b16 %v30
  %v379 = vunpack.c.l.b16 %v31
  %v380 = vunpack.c.h.b16 %v31
  %v381 = vunpack.c.l.b16 %v32
  %v382 = vunpack.c.l.b16 %v33
  %v383 = vunpack.c.h.b16 %v33
  %v384 = vunpack.c.l.b16 %v34
  %v385 = vunpack.c.h.b16 %v34
  %v386 = vunpack.c.l.b16 %v35
  %v387 = vunpack.c.l.b16 %v36
  %v388 = vunpack.c.h.b16 %v36
  %v389 = vunpack.c.l.b16 %v37
  %v390 = vunpack.c.h.b16 %v37
  %v391 = vunpack.c.l.b16 %v38
  %v392 = vunpack.c.l.b16 %v39
  %v393 = vunpack.c.h.b16 %v39
  %v394 = vunpack.c.l.b16 %v40
  %v395 = vunpack.c.h.b16 %v40
  %v396 = vunpack.c.l.b16 %v41
  %v397 = vunpack.c.l.b16 %v42
  %v398 = vunpack.c.h.b16 %v42
  %v399 = vunpack.c.l.b16 %v43
  %v400 = vunpack.c.h.b16 %v43
  %v401 = vunpack.c.l.b16 %v44
  %v402 = vunpack.c.l.b16 %v45
  %v403 = vunpack.c.h.b16 %v45
  %v404 = vunpack.c.l.b16 %v46
  %v405 = vunpack.c.h.b16 %v46
  %v406 = vunpack.c.l.b16 %v47
  %v407 = vunpack.c.l.b16 %v48
  %v408 = vunpack.c.h.b16 %v48
  %v409 = vunpack.c.l.b16 %v49
  %v410 = vunpack.c.h.b16 %v49
  %v411 = vunpack.c.l.b16 %v50
  %v412 = vunpack.c.l.b16 %v51
  %v413 = vunpack.c.h.b16 %v51
  %v414 = vunpack.c.l.b16 %v52
  %v415 = vunpack.c.h.b16 %v52
  %v416 = vunpack.c.l.b16 %v53
  %v417 = vunpack.c.l.b16 %v54
  %v418 = vunpack.c.h.b16 %v54
  %v419 = vunpack.c.l.b16 %v55
  %v420 = vunpack.c.h.b16 %v55
  %v421 = vunpack.c.l.b16 %v56
  %v422 = vunpack.c.l.b16 %v57
  %v423 = vunpack.c.h.b16 %v57
  %v424 = vunpack.c.l.b16 %v58
  %v425 = vunpack.c.h.b16 %v58
  %v426 = vunpack.c.l.b16 %v59
  %v427 = vunpack.c.l.b16 %v60
  %v428 = vunpack.c.h.b16 %v60
  %v429 = vunpack.c.l.b16 %v61
  %v430 = vunpack.c.h.b16 %v61
  %v431 = vunpack.c.l.b16 %v62
  %v432 = vunpack.c.l.b16 %v63
  %v433 = vunpack.c.h.b16 %v63
  %v434 = vunpack.c.l.b16 %v64
  %v435 = vunpack.c.h.b16 %v64
  %v436 = vunpack.c.l.b16 %v65
  %v437 = vunpack.c.l.b16 %v66
  %v438 = vunpack.c.h.b16 %v66
  %v439 = vunpack.c.l.b16 %v67
  %v440 = vunpack.c.h.b16 %v67
  %v441 = vunpack.c.l.b16 %v68
  %v442 = vunpack.c.l.b16 %v69
  %v443 = vunpack.c.h.b16 %v69
  %v444 = vunpack.c.l.b16 %v70
  %v445 = vunpack.c.h.b16 %v70
  %v446 = vunpack.c.l.b16 %v71
  %v447 = vunpack.c.l.b16 %v72
  %v448 = vunpack.c.h.b16 %v72
  %v449 = vunpack.c.l.b16 %v73
  %v450 = vunpack.c.h.b16 %v73
  %v451 = vunpack.c.l.b16 %v74
  %v452 = vunpack.c.l.b16 %v75
  %v453 = vunpack.c.h.b16 %v75
  %v454 = vunpack.c.l.b16 %v76
  %v455 = vunpack.c.h.b16 %v76
  %v456 = vunpack.c.l.b16 %v77
  %v457 = vunpack.c.l.b16 %v78
  %v458 = vunpack.c.h.b16 %v78
  %v459 = vunpack.c.l.b16 %v79
  %v460 = vunpack.c.h.b16 %v79
  %v461 = vunpack.c.l.b16 %v80
  %v462 = vunpack.c.l.b16 %v81
  %v463 = vunpack.c.h.b16 %v81
  %v464 = vunpack.c.l.b16 %v82
  %v465 = vunpack.c.h.b16 %v82
  %v466 = vunpack.c.l.b16 %v83
  %v467 = vunpack.c.l.b16 %v84
  %v468 = vunpack.c.h.b16 %v84
  %v469 = vunpack.c.l.b16 %v85
  %v470 = vunpack.c.h.b16 %v85
  %v471 = vunpack.c.l.b16 %v86
  %v472 = vunpack.c.l.b16 %v87
  %v473 = vunpack.c.h.b16 %v87
  %v474 = vunpack.c.l.b16 %v88
  %v475 = vunpack.c.h.b16 %v88
  %v476 = vunpack.c.l.b16 %v89
  %v477 = vunpack.c.l.b16 %v90
  %v478 = vunpack.c.h.b16 %v90
  %v479 = vunpack.c.l.b16 %v91
  %v480 = vunpack.c.h.b16 %v91
  %v481 = vunpack.c.l.b16 %v92
  %v482 = vunpack.c.l.b16 %v93
  %v483 = vunpack.c.h.b16 %v93
  %v484 = vunpack.c.l.b16 %v94
  %v485 = vunpack.c.h.b16 %v94
  %v486 = vunpack.c.l.b16 %v95
  %v487 = vunpack.c.l.b16 %v96
  %v488 = vunpack.c.h.b16 %v96
  %v489 = vunpack.c.l.b16 %v97
  %v490 = vunpack.c.h.b16 %v97
  %v491 = vunpack.c.l.b16 %v98
  %v492 = vunpack.c.l.b16 %v99
  %v493 = vunpack.c.h.b16 %v99
  %v494 = vunpack.c.l.b16 %v100
  %v495 = vunpack.c.h.b16 %v100
  %v496 = vunpack.c.l.b16 %v101
  %v497 = vunpack.c.l.b16 %v102
  %v498 = vunpack.c.h.b16 %v102
  %v499 = vunpack.c.l.b16 %v103
  %v500 = vunpack.c.h.b16 %v103
  %v501 = vunpack.c.l.b16 %v104
  %v502 = vunpack.c.l.b16 %v105
  %v503 = vunpack.c.h.b16 %v105
  %v504 = vunpack.c.l.b16 %v106
  %v505 = vunpack.c.h.b16 %v106
  %v506 = vunpack.c.l.b16 %v107
  %v507 = vunpack.c.l.b16 %v108
  %v508 = vunpack.c.h.b16 %v108
  %v509 = vunpack.c.l.b16 %v109
  %v510 = vunpack.c.h.b16 %v109
  %v511 = vunpack.c.l.b16 %v110
  %v512 = vunpack.c.l.b16 %v111
  %v513 = vunpack.c.h.b16 %v111
  %v514 = vunpack.c.l.b16 %v112
  %v515 = vunpack.c.h.b16 %v112
  %v516 = vunpack.c.l.b16 %v113
  %v517 = vunpack.c.l.b16 %v114
  %v518 = vunpack.c.h.b16 %v114
  %v519 = vunpack.c.l.b16 %v115
  %v520 = vunpack.c.h.b16 %v115
  %v521 = vunpack.c.l.b16 %v116
  %v522 = vunpack.c.l.b16 %v117
  %v523 = vunpack.c.h.b16 %v117
  %v524 = vunpack.c.l.b16 %v118
  %v525 = vunpack.c.h.b16 %v118
  %v526 = vunpack.c.l.b16 %v119
  %v527 = vunpack.c.l.b16 %v120
  %v528 = vunpack.c.h.b16 %v120
  %v529 = vunpack.c.l.b16 %v121
  %v530 = vunpack.c.h.b16 %v121
  %v531 = vunpack.c.l.b16 %v122
  %v532 = vunpack.c.l.b16 %v123
  %v533 = vunpack.c.h.b16 %v123
  %v534 = vunpack.c.l.b16 %v124
  %v535 = vunpack.c.h.b16 %v124
  %v536 = vunpack.c.l.b16 %v125
  %v537 = vunpack.c.l.b16 %v126
  %v538 = vunpack.c.h.b16 %v126
  %v539 = vunpack.c.l.b16 %v127
  %v540 = vunpack.c.h.b16 %v127
  %v541 = vunpack.c.l.b16 %v128
  %v542 = vunpack.c.l.b16 %v129
  %v543 = vunpack.c.h.b16 %v129
  %v544 = vunpack.c.l.b16 %v130
  %v545 = vunpack.c.h.b16 %v130
  %v546 = vunpack.c.l.b16 %v131
  %v547 = vunpack.c.l.b16 %v132
  %v548 = vunpack.c.h.b16 %v132
  %v549 = vunpack.c.l.b16 %v133
  %v550 = vunpack.c.h.b16 %v133
  %v551 = vunpack.c.l.b16 %v134
  %v552 = vunpack.c.l.b16 %v135
  %v553 = vunpack.c.h.b16 %v135
  %v554 = vunpack.c.l.b16 %v136
  %v555 = vunpack.c.h.b16 %v136
  %v556 = vunpack.c.l.b16 %v137
  %v557 = vunpack.c.l.b16 %v138
  %v558 = vunpack.c.h.b16 %v138
  %v559 = vunpack.c.l.b16 %v139
  %v560 = vunpack.c.h.b16 %v139
  %v561 = vunpack.c.l.b16 %v140
  %v562 = vunpack.c.l.b16 %v141
  %v563 = vunpack.c.h.b16 %v141
  %v564 = vunpack.c.l.b16 %v142
  %v565 = vunpack.c.h.b16 %v142
  %v566 = vunpack.c.l.b16 %v143
  %v567 = vpack.c.b16 %v357, %v352
  %v568 = vpack.c.b16 %v358, %v353
  %v569 = vpack.c.b16 %v359, %v354
  %v570 = vpack.c.b16 %v360, %v355
  %v571 = vpack.c.b16 %v361, %v356
  %v572 = vpack.c.b16 %v367, %v362
  %v573 = vpack.c.b16 %v368, %v363
  %v574 = vpack.c.b16 %v369, %v364
  %v575 = vpack.c.b16 %v370, %v365
  %v576 = vpack.c.b16 %v371, %v366
  %v577 = vpack.c.b16 %v377, %v372
  %v578 = vpack.c.b16 %v378, %v373
  %v579 = vpack.c.b16 %v379, %v374
  %v580 = vpack.c.b16 %v380, %v375
  %v581 = vpack.c.b16 %v381, %v376
  %v582 = vpack.c.b16 %v387, %v382
  %v583 = vpack.c.b16 %v388, %v383
  %v584 = vpack.c.b16 %v389, %v384
  %v585 = vpack.c.b16 %v390, %v385
  %v586 = vpack.c.b16 %v391, %v386
  %v587 = vpack.c.b16 %v397, %v392
  %v588 = vpack.c.b16 %v398, %v393
  %v589 = vpack.c.b16 %v399, %v394
  %v590 = vpack.c.b16 %v400, %v395
  %v591 = vpack.c.b16 %v401, %v396
  %v592 = vpack.c.b16 %v407, %v402
  %v593 = vpack.c.b16 %v408, %v403
  %v594 = vpack.c.b16 %v409, %v404
  %v595 = vpack.c.b16 %v410, %v405
  %v596 = vpack.c.b16 %v411, %v406
  %v597 = vpack.c.b16 %v417, %v412
  %v598 = vpack.c.b16 %v418, %v413
  %v599 = vpack.c.b16 %v419, %v414
  %v600 = vpack.c.b16 %v420, %v415
  %v601 = vpack.c.b16 %v421, %v416
  %v602 = vpack.c.b16 %v427, %v422
  %v603 = vpack.c.b16 %v428, %v423
  %v604 = vpack.c.b16 %v429, %v424
  %v605 = vpack.c.b16 %v430, %v425
  %v606 = vpack.c.b16 %v431, %v426
  %v607 = vpack.c.b16 %v437, %v432
  %v608 = vpack.c.b16 %v438, %v433
  %v609 = vpack.c.b16 %v439, %v434
  %v610 = vpack.c.b16 %v440, %v435
  %v611 = vpack.c.b16 %v441, %v436
  %v612 = vpack.c.b16 %v447, %v442
  %v613 = vpack.c.b16 %v448, %v443
  %v614 = vpack.c.b16 %v449, %v444
  %v615 = vpack.c.b16 %v450, %v445
  %v616 = vpack.c.b16 %v451, %v446
  %v617 = vpack.c.b16 %v457, %v452
  %v618 = vpack.c.b16 %v458, %v453
  %v619 = vpack.c.b16 %v459, %v454
  %v620 = vpack.c.b16 %v460, %v455
  %v621 = vpack.c.b16 %v461, %v456
  %v622 = vpack.c.b16 %v467, %v462
  %v623 = vpack.c.b16 %v468, %v463
  %v624 = vpack.c.b16 %v469, %v464
  %v625 = vpack.c.b16 %v470, %v465
  %v626 = vpack.c.b16 %v471, %v466
  %v627 = vpack.c.b16 %v477, %v472
  %v628 = vpack.c.b16 %v478, %v473
  %v629 = vpack.c.b16 %v479, %v474
  %v630 = vpack.c.b16 %v480, %v475
  %v631 = vpack.c.b16 %v481, %v476
  %v632 = vpack.c.b16 %v487, %v482
  %v633 = vpack.c.b16 %v488, %v483
  %v634 = vpack.c.b16 %v489, %v484
  %v635 = vpack.c.b16 %v490, %v485
  %v636 = vpack.c.b16 %v491, %v486
  %v637 = vpack.c.b16 %v497, %v492
  %v638 = vpack.c.b16 %v498, %v493
  %v639 = vpack.c.b16 %v499, %v494
  %v640 = vpack.c.b16 %v500, %v495
  %v641 = vpack.c.b16 %v501, %v496
  %v642 = vpack.c.b16 %v507, %v502
  %v643 = vpack.c.b16 %v508, %v503
  %v644 = vpack.c.b16 %v509, %v504
  %v645 = vpack.c.b16 %v510, %v505
  %v646 = vpack.c.b16 %v511, %v506
  %v647 = vpack.c.b16 %v517, %v512
  %v648 = vpack.c.b16 %v518, %v513
  %v649 = vpack.c.b16 %v519, %v514
  %v650 = vpack.c.b16 %v520, %v515
  %v651 = vpack.c.b16 %v521, %v516
  %v652 = vpack.c.b16 %v527, %v522
  %v653 = vpack.c.b16 %v528, %v523
  %v654 = vpack.c.b16 %v529, %v524
  %v655 = vpack.c.b16 %v530, %v525
  %v656 = vpack.c.b16 %v531, %v526
  %v657 = vpack.c.b16 %v537, %v532
  %v658 = vpack.c.b16 %v538, %v533
  %v659 = vpack.c.b16 %v539, %v534
  %v660 = vpack.c.b16 %v540, %v535
  %v661 = vpack.c.b16 %v541, %v536
  %v662 = vpack.c.b16 %v547, %v542
  %v663 = vpack.c.b16 %v548, %v543
  %v664 = vpack.c.b16 %v549, %v544
  %v665 = vpack.c.b16 %v550, %v545
  %v666 = vpack.c.b16 %v551, %v546
  %v667 = vpack.c.b16 %v557, %v552
  %v668 = vpack.c.b16 %v558, %v553
  %v669 = vpack.c.b16 %v559, %v554
  %v670 = vpack.c.b16 %v560, %v555
  %v671 = vpack.c.b16 %v561, %v556
  %v672 = vpack.c.b16 %v562, %v562
  %v673 = vpack.c.b16 %v563, %v563
  %v674 = vpack.c.b16 %v564, %v564
  %v675 = vpack.c.b16 %v565, %v565
  %v676 = vpack.c.b16 %v566, %v566
  %v837 = vunpack.c.l.b16 %v144
  %v838 = vunpack.c.l.b16 %v145
  %v839 = vunpack.c.l.b16 %v146
  %v840 = vunpack.c.l.b16 %v147
  %v841 = vunpack.c.l.b16 %v148
  %v842 = vunpack.c.l.b16 %v149
  %v843 = vunpack.c.l.b16 %v150
  %v844 = vunpack.c.l.b16 %v151
  %v845 = vunpack.c.l.b16 %v152
  %v846 = vunpack.c.l.b16 %v153
  %v847 = vunpack.c.l.b16 %v154
  %v848 = vunpack.c.l.b16 %v155
  %v849 = vunpack.c.l.b16 %v156
  %v850 = vunpack.c.l.b16 %v157
  %v851 = vunpack.c.l.b16 %v158
  %v852 = vunpack.c.l.b16 %v159
  %v853 = vunpack.c.l.b16 %v160
  %v854 = vunpack.c.l.b16 %v161
  %v855 = vunpack.c.l.b16 %v162
  %v856 = vunpack.c.l.b16 %v163
  %v857 = vunpack.c.l.b16 %v164
  %v858 = vunpack.c.l.b16 %v165
  %v859 = vunpack.c.l.b16 %v166
  %v860 = vunpack.c.l.b16 %v167
  %v861 = vunpack.c.l.b16 %v168
  %v862 = vunpack.c.l.b16 %v169
  %v863 = vunpack.c.l.b16 %v170
  %v864 = vunpack.c.l.b16 %v171
  %v865 = vunpack.c.l.b16 %v172
  %v866 = vunpack.c.l.b16 %v173
  %v867 = vunpack.c.l.b16 %v174
  %v868 = vunpack.c.l.b16 %v175
  %v869 = vunpack.c.l.b16 %v176
  %v870 = vunpack.c.l.b16 %v177
  %v871 = vunpack.c.l.b16 %v178
  %v872 = vunpack.c.l.b16 %v179
  %v873 = vunpack.c.l.b16 %v180
  %v874 = vunpack.c.l.b16 %v181
  %v875 = vunpack.c.l.b16 %v182
  %v876 = vunpack.c.l.b16 %v183
  %v877 = vunpack.c.l.b16 %v184
  %v878 = vunpack.c.l.b16 %v185
  %v879 = vunpack.c.l.b16 %v186
  %v880 = vunpack.c.l.b16 %v187
  %v881 = vunpack.c.l.b16 %v188
  %v882 = vunpack.c.l.b16 %v189
  %v883 = vunpack.c.l.b16 %v190
  %v884 = vunpack.c.l.b16 %v191
  %v885 = vunpack.c.l.b16 %v192
  %v886 = vunpack.c.l.b16 %v193
  %v887 = vunpack.c.l.b16 %v194
  %v888 = vunpack.c.l.b16 %v195
  %v889 = vunpack.c.l.b16 %v196
  %v890 = vunpack.c.l.b16 %v197
  %v891 = vunpack.c.l.b16 %v198
  %v892 = vunpack.c.l.b16 %v199
  %v893 = vunpack.c.l.b16 %v200
  %v894 = vunpack.c.l.b16 %v201
  %v895 = vunpack.c.l.b16 %v202
  %v896 = vunpack.c.l.b16 %v203
  %v897 = vunpack.c.l.b16 %v204
  %v898 = vunpack.c.l.b16 %v205
  %v899 = vunpack.c.l.b16 %v206
  %v900 = vunpack.c.l.b16 %v207
  %v901 = vunpack.c.l.b16 %v208
  %v902 = vunpack.c.l.b16 %v209
  %v903 = vunpack.c.l.b16 %v210
  %v904 = vunpack.c.l.b16 %v211
  %v905 = vunpack.c.l.b16 %v212
  %v906 = vunpack.c.l.b16 %v213
  %v907 = vunpack.c.l.b16 %v214
  %v908 = vunpack.c.l.b16 %v215
  %v909 = vpack.c.b16 %v838, %v837
  %v910 = vpack.c.b16 %v840, %v839
  %v911 = vpack.c.b16 %v842, %v841
  %v912 = vpack.c.b16 %v844, %v843
  %v913 = vpack.c.b16 %v846, %v845
  %v914 = vpack.c.b16 %v848, %v847
  %v915 = vpack.c.b16 %v850, %v849
  %v916 = vpack.c.b16 %v852, %v851
  %v917 = vpack.c.b16 %v854, %v853
  %v918 = vpack.c.b16 %v856, %v855
  %v919 = vpack.c.b16 %v858, %v857
  %v920 = vpack.c.b16 %v860, %v859
  %v921 = vpack.c.b16 %v862, %v861
  %v922 = vpack.c.b16 %v864, %v863
  %v923 = vpack.c.b16 %v866, %v865
  %v924 = vpack.c.b16 %v868, %v867
  %v925 = vpack.c.b16 %v870, %v869
  %v926 = vpack.c.b16 %v872, %v871
  %v927 = vpack.c.b16 %v874, %v873
  %v928 = vpack.c.b16 %v876, %v875
  %v929 = vpack.c.b16 %v878, %v877
  %v930 = vpack.c.b16 %v880, %v879
  %v931 = vpack.c.b16 %v882, %v881
  %v932 = vpack.c.b16 %v884, %v883
  %v933 = vpack.c.b16 %v886, %v885
  %v934 = vpack.c.b16 %v888, %v887
  %v935 = vpack.c.b16 %v890, %v889
  %v936 = vpack.c.b16 %v892, %v891
  %v937 = vpack.c.b16 %v894, %v893
  %v938 = vpack.c.b16 %v896, %v895
  %v939 = vpack.c.b16 %v898, %v897
  %v940 = vpack.c.b16 %v900, %v899
  %v941 = vpack.c.b16 %v902, %v901
  %v942 = vpack.c.b16 %v904, %v903
  %v943 = vpack.c.b16 %v906, %v905
  %v944 = vpack.c.b16 %v908, %v907
  %vm981 = vcmask 523264
  %v983 = vsel %vm981, %v571, 0
  %v986 = vsel %vm981, %v576, 0
  %v989 = vsel %vm981, %v581, 0
  %v992 = vsel %vm981, %v586, 0
  %v995 = vsel %vm981, %v591, 0
  %v998 = vsel %vm981, %v596, 0
  %v1001 = vsel %vm981, %v601, 0
  %v1004 = vsel %vm981, %v606, 0
  %v1007 = vsel %vm981, %v611, 0
  %v1010 = vsel %vm981, %v616, 0
  %v1013 = vsel %vm981, %v621, 0
  %v1016 = vsel %vm981, %v626, 0
  %v1019 = vsel %vm981, %v631, 0
  %v1022 = vsel %vm981, %v636, 0
  %v1025 = vsel %vm981, %v641, 0
  %v1028 = vsel %vm981, %v646, 0
  %v1031 = vsel %vm981, %v651, 0
  %v1034 = vsel %vm981, %v656, 0
  %v1037 = vsel %vm981, %v661, 0
  %v1040 = vsel %vm981, %v666, 0
  %v1043 = vsel %vm981, %v671, 0
  %v1046 = vsel %vm981, %v676, 0
  %1048 = vmatprep.subr.bf16.mxu0 0
  %1049 = vmatpush1.bf16.msra.mxu0 %v916
  %1050 = vmatprep.subr.bf16.mxu0 0
  %1051 = vmatpush1.bf16.msra.mxu0 %v915
  %1052 = vmatprep.subr.bf16.mxu0 0
  %1053 = vmatpush1.bf16.msra.mxu0 %v914
  %1054 = vmatprep.subr.bf16.mxu0 0
  %1055 = vmatpush1.bf16.msra.mxu0 %v913
  %1056 = vmatprep.subr.bf16.mxu0 0
  %1057 = vmatpush1.bf16.msra.mxu0 %v912
  %1058 = vmatprep.subr.bf16.mxu0 0
  %1059 = vmatpush1.bf16.msra.mxu0 %v911
  %1060 = vmatprep.subr.bf16.mxu0 0
  %1061 = vmatpush1.bf16.msra.mxu0 %v910
  %1062 = vmatprep.subr.bf16.mxu0 0
  %1063 = vmatpush1.bf16.msra.mxu0 %v909
  %1064 = vmatprep.subr.bf16.mxu0 0
  %1065 = vmatpush2.bf16.msra.mxu0 %v924
  %1066 = vmatprep.subr.bf16.mxu0 0
  %1067 = vmatpush2.bf16.msra.mxu0 %v923
  %1068 = vmatprep.subr.bf16.mxu0 0
  %1069 = vmatpush2.bf16.msra.mxu0 %v922
  %1070 = vmatprep.subr.bf16.mxu0 0
  %1071 = vmatpush2.bf16.msra.mxu0 %v921
  %1072 = vmatprep.subr.bf16.mxu0 0
  %1073 = vmatpush2.bf16.msra.mxu0 %v920
  %1074 = vmatprep.subr.bf16.mxu0 0
  %1075 = vmatpush2.bf16.msra.mxu0 %v919
  %1076 = vmatprep.subr.bf16.mxu0 0
  %1077 = vmatpush2.bf16.msra.mxu0 %v918
  %1078 = vmatprep.subr.bf16.mxu0 0
  %1079 = vmatpush2.bf16.msra.mxu0 %v917
  %1080 = vmatprep.mubr.bf16.mxu0 %v568
  %1081 = vmatmul.mubr.bf16.gmra.mxu0 %v567
  %v1082 = vpop.f32.mrf.mxu0
  %v1083 = vadd.f32 %v221, %v1082
  %v1084 = vpop.f32.mrf.mxu0
  %v1085 = vpop.f32.mrf.mxu0
  %v1086 = vadd.f32 %v221, %v1085
  %v1087 = vpop.f32.mrf.mxu0
  %1088 = vmatprep.mubr.bf16.mxu0 %v573
  %1089 = vmatmul.mubr.bf16.gmra.mxu0 %v572
  %v1090 = vpop.f32.mrf.mxu0
  %v1091 = vadd.f32 %v221, %v1090
  %v1092 = vpop.f32.mrf.mxu0
  %v1093 = vpop.f32.mrf.mxu0
  %v1094 = vadd.f32 %v221, %v1093
  %v1095 = vpop.f32.mrf.mxu0
  %1096 = vmatprep.mubr.bf16.mxu0 %v578
  %1097 = vmatmul.mubr.bf16.gmra.mxu0 %v577
  %v1098 = vpop.f32.mrf.mxu0
  %v1099 = vadd.f32 %v221, %v1098
  %v1100 = vpop.f32.mrf.mxu0
  %v1101 = vpop.f32.mrf.mxu0
  %v1102 = vadd.f32 %v221, %v1101
  %v1103 = vpop.f32.mrf.mxu0
  %1104 = vmatprep.mubr.bf16.mxu0 %v583
  %1105 = vmatmul.mubr.bf16.gmra.mxu0 %v582
  %v1106 = vpop.f32.mrf.mxu0
  %v1107 = vadd.f32 %v221, %v1106
  %v1108 = vpop.f32.mrf.mxu0
  %v1109 = vpop.f32.mrf.mxu0
  %v1110 = vadd.f32 %v221, %v1109
  %v1111 = vpop.f32.mrf.mxu0
  %1112 = vmatprep.mubr.bf16.mxu0 %v588
  %1113 = vmatmul.mubr.bf16.gmra.mxu0 %v587
  %v1114 = vpop.f32.mrf.mxu0
  %v1115 = vadd.f32 %v221, %v1114
  %v1116 = vpop.f32.mrf.mxu0
  %v1117 = vpop.f32.mrf.mxu0
  %v1118 = vadd.f32 %v221, %v1117
  %v1119 = vpop.f32.mrf.mxu0
  %1120 = vmatprep.mubr.bf16.mxu0 %v593
  %1121 = vmatmul.mubr.bf16.gmra.mxu0 %v592
  %v1122 = vpop.f32.mrf.mxu0
  %v1123 = vadd.f32 %v221, %v1122
  %v1124 = vpop.f32.mrf.mxu0
  %v1125 = vpop.f32.mrf.mxu0
  %v1126 = vadd.f32 %v221, %v1125
  %v1127 = vpop.f32.mrf.mxu0
  %1128 = vmatprep.mubr.bf16.mxu0 %v598
  %1129 = vmatmul.mubr.bf16.gmra.mxu0 %v597
  %v1130 = vpop.f32.mrf.mxu0
  %v1131 = vadd.f32 %v221, %v1130
  %v1132 = vpop.f32.mrf.mxu0
  %v1133 = vpop.f32.mrf.mxu0
  %v1134 = vadd.f32 %v221, %v1133
  %v1135 = vpop.f32.mrf.mxu0
  %1136 = vmatprep.mubr.bf16.mxu0 %v603
  %1137 = vmatmul.mubr.bf16.gmra.mxu0 %v602
  %v1138 = vpop.f32.mrf.mxu0
  %v1139 = vadd.f32 %v221, %v1138
  %v1140 = vpop.f32.mrf.mxu0
  %v1141 = vpop.f32.mrf.mxu0
  %v1142 = vadd.f32 %v221, %v1141
  %v1143 = vpop.f32.mrf.mxu0
  %1144 = vmatprep.mubr.bf16.mxu0 %v608
  %1145 = vmatmul.mubr.bf16.gmra.mxu0 %v607
  %v1146 = vpop.f32.mrf.mxu0
  %v1147 = vadd.f32 %v221, %v1146
  %v1148 = vpop.f32.mrf.mxu0
  %v1149 = vpop.f32.mrf.mxu0
  %v1150 = vadd.f32 %v221, %v1149
  %v1151 = vpop.f32.mrf.mxu0
  %1152 = vmatprep.mubr.bf16.mxu0 %v613
  %1153 = vmatmul.mubr.bf16.gmra.mxu0 %v612
  %v1154 = vpop.f32.mrf.mxu0
  %v1155 = vadd.f32 %v221, %v1154
  %v1156 = vpop.f32.mrf.mxu0
  %v1157 = vpop.f32.mrf.mxu0
  %v1158 = vadd.f32 %v221, %v1157
  %v1159 = vpop.f32.mrf.mxu0
  %1160 = vmatprep.mubr.bf16.mxu0 %v618
  %1161 = vmatmul.mubr.bf16.gmra.mxu0 %v617
  %v1162 = vpop.f32.mrf.mxu0
  %v1163 = vadd.f32 %v221, %v1162
  %v1164 = vpop.f32.mrf.mxu0
  %v1165 = vpop.f32.mrf.mxu0
  %v1166 = vadd.f32 %v221, %v1165
  %v1167 = vpop.f32.mrf.mxu0
  %1168 = vmatprep.mubr.bf16.mxu0 %v623
  %1169 = vmatmul.mubr.bf16.gmra.mxu0 %v622
  %v1170 = vpop.f32.mrf.mxu0
  %v1171 = vadd.f32 %v221, %v1170
  %v1172 = vpop.f32.mrf.mxu0
  %v1173 = vpop.f32.mrf.mxu0
  %v1174 = vadd.f32 %v221, %v1173
  %v1175 = vpop.f32.mrf.mxu0
  %1176 = vmatprep.mubr.bf16.mxu0 %v628
  %1177 = vmatmul.mubr.bf16.gmra.mxu0 %v627
  %v1178 = vpop.f32.mrf.mxu0
  %v1179 = vadd.f32 %v221, %v1178
  %v1180 = vpop.f32.mrf.mxu0
  %v1181 = vpop.f32.mrf.mxu0
  %v1182 = vadd.f32 %v221, %v1181
  %v1183 = vpop.f32.mrf.mxu0
  %1184 = vmatprep.mubr.bf16.mxu0 %v633
  %1185 = vmatmul.mubr.bf16.gmra.mxu0 %v632
  %v1186 = vpop.f32.mrf.mxu0
  %v1187 = vadd.f32 %v221, %v1186
  %v1188 = vpop.f32.mrf.mxu0
  %v1189 = vpop.f32.mrf.mxu0
  %v1190 = vadd.f32 %v221, %v1189
  %v1191 = vpop.f32.mrf.mxu0
  %1192 = vmatprep.mubr.bf16.mxu0 %v638
  %1193 = vmatmul.mubr.bf16.gmra.mxu0 %v637
  %v1194 = vpop.f32.mrf.mxu0
  %v1195 = vadd.f32 %v221, %v1194
  %v1196 = vpop.f32.mrf.mxu0
  %v1197 = vpop.f32.mrf.mxu0
  %v1198 = vadd.f32 %v221, %v1197
  %v1199 = vpop.f32.mrf.mxu0
  %1200 = vmatprep.mubr.bf16.mxu0 %v643
  %1201 = vmatmul.mubr.bf16.gmra.mxu0 %v642
  %v1202 = vpop.f32.mrf.mxu0
  %v1203 = vadd.f32 %v221, %v1202
  %v1204 = vpop.f32.mrf.mxu0
  %v1205 = vpop.f32.mrf.mxu0
  %v1206 = vadd.f32 %v221, %v1205
  %v1207 = vpop.f32.mrf.mxu0
  %1208 = vmatprep.mubr.bf16.mxu0 %v648
  %1209 = vmatmul.mubr.bf16.gmra.mxu0 %v647
  %v1210 = vpop.f32.mrf.mxu0
  %v1211 = vadd.f32 %v221, %v1210
  %v1212 = vpop.f32.mrf.mxu0
  %v1213 = vpop.f32.mrf.mxu0
  %v1214 = vadd.f32 %v221, %v1213
  %v1215 = vpop.f32.mrf.mxu0
  %1216 = vmatprep.mubr.bf16.mxu0 %v653
  %1217 = vmatmul.mubr.bf16.gmra.mxu0 %v652
  %v1218 = vpop.f32.mrf.mxu0
  %v1219 = vadd.f32 %v221, %v1218
  %v1220 = vpop.f32.mrf.mxu0
  %v1221 = vpop.f32.mrf.mxu0
  %v1222 = vadd.f32 %v221, %v1221
  %v1223 = vpop.f32.mrf.mxu0
  %1224 = vmatprep.mubr.bf16.mxu0 %v658
  %1225 = vmatmul.mubr.bf16.gmra.mxu0 %v657
  %v1226 = vpop.f32.mrf.mxu0
  %v1227 = vadd.f32 %v221, %v1226
  %v1228 = vpop.f32.mrf.mxu0
  %v1229 = vpop.f32.mrf.mxu0
  %v1230 = vadd.f32 %v221, %v1229
  %v1231 = vpop.f32.mrf.mxu0
  %1232 = vmatprep.mubr.bf16.mxu0 %v663
  %1233 = vmatmul.mubr.bf16.gmra.mxu0 %v662
  %v1234 = vpop.f32.mrf.mxu0
  %v1235 = vadd.f32 %v221, %v1234
  %v1236 = vpop.f32.mrf.mxu0
  %v1237 = vpop.f32.mrf.mxu0
  %v1238 = vadd.f32 %v221, %v1237
  %v1239 = vpop.f32.mrf.mxu0
  %1240 = vmatprep.mubr.bf16.mxu0 %v668
  %1241 = vmatmul.mubr.bf16.gmra.mxu0 %v667
  %v1242 = vpop.f32.mrf.mxu0
  %v1243 = vadd.f32 %v221, %v1242
  %v1244 = vpop.f32.mrf.mxu0
  %v1245 = vpop.f32.mrf.mxu0
  %v1246 = vadd.f32 %v221, %v1245
  %v1247 = vpop.f32.mrf.mxu0
  %1248 = vmatprep.mubr.bf16.mxu0 %v673
  %1249 = vmatmul.mubr.bf16.gmra.mxu0 %v672
  %v1250 = vpop.f32.mrf.mxu0
  %v1251 = vadd.f32 %v221, %v1250
  %v1252 = vpop.f32.mrf.mxu0
  %v1253 = vpop.f32.mrf.mxu0
  %v1254 = vpop.f32.mrf.mxu0
  %1255 = vdwg.mxu0
  %1256 = vmatprep.subr.bf16.mxu0 0
  %1257 = vmatpush1.bf16.msra.mxu0 %v932
  %1258 = vmatprep.subr.bf16.mxu0 0
  %1259 = vmatpush1.bf16.msra.mxu0 %v931
  %1260 = vmatprep.subr.bf16.mxu0 0
  %1261 = vmatpush1.bf16.msra.mxu0 %v930
  %1262 = vmatprep.subr.bf16.mxu0 0
  %1263 = vmatpush1.bf16.msra.mxu0 %v929
  %1264 = vmatprep.subr.bf16.mxu0 0
  %1265 = vmatpush1.bf16.msra.mxu0 %v928
  %1266 = vmatprep.subr.bf16.mxu0 0
  %1267 = vmatpush1.bf16.msra.mxu0 %v927
  %1268 = vmatprep.subr.bf16.mxu0 0
  %1269 = vmatpush1.bf16.msra.mxu0 %v926
  %1270 = vmatprep.subr.bf16.mxu0 0
  %1271 = vmatpush1.bf16.msra.mxu0 %v925
  %1272 = vmatprep.subr.bf16.mxu0 0
  %1273 = vmatpush2.bf16.msra.mxu0 %v940
  %1274 = vmatprep.subr.bf16.mxu0 0
  %1275 = vmatpush2.bf16.msra.mxu0 %v939
  %1276 = vmatprep.subr.bf16.mxu0 0
  %1277 = vmatpush2.bf16.msra.mxu0 %v938
  %1278 = vmatprep.subr.bf16.mxu0 0
  %1279 = vmatpush2.bf16.msra.mxu0 %v937
  %1280 = vmatprep.subr.bf16.mxu0 0
  %1281 = vmatpush2.bf16.msra.mxu0 %v936
  %1282 = vmatprep.subr.bf16.mxu0 0
  %1283 = vmatpush2.bf16.msra.mxu0 %v935
  %1284 = vmatprep.subr.bf16.mxu0 0
  %1285 = vmatpush2.bf16.msra.mxu0 %v934
  %1286 = vmatprep.subr.bf16.mxu0 0
  %1287 = vmatpush2.bf16.msra.mxu0 %v933
  %1288 = vmatprep.mubr.bf16.mxu0 %v570
  %1289 = vmatmul.mubr.bf16.gmra.mxu0 %v569
  %v1290 = vpop.f32.mrf.mxu0
  %v1291 = vadd.f32 %v1083, %v1290
  %v1292 = vpop.f32.mrf.mxu0
  %v1293 = vpop.f32.mrf.mxu0
  %v1294 = vadd.f32 %v1086, %v1293
  %v1295 = vpop.f32.mrf.mxu0
  %1296 = vmatprep.mubr.bf16.mxu0 %v575
  %1297 = vmatmul.mubr.bf16.gmra.mxu0 %v574
  %v1298 = vpop.f32.mrf.mxu0
  %v1299 = vadd.f32 %v1091, %v1298
  %v1300 = vpop.f32.mrf.mxu0
  %v1301 = vpop.f32.mrf.mxu0
  %v1302 = vadd.f32 %v1094, %v1301
  %v1303 = vpop.f32.mrf.mxu0
  %1304 = vmatprep.mubr.bf16.mxu0 %v580
  %1305 = vmatmul.mubr.bf16.gmra.mxu0 %v579
  %v1306 = vpop.f32.mrf.mxu0
  %v1307 = vadd.f32 %v1099, %v1306
  %v1308 = vpop.f32.mrf.mxu0
  %v1309 = vpop.f32.mrf.mxu0
  %v1310 = vadd.f32 %v1102, %v1309
  %v1311 = vpop.f32.mrf.mxu0
  %1312 = vmatprep.mubr.bf16.mxu0 %v585
  %1313 = vmatmul.mubr.bf16.gmra.mxu0 %v584
  %v1314 = vpop.f32.mrf.mxu0
  %v1315 = vadd.f32 %v1107, %v1314
  %v1316 = vpop.f32.mrf.mxu0
  %v1317 = vpop.f32.mrf.mxu0
  %v1318 = vadd.f32 %v1110, %v1317
  %v1319 = vpop.f32.mrf.mxu0
  %1320 = vmatprep.mubr.bf16.mxu0 %v590
  %1321 = vmatmul.mubr.bf16.gmra.mxu0 %v589
  %v1322 = vpop.f32.mrf.mxu0
  %v1323 = vadd.f32 %v1115, %v1322
  %v1324 = vpop.f32.mrf.mxu0
  %v1325 = vpop.f32.mrf.mxu0
  %v1326 = vadd.f32 %v1118, %v1325
  %v1327 = vpop.f32.mrf.mxu0
  %1328 = vmatprep.mubr.bf16.mxu0 %v595
  %1329 = vmatmul.mubr.bf16.gmra.mxu0 %v594
  %v1330 = vpop.f32.mrf.mxu0
  %v1331 = vadd.f32 %v1123, %v1330
  %v1332 = vpop.f32.mrf.mxu0
  %v1333 = vpop.f32.mrf.mxu0
  %v1334 = vadd.f32 %v1126, %v1333
  %v1335 = vpop.f32.mrf.mxu0
  %1336 = vmatprep.mubr.bf16.mxu0 %v600
  %1337 = vmatmul.mubr.bf16.gmra.mxu0 %v599
  %v1338 = vpop.f32.mrf.mxu0
  %v1339 = vadd.f32 %v1131, %v1338
  %v1340 = vpop.f32.mrf.mxu0
  %v1341 = vpop.f32.mrf.mxu0
  %v1342 = vadd.f32 %v1134, %v1341
  %v1343 = vpop.f32.mrf.mxu0
  %1344 = vmatprep.mubr.bf16.mxu0 %v605
  %1345 = vmatmul.mubr.bf16.gmra.mxu0 %v604
  %v1346 = vpop.f32.mrf.mxu0
  %v1347 = vadd.f32 %v1139, %v1346
  %v1348 = vpop.f32.mrf.mxu0
  %v1349 = vpop.f32.mrf.mxu0
  %v1350 = vadd.f32 %v1142, %v1349
  %v1351 = vpop.f32.mrf.mxu0
  %1352 = vmatprep.mubr.bf16.mxu0 %v610
  %1353 = vmatmul.mubr.bf16.gmra.mxu0 %v609
  %v1354 = vpop.f32.mrf.mxu0
  %v1355 = vadd.f32 %v1147, %v1354
  %v1356 = vpop.f32.mrf.mxu0
  %v1357 = vpop.f32.mrf.mxu0
  %v1358 = vadd.f32 %v1150, %v1357
  %v1359 = vpop.f32.mrf.mxu0
  %1360 = vmatprep.mubr.bf16.mxu0 %v615
  %1361 = vmatmul.mubr.bf16.gmra.mxu0 %v614
  %v1362 = vpop.f32.mrf.mxu0
  %v1363 = vadd.f32 %v1155, %v1362
  %v1364 = vpop.f32.mrf.mxu0
  %v1365 = vpop.f32.mrf.mxu0
  %v1366 = vadd.f32 %v1158, %v1365
  %v1367 = vpop.f32.mrf.mxu0
  %1368 = vmatprep.mubr.bf16.mxu0 %v620
  %1369 = vmatmul.mubr.bf16.gmra.mxu0 %v619
  %v1370 = vpop.f32.mrf.mxu0
  %v1371 = vadd.f32 %v1163, %v1370
  %v1372 = vpop.f32.mrf.mxu0
  %v1373 = vpop.f32.mrf.mxu0
  %v1374 = vadd.f32 %v1166, %v1373
  %v1375 = vpop.f32.mrf.mxu0
  %1376 = vmatprep.mubr.bf16.mxu0 %v625
  %1377 = vmatmul.mubr.bf16.gmra.mxu0 %v624
  %v1378 = vpop.f32.mrf.mxu0
  %v1379 = vadd.f32 %v1171, %v1378
  %v1380 = vpop.f32.mrf.mxu0
  %v1381 = vpop.f32.mrf.mxu0
  %v1382 = vadd.f32 %v1174, %v1381
  %v1383 = vpop.f32.mrf.mxu0
  %1384 = vmatprep.mubr.bf16.mxu0 %v630
  %1385 = vmatmul.mubr.bf16.gmra.mxu0 %v629
  %v1386 = vpop.f32.mrf.mxu0
  %v1387 = vadd.f32 %v1179, %v1386
  %v1388 = vpop.f32.mrf.mxu0
  %v1389 = vpop.f32.mrf.mxu0
  %v1390 = vadd.f32 %v1182, %v1389
  %v1391 = vpop.f32.mrf.mxu0
  %1392 = vmatprep.mubr.bf16.mxu0 %v635
  %1393 = vmatmul.mubr.bf16.gmra.mxu0 %v634
  %v1394 = vpop.f32.mrf.mxu0
  %v1395 = vadd.f32 %v1187, %v1394
  %v1396 = vpop.f32.mrf.mxu0
  %v1397 = vpop.f32.mrf.mxu0
  %v1398 = vadd.f32 %v1190, %v1397
  %v1399 = vpop.f32.mrf.mxu0
  %1400 = vmatprep.mubr.bf16.mxu0 %v640
  %1401 = vmatmul.mubr.bf16.gmra.mxu0 %v639
  %v1402 = vpop.f32.mrf.mxu0
  %v1403 = vadd.f32 %v1195, %v1402
  %v1404 = vpop.f32.mrf.mxu0
  %v1405 = vpop.f32.mrf.mxu0
  %v1406 = vadd.f32 %v1198, %v1405
  %v1407 = vpop.f32.mrf.mxu0
  %1408 = vmatprep.mubr.bf16.mxu0 %v645
  %1409 = vmatmul.mubr.bf16.gmra.mxu0 %v644
  %v1410 = vpop.f32.mrf.mxu0
  %v1411 = vadd.f32 %v1203, %v1410
  %v1412 = vpop.f32.mrf.mxu0
  %v1413 = vpop.f32.mrf.mxu0
  %v1414 = vadd.f32 %v1206, %v1413
  %v1415 = vpop.f32.mrf.mxu0
  %1416 = vmatprep.mubr.bf16.mxu0 %v650
  %1417 = vmatmul.mubr.bf16.gmra.mxu0 %v649
  %v1418 = vpop.f32.mrf.mxu0
  %v1419 = vadd.f32 %v1211, %v1418
  %v1420 = vpop.f32.mrf.mxu0
  %v1421 = vpop.f32.mrf.mxu0
  %v1422 = vadd.f32 %v1214, %v1421
  %v1423 = vpop.f32.mrf.mxu0
  %1424 = vmatprep.mubr.bf16.mxu0 %v655
  %1425 = vmatmul.mubr.bf16.gmra.mxu0 %v654
  %v1426 = vpop.f32.mrf.mxu0
  %v1427 = vadd.f32 %v1219, %v1426
  %v1428 = vpop.f32.mrf.mxu0
  %v1429 = vpop.f32.mrf.mxu0
  %v1430 = vadd.f32 %v1222, %v1429
  %v1431 = vpop.f32.mrf.mxu0
  %1432 = vmatprep.mubr.bf16.mxu0 %v660
  %1433 = vmatmul.mubr.bf16.gmra.mxu0 %v659
  %v1434 = vpop.f32.mrf.mxu0
  %v1435 = vadd.f32 %v1227, %v1434
  %v1436 = vpop.f32.mrf.mxu0
  %v1437 = vpop.f32.mrf.mxu0
  %v1438 = vadd.f32 %v1230, %v1437
  %v1439 = vpop.f32.mrf.mxu0
  %1440 = vmatprep.mubr.bf16.mxu0 %v665
  %1441 = vmatmul.mubr.bf16.gmra.mxu0 %v664
  %v1442 = vpop.f32.mrf.mxu0
  %v1443 = vadd.f32 %v1235, %v1442
  %v1444 = vpop.f32.mrf.mxu0
  %v1445 = vpop.f32.mrf.mxu0
  %v1446 = vadd.f32 %v1238, %v1445
  %v1447 = vpop.f32.mrf.mxu0
  %1448 = vmatprep.mubr.bf16.mxu0 %v670
  %1449 = vmatmul.mubr.bf16.gmra.mxu0 %v669
  %v1450 = vpop.f32.mrf.mxu0
  %v1451 = vadd.f32 %v1243, %v1450
  %v1452 = vpop.f32.mrf.mxu0
  %v1453 = vpop.f32.mrf.mxu0
  %v1454 = vadd.f32 %v1246, %v1453
  %v1455 = vpop.f32.mrf.mxu0
  %1456 = vmatprep.mubr.bf16.mxu0 %v675
  %1457 = vmatmul.mubr.bf16.gmra.mxu0 %v674
  %v1458 = vpop.f32.mrf.mxu0
  %v1459 = vadd.f32 %v1251, %v1458
  %v1460 = vpop.f32.mrf.mxu0
  %v1461 = vpop.f32.mrf.mxu0
  %v1462 = vpop.f32.mrf.mxu0
  %1463 = vdwg.mxu0
  %1464 = vmatprep.subr.bf16.mxu0 0
  %1465 = vmatpush1.bf16.msra.mxu0 0
  %1466 = vmatprep.subr.bf16.mxu0 0
  %1467 = vmatpush1.bf16.msra.mxu0 0
  %1468 = vmatprep.subr.bf16.mxu0 0
  %1469 = vmatpush1.bf16.msra.mxu0 0
  %1470 = vmatprep.subr.bf16.mxu0 0
  %1471 = vmatpush1.bf16.msra.mxu0 0
  %1472 = vmatprep.subr.bf16.mxu0 0
  %1473 = vmatpush1.bf16.msra.mxu0 %v944
  %1474 = vmatprep.subr.bf16.mxu0 0
  %1475 = vmatpush1.bf16.msra.mxu0 %v943
  %1476 = vmatprep.subr.bf16.mxu0 0
  %1477 = vmatpush1.bf16.msra.mxu0 %v942
  %1478 = vmatprep.subr.bf16.mxu0 0
  %1479 = vmatpush1.bf16.msra.mxu0 %v941
  %1480 = vmatprep.subr.bf16.mxu0 0
  %1481 = vmatpush2.bf16.msra.mxu0 0
  %1482 = vmatprep.subr.bf16.mxu0 0
  %1483 = vmatpush2.bf16.msra.mxu0 0
  %1484 = vmatprep.subr.bf16.mxu0 0
  %1485 = vmatpush2.bf16.msra.mxu0 0
  %1486 = vmatprep.subr.bf16.mxu0 0
  %1487 = vmatpush2.bf16.msra.mxu0 0
  %1488 = vmatprep.subr.bf16.mxu0 0
  %1489 = vmatpush2.bf16.msra.mxu0 0
  %1490 = vmatprep.subr.bf16.mxu0 0
  %1491 = vmatpush2.bf16.msra.mxu0 0
  %1492 = vmatprep.subr.bf16.mxu0 0
  %1493 = vmatpush2.bf16.msra.mxu0 0
  %1494 = vmatprep.subr.bf16.mxu0 0
  %1495 = vmatpush2.bf16.msra.mxu0 0
  %1496 = vmatprep.mubr.bf16.mxu0 0
  %1497 = vmatmul.mubr.bf16.gmra.mxu0 %v983
  %v1498 = vpop.f32.mrf.mxu0
  %v1499 = vadd.f32 %v1291, %v1498
  %v1500 = vpop.f32.mrf.mxu0
  %v1501 = vpop.f32.mrf.mxu0
  %v1502 = vadd.f32 %v1294, %v1501
  %v1503 = vpop.f32.mrf.mxu0
  %1504 = vmatprep.mubr.bf16.mxu0 0
  %1505 = vmatmul.mubr.bf16.gmra.mxu0 %v986
  %v1506 = vpop.f32.mrf.mxu0
  %v1507 = vadd.f32 %v1299, %v1506
  %v1508 = vpop.f32.mrf.mxu0
  %v1509 = vpop.f32.mrf.mxu0
  %v1510 = vadd.f32 %v1302, %v1509
  %v1511 = vpop.f32.mrf.mxu0
  %1512 = vmatprep.mubr.bf16.mxu0 0
  %1513 = vmatmul.mubr.bf16.gmra.mxu0 %v989
  %v1514 = vpop.f32.mrf.mxu0
  %v1515 = vadd.f32 %v1307, %v1514
  %v1516 = vpop.f32.mrf.mxu0
  %v1517 = vpop.f32.mrf.mxu0
  %v1518 = vadd.f32 %v1310, %v1517
  %v1519 = vpop.f32.mrf.mxu0
  %1520 = vmatprep.mubr.bf16.mxu0 0
  %1521 = vmatmul.mubr.bf16.gmra.mxu0 %v992
  %v1522 = vpop.f32.mrf.mxu0
  %v1523 = vadd.f32 %v1315, %v1522
  %v1524 = vpop.f32.mrf.mxu0
  %v1525 = vpop.f32.mrf.mxu0
  %v1526 = vadd.f32 %v1318, %v1525
  %v1527 = vpop.f32.mrf.mxu0
  %1528 = vmatprep.mubr.bf16.mxu0 0
  %1529 = vmatmul.mubr.bf16.gmra.mxu0 %v995
  %v1530 = vpop.f32.mrf.mxu0
  %v1531 = vadd.f32 %v1323, %v1530
  %v1532 = vpop.f32.mrf.mxu0
  %v1533 = vpop.f32.mrf.mxu0
  %v1534 = vadd.f32 %v1326, %v1533
  %v1535 = vpop.f32.mrf.mxu0
  %1536 = vmatprep.mubr.bf16.mxu0 0
  %1537 = vmatmul.mubr.bf16.gmra.mxu0 %v998
  %v1538 = vpop.f32.mrf.mxu0
  %v1539 = vadd.f32 %v1331, %v1538
  %v1540 = vpop.f32.mrf.mxu0
  %v1541 = vpop.f32.mrf.mxu0
  %v1542 = vadd.f32 %v1334, %v1541
  %v1543 = vpop.f32.mrf.mxu0
  %1544 = vmatprep.mubr.bf16.mxu0 0
  %1545 = vmatmul.mubr.bf16.gmra.mxu0 %v1001
  %v1546 = vpop.f32.mrf.mxu0
  %v1547 = vadd.f32 %v1339, %v1546
  %v1548 = vpop.f32.mrf.mxu0
  %v1549 = vpop.f32.mrf.mxu0
  %v1550 = vadd.f32 %v1342, %v1549
  %v1551 = vpop.f32.mrf.mxu0
  %1552 = vmatprep.mubr.bf16.mxu0 0
  %1553 = vmatmul.mubr.bf16.gmra.mxu0 %v1004
  %v1554 = vpop.f32.mrf.mxu0
  %v1555 = vadd.f32 %v1347, %v1554
  %v1556 = vpop.f32.mrf.mxu0
  %v1557 = vpop.f32.mrf.mxu0
  %v1558 = vadd.f32 %v1350, %v1557
  %v1559 = vpop.f32.mrf.mxu0
  %1560 = vmatprep.mubr.bf16.mxu0 0
  %1561 = vmatmul.mubr.bf16.gmra.mxu0 %v1007
  %v1562 = vpop.f32.mrf.mxu0
  %v1563 = vadd.f32 %v1355, %v1562
  %v1564 = vpop.f32.mrf.mxu0
  %v1565 = vpop.f32.mrf.mxu0
  %v1566 = vadd.f32 %v1358, %v1565
  %v1567 = vpop.f32.mrf.mxu0
  %1568 = vmatprep.mubr.bf16.mxu0 0
  %1569 = vmatmul.mubr.bf16.gmra.mxu0 %v1010
  %v1570 = vpop.f32.mrf.mxu0
  %v1571 = vadd.f32 %v1363, %v1570
  %v1572 = vpop.f32.mrf.mxu0
  %v1573 = vpop.f32.mrf.mxu0
  %v1574 = vadd.f32 %v1366, %v1573
  %v1575 = vpop.f32.mrf.mxu0
  %1576 = vmatprep.mubr.bf16.mxu0 0
  %1577 = vmatmul.mubr.bf16.gmra.mxu0 %v1013
  %v1578 = vpop.f32.mrf.mxu0
  %v1579 = vadd.f32 %v1371, %v1578
  %v1580 = vpop.f32.mrf.mxu0
  %v1581 = vpop.f32.mrf.mxu0
  %v1582 = vadd.f32 %v1374, %v1581
  %v1583 = vpop.f32.mrf.mxu0
  %1584 = vmatprep.mubr.bf16.mxu0 0
  %1585 = vmatmul.mubr.bf16.gmra.mxu0 %v1016
  %v1586 = vpop.f32.mrf.mxu0
  %v1587 = vadd.f32 %v1379, %v1586
  %v1588 = vpop.f32.mrf.mxu0
  %v1589 = vpop.f32.mrf.mxu0
  %v1590 = vadd.f32 %v1382, %v1589
  %v1591 = vpop.f32.mrf.mxu0
  %1592 = vmatprep.mubr.bf16.mxu0 0
  %1593 = vmatmul.mubr.bf16.gmra.mxu0 %v1019
  %v1594 = vpop.f32.mrf.mxu0
  %v1595 = vadd.f32 %v1387, %v1594
  %v1596 = vpop.f32.mrf.mxu0
  %v1597 = vpop.f32.mrf.mxu0
  %v1598 = vadd.f32 %v1390, %v1597
  %v1599 = vpop.f32.mrf.mxu0
  %1600 = vmatprep.mubr.bf16.mxu0 0
  %1601 = vmatmul.mubr.bf16.gmra.mxu0 %v1022
  %v1602 = vpop.f32.mrf.mxu0
  %v1603 = vadd.f32 %v1395, %v1602
  %v1604 = vpop.f32.mrf.mxu0
  %v1605 = vpop.f32.mrf.mxu0
  %v1606 = vadd.f32 %v1398, %v1605
  %v1607 = vpop.f32.mrf.mxu0
  %1608 = vmatprep.mubr.bf16.mxu0 0
  %1609 = vmatmul.mubr.bf16.gmra.mxu0 %v1025
  %v1610 = vpop.f32.mrf.mxu0
  %v1611 = vadd.f32 %v1403, %v1610
  %v1612 = vpop.f32.mrf.mxu0
  %v1613 = vpop.f32.mrf.mxu0
  %v1614 = vadd.f32 %v1406, %v1613
  %v1615 = vpop.f32.mrf.mxu0
  %1616 = vmatprep.mubr.bf16.mxu0 0
  %1617 = vmatmul.mubr.bf16.gmra.mxu0 %v1028
  %v1618 = vpop.f32.mrf.mxu0
  %v1619 = vadd.f32 %v1411, %v1618
  %v1620 = vpop.f32.mrf.mxu0
  %v1621 = vpop.f32.mrf.mxu0
  %v1622 = vadd.f32 %v1414, %v1621
  %v1623 = vpop.f32.mrf.mxu0
  %1624 = vmatprep.mubr.bf16.mxu0 0
  %1625 = vmatmul.mubr.bf16.gmra.mxu0 %v1031
  %v1626 = vpop.f32.mrf.mxu0
  %v1627 = vadd.f32 %v1419, %v1626
  %v1628 = vpop.f32.mrf.mxu0
  %v1629 = vpop.f32.mrf.mxu0
  %v1630 = vadd.f32 %v1422, %v1629
  %v1631 = vpop.f32.mrf.mxu0
  %1632 = vmatprep.mubr.bf16.mxu0 0
  %1633 = vmatmul.mubr.bf16.gmra.mxu0 %v1034
  %v1634 = vpop.f32.mrf.mxu0
  %v1635 = vadd.f32 %v1427, %v1634
  %v1636 = vpop.f32.mrf.mxu0
  %v1637 = vpop.f32.mrf.mxu0
  %v1638 = vadd.f32 %v1430, %v1637
  %v1639 = vpop.f32.mrf.mxu0
  %1640 = vmatprep.mubr.bf16.mxu0 0
  %1641 = vmatmul.mubr.bf16.gmra.mxu0 %v1037
  %v1642 = vpop.f32.mrf.mxu0
  %v1643 = vadd.f32 %v1435, %v1642
  %v1644 = vpop.f32.mrf.mxu0
  %v1645 = vpop.f32.mrf.mxu0
  %v1646 = vadd.f32 %v1438, %v1645
  %v1647 = vpop.f32.mrf.mxu0
  %1648 = vmatprep.mubr.bf16.mxu0 0
  %1649 = vmatmul.mubr.bf16.gmra.mxu0 %v1040
  %v1650 = vpop.f32.mrf.mxu0
  %v1651 = vadd.f32 %v1443, %v1650
  %v1652 = vpop.f32.mrf.mxu0
  %v1653 = vpop.f32.mrf.mxu0
  %v1654 = vadd.f32 %v1446, %v1653
  %v1655 = vpop.f32.mrf.mxu0
  %1656 = vmatprep.mubr.bf16.mxu0 0
  %1657 = vmatmul.mubr.bf16.gmra.mxu0 %v1043
  %v1658 = vpop.f32.mrf.mxu0
  %v1659 = vadd.f32 %v1451, %v1658
  %v1660 = vpop.f32.mrf.mxu0
  %v1661 = vpop.f32.mrf.mxu0
  %v1662 = vadd.f32 %v1454, %v1661
  %v1663 = vpop.f32.mrf.mxu0
  %1664 = vmatprep.mubr.bf16.mxu0 0
  %1665 = vmatmul.mubr.bf16.gmra.mxu0 %v1046
  %v1666 = vpop.f32.mrf.mxu0
  %v1667 = vadd.f32 %v1459, %v1666
  %v1668 = vpop.f32.mrf.mxu0
  %v1669 = vpop.f32.mrf.mxu0
  %v1670 = vpop.f32.mrf.mxu0
  %1671 = vdwg.mxu0
  %v1672 = vmax.f32 %v1499, 0.0
  %v1673 = vmax.f32 %v1502, 0.0
  %v1674 = vmax.f32 %v1507, 0.0
  %v1675 = vmax.f32 %v1510, 0.0
  %v1676 = vmax.f32 %v1515, 0.0
  %v1677 = vmax.f32 %v1518, 0.0
  %v1678 = vmax.f32 %v1523, 0.0
  %v1679 = vmax.f32 %v1526, 0.0
  %v1680 = vmax.f32 %v1531, 0.0
  %v1681 = vmax.f32 %v1534, 0.0
  %v1682 = vmax.f32 %v1539, 0.0
  %v1683 = vmax.f32 %v1542, 0.0
  %v1684 = vmax.f32 %v1547, 0.0
  %v1685 = vmax.f32 %v1550, 0.0
  %v1686 = vmax.f32 %v1555, 0.0
  %v1687 = vmax.f32 %v1558, 0.0
  %v1688 = vmax.f32 %v1563, 0.0
  %v1689 = vmax.f32 %v1566, 0.0
  %v1690 = vmax.f32 %v1571, 0.0
  %v1691 = vmax.f32 %v1574, 0.0
  %v1692 = vmax.f32 %v1579, 0.0
  %v1693 = vmax.f32 %v1582, 0.0
  %v1694 = vmax.f32 %v1587, 0.0
  %v1695 = vmax.f32 %v1590, 0.0
  %v1696 = vmax.f32 %v1595, 0.0
  %v1697 = vmax.f32 %v1598, 0.0
  %v1698 = vmax.f32 %v1603, 0.0
  %v1699 = vmax.f32 %v1606, 0.0
  %v1700 = vmax.f32 %v1611, 0.0
  %v1701 = vmax.f32 %v1614, 0.0
  %v1702 = vmax.f32 %v1619, 0.0
  %v1703 = vmax.f32 %v1622, 0.0
  %v1704 = vmax.f32 %v1627, 0.0
  %v1705 = vmax.f32 %v1630, 0.0
  %v1706 = vmax.f32 %v1635, 0.0
  %v1707 = vmax.f32 %v1638, 0.0
  %v1708 = vmax.f32 %v1643, 0.0
  %v1709 = vmax.f32 %v1646, 0.0
  %v1710 = vmax.f32 %v1651, 0.0
  %v1711 = vmax.f32 %v1654, 0.0
  %v1712 = vmax.f32 %v1659, 0.0
  %v1713 = vmax.f32 %v1662, 0.0
  %v1714 = vmax.f32 %v1667, 0.0
  %v1715 = vpack.c.bf16 %v1673, %v1672
  %v1716 = vpack.c.bf16 %v1675, %v1674
  %v1717 = vpack.c.bf16 %v1677, %v1676
  %v1718 = vpack.c.bf16 %v1679, %v1678
  %v1719 = vpack.c.bf16 %v1681, %v1680
  %v1720 = vpack.c.bf16 %v1683, %v1682
  %v1721 = vpack.c.bf16 %v1685, %v1684
  %v1722 = vpack.c.bf16 %v1687, %v1686
  %v1723 = vpack.c.bf16 %v1689, %v1688
  %v1724 = vpack.c.bf16 %v1691, %v1690
  %v1725 = vpack.c.bf16 %v1693, %v1692
  %v1726 = vpack.c.bf16 %v1695, %v1694
  %v1727 = vpack.c.bf16 %v1697, %v1696
  %v1728 = vpack.c.bf16 %v1699, %v1698
  %v1729 = vpack.c.bf16 %v1701, %v1700
  %v1730 = vpack.c.bf16 %v1703, %v1702
  %v1731 = vpack.c.bf16 %v1705, %v1704
  %v1732 = vpack.c.bf16 %v1707, %v1706
  %v1733 = vpack.c.bf16 %v1709, %v1708
  %v1734 = vpack.c.bf16 %v1711, %v1710
  %v1735 = vpack.c.bf16 %v1713, %v1712
  %v1736 = vpack.c.bf16 %v1714, %v1714
  %v1759 = vunpack.c.l.b16 %v1715
  %v1760 = vunpack.c.h.b16 %v1715
  %v1761 = vunpack.c.l.b16 %v1716
  %v1762 = vunpack.c.h.b16 %v1716
  %v1763 = vunpack.c.l.b16 %v1717
  %v1764 = vunpack.c.h.b16 %v1717
  %v1765 = vunpack.c.l.b16 %v1718
  %v1766 = vunpack.c.h.b16 %v1718
  %v1767 = vunpack.c.l.b16 %v1719
  %v1768 = vunpack.c.h.b16 %v1719
  %v1769 = vunpack.c.l.b16 %v1720
  %v1770 = vunpack.c.h.b16 %v1720
  %v1771 = vunpack.c.l.b16 %v1721
  %v1772 = vunpack.c.h.b16 %v1721
  %v1773 = vunpack.c.l.b16 %v1722
  %v1774 = vunpack.c.h.b16 %v1722
  %v1775 = vunpack.c.l.b16 %v1723
  %v1776 = vunpack.c.h.b16 %v1723
  %v1777 = vunpack.c.l.b16 %v1724
  %v1778 = vunpack.c.h.b16 %v1724
  %v1779 = vunpack.c.l.b16 %v1725
  %v1780 = vunpack.c.h.b16 %v1725
  %v1781 = vunpack.c.l.b16 %v1726
  %v1782 = vunpack.c.h.b16 %v1726
  %v1783 = vunpack.c.l.b16 %v1727
  %v1784 = vunpack.c.h.b16 %v1727
  %v1785 = vunpack.c.l.b16 %v1728
  %v1786 = vunpack.c.h.b16 %v1728
  %v1787 = vunpack.c.l.b16 %v1729
  %v1788 = vunpack.c.h.b16 %v1729
  %v1789 = vunpack.c.l.b16 %v1730
  %v1790 = vunpack.c.h.b16 %v1730
  %v1791 = vunpack.c.l.b16 %v1731
  %v1792 = vunpack.c.h.b16 %v1731
  %v1793 = vunpack.c.l.b16 %v1732
  %v1794 = vunpack.c.h.b16 %v1732
  %v1795 = vunpack.c.l.b16 %v1733
  %v1796 = vunpack.c.h.b16 %v1733
  %v1797 = vunpack.c.l.b16 %v1734
  %v1798 = vunpack.c.h.b16 %v1734
  %v1799 = vunpack.c.l.b16 %v1735
  %v1800 = vunpack.c.h.b16 %v1735
  %v1801 = vunpack.c.l.b16 %v1736
  %v1802 = vpack.c.b16 %v1759, %v1759
  %v1803 = vpack.c.b16 %v1760, %v1760
  %v1804 = vpack.c.b16 %v1761, %v1761
  %v1805 = vpack.c.b16 %v1762, %v1762
  %v1806 = vpack.c.b16 %v1763, %v1763
  %v1807 = vpack.c.b16 %v1764, %v1764
  %v1808 = vpack.c.b16 %v1765, %v1765
  %v1809 = vpack.c.b16 %v1766, %v1766
  %v1810 = vpack.c.b16 %v1767, %v1767
  %v1811 = vpack.c.b16 %v1768, %v1768
  %v1812 = vpack.c.b16 %v1769, %v1769
  %v1813 = vpack.c.b16 %v1770, %v1770
  %v1814 = vpack.c.b16 %v1771, %v1771
  %v1815 = vpack.c.b16 %v1772, %v1772
  %v1816 = vpack.c.b16 %v1773, %v1773
  %v1817 = vpack.c.b16 %v1774, %v1774
  %v1818 = vpack.c.b16 %v1775, %v1775
  %v1819 = vpack.c.b16 %v1776, %v1776
  %v1820 = vpack.c.b16 %v1777, %v1777
  %v1821 = vpack.c.b16 %v1778, %v1778
  %v1822 = vpack.c.b16 %v1779, %v1779
  %v1823 = vpack.c.b16 %v1780, %v1780
  %v1824 = vpack.c.b16 %v1781, %v1781
  %v1825 = vpack.c.b16 %v1782, %v1782
  %v1826 = vpack.c.b16 %v1783, %v1783
  %v1827 = vpack.c.b16 %v1784, %v1784
  %v1828 = vpack.c.b16 %v1785, %v1785
  %v1829 = vpack.c.b16 %v1786, %v1786
  %v1830 = vpack.c.b16 %v1787, %v1787
  %v1831 = vpack.c.b16 %v1788, %v1788
  %v1832 = vpack.c.b16 %v1789, %v1789
  %v1833 = vpack.c.b16 %v1790, %v1790
  %v1834 = vpack.c.b16 %v1791, %v1791
  %v1835 = vpack.c.b16 %v1792, %v1792
  %v1836 = vpack.c.b16 %v1793, %v1793
  %v1837 = vpack.c.b16 %v1794, %v1794
  %v1838 = vpack.c.b16 %v1795, %v1795
  %v1839 = vpack.c.b16 %v1796, %v1796
  %v1840 = vpack.c.b16 %v1797, %v1797
  %v1841 = vpack.c.b16 %v1798, %v1798
  %v1842 = vpack.c.b16 %v1799, %v1799
  %v1843 = vpack.c.b16 %v1800, %v1800
  %v1844 = vpack.c.b16 %v1801, %v1801
  %1888 = vst [vmem:[%s3] sm:$0xf] %v1802
  %1889 = vst [vmem:[%s3 + $0x4] sm:$0xf] %v1803
  %1890 = vst [vmem:[%s3 + $0x8] sm:$0xf] %v1804
  %1891 = vst [vmem:[%s3 + $0xc] sm:$0xf] %v1805
  %1892 = vst [vmem:[%s3 + $0x10] sm:$0xf] %v1806
  %1893 = vst [vmem:[%s3 + $0x14] sm:$0xf] %v1807
  %1894 = vst [vmem:[%s3 + $0x18] sm:$0xf] %v1808
  %1895 = vst [vmem:[%s3 + $0x1c] sm:$0xf] %v1809
  %1896 = vst [vmem:[%s3 + $0x20] sm:$0xf] %v1810
  %1897 = vst [vmem:[%s3 + $0x24] sm:$0xf] %v1811
  %1898 = vst [vmem:[%s3 + $0x28] sm:$0xf] %v1812
  %1899 = vst [vmem:[%s3 + $0x2c] sm:$0xf] %v1813
  %1900 = vst [vmem:[%s3 + $0x30] sm:$0xf] %v1814
  %1901 = vst [vmem:[%s3 + $0x34] sm:$0xf] %v1815
  %1902 = vst [vmem:[%s3 + $0x38] sm:$0xf] %v1816
  %1903 = vst [vmem:[%s3 + $0x3c] sm:$0xf] %v1817
  %1904 = vst [vmem:[%s3 + $0x40] sm:$0xf] %v1818
  %1905 = vst [vmem:[%s3 + $0x44] sm:$0xf] %v1819
  %1906 = vst [vmem:[%s3 + $0x48] sm:$0xf] %v1820
  %1907 = vst [vmem:[%s3 + $0x4c] sm:$0xf] %v1821
  %1908 = vst [vmem:[%s3 + $0x50] sm:$0xf] %v1822
  %1909 = vst [vmem:[%s3 + $0x54] sm:$0xf] %v1823
  %1910 = vst [vmem:[%s3 + $0x58] sm:$0xf] %v1824
  %1911 = vst [vmem:[%s3 + $0x5c] sm:$0xf] %v1825
  %1912 = vst [vmem:[%s3 + $0x60] sm:$0xf] %v1826
  %1913 = vst [vmem:[%s3 + $0x64] sm:$0xf] %v1827
  %1914 = vst [vmem:[%s3 + $0x68] sm:$0xf] %v1828
  %1915 = vst [vmem:[%s3 + $0x6c] sm:$0xf] %v1829
  %1916 = vst [vmem:[%s3 + $0x70] sm:$0xf] %v1830
  %1917 = vst [vmem:[%s3 + $0x74] sm:$0xf] %v1831
  %1918 = vst [vmem:[%s3 + $0x78] sm:$0xf] %v1832
  %1919 = vst [vmem:[%s3 + $0x7c] sm:$0xf] %v1833
  %1920 = vst [vmem:[%s3 + $0x80] sm:$0xf] %v1834
  %1921 = vst [vmem:[%s3 + $0x84] sm:$0xf] %v1835
  %1922 = vst [vmem:[%s3 + $0x88] sm:$0xf] %v1836
  %1923 = vst [vmem:[%s3 + $0x8c] sm:$0xf] %v1837
  %1924 = vst [vmem:[%s3 + $0x90] sm:$0xf] %v1838
  %1925 = vst [vmem:[%s3 + $0x94] sm:$0xf] %v1839
  %1926 = vst [vmem:[%s3 + $0x98] sm:$0xf] %v1840
  %1927 = vst [vmem:[%s3 + $0x9c] sm:$0xf] %v1841
  %1928 = vst [vmem:[%s3 + $0xa0] sm:$0xf] %v1842
  %1929 = vst [vmem:[%s3 + $0xa4] sm:$0xf] %v1843
  %1930 = vst [vmem:[%s3 + $0xa8] sm:$0xf] %v1844
  // Predicated region
  $region14: #{vae_forward.15} parent=0 // pred_check
    _
  $region15: #{vae_forward.15} parent=0 // pred_check_branch
    %1932 = sbr.rel (0) target = $region17
  $region16: #{vae_forward.15} parent=0 // pred_region
    _
  $region17: #{vae_forward.15} parent=0 // pred_fallthru
    _
  // Predicated region
  $region18: #{vae_forward.15} parent=0 // pred_check
    _
  $region19: #{vae_forward.15} parent=0 // pred_check_branch
    %1934 = sbr.rel (0) target = $region21
  $region20: #{vae_forward.15} parent=0 // pred_region
    _
  $region21: #{vae_forward.15} parent=0 // pred_fallthru
    _

// kernel: vae_forward.16
$region0: #{vae_forward.16}
  #allocation0 [shape = 'u32[]', space=smem, size = 0x4, offset = 0x4, fixed_abs, tag = 'smem constant byte address 0x4 - core index']
  #allocation1 [shape = 'u32[144,128]{1,0:T(1,128)}', space=vmem, size = 0x12000, scoped, tag = 'internal scratch']
  %s0 = inlined_call_operand.vmem [shape: bf16[1464,576], index: 0, kind: input, shape index: {}]
  %s1 = inlined_call_operand.vmem [shape: bf16[576,128], index: 1, kind: input, shape index: {}]
  %s2 = inlined_call_operand.vmem [shape: f32[1,128], index: 2, kind: input, shape index: {}]
  %s3 = inlined_call_operand.vmem [shape: bf16[1464,128], index: 3, kind: output, shape index: {}]
  %s4 = sld [smem:[#allocation0]]
  $region45: #{vae_forward.16} parent=0
    _
  %s6 = ssub.s32 1, %s4
  %s7 = scalar_select 0, %s6, %s4
  loop: start=0, step=1, limit=5
  $region2: #{vae_forward.16} parent=0 // loop_pre_header
    _
  $region3: #{vae_forward.16} parent=0 // loop_header
    %s9 = sphi 0, %s13
    %p10 = scmp.ge.s32.totalorder %s9, 5
    %s19 = sphi 0, %s21
    %s22 = sphi 0, %s19
    %s23 = sphi 0, %s22
    %s39 = sphi 0, %s23
    %s43 = sphi 0, %s43
    %s45 = sphi 0, %s43
    %s46 = sphi 0, %s45
    %s60 = sphi 0, %s46
    %s64 = sphi 0, %s64
    %s66 = sphi 0, %s64
    %s67 = sphi 0, %s66
    %s81 = sphi 0, %s67
    %s87 = sphi 0, %s89
    %s90 = sphi 0, %s87
    %s91 = sphi 0, %s90
    %s107 = sphi 0, %s91
  $region4: #{vae_forward.16} parent=0 // loop_header_branch
    %12 = sbr.rel (%p10) target = $region8
  $region5: #{vae_forward.16} parent=0 // loop_body
    %s14 = ssub.s32 %s9, 1
    %s15 = ssub.s32 %s9, 2
    %s16 = sadd.s32 %s9, 1
    %s17 = ssub.s32 %s9, %s16
    %p18 = scmp.eq.s32.totalorder %s17, 0
    %s20 = sadd.s32 %s19, 1
    %s21 = scalar_select %p18, %s19, %s20
    %p24 = pneg %p18
    %p25 = scmp.eq.s32.totalorder %s9, 2
    %p26 = por %p24, %p25
    %p27 = scmp.ne.s32.totalorder %s19, %s22
    %p28 = scmp.eq.s32.totalorder %s9, 0
    %p29 = por %p27, %p28
    %p30 = scmp.ne.s32.totalorder %s19, %s22
    %p31 = scmp.eq.s32.totalorder %s14, 2
    %p32 = por %p30, %p31
    %p33 = scmp.ne.s32.totalorder %s22, %s23
    %p34 = scmp.eq.s32.totalorder %s14, 0
    %p35 = por %p33, %p34
    %p36 = scmp.ne.s32.totalorder %s22, %s23
    %p37 = scmp.eq.s32.totalorder %s15, 2
    %p38 = por %p36, %p37
    %p40 = scmp.ne.s32.totalorder %s23, %s39
    %p41 = scmp.eq.s32.totalorder %s15, 0
    %p42 = por %p40, %p41
    %s44 = sadd.s32 %s43, 1
    %p47 = scmp.eq.s32.totalorder %s9, 2
    %p48 = scmp.ne.s32.totalorder %s43, %s45
    %p49 = scmp.eq.s32.totalorder %s9, 0
    %p50 = por %p48, %p49
    %p51 = scmp.ne.s32.totalorder %s43, %s45
    %p52 = scmp.eq.s32.totalorder %s14, 2
    %p53 = por %p51, %p52
    %p54 = scmp.ne.s32.totalorder %s45, %s46
    %p55 = scmp.eq.s32.totalorder %s14, 0
    %p56 = por %p54, %p55
    %p57 = scmp.ne.s32.totalorder %s45, %s46
    %p58 = scmp.eq.s32.totalorder %s15, 2
    %p59 = por %p57, %p58
    %p61 = scmp.ne.s32.totalorder %s46, %s60
    %p62 = scmp.eq.s32.totalorder %s15, 0
    %p63 = por %p61, %p62
    %s65 = sadd.s32 %s64, 1
    %p68 = scmp.eq.s32.totalorder %s9, 2
    %p69 = scmp.ne.s32.totalorder %s64, %s66
    %p70 = scmp.eq.s32.totalorder %s9, 0
    %p71 = por %p69, %p70
    %p72 = scmp.ne.s32.totalorder %s64, %s66
    %p73 = scmp.eq.s32.totalorder %s14, 2
    %p74 = por %p72, %p73
    %p75 = scmp.ne.s32.totalorder %s66, %s67
    %p76 = scmp.eq.s32.totalorder %s14, 0
    %p77 = por %p75, %p76
    %p78 = scmp.ne.s32.totalorder %s66, %s67
    %p79 = scmp.eq.s32.totalorder %s15, 2
    %p80 = por %p78, %p79
    %p82 = scmp.ne.s32.totalorder %s67, %s81
    %p83 = scmp.eq.s32.totalorder %s15, 0
    %p84 = por %p82, %p83
    %s85 = ssub.s32 %s9, %s16
    %p86 = scmp.eq.s32.totalorder %s85, 0
    %s88 = sadd.s32 %s87, 1
    %s89 = scalar_select %p86, %s87, %s88
    %p92 = pneg %p86
    %p93 = scmp.eq.s32.totalorder %s9, 2
    %p94 = por %p92, %p93
    %p95 = scmp.ne.s32.totalorder %s87, %s90
    %p96 = scmp.eq.s32.totalorder %s9, 0
    %p97 = por %p95, %p96
    %p98 = scmp.ne.s32.totalorder %s87, %s90
    %p99 = scmp.eq.s32.totalorder %s14, 2
    %p100 = por %p98, %p99
    %p101 = scmp.ne.s32.totalorder %s90, %s91
    %p102 = scmp.eq.s32.totalorder %s14, 0
    %p103 = por %p101, %p102
    %p104 = scmp.ne.s32.totalorder %s90, %s91
    %p105 = scmp.eq.s32.totalorder %s15, 2
    %p106 = por %p104, %p105
    %p108 = scmp.ne.s32.totalorder %s91, %s107
    %p109 = scmp.eq.s32.totalorder %s15, 0
    %p110 = por %p108, %p109
    %p111 = scmp.le.s32.totalorder 1, %s9
    %p112 = scmp.lt.s32.totalorder %s9, 4
    %p113 = pnand %p111, %p112
    %p114 = pneg %p113
    // Predicated region
    $region9: #{vae_forward.16} parent=5 // pred_check
      _
    $region10: #{vae_forward.16} parent=5 // pred_check_branch
      %116 = sbr.rel (%p113) target = $region12
    $region11: #{vae_forward.16} parent=5 // pred_region
      %s117 = ssub.s32 %s9, 1
      // Predicated region
      $region13: #{vae_forward.16} parent=11 // pred_check
        %p118 = pneg %p56
      $region14: #{vae_forward.16} parent=11 // pred_check_branch
        %120 = sbr.rel (%p118) target = $region16
      $region15: #{vae_forward.16} parent=11 // pred_region
        _
      $region16: #{vae_forward.16} parent=11 // pred_fallthru
        _
      // Predicated region
      $region17: #{vae_forward.16} parent=11 // pred_check
        %p121 = pneg %p77
      $region18: #{vae_forward.16} parent=11 // pred_check_branch
        %123 = sbr.rel (%p121) target = $region20
      $region19: #{vae_forward.16} parent=11 // pred_region
        _
      $region20: #{vae_forward.16} parent=11 // pred_fallthru
        _
    $region12: #{vae_forward.16} parent=5 // pred_fallthru
      _
    %p124 = scmp.lt.s32.totalorder %s9, 3
    // Predicated region
    $region21: #{vae_forward.16} parent=5 // pred_check
      %p125 = pneg %p124
    $region22: #{vae_forward.16} parent=5 // pred_check_branch
      %127 = sbr.rel (%p125) target = $region24
    $region23: #{vae_forward.16} parent=5 // pred_region
      // Predicated region
      $region25: #{vae_forward.16} parent=23 // pred_check
        %p128 = pneg %p29
      $region26: #{vae_forward.16} parent=23 // pred_check_branch
        %130 = sbr.rel (%p128) target = $region28
      $region27: #{vae_forward.16} parent=23 // pred_region
        %s131 = smul.u32 61, %s9
        %p132 = scmp.lt.s32.totalorder %s131, 182
        %s133 = scalar_select %p132, %s131, 182
        %s134 = smul.addr %s133, 5
        %s135 = smul.addr %s134, 4
        %s136 = scalar_lea.vmem %s0, %s135
        %s137 = smul.u32 61, %s9
      $region28: #{vae_forward.16} parent=23 // pred_fallthru
        _
    $region24: #{vae_forward.16} parent=5 // pred_fallthru
      _
    %p138 = scmp.le.s32.totalorder 1, %s9
    %p139 = scmp.lt.s32.totalorder %s9, 4
    %p140 = pnand %p138, %p139
    %p141 = pneg %p140
    // Predicated region
    $region29: #{vae_forward.16} parent=5 // pred_check
      _
    $region30: #{vae_forward.16} parent=5 // pred_check_branch
      %143 = sbr.rel (%p140) target = $region32
    $region31: #{vae_forward.16} parent=5 // pred_region
      %s144 = ssub.s32 %s9, 1
      %s145 = smul.u32 61, %s14
      %p146 = scmp.lt.s32.totalorder %s145, 182
      %s147 = scalar_select %p146, %s145, 182
      %s148 = smul.addr %s147, 5
      %s149 = smul.addr %s148, 4
      %s150 = scalar_lea.vmem %s0, %s149
      %p151 = pneg %p35
      %p152 = pneg %p32
      %p153 = pneg %p56
      %p154 = pneg %p53
      %p155 = pneg %p77
      %p156 = pneg %p74
      %p157 = pneg %p103
      %p158 = pneg %p100
      %s159 = smul.u32 61, %s14
      %p160 = scmp.lt.s32.totalorder %s159, 182
      %s161 = scalar_select %p160, %s159, 182
      %s162 = smul.addr %s161, 4
      %s163 = scalar_lea.vmem %s3, %s162
      %s164 = smul.u32 61, %s14
      %p165 = scmp.lt.s32.totalorder %s164, 182
      %s166 = scalar_select %p165, %s164, 182
      %s167 = smul.addr %s166, 5
      %s168 = smul.addr %s167, 4
      %s169 = scalar_lea.vmem %s0, %s168
      %s170 = smul.u32 61, %s14
      %s171 = smul.u32 61, %s14
      %p172 = scmp.lt.s32.totalorder %s171, 182
      %s173 = scalar_select %p172, %s171, 182
      %s174 = smul.addr %s173, 4
      %s175 = scalar_lea.vmem %s3, %s174
      %s176 = smul.u32 61, %s14
      %v178 = vld [vmem:[%s169] sm:$0xff]
      %v179 = vld [vmem:[%s169 + $0x8] sm:$0xff]
      %v180 = vld [vmem:[%s169 + $0x10] sm:$0xf]
      %v181 = vld [vmem:[%s169 + $0x14] sm:$0xff]
      %v182 = vld [vmem:[%s169 + $0x1c] sm:$0xff]
      %v183 = vld [vmem:[%s169 + $0x24] sm:$0xf]
      %v184 = vld [vmem:[%s169 + $0x28] sm:$0xff]
      %v185 = vld [vmem:[%s169 + $0x30] sm:$0xff]
      %v186 = vld [vmem:[%s169 + $0x38] sm:$0xf]
      %v187 = vld [vmem:[%s169 + $0x3c] sm:$0xff]
      %v188 = vld [vmem:[%s169 + $0x44] sm:$0xff]
      %v189 = vld [vmem:[%s169 + $0x4c] sm:$0xf]
      %v190 = vld [vmem:[%s169 + $0x50] sm:$0xff]
      %v191 = vld [vmem:[%s169 + $0x58] sm:$0xff]
      %v192 = vld [vmem:[%s169 + $0x60] sm:$0xf]
      %v193 = vld [vmem:[%s169 + $0x64] sm:$0xff]
      %v194 = vld [vmem:[%s169 + $0x6c] sm:$0xff]
      %v195 = vld [vmem:[%s169 + $0x74] sm:$0xf]
      %v196 = vld [vmem:[%s169 + $0x78] sm:$0xff]
      %v197 = vld [vmem:[%s169 + $0x80] sm:$0xff]
      %v198 = vld [vmem:[%s169 + $0x88] sm:$0xf]
      %v199 = vld [vmem:[%s169 + $0x8c] sm:$0xff]
      %v200 = vld [vmem:[%s169 + $0x94] sm:$0xff]
      %v201 = vld [vmem:[%s169 + $0x9c] sm:$0xf]
      %v202 = vld [vmem:[%s169 + $0xa0] sm:$0xff]
      %v203 = vld [vmem:[%s169 + $0xa8] sm:$0xff]
      %v204 = vld [vmem:[%s169 + $0xb0] sm:$0xf]
      %v205 = vld [vmem:[%s169 + $0xb4] sm:$0xff]
      %v206 = vld [vmem:[%s169 + $0xbc] sm:$0xff]
      %v207 = vld [vmem:[%s169 + $0xc4] sm:$0xf]
      %v208 = vld [vmem:[%s169 + $0xc8] sm:$0xff]
      %v209 = vld [vmem:[%s169 + $0xd0] sm:$0xff]
      %v210 = vld [vmem:[%s169 + $0xd8] sm:$0xf]
      %v211 = vld [vmem:[%s169 + $0xdc] sm:$0xff]
      %v212 = vld [vmem:[%s169 + $0xe4] sm:$0xff]
      %v213 = vld [vmem:[%s169 + $0xec] sm:$0xf]
      %v214 = vld [vmem:[%s169 + $0xf0] sm:$0xff]
      %v215 = vld [vmem:[%s169 + $0xf8] sm:$0xff]
      %v216 = vld [vmem:[%s169 + $0x100] sm:$0xf]
      %v217 = vld [vmem:[%s169 + $0x104] sm:$0xff]
      %v218 = vld [vmem:[%s169 + $0x10c] sm:$0xff]
      %v219 = vld [vmem:[%s169 + $0x114] sm:$0xf]
      %v220 = vld [vmem:[%s169 + $0x118] sm:$0xff]
      %v221 = vld [vmem:[%s169 + $0x120] sm:$0xff]
      %v222 = vld [vmem:[%s169 + $0x128] sm:$0xf]
      %v223 = vld [vmem:[%s169 + $0x12c] sm:$0xff]
      %v224 = vld [vmem:[%s169 + $0x134] sm:$0xff]
      %v225 = vld [vmem:[%s169 + $0x13c] sm:$0xf]
      %v226 = vld [vmem:[%s169 + $0x140] sm:$0xff]
      %v227 = vld [vmem:[%s169 + $0x148] sm:$0xff]
      %v228 = vld [vmem:[%s169 + $0x150] sm:$0xf]
      %v229 = vld [vmem:[%s169 + $0x154] sm:$0xff]
      %v230 = vld [vmem:[%s169 + $0x15c] sm:$0xff]
      %v231 = vld [vmem:[%s169 + $0x164] sm:$0xf]
      %v232 = vld [vmem:[%s169 + $0x168] sm:$0xff]
      %v233 = vld [vmem:[%s169 + $0x170] sm:$0xff]
      %v234 = vld [vmem:[%s169 + $0x178] sm:$0xf]
      %v235 = vld [vmem:[%s169 + $0x17c] sm:$0xff]
      %v236 = vld [vmem:[%s169 + $0x184] sm:$0xff]
      %v237 = vld [vmem:[%s169 + $0x18c] sm:$0xf]
      %v238 = vld [vmem:[%s169 + $0x190] sm:$0xff]
      %v239 = vld [vmem:[%s169 + $0x198] sm:$0xff]
      %v240 = vld [vmem:[%s169 + $0x1a0] sm:$0xf]
      %v241 = vld [vmem:[%s169 + $0x1a4] sm:$0xff]
      %v242 = vld [vmem:[%s169 + $0x1ac] sm:$0xff]
      %v243 = vld [vmem:[%s169 + $0x1b4] sm:$0xf]
      %v244 = vld [vmem:[%s169 + $0x1b8] sm:$0xff]
      %v245 = vld [vmem:[%s169 + $0x1c0] sm:$0xff]
      %v246 = vld [vmem:[%s169 + $0x1c8] sm:$0xf]
      %v247 = vld [vmem:[%s169 + $0x1cc] sm:$0xff]
      %v248 = vld [vmem:[%s169 + $0x1d4] sm:$0xff]
      %v249 = vld [vmem:[%s169 + $0x1dc] sm:$0xf]
      %v250 = vld [vmem:[%s169 + $0x1e0] sm:$0xff]
      %v251 = vld [vmem:[%s169 + $0x1e8] sm:$0xff]
      %v252 = vld [vmem:[%s169 + $0x1f0] sm:$0xf]
      %v253 = vld [vmem:[%s169 + $0x1f4] sm:$0xff]
      %v254 = vld [vmem:[%s169 + $0x1fc] sm:$0xff]
      %v255 = vld [vmem:[%s169 + $0x204] sm:$0xf]
      %v256 = vld [vmem:[%s169 + $0x208] sm:$0xff]
      %v257 = vld [vmem:[%s169 + $0x210] sm:$0xff]
      %v258 = vld [vmem:[%s169 + $0x218] sm:$0xf]
      %v259 = vld [vmem:[%s169 + $0x21c] sm:$0xff]
      %v260 = vld [vmem:[%s169 + $0x224] sm:$0xff]
      %v261 = vld [vmem:[%s169 + $0x22c] sm:$0xf]
      %v262 = vld [vmem:[%s169 + $0x230] sm:$0xff]
      %v263 = vld [vmem:[%s169 + $0x238] sm:$0xff]
      %v264 = vld [vmem:[%s169 + $0x240] sm:$0xf]
      %v265 = vld [vmem:[%s169 + $0x244] sm:$0xff]
      %v266 = vld [vmem:[%s169 + $0x24c] sm:$0xff]
      %v267 = vld [vmem:[%s169 + $0x254] sm:$0xf]
      %v268 = vld [vmem:[%s169 + $0x258] sm:$0xff]
      %v269 = vld [vmem:[%s169 + $0x260] sm:$0xff]
      %v270 = vld [vmem:[%s169 + $0x268] sm:$0xf]
      %v271 = vld [vmem:[%s169 + $0x26c] sm:$0xff]
      %v272 = vld [vmem:[%s169 + $0x274] sm:$0xff]
      %v273 = vld [vmem:[%s169 + $0x27c] sm:$0xf]
      %v274 = vld [vmem:[%s169 + $0x280] sm:$0xff]
      %v275 = vld [vmem:[%s169 + $0x288] sm:$0xff]
      %v276 = vld [vmem:[%s169 + $0x290] sm:$0xf]
      %v277 = vld [vmem:[%s169 + $0x294] sm:$0xff]
      %v278 = vld [vmem:[%s169 + $0x29c] sm:$0xff]
      %v279 = vld [vmem:[%s169 + $0x2a4] sm:$0xf]
      %v280 = vld [vmem:[%s169 + $0x2a8] sm:$0xff]
      %v281 = vld [vmem:[%s169 + $0x2b0] sm:$0xff]
      %v282 = vld [vmem:[%s169 + $0x2b8] sm:$0xf]
      %v283 = vld [vmem:[%s169 + $0x2bc] sm:$0xff]
      %v284 = vld [vmem:[%s169 + $0x2c4] sm:$0xff]
      %v285 = vld [vmem:[%s169 + $0x2cc] sm:$0xf]
      %v286 = vld [vmem:[%s169 + $0x2d0] sm:$0xff]
      %v287 = vld [vmem:[%s169 + $0x2d8] sm:$0xff]
      %v288 = vld [vmem:[%s169 + $0x2e0] sm:$0xf]
      %v289 = vld [vmem:[%s169 + $0x2e4] sm:$0xff]
      %v290 = vld [vmem:[%s169 + $0x2ec] sm:$0xff]
      %v291 = vld [vmem:[%s169 + $0x2f4] sm:$0xf]
      %v292 = vld [vmem:[%s169 + $0x2f8] sm:$0xff]
      %v293 = vld [vmem:[%s169 + $0x300] sm:$0xff]
      %v294 = vld [vmem:[%s169 + $0x308] sm:$0xf]
      %v295 = vld [vmem:[%s169 + $0x30c] sm:$0xff]
      %v296 = vld [vmem:[%s169 + $0x314] sm:$0xff]
      %v297 = vld [vmem:[%s169 + $0x31c] sm:$0xf]
      %v298 = vld [vmem:[%s169 + $0x320] sm:$0xff]
      %v299 = vld [vmem:[%s169 + $0x328] sm:$0xff]
      %v300 = vld [vmem:[%s169 + $0x330] sm:$0xf]
      %v301 = vld [vmem:[%s169 + $0x334] sm:$0xff]
      %v302 = vld [vmem:[%s169 + $0x33c] sm:$0xff]
      %v303 = vld [vmem:[%s169 + $0x344] sm:$0xf]
      %v304 = vld [vmem:[%s169 + $0x348] sm:$0xff]
      %v305 = vld [vmem:[%s169 + $0x350] sm:$0xff]
      %v306 = vld [vmem:[%s169 + $0x358] sm:$0xf]
      %v307 = vld [vmem:[%s169 + $0x35c] sm:$0xff]
      %v308 = vld [vmem:[%s169 + $0x364] sm:$0xff]
      %v309 = vld [vmem:[%s169 + $0x36c] sm:$0xf]
      %v310 = vld [vmem:[%s169 + $0x370] sm:$0xff]
      %v311 = vld [vmem:[%s169 + $0x378] sm:$0xff]
      %v312 = vld [vmem:[%s169 + $0x380] sm:$0xf]
      %v313 = vld [vmem:[%s169 + $0x384] sm:$0xff]
      %v314 = vld [vmem:[%s169 + $0x38c] sm:$0xff]
      %v315 = vld [vmem:[%s169 + $0x394] sm:$0xf]
      %v316 = vld [vmem:[%s169 + $0x398] sm:$0xff]
      %v317 = vld [vmem:[%s169 + $0x3a0] sm:$0xff]
      %v318 = vld [vmem:[%s169 + $0x3a8] sm:$0xf]
      %v319 = vld [vmem:[%s169 + $0x3ac] sm:$0xff]
      %v320 = vld [vmem:[%s169 + $0x3b4] sm:$0xff]
      %v321 = vld [vmem:[%s169 + $0x3bc] sm:$0xf]
      %v322 = vld [vmem:[%s169 + $0x3c0] sm:$0xff]
      %v323 = vld [vmem:[%s169 + $0x3c8] sm:$0xff]
      %v324 = vld [vmem:[%s169 + $0x3d0] sm:$0xf]
      %v325 = vld [vmem:[%s169 + $0x3d4] sm:$0xff]
      %v326 = vld [vmem:[%s169 + $0x3dc] sm:$0xff]
      %v327 = vld [vmem:[%s169 + $0x3e4] sm:$0xf]
      %v328 = vld [vmem:[%s169 + $0x3e8] sm:$0xff]
      %v329 = vld [vmem:[%s169 + $0x3f0] sm:$0xff]
      %v330 = vld [vmem:[%s169 + $0x3f8] sm:$0xf]
      %v331 = vld [vmem:[%s169 + $0x3fc] sm:$0xff]
      %v332 = vld [vmem:[%s169 + $0x404] sm:$0xff]
      %v333 = vld [vmem:[%s169 + $0x40c] sm:$0xf]
      %v334 = vld [vmem:[%s169 + $0x410] sm:$0xff]
      %v335 = vld [vmem:[%s169 + $0x418] sm:$0xff]
      %v336 = vld [vmem:[%s169 + $0x420] sm:$0xf]
      %v337 = vld [vmem:[%s169 + $0x424] sm:$0xff]
      %v338 = vld [vmem:[%s169 + $0x42c] sm:$0xff]
      %v339 = vld [vmem:[%s169 + $0x434] sm:$0xf]
      %v340 = vld [vmem:[%s169 + $0x438] sm:$0xff]
      %v341 = vld [vmem:[%s169 + $0x440] sm:$0xff]
      %v342 = vld [vmem:[%s169 + $0x448] sm:$0xf]
      %v343 = vld [vmem:[%s169 + $0x44c] sm:$0xff]
      %v344 = vld [vmem:[%s169 + $0x454] sm:$0xff]
      %v345 = vld [vmem:[%s169 + $0x45c] sm:$0xf]
      %v346 = vld [vmem:[%s169 + $0x460] sm:$0xff]
      %v347 = vld [vmem:[%s169 + $0x468] sm:$0xff]
      %v348 = vld [vmem:[%s169 + $0x470] sm:$0xf]
      %v349 = vld [vmem:[%s169 + $0x474] sm:$0xff]
      %v350 = vld [vmem:[%s169 + $0x47c] sm:$0xff]
      %v351 = vld [vmem:[%s169 + $0x484] sm:$0xf]
      %v352 = vld [vmem:[%s169 + $0x488] sm:$0xff]
      %v353 = vld [vmem:[%s169 + $0x490] sm:$0xff]
      %v354 = vld [vmem:[%s169 + $0x498] sm:$0xf]
      %v355 = vld [vmem:[%s169 + $0x49c] sm:$0xff]
      %v356 = vld [vmem:[%s169 + $0x4a4] sm:$0xff]
      %v357 = vld [vmem:[%s169 + $0x4ac] sm:$0xf]
      %v358 = vld [vmem:[%s169 + $0x4b0] sm:$0xff]
      %v359 = vld [vmem:[%s169 + $0x4b8] sm:$0xff]
      %v360 = vld [vmem:[%s169 + $0x4c0] sm:$0xf]
      %v361 = vld [vmem:[%s1] sm:$0xf]
      %v362 = vld [vmem:[%s1 + $0x4] sm:$0xf]
      %v363 = vld [vmem:[%s1 + $0x8] sm:$0xf]
      %v364 = vld [vmem:[%s1 + $0xc] sm:$0xf]
      %v365 = vld [vmem:[%s1 + $0x10] sm:$0xf]
      %v366 = vld [vmem:[%s1 + $0x14] sm:$0xf]
      %v367 = vld [vmem:[%s1 + $0x18] sm:$0xf]
      %v368 = vld [vmem:[%s1 + $0x1c] sm:$0xf]
      %v369 = vld [vmem:[%s1 + $0x20] sm:$0xf]
      %v370 = vld [vmem:[%s1 + $0x24] sm:$0xf]
      %v371 = vld [vmem:[%s1 + $0x28] sm:$0xf]
      %v372 = vld [vmem:[%s1 + $0x2c] sm:$0xf]
      %v373 = vld [vmem:[%s1 + $0x30] sm:$0xf]
      %v374 = vld [vmem:[%s1 + $0x34] sm:$0xf]
      %v375 = vld [vmem:[%s1 + $0x38] sm:$0xf]
      %v376 = vld [vmem:[%s1 + $0x3c] sm:$0xf]
      %v377 = vld [vmem:[%s1 + $0x40] sm:$0xf]
      %v378 = vld [vmem:[%s1 + $0x44] sm:$0xf]
      %v379 = vld [vmem:[%s1 + $0x48] sm:$0xf]
      %v380 = vld [vmem:[%s1 + $0x4c] sm:$0xf]
      %v381 = vld [vmem:[%s1 + $0x50] sm:$0xf]
      %v382 = vld [vmem:[%s1 + $0x54] sm:$0xf]
      %v383 = vld [vmem:[%s1 + $0x58] sm:$0xf]
      %v384 = vld [vmem:[%s1 + $0x5c] sm:$0xf]
      %v385 = vld [vmem:[%s1 + $0x60] sm:$0xf]
      %v386 = vld [vmem:[%s1 + $0x64] sm:$0xf]
      %v387 = vld [vmem:[%s1 + $0x68] sm:$0xf]
      %v388 = vld [vmem:[%s1 + $0x6c] sm:$0xf]
      %v389 = vld [vmem:[%s1 + $0x70] sm:$0xf]
      %v390 = vld [vmem:[%s1 + $0x74] sm:$0xf]
      %v391 = vld [vmem:[%s1 + $0x78] sm:$0xf]
      %v392 = vld [vmem:[%s1 + $0x7c] sm:$0xf]
      %v393 = vld [vmem:[%s1 + $0x80] sm:$0xf]
      %v394 = vld [vmem:[%s1 + $0x84] sm:$0xf]
      %v395 = vld [vmem:[%s1 + $0x88] sm:$0xf]
      %v396 = vld [vmem:[%s1 + $0x8c] sm:$0xf]
      %v397 = vld [vmem:[%s1 + $0x90] sm:$0xf]
      %v398 = vld [vmem:[%s1 + $0x94] sm:$0xf]
      %v399 = vld [vmem:[%s1 + $0x98] sm:$0xf]
      %v400 = vld [vmem:[%s1 + $0x9c] sm:$0xf]
      %v401 = vld [vmem:[%s1 + $0xa0] sm:$0xf]
      %v402 = vld [vmem:[%s1 + $0xa4] sm:$0xf]
      %v403 = vld [vmem:[%s1 + $0xa8] sm:$0xf]
      %v404 = vld [vmem:[%s1 + $0xac] sm:$0xf]
      %v405 = vld [vmem:[%s1 + $0xb0] sm:$0xf]
      %v406 = vld [vmem:[%s1 + $0xb4] sm:$0xf]
      %v407 = vld [vmem:[%s1 + $0xb8] sm:$0xf]
      %v408 = vld [vmem:[%s1 + $0xbc] sm:$0xf]
      %v409 = vld [vmem:[%s1 + $0xc0] sm:$0xf]
      %v410 = vld [vmem:[%s1 + $0xc4] sm:$0xf]
      %v411 = vld [vmem:[%s1 + $0xc8] sm:$0xf]
      %v412 = vld [vmem:[%s1 + $0xcc] sm:$0xf]
      %v413 = vld [vmem:[%s1 + $0xd0] sm:$0xf]
      %v414 = vld [vmem:[%s1 + $0xd4] sm:$0xf]
      %v415 = vld [vmem:[%s1 + $0xd8] sm:$0xf]
      %v416 = vld [vmem:[%s1 + $0xdc] sm:$0xf]
      %v417 = vld [vmem:[%s1 + $0xe0] sm:$0xf]
      %v418 = vld [vmem:[%s1 + $0xe4] sm:$0xf]
      %v419 = vld [vmem:[%s1 + $0xe8] sm:$0xf]
      %v420 = vld [vmem:[%s1 + $0xec] sm:$0xf]
      %v421 = vld [vmem:[%s1 + $0xf0] sm:$0xf]
      %v422 = vld [vmem:[%s1 + $0xf4] sm:$0xf]
      %v423 = vld [vmem:[%s1 + $0xf8] sm:$0xf]
      %v424 = vld [vmem:[%s1 + $0xfc] sm:$0xf]
      %v425 = vld [vmem:[%s1 + $0x100] sm:$0xf]
      %v426 = vld [vmem:[%s1 + $0x104] sm:$0xf]
      %v427 = vld [vmem:[%s1 + $0x108] sm:$0xf]
      %v428 = vld [vmem:[%s1 + $0x10c] sm:$0xf]
      %v429 = vld [vmem:[%s1 + $0x110] sm:$0xf]
      %v430 = vld [vmem:[%s1 + $0x114] sm:$0xf]
      %v431 = vld [vmem:[%s1 + $0x118] sm:$0xf]
      %v432 = vld [vmem:[%s1 + $0x11c] sm:$0xf]
      %v433 = vld [vmem:[%s2] sm:$0x1]
      %v435 = vlaneseq
      %v436 = vshrl.u32 %v435, 7
      %v437 = vsub.s32 0, %v436
      %v438 = vrot.slane %v433, %v437
      %v623 = vunpack.c.l.b16 %v178
      %v624 = vunpack.c.h.b16 %v178
      %v625 = vunpack.c.l.b16 %v179
      %v626 = vunpack.c.h.b16 %v179
      %v627 = vunpack.c.l.b16 %v180
      %v628 = vunpack.c.l.b16 %v181
      %v629 = vunpack.c.h.b16 %v181
      %v630 = vunpack.c.l.b16 %v182
      %v631 = vunpack.c.h.b16 %v182
      %v632 = vunpack.c.l.b16 %v183
      %v633 = vunpack.c.l.b16 %v184
      %v634 = vunpack.c.h.b16 %v184
      %v635 = vunpack.c.l.b16 %v185
      %v636 = vunpack.c.h.b16 %v185
      %v637 = vunpack.c.l.b16 %v186
      %v638 = vunpack.c.l.b16 %v187
      %v639 = vunpack.c.h.b16 %v187
      %v640 = vunpack.c.l.b16 %v188
      %v641 = vunpack.c.h.b16 %v188
      %v642 = vunpack.c.l.b16 %v189
      %v643 = vunpack.c.l.b16 %v190
      %v644 = vunpack.c.h.b16 %v190
      %v645 = vunpack.c.l.b16 %v191
      %v646 = vunpack.c.h.b16 %v191
      %v647 = vunpack.c.l.b16 %v192
      %v648 = vunpack.c.l.b16 %v193
      %v649 = vunpack.c.h.b16 %v193
      %v650 = vunpack.c.l.b16 %v194
      %v651 = vunpack.c.h.b16 %v194
      %v652 = vunpack.c.l.b16 %v195
      %v653 = vunpack.c.l.b16 %v196
      %v654 = vunpack.c.h.b16 %v196
      %v655 = vunpack.c.l.b16 %v197
      %v656 = vunpack.c.h.b16 %v197
      %v657 = vunpack.c.l.b16 %v198
      %v658 = vunpack.c.l.b16 %v199
      %v659 = vunpack.c.h.b16 %v199
      %v660 = vunpack.c.l.b16 %v200
      %v661 = vunpack.c.h.b16 %v200
      %v662 = vunpack.c.l.b16 %v201
      %v663 = vunpack.c.l.b16 %v202
      %v664 = vunpack.c.h.b16 %v202
      %v665 = vunpack.c.l.b16 %v203
      %v666 = vunpack.c.h.b16 %v203
      %v667 = vunpack.c.l.b16 %v204
      %v668 = vunpack.c.l.b16 %v205
      %v669 = vunpack.c.h.b16 %v205
      %v670 = vunpack.c.l.b16 %v206
      %v671 = vunpack.c.h.b16 %v206
      %v672 = vunpack.c.l.b16 %v207
      %v673 = vunpack.c.l.b16 %v208
      %v674 = vunpack.c.h.b16 %v208
      %v675 = vunpack.c.l.b16 %v209
      %v676 = vunpack.c.h.b16 %v209
      %v677 = vunpack.c.l.b16 %v210
      %v678 = vunpack.c.l.b16 %v211
      %v679 = vunpack.c.h.b16 %v211
      %v680 = vunpack.c.l.b16 %v212
      %v681 = vunpack.c.h.b16 %v212
      %v682 = vunpack.c.l.b16 %v213
      %v683 = vunpack.c.l.b16 %v214
      %v684 = vunpack.c.h.b16 %v214
      %v685 = vunpack.c.l.b16 %v215
      %v686 = vunpack.c.h.b16 %v215
      %v687 = vunpack.c.l.b16 %v216
      %v688 = vunpack.c.l.b16 %v217
      %v689 = vunpack.c.h.b16 %v217
      %v690 = vunpack.c.l.b16 %v218
      %v691 = vunpack.c.h.b16 %v218
      %v692 = vunpack.c.l.b16 %v219
      %v693 = vunpack.c.l.b16 %v220
      %v694 = vunpack.c.h.b16 %v220
      %v695 = vunpack.c.l.b16 %v221
      %v696 = vunpack.c.h.b16 %v221
      %v697 = vunpack.c.l.b16 %v222
      %v698 = vunpack.c.l.b16 %v223
      %v699 = vunpack.c.h.b16 %v223
      %v700 = vunpack.c.l.b16 %v224
      %v701 = vunpack.c.h.b16 %v224
      %v702 = vunpack.c.l.b16 %v225
      %v703 = vunpack.c.l.b16 %v226
      %v704 = vunpack.c.h.b16 %v226
      %v705 = vunpack.c.l.b16 %v227
      %v706 = vunpack.c.h.b16 %v227
      %v707 = vunpack.c.l.b16 %v228
      %v708 = vunpack.c.l.b16 %v229
      %v709 = vunpack.c.h.b16 %v229
      %v710 = vunpack.c.l.b16 %v230
      %v711 = vunpack.c.h.b16 %v230
      %v712 = vunpack.c.l.b16 %v231
      %v713 = vunpack.c.l.b16 %v232
      %v714 = vunpack.c.h.b16 %v232
      %v715 = vunpack.c.l.b16 %v233
      %v716 = vunpack.c.h.b16 %v233
      %v717 = vunpack.c.l.b16 %v234
      %v718 = vunpack.c.l.b16 %v235
      %v719 = vunpack.c.h.b16 %v235
      %v720 = vunpack.c.l.b16 %v236
      %v721 = vunpack.c.h.b16 %v236
      %v722 = vunpack.c.l.b16 %v237
      %v723 = vunpack.c.l.b16 %v238
      %v724 = vunpack.c.h.b16 %v238
      %v725 = vunpack.c.l.b16 %v239
      %v726 = vunpack.c.h.b16 %v239
      %v727 = vunpack.c.l.b16 %v240
      %v728 = vunpack.c.l.b16 %v241
      %v729 = vunpack.c.h.b16 %v241
      %v730 = vunpack.c.l.b16 %v242
      %v731 = vunpack.c.h.b16 %v242
      %v732 = vunpack.c.l.b16 %v243
      %v733 = vunpack.c.l.b16 %v244
      %v734 = vunpack.c.h.b16 %v244
      %v735 = vunpack.c.l.b16 %v245
      %v736 = vunpack.c.h.b16 %v245
      %v737 = vunpack.c.l.b16 %v246
      %v738 = vunpack.c.l.b16 %v247
      %v739 = vunpack.c.h.b16 %v247
      %v740 = vunpack.c.l.b16 %v248
      %v741 = vunpack.c.h.b16 %v248
      %v742 = vunpack.c.l.b16 %v249
      %v743 = vunpack.c.l.b16 %v250
      %v744 = vunpack.c.h.b16 %v250
      %v745 = vunpack.c.l.b16 %v251
      %v746 = vunpack.c.h.b16 %v251
      %v747 = vunpack.c.l.b16 %v252
      %v748 = vunpack.c.l.b16 %v253
      %v749 = vunpack.c.h.b16 %v253
      %v750 = vunpack.c.l.b16 %v254
      %v751 = vunpack.c.h.b16 %v254
      %v752 = vunpack.c.l.b16 %v255
      %v753 = vunpack.c.l.b16 %v256
      %v754 = vunpack.c.h.b16 %v256
      %v755 = vunpack.c.l.b16 %v257
      %v756 = vunpack.c.h.b16 %v257
      %v757 = vunpack.c.l.b16 %v258
      %v758 = vunpack.c.l.b16 %v259
      %v759 = vunpack.c.h.b16 %v259
      %v760 = vunpack.c.l.b16 %v260
      %v761 = vunpack.c.h.b16 %v260
      %v762 = vunpack.c.l.b16 %v261
      %v763 = vunpack.c.l.b16 %v262
      %v764 = vunpack.c.h.b16 %v262
      %v765 = vunpack.c.l.b16 %v263
      %v766 = vunpack.c.h.b16 %v263
      %v767 = vunpack.c.l.b16 %v264
      %v768 = vunpack.c.l.b16 %v265
      %v769 = vunpack.c.h.b16 %v265
      %v770 = vunpack.c.l.b16 %v266
      %v771 = vunpack.c.h.b16 %v266
      %v772 = vunpack.c.l.b16 %v267
      %v773 = vunpack.c.l.b16 %v268
      %v774 = vunpack.c.h.b16 %v268
      %v775 = vunpack.c.l.b16 %v269
      %v776 = vunpack.c.h.b16 %v269
      %v777 = vunpack.c.l.b16 %v270
      %v778 = vunpack.c.l.b16 %v271
      %v779 = vunpack.c.h.b16 %v271
      %v780 = vunpack.c.l.b16 %v272
      %v781 = vunpack.c.h.b16 %v272
      %v782 = vunpack.c.l.b16 %v273
      %v783 = vunpack.c.l.b16 %v274
      %v784 = vunpack.c.h.b16 %v274
      %v785 = vunpack.c.l.b16 %v275
      %v786 = vunpack.c.h.b16 %v275
      %v787 = vunpack.c.l.b16 %v276
      %v788 = vunpack.c.l.b16 %v277
      %v789 = vunpack.c.h.b16 %v277
      %v790 = vunpack.c.l.b16 %v278
      %v791 = vunpack.c.h.b16 %v278
      %v792 = vunpack.c.l.b16 %v279
      %v793 = vunpack.c.l.b16 %v280
      %v794 = vunpack.c.h.b16 %v280
      %v795 = vunpack.c.l.b16 %v281
      %v796 = vunpack.c.h.b16 %v281
      %v797 = vunpack.c.l.b16 %v282
      %v798 = vunpack.c.l.b16 %v283
      %v799 = vunpack.c.h.b16 %v283
      %v800 = vunpack.c.l.b16 %v284
      %v801 = vunpack.c.h.b16 %v284
      %v802 = vunpack.c.l.b16 %v285
      %v803 = vunpack.c.l.b16 %v286
      %v804 = vunpack.c.h.b16 %v286
      %v805 = vunpack.c.l.b16 %v287
      %v806 = vunpack.c.h.b16 %v287
      %v807 = vunpack.c.l.b16 %v288
      %v808 = vunpack.c.l.b16 %v289
      %v809 = vunpack.c.h.b16 %v289
      %v810 = vunpack.c.l.b16 %v290
      %v811 = vunpack.c.h.b16 %v290
      %v812 = vunpack.c.l.b16 %v291
      %v813 = vunpack.c.l.b16 %v292
      %v814 = vunpack.c.h.b16 %v292
      %v815 = vunpack.c.l.b16 %v293
      %v816 = vunpack.c.h.b16 %v293
      %v817 = vunpack.c.l.b16 %v294
      %v818 = vunpack.c.l.b16 %v295
      %v819 = vunpack.c.h.b16 %v295
      %v820 = vunpack.c.l.b16 %v296
      %v821 = vunpack.c.h.b16 %v296
      %v822 = vunpack.c.l.b16 %v297
      %v823 = vunpack.c.l.b16 %v298
      %v824 = vunpack.c.h.b16 %v298
      %v825 = vunpack.c.l.b16 %v299
      %v826 = vunpack.c.h.b16 %v299
      %v827 = vunpack.c.l.b16 %v300
      %v828 = vunpack.c.l.b16 %v301
      %v829 = vunpack.c.h.b16 %v301
      %v830 = vunpack.c.l.b16 %v302
      %v831 = vunpack.c.h.b16 %v302
      %v832 = vunpack.c.l.b16 %v303
      %v833 = vunpack.c.l.b16 %v304
      %v834 = vunpack.c.h.b16 %v304
      %v835 = vunpack.c.l.b16 %v305
      %v836 = vunpack.c.h.b16 %v305
      %v837 = vunpack.c.l.b16 %v306
      %v838 = vunpack.c.l.b16 %v307
      %v839 = vunpack.c.h.b16 %v307
      %v840 = vunpack.c.l.b16 %v308
      %v841 = vunpack.c.h.b16 %v308
      %v842 = vunpack.c.l.b16 %v309
      %v843 = vunpack.c.l.b16 %v310
      %v844 = vunpack.c.h.b16 %v310
      %v845 = vunpack.c.l.b16 %v311
      %v846 = vunpack.c.h.b16 %v311
      %v847 = vunpack.c.l.b16 %v312
      %v848 = vunpack.c.l.b16 %v313
      %v849 = vunpack.c.h.b16 %v313
      %v850 = vunpack.c.l.b16 %v314
      %v851 = vunpack.c.h.b16 %v314
      %v852 = vunpack.c.l.b16 %v315
      %v853 = vunpack.c.l.b16 %v316
      %v854 = vunpack.c.h.b16 %v316
      %v855 = vunpack.c.l.b16 %v317
      %v856 = vunpack.c.h.b16 %v317
      %v857 = vunpack.c.l.b16 %v318
      %v858 = vunpack.c.l.b16 %v319
      %v859 = vunpack.c.h.b16 %v319
      %v860 = vunpack.c.l.b16 %v320
      %v861 = vunpack.c.h.b16 %v320
      %v862 = vunpack.c.l.b16 %v321
      %v863 = vunpack.c.l.b16 %v322
      %v864 = vunpack.c.h.b16 %v322
      %v865 = vunpack.c.l.b16 %v323
      %v866 = vunpack.c.h.b16 %v323
      %v867 = vunpack.c.l.b16 %v324
      %v868 = vunpack.c.l.b16 %v325
      %v869 = vunpack.c.h.b16 %v325
      %v870 = vunpack.c.l.b16 %v326
      %v871 = vunpack.c.h.b16 %v326
      %v872 = vunpack.c.l.b16 %v327
      %v873 = vunpack.c.l.b16 %v328
      %v874 = vunpack.c.h.b16 %v328
      %v875 = vunpack.c.l.b16 %v329
      %v876 = vunpack.c.h.b16 %v329
      %v877 = vunpack.c.l.b16 %v330
      %v878 = vunpack.c.l.b16 %v331
      %v879 = vunpack.c.h.b16 %v331
      %v880 = vunpack.c.l.b16 %v332
      %v881 = vunpack.c.h.b16 %v332
      %v882 = vunpack.c.l.b16 %v333
      %v883 = vunpack.c.l.b16 %v334
      %v884 = vunpack.c.h.b16 %v334
      %v885 = vunpack.c.l.b16 %v335
      %v886 = vunpack.c.h.b16 %v335
      %v887 = vunpack.c.l.b16 %v336
      %v888 = vunpack.c.l.b16 %v337
      %v889 = vunpack.c.h.b16 %v337
      %v890 = vunpack.c.l.b16 %v338
      %v891 = vunpack.c.h.b16 %v338
      %v892 = vunpack.c.l.b16 %v339
      %v893 = vunpack.c.l.b16 %v340
      %v894 = vunpack.c.h.b16 %v340
      %v895 = vunpack.c.l.b16 %v341
      %v896 = vunpack.c.h.b16 %v341
      %v897 = vunpack.c.l.b16 %v342
      %v898 = vunpack.c.l.b16 %v343
      %v899 = vunpack.c.h.b16 %v343
      %v900 = vunpack.c.l.b16 %v344
      %v901 = vunpack.c.h.b16 %v344
      %v902 = vunpack.c.l.b16 %v345
      %v903 = vunpack.c.l.b16 %v346
      %v904 = vunpack.c.h.b16 %v346
      %v905 = vunpack.c.l.b16 %v347
      %v906 = vunpack.c.h.b16 %v347
      %v907 = vunpack.c.l.b16 %v348
      %v908 = vunpack.c.l.b16 %v349
      %v909 = vunpack.c.h.b16 %v349
      %v910 = vunpack.c.l.b16 %v350
      %v911 = vunpack.c.h.b16 %v350
      %v912 = vunpack.c.l.b16 %v351
      %v913 = vunpack.c.l.b16 %v352
      %v914 = vunpack.c.h.b16 %v352
      %v915 = vunpack.c.l.b16 %v353
      %v916 = vunpack.c.h.b16 %v353
      %v917 = vunpack.c.l.b16 %v354
      %v918 = vunpack.c.l.b16 %v355
      %v919 = vunpack.c.h.b16 %v355
      %v920 = vunpack.c.l.b16 %v356
      %v921 = vunpack.c.h.b16 %v356
      %v922 = vunpack.c.l.b16 %v357
      %v923 = vunpack.c.l.b16 %v358
      %v924 = vunpack.c.h.b16 %v358
      %v925 = vunpack.c.l.b16 %v359
      %v926 = vunpack.c.h.b16 %v359
      %v927 = vunpack.c.l.b16 %v360
      %v928 = vpack.c.b16 %v628, %v623
      %v929 = vpack.c.b16 %v629, %v624
      %v930 = vpack.c.b16 %v630, %v625
      %v931 = vpack.c.b16 %v631, %v626
      %v932 = vpack.c.b16 %v632, %v627
      %v933 = vpack.c.b16 %v638, %v633
      %v934 = vpack.c.b16 %v639, %v634
      %v935 = vpack.c.b16 %v640, %v635
      %v936 = vpack.c.b16 %v641, %v636
      %v937 = vpack.c.b16 %v642, %v637
      %v938 = vpack.c.b16 %v648, %v643
      %v939 = vpack.c.b16 %v649, %v644
      %v940 = vpack.c.b16 %v650, %v645
      %v941 = vpack.c.b16 %v651, %v646
      %v942 = vpack.c.b16 %v652, %v647
      %v943 = vpack.c.b16 %v658, %v653
      %v944 = vpack.c.b16 %v659, %v654
      %v945 = vpack.c.b16 %v660, %v655
      %v946 = vpack.c.b16 %v661, %v656
      %v947 = vpack.c.b16 %v662, %v657
      %v948 = vpack.c.b16 %v668, %v663
      %v949 = vpack.c.b16 %v669, %v664
      %v950 = vpack.c.b16 %v670, %v665
      %v951 = vpack.c.b16 %v671, %v666
      %v952 = vpack.c.b16 %v672, %v667
      %v953 = vpack.c.b16 %v678, %v673
      %v954 = vpack.c.b16 %v679, %v674
      %v955 = vpack.c.b16 %v680, %v675
      %v956 = vpack.c.b16 %v681, %v676
      %v957 = vpack.c.b16 %v682, %v677
      %v958 = vpack.c.b16 %v688, %v683
      %v959 = vpack.c.b16 %v689, %v684
      %v960 = vpack.c.b16 %v690, %v685
      %v961 = vpack.c.b16 %v691, %v686
      %v962 = vpack.c.b16 %v692, %v687
      %v963 = vpack.c.b16 %v698, %v693
      %v964 = vpack.c.b16 %v699, %v694
      %v965 = vpack.c.b16 %v700, %v695
      %v966 = vpack.c.b16 %v701, %v696
      %v967 = vpack.c.b16 %v702, %v697
      %v968 = vpack.c.b16 %v708, %v703
      %v969 = vpack.c.b16 %v709, %v704
      %v970 = vpack.c.b16 %v710, %v705
      %v971 = vpack.c.b16 %v711, %v706
      %v972 = vpack.c.b16 %v712, %v707
      %v973 = vpack.c.b16 %v718, %v713
      %v974 = vpack.c.b16 %v719, %v714
      %v975 = vpack.c.b16 %v720, %v715
      %v976 = vpack.c.b16 %v721, %v716
      %v977 = vpack.c.b16 %v722, %v717
      %v978 = vpack.c.b16 %v728, %v723
      %v979 = vpack.c.b16 %v729, %v724
      %v980 = vpack.c.b16 %v730, %v725
      %v981 = vpack.c.b16 %v731, %v726
      %v982 = vpack.c.b16 %v732, %v727
      %v983 = vpack.c.b16 %v738, %v733
      %v984 = vpack.c.b16 %v739, %v734
      %v985 = vpack.c.b16 %v740, %v735
      %v986 = vpack.c.b16 %v741, %v736
      %v987 = vpack.c.b16 %v742, %v737
      %v988 = vpack.c.b16 %v748, %v743
      %v989 = vpack.c.b16 %v749, %v744
      %v990 = vpack.c.b16 %v750, %v745
      %v991 = vpack.c.b16 %v751, %v746
      %v992 = vpack.c.b16 %v752, %v747
      %v993 = vpack.c.b16 %v758, %v753
      %v994 = vpack.c.b16 %v759, %v754
      %v995 = vpack.c.b16 %v760, %v755
      %v996 = vpack.c.b16 %v761, %v756
      %v997 = vpack.c.b16 %v762, %v757
      %v998 = vpack.c.b16 %v768, %v763
      %v999 = vpack.c.b16 %v769, %v764
      %v1000 = vpack.c.b16 %v770, %v765
      %v1001 = vpack.c.b16 %v771, %v766
      %v1002 = vpack.c.b16 %v772, %v767
      %v1003 = vpack.c.b16 %v778, %v773
      %v1004 = vpack.c.b16 %v779, %v774
      %v1005 = vpack.c.b16 %v780, %v775
      %v1006 = vpack.c.b16 %v781, %v776
      %v1007 = vpack.c.b16 %v782, %v777
      %v1008 = vpack.c.b16 %v788, %v783
      %v1009 = vpack.c.b16 %v789, %v784
      %v1010 = vpack.c.b16 %v790, %v785
      %v1011 = vpack.c.b16 %v791, %v786
      %v1012 = vpack.c.b16 %v792, %v787
      %v1013 = vpack.c.b16 %v798, %v793
      %v1014 = vpack.c.b16 %v799, %v794
      %v1015 = vpack.c.b16 %v800, %v795
      %v1016 = vpack.c.b16 %v801, %v796
      %v1017 = vpack.c.b16 %v802, %v797
      %v1018 = vpack.c.b16 %v808, %v803
      %v1019 = vpack.c.b16 %v809, %v804
      %v1020 = vpack.c.b16 %v810, %v805
      %v1021 = vpack.c.b16 %v811, %v806
      %v1022 = vpack.c.b16 %v812, %v807
      %v1023 = vpack.c.b16 %v818, %v813
      %v1024 = vpack.c.b16 %v819, %v814
      %v1025 = vpack.c.b16 %v820, %v815
      %v1026 = vpack.c.b16 %v821, %v816
      %v1027 = vpack.c.b16 %v822, %v817
      %v1028 = vpack.c.b16 %v828, %v823
      %v1029 = vpack.c.b16 %v829, %v824
      %v1030 = vpack.c.b16 %v830, %v825
      %v1031 = vpack.c.b16 %v831, %v826
      %v1032 = vpack.c.b16 %v832, %v827
      %v1033 = vpack.c.b16 %v838, %v833
      %v1034 = vpack.c.b16 %v839, %v834
      %v1035 = vpack.c.b16 %v840, %v835
      %v1036 = vpack.c.b16 %v841, %v836
      %v1037 = vpack.c.b16 %v842, %v837
      %v1038 = vpack.c.b16 %v848, %v843
      %v1039 = vpack.c.b16 %v849, %v844
      %v1040 = vpack.c.b16 %v850, %v845
      %v1041 = vpack.c.b16 %v851, %v846
      %v1042 = vpack.c.b16 %v852, %v847
      %v1043 = vpack.c.b16 %v858, %v853
      %v1044 = vpack.c.b16 %v859, %v854
      %v1045 = vpack.c.b16 %v860, %v855
      %v1046 = vpack.c.b16 %v861, %v856
      %v1047 = vpack.c.b16 %v862, %v857
      %v1048 = vpack.c.b16 %v868, %v863
      %v1049 = vpack.c.b16 %v869, %v864
      %v1050 = vpack.c.b16 %v870, %v865
      %v1051 = vpack.c.b16 %v871, %v866
      %v1052 = vpack.c.b16 %v872, %v867
      %v1053 = vpack.c.b16 %v878, %v873
      %v1054 = vpack.c.b16 %v879, %v874
      %v1055 = vpack.c.b16 %v880, %v875
      %v1056 = vpack.c.b16 %v881, %v876
      %v1057 = vpack.c.b16 %v882, %v877
      %v1058 = vpack.c.b16 %v888, %v883
      %v1059 = vpack.c.b16 %v889, %v884
      %v1060 = vpack.c.b16 %v890, %v885
      %v1061 = vpack.c.b16 %v891, %v886
      %v1062 = vpack.c.b16 %v892, %v887
      %v1063 = vpack.c.b16 %v898, %v893
      %v1064 = vpack.c.b16 %v899, %v894
      %v1065 = vpack.c.b16 %v900, %v895
      %v1066 = vpack.c.b16 %v901, %v896
      %v1067 = vpack.c.b16 %v902, %v897
      %v1068 = vpack.c.b16 %v908, %v903
      %v1069 = vpack.c.b16 %v909, %v904
      %v1070 = vpack.c.b16 %v910, %v905
      %v1071 = vpack.c.b16 %v911, %v906
      %v1072 = vpack.c.b16 %v912, %v907
      %v1073 = vpack.c.b16 %v918, %v913
      %v1074 = vpack.c.b16 %v919, %v914
      %v1075 = vpack.c.b16 %v920, %v915
      %v1076 = vpack.c.b16 %v921, %v916
      %v1077 = vpack.c.b16 %v922, %v917
      %v1078 = vpack.c.b16 %v923, %v923
      %v1079 = vpack.c.b16 %v924, %v924
      %v1080 = vpack.c.b16 %v925, %v925
      %v1081 = vpack.c.b16 %v926, %v926
      %v1082 = vpack.c.b16 %v927, %v927
      %v1279 = vunpack.c.l.b16 %v361
      %v1280 = vunpack.c.l.b16 %v362
      %v1281 = vunpack.c.l.b16 %v363
      %v1282 = vunpack.c.l.b16 %v364
      %v1283 = vunpack.c.l.b16 %v365
      %v1284 = vunpack.c.l.b16 %v366
      %v1285 = vunpack.c.l.b16 %v367
      %v1286 = vunpack.c.l.b16 %v368
      %v1287 = vunpack.c.l.b16 %v369
      %v1288 = vunpack.c.l.b16 %v370
      %v1289 = vunpack.c.l.b16 %v371
      %v1290 = vunpack.c.l.b16 %v372
      %v1291 = vunpack.c.l.b16 %v373
      %v1292 = vunpack.c.l.b16 %v374
      %v1293 = vunpack.c.l.b16 %v375
      %v1294 = vunpack.c.l.b16 %v376
      %v1295 = vunpack.c.l.b16 %v377
      %v1296 = vunpack.c.l.b16 %v378
      %v1297 = vunpack.c.l.b16 %v379
      %v1298 = vunpack.c.l.b16 %v380
      %v1299 = vunpack.c.l.b16 %v381
      %v1300 = vunpack.c.l.b16 %v382
      %v1301 = vunpack.c.l.b16 %v383
      %v1302 = vunpack.c.l.b16 %v384
      %v1303 = vunpack.c.l.b16 %v385
      %v1304 = vunpack.c.l.b16 %v386
      %v1305 = vunpack.c.l.b16 %v387
      %v1306 = vunpack.c.l.b16 %v388
      %v1307 = vunpack.c.l.b16 %v389
      %v1308 = vunpack.c.l.b16 %v390
      %v1309 = vunpack.c.l.b16 %v391
      %v1310 = vunpack.c.l.b16 %v392
      %v1311 = vunpack.c.l.b16 %v393
      %v1312 = vunpack.c.l.b16 %v394
      %v1313 = vunpack.c.l.b16 %v395
      %v1314 = vunpack.c.l.b16 %v396
      %v1315 = vunpack.c.l.b16 %v397
      %v1316 = vunpack.c.l.b16 %v398
      %v1317 = vunpack.c.l.b16 %v399
      %v1318 = vunpack.c.l.b16 %v400
      %v1319 = vunpack.c.l.b16 %v401
      %v1320 = vunpack.c.l.b16 %v402
      %v1321 = vunpack.c.l.b16 %v403
      %v1322 = vunpack.c.l.b16 %v404
      %v1323 = vunpack.c.l.b16 %v405
      %v1324 = vunpack.c.l.b16 %v406
      %v1325 = vunpack.c.l.b16 %v407
      %v1326 = vunpack.c.l.b16 %v408
      %v1327 = vunpack.c.l.b16 %v409
      %v1328 = vunpack.c.l.b16 %v410
      %v1329 = vunpack.c.l.b16 %v411
      %v1330 = vunpack.c.l.b16 %v412
      %v1331 = vunpack.c.l.b16 %v413
      %v1332 = vunpack.c.l.b16 %v414
      %v1333 = vunpack.c.l.b16 %v415
      %v1334 = vunpack.c.l.b16 %v416
      %v1335 = vunpack.c.l.b16 %v417
      %v1336 = vunpack.c.l.b16 %v418
      %v1337 = vunpack.c.l.b16 %v419
      %v1338 = vunpack.c.l.b16 %v420
      %v1339 = vunpack.c.l.b16 %v421
      %v1340 = vunpack.c.l.b16 %v422
      %v1341 = vunpack.c.l.b16 %v423
      %v1342 = vunpack.c.l.b16 %v424
      %v1343 = vunpack.c.l.b16 %v425
      %v1344 = vunpack.c.l.b16 %v426
      %v1345 = vunpack.c.l.b16 %v427
      %v1346 = vunpack.c.l.b16 %v428
      %v1347 = vunpack.c.l.b16 %v429
      %v1348 = vunpack.c.l.b16 %v430
      %v1349 = vunpack.c.l.b16 %v431
      %v1350 = vunpack.c.l.b16 %v432
      %v1351 = vpack.c.b16 %v1280, %v1279
      %v1352 = vpack.c.b16 %v1282, %v1281
      %v1353 = vpack.c.b16 %v1284, %v1283
      %v1354 = vpack.c.b16 %v1286, %v1285
      %v1355 = vpack.c.b16 %v1288, %v1287
      %v1356 = vpack.c.b16 %v1290, %v1289
      %v1357 = vpack.c.b16 %v1292, %v1291
      %v1358 = vpack.c.b16 %v1294, %v1293
      %v1359 = vpack.c.b16 %v1296, %v1295
      %v1360 = vpack.c.b16 %v1298, %v1297
      %v1361 = vpack.c.b16 %v1300, %v1299
      %v1362 = vpack.c.b16 %v1302, %v1301
      %v1363 = vpack.c.b16 %v1304, %v1303
      %v1364 = vpack.c.b16 %v1306, %v1305
      %v1365 = vpack.c.b16 %v1308, %v1307
      %v1366 = vpack.c.b16 %v1310, %v1309
      %v1367 = vpack.c.b16 %v1312, %v1311
      %v1368 = vpack.c.b16 %v1314, %v1313
      %v1369 = vpack.c.b16 %v1316, %v1315
      %v1370 = vpack.c.b16 %v1318, %v1317
      %v1371 = vpack.c.b16 %v1320, %v1319
      %v1372 = vpack.c.b16 %v1322, %v1321
      %v1373 = vpack.c.b16 %v1324, %v1323
      %v1374 = vpack.c.b16 %v1326, %v1325
      %v1375 = vpack.c.b16 %v1328, %v1327
      %v1376 = vpack.c.b16 %v1330, %v1329
      %v1377 = vpack.c.b16 %v1332, %v1331
      %v1378 = vpack.c.b16 %v1334, %v1333
      %v1379 = vpack.c.b16 %v1336, %v1335
      %v1380 = vpack.c.b16 %v1338, %v1337
      %v1381 = vpack.c.b16 %v1340, %v1339
      %v1382 = vpack.c.b16 %v1342, %v1341
      %v1383 = vpack.c.b16 %v1344, %v1343
      %v1384 = vpack.c.b16 %v1346, %v1345
      %v1385 = vpack.c.b16 %v1348, %v1347
      %v1386 = vpack.c.b16 %v1350, %v1349
      %vm1423 = vcmask 523264
      %v1425 = vsel %vm1423, %v932, 0
      %v1428 = vsel %vm1423, %v937, 0
      %v1431 = vsel %vm1423, %v942, 0
      %v1434 = vsel %vm1423, %v947, 0
      %v1437 = vsel %vm1423, %v952, 0
      %v1440 = vsel %vm1423, %v957, 0
      %v1443 = vsel %vm1423, %v962, 0
      %v1446 = vsel %vm1423, %v967, 0
      %v1449 = vsel %vm1423, %v972, 0
      %v1452 = vsel %vm1423, %v977, 0
      %v1455 = vsel %vm1423, %v982, 0
      %v1458 = vsel %vm1423, %v987, 0
      %v1461 = vsel %vm1423, %v992, 0
      %v1464 = vsel %vm1423, %v997, 0
      %v1467 = vsel %vm1423, %v1002, 0
      %v1470 = vsel %vm1423, %v1007, 0
      %v1473 = vsel %vm1423, %v1012, 0
      %v1476 = vsel %vm1423, %v1017, 0
      %v1479 = vsel %vm1423, %v1022, 0
      %v1482 = vsel %vm1423, %v1027, 0
      %v1485 = vsel %vm1423, %v1032, 0
      %v1488 = vsel %vm1423, %v1037, 0
      %v1491 = vsel %vm1423, %v1042, 0
      %v1494 = vsel %vm1423, %v1047, 0
      %v1497 = vsel %vm1423, %v1052, 0
      %v1500 = vsel %vm1423, %v1057, 0
      %v1503 = vsel %vm1423, %v1062, 0
      %v1506 = vsel %vm1423, %v1067, 0
      %v1509 = vsel %vm1423, %v1072, 0
      %v1512 = vsel %vm1423, %v1077, 0
      %v1515 = vsel %vm1423, %v1082, 0
      %1517 = vmatprep.subr.bf16.mxu0 0
      %1518 = vmatpush1.bf16.msra.mxu0 %v1358
      %1519 = vmatprep.subr.bf16.mxu0 0
      %1520 = vmatpush1.bf16.msra.mxu0 %v1357
      %1521 = vmatprep.subr.bf16.mxu0 0
      %1522 = vmatpush1.bf16.msra.mxu0 %v1356
      %1523 = vmatprep.subr.bf16.mxu0 0
      %1524 = vmatpush1.bf16.msra.mxu0 %v1355
      %1525 = vmatprep.subr.bf16.mxu0 0
      %1526 = vmatpush1.bf16.msra.mxu0 %v1354
      %1527 = vmatprep.subr.bf16.mxu0 0
      %1528 = vmatpush1.bf16.msra.mxu0 %v1353
      %1529 = vmatprep.subr.bf16.mxu0 0
      %1530 = vmatpush1.bf16.msra.mxu0 %v1352
      %1531 = vmatprep.subr.bf16.mxu0 0
      %1532 = vmatpush1.bf16.msra.mxu0 %v1351
      %1533 = vmatprep.subr.bf16.mxu0 0
      %1534 = vmatpush2.bf16.msra.mxu0 %v1366
      %1535 = vmatprep.subr.bf16.mxu0 0
      %1536 = vmatpush2.bf16.msra.mxu0 %v1365
      %1537 = vmatprep.subr.bf16.mxu0 0
      %1538 = vmatpush2.bf16.msra.mxu0 %v1364
      %1539 = vmatprep.subr.bf16.mxu0 0
      %1540 = vmatpush2.bf16.msra.mxu0 %v1363
      %1541 = vmatprep.subr.bf16.mxu0 0
      %1542 = vmatpush2.bf16.msra.mxu0 %v1362
      %1543 = vmatprep.subr.bf16.mxu0 0
      %1544 = vmatpush2.bf16.msra.mxu0 %v1361
      %1545 = vmatprep.subr.bf16.mxu0 0
      %1546 = vmatpush2.bf16.msra.mxu0 %v1360
      %1547 = vmatprep.subr.bf16.mxu0 0
      %1548 = vmatpush2.bf16.msra.mxu0 %v1359
      %1549 = vmatprep.mubr.bf16.mxu0 %v929
      %1550 = vmatmul.mubr.bf16.gmra.mxu0 %v928
      %v1551 = vpop.f32.mrf.mxu0
      %v1552 = vadd.f32 %v438, %v1551
      %v1553 = vpop.f32.mrf.mxu0
      %v1554 = vpop.f32.mrf.mxu0
      %v1555 = vadd.f32 %v438, %v1554
      %v1556 = vpop.f32.mrf.mxu0
      %1557 = vmatprep.mubr.bf16.mxu0 %v934
      %1558 = vmatmul.mubr.bf16.gmra.mxu0 %v933
      %v1559 = vpop.f32.mrf.mxu0
      %v1560 = vadd.f32 %v438, %v1559
      %v1561 = vpop.f32.mrf.mxu0
      %v1562 = vpop.f32.mrf.mxu0
      %v1563 = vadd.f32 %v438, %v1562
      %v1564 = vpop.f32.mrf.mxu0
      %1565 = vmatprep.mubr.bf16.mxu0 %v939
      %1566 = vmatmul.mubr.bf16.gmra.mxu0 %v938
      %v1567 = vpop.f32.mrf.mxu0
      %v1568 = vadd.f32 %v438, %v1567
      %v1569 = vpop.f32.mrf.mxu0
      %v1570 = vpop.f32.mrf.mxu0
      %v1571 = vadd.f32 %v438, %v1570
      %v1572 = vpop.f32.mrf.mxu0
      %1573 = vmatprep.mubr.bf16.mxu0 %v944
      %1574 = vmatmul.mubr.bf16.gmra.mxu0 %v943
      %v1575 = vpop.f32.mrf.mxu0
      %v1576 = vadd.f32 %v438, %v1575
      %v1577 = vpop.f32.mrf.mxu0
      %v1578 = vpop.f32.mrf.mxu0
      %v1579 = vadd.f32 %v438, %v1578
      %v1580 = vpop.f32.mrf.mxu0
      %1581 = vmatprep.mubr.bf16.mxu0 %v949
      %1582 = vmatmul.mubr.bf16.gmra.mxu0 %v948
      %v1583 = vpop.f32.mrf.mxu0
      %v1584 = vadd.f32 %v438, %v1583
      %v1585 = vpop.f32.mrf.mxu0
      %v1586 = vpop.f32.mrf.mxu0
      %v1587 = vadd.f32 %v438, %v1586
      %v1588 = vpop.f32.mrf.mxu0
      %1589 = vmatprep.mubr.bf16.mxu0 %v954
      %1590 = vmatmul.mubr.bf16.gmra.mxu0 %v953
      %v1591 = vpop.f32.mrf.mxu0
      %v1592 = vadd.f32 %v438, %v1591
      %v1593 = vpop.f32.mrf.mxu0
      %v1594 = vpop.f32.mrf.mxu0
      %v1595 = vadd.f32 %v438, %v1594
      %v1596 = vpop.f32.mrf.mxu0
      %1597 = vmatprep.mubr.bf16.mxu0 %v959
      %1598 = vmatmul.mubr.bf16.gmra.mxu0 %v958
      %v1599 = vpop.f32.mrf.mxu0
      %v1600 = vadd.f32 %v438, %v1599
      %v1601 = vpop.f32.mrf.mxu0
      %v1602 = vpop.f32.mrf.mxu0
      %v1603 = vadd.f32 %v438, %v1602
      %v1604 = vpop.f32.mrf.mxu0
      %1605 = vmatprep.mubr.bf16.mxu0 %v964
      %1606 = vmatmul.mubr.bf16.gmra.mxu0 %v963
      %v1607 = vpop.f32.mrf.mxu0
      %v1608 = vadd.f32 %v438, %v1607
      %v1609 = vpop.f32.mrf.mxu0
      %v1610 = vpop.f32.mrf.mxu0
      %v1611 = vadd.f32 %v438, %v1610
      %v1612 = vpop.f32.mrf.mxu0
      %1613 = vmatprep.mubr.bf16.mxu0 %v969
      %1614 = vmatmul.mubr.bf16.gmra.mxu0 %v968
      %v1615 = vpop.f32.mrf.mxu0
      %v1616 = vadd.f32 %v438, %v1615
      %v1617 = vpop.f32.mrf.mxu0
      %v1618 = vpop.f32.mrf.mxu0
      %v1619 = vadd.f32 %v438, %v1618
      %v1620 = vpop.f32.mrf.mxu0
      %1621 = vmatprep.mubr.bf16.mxu0 %v974
      %1622 = vmatmul.mubr.bf16.gmra.mxu0 %v973
      %v1623 = vpop.f32.mrf.mxu0
      %v1624 = vadd.f32 %v438, %v1623
      %v1625 = vpop.f32.mrf.mxu0
      %v1626 = vpop.f32.mrf.mxu0
      %v1627 = vadd.f32 %v438, %v1626
      %v1628 = vpop.f32.mrf.mxu0
      %1629 = vmatprep.mubr.bf16.mxu0 %v979
      %1630 = vmatmul.mubr.bf16.gmra.mxu0 %v978
      %v1631 = vpop.f32.mrf.mxu0
      %v1632 = vadd.f32 %v438, %v1631
      %v1633 = vpop.f32.mrf.mxu0
      %v1634 = vpop.f32.mrf.mxu0
      %v1635 = vadd.f32 %v438, %v1634
      %v1636 = vpop.f32.mrf.mxu0
      %1637 = vmatprep.mubr.bf16.mxu0 %v984
      %1638 = vmatmul.mubr.bf16.gmra.mxu0 %v983
      %v1639 = vpop.f32.mrf.mxu0
      %v1640 = vadd.f32 %v438, %v1639
      %v1641 = vpop.f32.mrf.mxu0
      %v1642 = vpop.f32.mrf.mxu0
      %v1643 = vadd.f32 %v438, %v1642
      %v1644 = vpop.f32.mrf.mxu0
      %1645 = vmatprep.mubr.bf16.mxu0 %v989
      %1646 = vmatmul.mubr.bf16.gmra.mxu0 %v988
      %v1647 = vpop.f32.mrf.mxu0
      %v1648 = vadd.f32 %v438, %v1647
      %v1649 = vpop.f32.mrf.mxu0
      %v1650 = vpop.f32.mrf.mxu0
      %v1651 = vadd.f32 %v438, %v1650
      %v1652 = vpop.f32.mrf.mxu0
      %1653 = vmatprep.mubr.bf16.mxu0 %v994
      %1654 = vmatmul.mubr.bf16.gmra.mxu0 %v993
      %v1655 = vpop.f32.mrf.mxu0
      %v1656 = vadd.f32 %v438, %v1655
      %v1657 = vpop.f32.mrf.mxu0
      %v1658 = vpop.f32.mrf.mxu0
      %v1659 = vadd.f32 %v438, %v1658
      %v1660 = vpop.f32.mrf.mxu0
      %1661 = vmatprep.mubr.bf16.mxu0 %v999
      %1662 = vmatmul.mubr.bf16.gmra.mxu0 %v998
      %v1663 = vpop.f32.mrf.mxu0
      %v1664 = vadd.f32 %v438, %v1663
      %v1665 = vpop.f32.mrf.mxu0
      %v1666 = vpop.f32.mrf.mxu0
      %v1667 = vadd.f32 %v438, %v1666
      %v1668 = vpop.f32.mrf.mxu0
      %1669 = vmatprep.mubr.bf16.mxu0 %v1004
      %1670 = vmatmul.mubr.bf16.gmra.mxu0 %v1003
      %v1671 = vpop.f32.mrf.mxu0
      %v1672 = vadd.f32 %v438, %v1671
      %v1673 = vpop.f32.mrf.mxu0
      %v1674 = vpop.f32.mrf.mxu0
      %v1675 = vadd.f32 %v438, %v1674
      %v1676 = vpop.f32.mrf.mxu0
      %1677 = vmatprep.mubr.bf16.mxu0 %v1009
      %1678 = vmatmul.mubr.bf16.gmra.mxu0 %v1008
      %v1679 = vpop.f32.mrf.mxu0
      %v1680 = vadd.f32 %v438, %v1679
      %v1681 = vpop.f32.mrf.mxu0
      %v1682 = vpop.f32.mrf.mxu0
      %v1683 = vadd.f32 %v438, %v1682
      %v1684 = vpop.f32.mrf.mxu0
      %1685 = vmatprep.mubr.bf16.mxu0 %v1014
      %1686 = vmatmul.mubr.bf16.gmra.mxu0 %v1013
      %v1687 = vpop.f32.mrf.mxu0
      %v1688 = vadd.f32 %v438, %v1687
      %v1689 = vpop.f32.mrf.mxu0
      %v1690 = vpop.f32.mrf.mxu0
      %v1691 = vadd.f32 %v438, %v1690
      %v1692 = vpop.f32.mrf.mxu0
      %1693 = vmatprep.mubr.bf16.mxu0 %v1019
      %1694 = vmatmul.mubr.bf16.gmra.mxu0 %v1018
      %v1695 = vpop.f32.mrf.mxu0
      %v1696 = vadd.f32 %v438, %v1695
      %v1697 = vpop.f32.mrf.mxu0
      %v1698 = vpop.f32.mrf.mxu0
      %v1699 = vadd.f32 %v438, %v1698
      %v1700 = vpop.f32.mrf.mxu0
      %1701 = vmatprep.mubr.bf16.mxu0 %v1024
      %1702 = vmatmul.mubr.bf16.gmra.mxu0 %v1023
      %v1703 = vpop.f32.mrf.mxu0
      %v1704 = vadd.f32 %v438, %v1703
      %v1705 = vpop.f32.mrf.mxu0
      %v1706 = vpop.f32.mrf.mxu0
      %v1707 = vadd.f32 %v438, %v1706
      %v1708 = vpop.f32.mrf.mxu0
      %1709 = vmatprep.mubr.bf16.mxu0 %v1029
      %1710 = vmatmul.mubr.bf16.gmra.mxu0 %v1028
      %v1711 = vpop.f32.mrf.mxu0
      %v1712 = vadd.f32 %v438, %v1711
      %v1713 = vpop.f32.mrf.mxu0
      %v1714 = vpop.f32.mrf.mxu0
      %v1715 = vadd.f32 %v438, %v1714
      %v1716 = vpop.f32.mrf.mxu0
      %1717 = vmatprep.mubr.bf16.mxu0 %v1034
      %1718 = vmatmul.mubr.bf16.gmra.mxu0 %v1033
      %v1719 = vpop.f32.mrf.mxu0
      %v1720 = vadd.f32 %v438, %v1719
      %v1721 = vpop.f32.mrf.mxu0
      %v1722 = vpop.f32.mrf.mxu0
      %v1723 = vadd.f32 %v438, %v1722
      %v1724 = vpop.f32.mrf.mxu0
      %1725 = vmatprep.mubr.bf16.mxu0 %v1039
      %1726 = vmatmul.mubr.bf16.gmra.mxu0 %v1038
      %v1727 = vpop.f32.mrf.mxu0
      %v1728 = vadd.f32 %v438, %v1727
      %v1729 = vpop.f32.mrf.mxu0
      %v1730 = vpop.f32.mrf.mxu0
      %v1731 = vadd.f32 %v438, %v1730
      %v1732 = vpop.f32.mrf.mxu0
      %1733 = vmatprep.mubr.bf16.mxu0 %v1044
      %1734 = vmatmul.mubr.bf16.gmra.mxu0 %v1043
      %v1735 = vpop.f32.mrf.mxu0
      %v1736 = vadd.f32 %v438, %v1735
      %v1737 = vpop.f32.mrf.mxu0
      %v1738 = vpop.f32.mrf.mxu0
      %v1739 = vadd.f32 %v438, %v1738
      %v1740 = vpop.f32.mrf.mxu0
      %1741 = vmatprep.mubr.bf16.mxu0 %v1049
      %1742 = vmatmul.mubr.bf16.gmra.mxu0 %v1048
      %v1743 = vpop.f32.mrf.mxu0
      %v1744 = vadd.f32 %v438, %v1743
      %v1745 = vpop.f32.mrf.mxu0
      %v1746 = vpop.f32.mrf.mxu0
      %v1747 = vadd.f32 %v438, %v1746
      %v1748 = vpop.f32.mrf.mxu0
      %1749 = vmatprep.mubr.bf16.mxu0 %v1054
      %1750 = vmatmul.mubr.bf16.gmra.mxu0 %v1053
      %v1751 = vpop.f32.mrf.mxu0
      %v1752 = vadd.f32 %v438, %v1751
      %v1753 = vpop.f32.mrf.mxu0
      %v1754 = vpop.f32.mrf.mxu0
      %v1755 = vadd.f32 %v438, %v1754
      %v1756 = vpop.f32.mrf.mxu0
      %1757 = vmatprep.mubr.bf16.mxu0 %v1059
      %1758 = vmatmul.mubr.bf16.gmra.mxu0 %v1058
      %v1759 = vpop.f32.mrf.mxu0
      %v1760 = vadd.f32 %v438, %v1759
      %v1761 = vpop.f32.mrf.mxu0
      %v1762 = vpop.f32.mrf.mxu0
      %v1763 = vadd.f32 %v438, %v1762
      %v1764 = vpop.f32.mrf.mxu0
      %1765 = vmatprep.mubr.bf16.mxu0 %v1064
      %1766 = vmatmul.mubr.bf16.gmra.mxu0 %v1063
      %v1767 = vpop.f32.mrf.mxu0
      %v1768 = vadd.f32 %v438, %v1767
      %v1769 = vpop.f32.mrf.mxu0
      %v1770 = vpop.f32.mrf.mxu0
      %v1771 = vadd.f32 %v438, %v1770
      %v1772 = vpop.f32.mrf.mxu0
      %1773 = vmatprep.mubr.bf16.mxu0 %v1069
      %1774 = vmatmul.mubr.bf16.gmra.mxu0 %v1068
      %v1775 = vpop.f32.mrf.mxu0
      %v1776 = vadd.f32 %v438, %v1775
      %v1777 = vpop.f32.mrf.mxu0
      %v1778 = vpop.f32.mrf.mxu0
      %v1779 = vadd.f32 %v438, %v1778
      %v1780 = vpop.f32.mrf.mxu0
      %1781 = vmatprep.mubr.bf16.mxu0 %v1074
      %1782 = vmatmul.mubr.bf16.gmra.mxu0 %v1073
      %v1783 = vpop.f32.mrf.mxu0
      %v1784 = vadd.f32 %v438, %v1783
      %v1785 = vpop.f32.mrf.mxu0
      %v1786 = vpop.f32.mrf.mxu0
      %v1787 = vadd.f32 %v438, %v1786
      %v1788 = vpop.f32.mrf.mxu0
      %1789 = vmatprep.mubr.bf16.mxu0 %v1079
      %1790 = vmatmul.mubr.bf16.gmra.mxu0 %v1078
      %v1791 = vpop.f32.mrf.mxu0
      %v1792 = vadd.f32 %v438, %v1791
      %v1793 = vpop.f32.mrf.mxu0
      %v1794 = vpop.f32.mrf.mxu0
      %v1795 = vpop.f32.mrf.mxu0
      %1796 = vdwg.mxu0
      %1797 = vmatprep.subr.bf16.mxu0 0
      %1798 = vmatpush1.bf16.msra.mxu0 %v1374
      %1799 = vmatprep.subr.bf16.mxu0 0
      %1800 = vmatpush1.bf16.msra.mxu0 %v1373
      %1801 = vmatprep.subr.bf16.mxu0 0
      %1802 = vmatpush1.bf16.msra.mxu0 %v1372
      %1803 = vmatprep.subr.bf16.mxu0 0
      %1804 = vmatpush1.bf16.msra.mxu0 %v1371
      %1805 = vmatprep.subr.bf16.mxu0 0
      %1806 = vmatpush1.bf16.msra.mxu0 %v1370
      %1807 = vmatprep.subr.bf16.mxu0 0
      %1808 = vmatpush1.bf16.msra.mxu0 %v1369
      %1809 = vmatprep.subr.bf16.mxu0 0
      %1810 = vmatpush1.bf16.msra.mxu0 %v1368
      %1811 = vmatprep.subr.bf16.mxu0 0
      %1812 = vmatpush1.bf16.msra.mxu0 %v1367
      %1813 = vmatprep.subr.bf16.mxu0 0
      %1814 = vmatpush2.bf16.msra.mxu0 %v1382
      %1815 = vmatprep.subr.bf16.mxu0 0
      %1816 = vmatpush2.bf16.msra.mxu0 %v1381
      %1817 = vmatprep.subr.bf16.mxu0 0
      %1818 = vmatpush2.bf16.msra.mxu0 %v1380
      %1819 = vmatprep.subr.bf16.mxu0 0
      %1820 = vmatpush2.bf16.msra.mxu0 %v1379
      %1821 = vmatprep.subr.bf16.mxu0 0
      %1822 = vmatpush2.bf16.msra.mxu0 %v1378
      %1823 = vmatprep.subr.bf16.mxu0 0
      %1824 = vmatpush2.bf16.msra.mxu0 %v1377
      %1825 = vmatprep.subr.bf16.mxu0 0
      %1826 = vmatpush2.bf16.msra.mxu0 %v1376
      %1827 = vmatprep.subr.bf16.mxu0 0
      %1828 = vmatpush2.bf16.msra.mxu0 %v1375
      %1829 = vmatprep.mubr.bf16.mxu0 %v931
      %1830 = vmatmul.mubr.bf16.gmra.mxu0 %v930
      %v1831 = vpop.f32.mrf.mxu0
      %v1832 = vadd.f32 %v1552, %v1831
      %v1833 = vpop.f32.mrf.mxu0
      %v1834 = vpop.f32.mrf.mxu0
      %v1835 = vadd.f32 %v1555, %v1834
      %v1836 = vpop.f32.mrf.mxu0
      %1837 = vmatprep.mubr.bf16.mxu0 %v936
      %1838 = vmatmul.mubr.bf16.gmra.mxu0 %v935
      %v1839 = vpop.f32.mrf.mxu0
      %v1840 = vadd.f32 %v1560, %v1839
      %v1841 = vpop.f32.mrf.mxu0
      %v1842 = vpop.f32.mrf.mxu0
      %v1843 = vadd.f32 %v1563, %v1842
      %v1844 = vpop.f32.mrf.mxu0
      %1845 = vmatprep.mubr.bf16.mxu0 %v941
      %1846 = vmatmul.mubr.bf16.gmra.mxu0 %v940
      %v1847 = vpop.f32.mrf.mxu0
      %v1848 = vadd.f32 %v1568, %v1847
      %v1849 = vpop.f32.mrf.mxu0
      %v1850 = vpop.f32.mrf.mxu0
      %v1851 = vadd.f32 %v1571, %v1850
      %v1852 = vpop.f32.mrf.mxu0
      %1853 = vmatprep.mubr.bf16.mxu0 %v946
      %1854 = vmatmul.mubr.bf16.gmra.mxu0 %v945
      %v1855 = vpop.f32.mrf.mxu0
      %v1856 = vadd.f32 %v1576, %v1855
      %v1857 = vpop.f32.mrf.mxu0
      %v1858 = vpop.f32.mrf.mxu0
      %v1859 = vadd.f32 %v1579, %v1858
      %v1860 = vpop.f32.mrf.mxu0
      %1861 = vmatprep.mubr.bf16.mxu0 %v951
      %1862 = vmatmul.mubr.bf16.gmra.mxu0 %v950
      %v1863 = vpop.f32.mrf.mxu0
      %v1864 = vadd.f32 %v1584, %v1863
      %v1865 = vpop.f32.mrf.mxu0
      %v1866 = vpop.f32.mrf.mxu0
      %v1867 = vadd.f32 %v1587, %v1866
      %v1868 = vpop.f32.mrf.mxu0
      %1869 = vmatprep.mubr.bf16.mxu0 %v956
      %1870 = vmatmul.mubr.bf16.gmra.mxu0 %v955
      %v1871 = vpop.f32.mrf.mxu0
      %v1872 = vadd.f32 %v1592, %v1871
      %v1873 = vpop.f32.mrf.mxu0
      %v1874 = vpop.f32.mrf.mxu0
      %v1875 = vadd.f32 %v1595, %v1874
      %v1876 = vpop.f32.mrf.mxu0
      %1877 = vmatprep.mubr.bf16.mxu0 %v961
      %1878 = vmatmul.mubr.bf16.gmra.mxu0 %v960
      %v1879 = vpop.f32.mrf.mxu0
      %v1880 = vadd.f32 %v1600, %v1879
      %v1881 = vpop.f32.mrf.mxu0
      %v1882 = vpop.f32.mrf.mxu0
      %v1883 = vadd.f32 %v1603, %v1882
      %v1884 = vpop.f32.mrf.mxu0
      %1885 = vmatprep.mubr.bf16.mxu0 %v966
      %1886 = vmatmul.mubr.bf16.gmra.mxu0 %v965
      %v1887 = vpop.f32.mrf.mxu0
      %v1888 = vadd.f32 %v1608, %v1887
      %v1889 = vpop.f32.mrf.mxu0
      %v1890 = vpop.f32.mrf.mxu0
      %v1891 = vadd.f32 %v1611, %v1890
      %v1892 = vpop.f32.mrf.mxu0
      %1893 = vmatprep.mubr.bf16.mxu0 %v971
      %1894 = vmatmul.mubr.bf16.gmra.mxu0 %v970
      %v1895 = vpop.f32.mrf.mxu0
      %v1896 = vadd.f32 %v1616, %v1895
      %v1897 = vpop.f32.mrf.mxu0
      %v1898 = vpop.f32.mrf.mxu0
      %v1899 = vadd.f32 %v1619, %v1898
      %v1900 = vpop.f32.mrf.mxu0
      %1901 = vmatprep.mubr.bf16.mxu0 %v976
      %1902 = vmatmul.mubr.bf16.gmra.mxu0 %v975
      %v1903 = vpop.f32.mrf.mxu0
      %v1904 = vadd.f32 %v1624, %v1903
      %v1905 = vpop.f32.mrf.mxu0
      %v1906 = vpop.f32.mrf.mxu0
      %v1907 = vadd.f32 %v1627, %v1906
      %v1908 = vpop.f32.mrf.mxu0
      %1909 = vmatprep.mubr.bf16.mxu0 %v981
      %1910 = vmatmul.mubr.bf16.gmra.mxu0 %v980
      %v1911 = vpop.f32.mrf.mxu0
      %v1912 = vadd.f32 %v1632, %v1911
      %v1913 = vpop.f32.mrf.mxu0
      %v1914 = vpop.f32.mrf.mxu0
      %v1915 = vadd.f32 %v1635, %v1914
      %v1916 = vpop.f32.mrf.mxu0
      %1917 = vmatprep.mubr.bf16.mxu0 %v986
      %1918 = vmatmul.mubr.bf16.gmra.mxu0 %v985
      %v1919 = vpop.f32.mrf.mxu0
      %v1920 = vadd.f32 %v1640, %v1919
      %v1921 = vpop.f32.mrf.mxu0
      %v1922 = vpop.f32.mrf.mxu0
      %v1923 = vadd.f32 %v1643, %v1922
      %v1924 = vpop.f32.mrf.mxu0
      %1925 = vmatprep.mubr.bf16.mxu0 %v991
      %1926 = vmatmul.mubr.bf16.gmra.mxu0 %v990
      %v1927 = vpop.f32.mrf.mxu0
      %v1928 = vadd.f32 %v1648, %v1927
      %v1929 = vpop.f32.mrf.mxu0
      %v1930 = vpop.f32.mrf.mxu0
      %v1931 = vadd.f32 %v1651, %v1930
      %v1932 = vpop.f32.mrf.mxu0
      %1933 = vmatprep.mubr.bf16.mxu0 %v996
      %1934 = vmatmul.mubr.bf16.gmra.mxu0 %v995
      %v1935 = vpop.f32.mrf.mxu0
      %v1936 = vadd.f32 %v1656, %v1935
      %v1937 = vpop.f32.mrf.mxu0
      %v1938 = vpop.f32.mrf.mxu0
      %v1939 = vadd.f32 %v1659, %v1938
      %v1940 = vpop.f32.mrf.mxu0
      %1941 = vmatprep.mubr.bf16.mxu0 %v1001
      %1942 = vmatmul.mubr.bf16.gmra.mxu0 %v1000
      %v1943 = vpop.f32.mrf.mxu0
      %v1944 = vadd.f32 %v1664, %v1943
      %v1945 = vpop.f32.mrf.mxu0
      %v1946 = vpop.f32.mrf.mxu0
      %v1947 = vadd.f32 %v1667, %v1946
      %v1948 = vpop.f32.mrf.mxu0
      %1949 = vmatprep.mubr.bf16.mxu0 %v1006
      %1950 = vmatmul.mubr.bf16.gmra.mxu0 %v1005
      %v1951 = vpop.f32.mrf.mxu0
      %v1952 = vadd.f32 %v1672, %v1951
      %v1953 = vpop.f32.mrf.mxu0
      %v1954 = vpop.f32.mrf.mxu0
      %v1955 = vadd.f32 %v1675, %v1954
      %v1956 = vpop.f32.mrf.mxu0
      %1957 = vmatprep.mubr.bf16.mxu0 %v1011
      %1958 = vmatmul.mubr.bf16.gmra.mxu0 %v1010
      %v1959 = vpop.f32.mrf.mxu0
      %v1960 = vadd.f32 %v1680, %v1959
      %v1961 = vpop.f32.mrf.mxu0
      %v1962 = vpop.f32.mrf.mxu0
      %v1963 = vadd.f32 %v1683, %v1962
      %v1964 = vpop.f32.mrf.mxu0
      %1965 = vmatprep.mubr.bf16.mxu0 %v1016
      %1966 = vmatmul.mubr.bf16.gmra.mxu0 %v1015
      %v1967 = vpop.f32.mrf.mxu0
      %v1968 = vadd.f32 %v1688, %v1967
      %v1969 = vpop.f32.mrf.mxu0
      %v1970 = vpop.f32.mrf.mxu0
      %v1971 = vadd.f32 %v1691, %v1970
      %v1972 = vpop.f32.mrf.mxu0
      %1973 = vmatprep.mubr.bf16.mxu0 %v1021
      %1974 = vmatmul.mubr.bf16.gmra.mxu0 %v1020
      %v1975 = vpop.f32.mrf.mxu0
      %v1976 = vadd.f32 %v1696, %v1975
      %v1977 = vpop.f32.mrf.mxu0
      %v1978 = vpop.f32.mrf.mxu0
      %v1979 = vadd.f32 %v1699, %v1978
      %v1980 = vpop.f32.mrf.mxu0
      %1981 = vmatprep.mubr.bf16.mxu0 %v1026
      %1982 = vmatmul.mubr.bf16.gmra.mxu0 %v1025
      %v1983 = vpop.f32.mrf.mxu0
      %v1984 = vadd.f32 %v1704, %v1983
      %v1985 = vpop.f32.mrf.mxu0
      %v1986 = vpop.f32.mrf.mxu0
      %v1987 = vadd.f32 %v1707, %v1986
      %v1988 = vpop.f32.mrf.mxu0
      %1989 = vmatprep.mubr.bf16.mxu0 %v1031
      %1990 = vmatmul.mubr.bf16.gmra.mxu0 %v1030
      %v1991 = vpop.f32.mrf.mxu0
      %v1992 = vadd.f32 %v1712, %v1991
      %v1993 = vpop.f32.mrf.mxu0
      %v1994 = vpop.f32.mrf.mxu0
      %v1995 = vadd.f32 %v1715, %v1994
      %v1996 = vpop.f32.mrf.mxu0
      %1997 = vmatprep.mubr.bf16.mxu0 %v1036
      %1998 = vmatmul.mubr.bf16.gmra.mxu0 %v1035
      %v1999 = vpop.f32.mrf.mxu0
      %v2000 = vadd.f32 %v1720, %v1999
      %v2001 = vpop.f32.mrf.mxu0
      %v2002 = vpop.f32.mrf.mxu0
      %v2003 = vadd.f32 %v1723, %v2002
      %v2004 = vpop.f32.mrf.mxu0
      %2005 = vmatprep.mubr.bf16.mxu0 %v1041
      %2006 = vmatmul.mubr.bf16.gmra.mxu0 %v1040
      %v2007 = vpop.f32.mrf.mxu0
      %v2008 = vadd.f32 %v1728, %v2007
      %v2009 = vpop.f32.mrf.mxu0
      %v2010 = vpop.f32.mrf.mxu0
      %v2011 = vadd.f32 %v1731, %v2010
      %v2012 = vpop.f32.mrf.mxu0
      %2013 = vmatprep.mubr.bf16.mxu0 %v1046
      %2014 = vmatmul.mubr.bf16.gmra.mxu0 %v1045
      %v2015 = vpop.f32.mrf.mxu0
      %v2016 = vadd.f32 %v1736, %v2015
      %v2017 = vpop.f32.mrf.mxu0
      %v2018 = vpop.f32.mrf.mxu0
      %v2019 = vadd.f32 %v1739, %v2018
      %v2020 = vpop.f32.mrf.mxu0
      %2021 = vmatprep.mubr.bf16.mxu0 %v1051
      %2022 = vmatmul.mubr.bf16.gmra.mxu0 %v1050
      %v2023 = vpop.f32.mrf.mxu0
      %v2024 = vadd.f32 %v1744, %v2023
      %v2025 = vpop.f32.mrf.mxu0
      %v2026 = vpop.f32.mrf.mxu0
      %v2027 = vadd.f32 %v1747, %v2026
      %v2028 = vpop.f32.mrf.mxu0
      %2029 = vmatprep.mubr.bf16.mxu0 %v1056
      %2030 = vmatmul.mubr.bf16.gmra.mxu0 %v1055
      %v2031 = vpop.f32.mrf.mxu0
      %v2032 = vadd.f32 %v1752, %v2031
      %v2033 = vpop.f32.mrf.mxu0
      %v2034 = vpop.f32.mrf.mxu0
      %v2035 = vadd.f32 %v1755, %v2034
      %v2036 = vpop.f32.mrf.mxu0
      %2037 = vmatprep.mubr.bf16.mxu0 %v1061
      %2038 = vmatmul.mubr.bf16.gmra.mxu0 %v1060
      %v2039 = vpop.f32.mrf.mxu0
      %v2040 = vadd.f32 %v1760, %v2039
      %v2041 = vpop.f32.mrf.mxu0
      %v2042 = vpop.f32.mrf.mxu0
      %v2043 = vadd.f32 %v1763, %v2042
      %v2044 = vpop.f32.mrf.mxu0
      %2045 = vmatprep.mubr.bf16.mxu0 %v1066
      %2046 = vmatmul.mubr.bf16.gmra.mxu0 %v1065
      %v2047 = vpop.f32.mrf.mxu0
      %v2048 = vadd.f32 %v1768, %v2047
      %v2049 = vpop.f32.mrf.mxu0
      %v2050 = vpop.f32.mrf.mxu0
      %v2051 = vadd.f32 %v1771, %v2050
      %v2052 = vpop.f32.mrf.mxu0
      %2053 = vmatprep.mubr.bf16.mxu0 %v1071
      %2054 = vmatmul.mubr.bf16.gmra.mxu0 %v1070
      %v2055 = vpop.f32.mrf.mxu0
      %v2056 = vadd.f32 %v1776, %v2055
      %v2057 = vpop.f32.mrf.mxu0
      %v2058 = vpop.f32.mrf.mxu0
      %v2059 = vadd.f32 %v1779, %v2058
      %v2060 = vpop.f32.mrf.mxu0
      %2061 = vmatprep.mubr.bf16.mxu0 %v1076
      %2062 = vmatmul.mubr.bf16.gmra.mxu0 %v1075
      %v2063 = vpop.f32.mrf.mxu0
      %v2064 = vadd.f32 %v1784, %v2063
      %v2065 = vpop.f32.mrf.mxu0
      %v2066 = vpop.f32.mrf.mxu0
      %v2067 = vadd.f32 %v1787, %v2066
      %v2068 = vpop.f32.mrf.mxu0
      %2069 = vmatprep.mubr.bf16.mxu0 %v1081
      %2070 = vmatmul.mubr.bf16.gmra.mxu0 %v1080
      %v2071 = vpop.f32.mrf.mxu0
      %v2072 = vadd.f32 %v1792, %v2071
      %v2073 = vpop.f32.mrf.mxu0
      %v2074 = vpop.f32.mrf.mxu0
      %v2075 = vpop.f32.mrf.mxu0
      %2076 = vdwg.mxu0
      %2077 = vmatprep.subr.bf16.mxu0 0
      %2078 = vmatpush1.bf16.msra.mxu0 0
      %2079 = vmatprep.subr.bf16.mxu0 0
      %2080 = vmatpush1.bf16.msra.mxu0 0
      %2081 = vmatprep.subr.bf16.mxu0 0
      %2082 = vmatpush1.bf16.msra.mxu0 0
      %2083 = vmatprep.subr.bf16.mxu0 0
      %2084 = vmatpush1.bf16.msra.mxu0 0
      %2085 = vmatprep.subr.bf16.mxu0 0
      %2086 = vmatpush1.bf16.msra.mxu0 %v1386
      %2087 = vmatprep.subr.bf16.mxu0 0
      %2088 = vmatpush1.bf16.msra.mxu0 %v1385
      %2089 = vmatprep.subr.bf16.mxu0 0
      %2090 = vmatpush1.bf16.msra.mxu0 %v1384
      %2091 = vmatprep.subr.bf16.mxu0 0
      %2092 = vmatpush1.bf16.msra.mxu0 %v1383
      %2093 = vmatprep.subr.bf16.mxu0 0
      %2094 = vmatpush2.bf16.msra.mxu0 0
      %2095 = vmatprep.subr.bf16.mxu0 0
      %2096 = vmatpush2.bf16.msra.mxu0 0
      %2097 = vmatprep.subr.bf16.mxu0 0
      %2098 = vmatpush2.bf16.msra.mxu0 0
      %2099 = vmatprep.subr.bf16.mxu0 0
      %2100 = vmatpush2.bf16.msra.mxu0 0
      %2101 = vmatprep.subr.bf16.mxu0 0
      %2102 = vmatpush2.bf16.msra.mxu0 0
      %2103 = vmatprep.subr.bf16.mxu0 0
      %2104 = vmatpush2.bf16.msra.mxu0 0
      %2105 = vmatprep.subr.bf16.mxu0 0
      %2106 = vmatpush2.bf16.msra.mxu0 0
      %2107 = vmatprep.subr.bf16.mxu0 0
      %2108 = vmatpush2.bf16.msra.mxu0 0
      %2109 = vmatprep.mubr.bf16.mxu0 0
      %2110 = vmatmul.mubr.bf16.gmra.mxu0 %v1425
      %v2111 = vpop.f32.mrf.mxu0
      %v2112 = vadd.f32 %v1832, %v2111
      %v2113 = vpop.f32.mrf.mxu0
      %v2114 = vpop.f32.mrf.mxu0
      %v2115 = vadd.f32 %v1835, %v2114
      %v2116 = vpop.f32.mrf.mxu0
      %2117 = vmatprep.mubr.bf16.mxu0 0
      %2118 = vmatmul.mubr.bf16.gmra.mxu0 %v1428
      %v2119 = vpop.f32.mrf.mxu0
      %v2120 = vadd.f32 %v1840, %v2119
      %v2121 = vpop.f32.mrf.mxu0
      %v2122 = vpop.f32.mrf.mxu0
      %v2123 = vadd.f32 %v1843, %v2122
      %v2124 = vpop.f32.mrf.mxu0
      %2125 = vmatprep.mubr.bf16.mxu0 0
      %2126 = vmatmul.mubr.bf16.gmra.mxu0 %v1431
      %v2127 = vpop.f32.mrf.mxu0
      %v2128 = vadd.f32 %v1848, %v2127
      %v2129 = vpop.f32.mrf.mxu0
      %v2130 = vpop.f32.mrf.mxu0
      %v2131 = vadd.f32 %v1851, %v2130
      %v2132 = vpop.f32.mrf.mxu0
      %2133 = vmatprep.mubr.bf16.mxu0 0
      %2134 = vmatmul.mubr.bf16.gmra.mxu0 %v1434
      %v2135 = vpop.f32.mrf.mxu0
      %v2136 = vadd.f32 %v1856, %v2135
      %v2137 = vpop.f32.mrf.mxu0
      %v2138 = vpop.f32.mrf.mxu0
      %v2139 = vadd.f32 %v1859, %v2138
      %v2140 = vpop.f32.mrf.mxu0
      %2141 = vmatprep.mubr.bf16.mxu0 0
      %2142 = vmatmul.mubr.bf16.gmra.mxu0 %v1437
      %v2143 = vpop.f32.mrf.mxu0
      %v2144 = vadd.f32 %v1864, %v2143
      %v2145 = vpop.f32.mrf.mxu0
      %v2146 = vpop.f32.mrf.mxu0
      %v2147 = vadd.f32 %v1867, %v2146
      %v2148 = vpop.f32.mrf.mxu0
      %2149 = vmatprep.mubr.bf16.mxu0 0
      %2150 = vmatmul.mubr.bf16.gmra.mxu0 %v1440
      %v2151 = vpop.f32.mrf.mxu0
      %v2152 = vadd.f32 %v1872, %v2151
      %v2153 = vpop.f32.mrf.mxu0
      %v2154 = vpop.f32.mrf.mxu0
      %v2155 = vadd.f32 %v1875, %v2154
      %v2156 = vpop.f32.mrf.mxu0
      %2157 = vmatprep.mubr.bf16.mxu0 0
      %2158 = vmatmul.mubr.bf16.gmra.mxu0 %v1443
      %v2159 = vpop.f32.mrf.mxu0
      %v2160 = vadd.f32 %v1880, %v2159
      %v2161 = vpop.f32.mrf.mxu0
      %v2162 = vpop.f32.mrf.mxu0
      %v2163 = vadd.f32 %v1883, %v2162
      %v2164 = vpop.f32.mrf.mxu0
      %2165 = vmatprep.mubr.bf16.mxu0 0
      %2166 = vmatmul.mubr.bf16.gmra.mxu0 %v1446
      %v2167 = vpop.f32.mrf.mxu0
      %v2168 = vadd.f32 %v1888, %v2167
      %v2169 = vpop.f32.mrf.mxu0
      %v2170 = vpop.f32.mrf.mxu0
      %v2171 = vadd.f32 %v1891, %v2170
      %v2172 = vpop.f32.mrf.mxu0
      %2173 = vmatprep.mubr.bf16.mxu0 0
      %2174 = vmatmul.mubr.bf16.gmra.mxu0 %v1449
      %v2175 = vpop.f32.mrf.mxu0
      %v2176 = vadd.f32 %v1896, %v2175
      %v2177 = vpop.f32.mrf.mxu0
      %v2178 = vpop.f32.mrf.mxu0
      %v2179 = vadd.f32 %v1899, %v2178
      %v2180 = vpop.f32.mrf.mxu0
      %2181 = vmatprep.mubr.bf16.mxu0 0
      %2182 = vmatmul.mubr.bf16.gmra.mxu0 %v1452
      %v2183 = vpop.f32.mrf.mxu0
      %v2184 = vadd.f32 %v1904, %v2183
      %v2185 = vpop.f32.mrf.mxu0
      %v2186 = vpop.f32.mrf.mxu0
      %v2187 = vadd.f32 %v1907, %v2186
      %v2188 = vpop.f32.mrf.mxu0
      %2189 = vmatprep.mubr.bf16.mxu0 0
      %2190 = vmatmul.mubr.bf16.gmra.mxu0 %v1455
      %v2191 = vpop.f32.mrf.mxu0
      %v2192 = vadd.f32 %v1912, %v2191
      %v2193 = vpop.f32.mrf.mxu0
      %v2194 = vpop.f32.mrf.mxu0
      %v2195 = vadd.f32 %v1915, %v2194
      %v2196 = vpop.f32.mrf.mxu0
      %2197 = vmatprep.mubr.bf16.mxu0 0
      %2198 = vmatmul.mubr.bf16.gmra.mxu0 %v1458
      %v2199 = vpop.f32.mrf.mxu0
      %v2200 = vadd.f32 %v1920, %v2199
      %v2201 = vpop.f32.mrf.mxu0
      %v2202 = vpop.f32.mrf.mxu0
      %v2203 = vadd.f32 %v1923, %v2202
      %v2204 = vpop.f32.mrf.mxu0
      %2205 = vmatprep.mubr.bf16.mxu0 0
      %2206 = vmatmul.mubr.bf16.gmra.mxu0 %v1461
      %v2207 = vpop.f32.mrf.mxu0
      %v2208 = vadd.f32 %v1928, %v2207
      %v2209 = vpop.f32.mrf.mxu0
      %v2210 = vpop.f32.mrf.mxu0
      %v2211 = vadd.f32 %v1931, %v2210
      %v2212 = vpop.f32.mrf.mxu0
      %2213 = vmatprep.mubr.bf16.mxu0 0
      %2214 = vmatmul.mubr.bf16.gmra.mxu0 %v1464
      %v2215 = vpop.f32.mrf.mxu0
      %v2216 = vadd.f32 %v1936, %v2215
      %v2217 = vpop.f32.mrf.mxu0
      %v2218 = vpop.f32.mrf.mxu0
      %v2219 = vadd.f32 %v1939, %v2218
      %v2220 = vpop.f32.mrf.mxu0
      %2221 = vmatprep.mubr.bf16.mxu0 0
      %2222 = vmatmul.mubr.bf16.gmra.mxu0 %v1467
      %v2223 = vpop.f32.mrf.mxu0
      %v2224 = vadd.f32 %v1944, %v2223
      %v2225 = vpop.f32.mrf.mxu0
      %v2226 = vpop.f32.mrf.mxu0
      %v2227 = vadd.f32 %v1947, %v2226
      %v2228 = vpop.f32.mrf.mxu0
      %2229 = vmatprep.mubr.bf16.mxu0 0
      %2230 = vmatmul.mubr.bf16.gmra.mxu0 %v1470
      %v2231 = vpop.f32.mrf.mxu0
      %v2232 = vadd.f32 %v1952, %v2231
      %v2233 = vpop.f32.mrf.mxu0
      %v2234 = vpop.f32.mrf.mxu0
      %v2235 = vadd.f32 %v1955, %v2234
      %v2236 = vpop.f32.mrf.mxu0
      %2237 = vmatprep.mubr.bf16.mxu0 0
      %2238 = vmatmul.mubr.bf16.gmra.mxu0 %v1473
      %v2239 = vpop.f32.mrf.mxu0
      %v2240 = vadd.f32 %v1960, %v2239
      %v2241 = vpop.f32.mrf.mxu0
      %v2242 = vpop.f32.mrf.mxu0
      %v2243 = vadd.f32 %v1963, %v2242
      %v2244 = vpop.f32.mrf.mxu0
      %2245 = vmatprep.mubr.bf16.mxu0 0
      %2246 = vmatmul.mubr.bf16.gmra.mxu0 %v1476
      %v2247 = vpop.f32.mrf.mxu0
      %v2248 = vadd.f32 %v1968, %v2247
      %v2249 = vpop.f32.mrf.mxu0
      %v2250 = vpop.f32.mrf.mxu0
      %v2251 = vadd.f32 %v1971, %v2250
      %v2252 = vpop.f32.mrf.mxu0
      %2253 = vmatprep.mubr.bf16.mxu0 0
      %2254 = vmatmul.mubr.bf16.gmra.mxu0 %v1479
      %v2255 = vpop.f32.mrf.mxu0
      %v2256 = vadd.f32 %v1976, %v2255
      %v2257 = vpop.f32.mrf.mxu0
      %v2258 = vpop.f32.mrf.mxu0
      %v2259 = vadd.f32 %v1979, %v2258
      %v2260 = vpop.f32.mrf.mxu0
      %2261 = vmatprep.mubr.bf16.mxu0 0
      %2262 = vmatmul.mubr.bf16.gmra.mxu0 %v1482
      %v2263 = vpop.f32.mrf.mxu0
      %v2264 = vadd.f32 %v1984, %v2263
      %v2265 = vpop.f32.mrf.mxu0
      %v2266 = vpop.f32.mrf.mxu0
      %v2267 = vadd.f32 %v1987, %v2266
      %v2268 = vpop.f32.mrf.mxu0
      %2269 = vmatprep.mubr.bf16.mxu0 0
      %2270 = vmatmul.mubr.bf16.gmra.mxu0 %v1485
      %v2271 = vpop.f32.mrf.mxu0
      %v2272 = vadd.f32 %v1992, %v2271
      %v2273 = vpop.f32.mrf.mxu0
      %v2274 = vpop.f32.mrf.mxu0
      %v2275 = vadd.f32 %v1995, %v2274
      %v2276 = vpop.f32.mrf.mxu0
      %2277 = vmatprep.mubr.bf16.mxu0 0
      %2278 = vmatmul.mubr.bf16.gmra.mxu0 %v1488
      %v2279 = vpop.f32.mrf.mxu0
      %v2280 = vadd.f32 %v2000, %v2279
      %v2281 = vpop.f32.mrf.mxu0
      %v2282 = vpop.f32.mrf.mxu0
      %v2283 = vadd.f32 %v2003, %v2282
      %v2284 = vpop.f32.mrf.mxu0
      %2285 = vmatprep.mubr.bf16.mxu0 0
      %2286 = vmatmul.mubr.bf16.gmra.mxu0 %v1491
      %v2287 = vpop.f32.mrf.mxu0
      %v2288 = vadd.f32 %v2008, %v2287
      %v2289 = vpop.f32.mrf.mxu0
      %v2290 = vpop.f32.mrf.mxu0
      %v2291 = vadd.f32 %v2011, %v2290
      %v2292 = vpop.f32.mrf.mxu0
      %2293 = vmatprep.mubr.bf16.mxu0 0
      %2294 = vmatmul.mubr.bf16.gmra.mxu0 %v1494
      %v2295 = vpop.f32.mrf.mxu0
      %v2296 = vadd.f32 %v2016, %v2295
      %v2297 = vpop.f32.mrf.mxu0
      %v2298 = vpop.f32.mrf.mxu0
      %v2299 = vadd.f32 %v2019, %v2298
      %v2300 = vpop.f32.mrf.mxu0
      %2301 = vmatprep.mubr.bf16.mxu0 0
      %2302 = vmatmul.mubr.bf16.gmra.mxu0 %v1497
      %v2303 = vpop.f32.mrf.mxu0
      %v2304 = vadd.f32 %v2024, %v2303
      %v2305 = vpop.f32.mrf.mxu0
      %v2306 = vpop.f32.mrf.mxu0
      %v2307 = vadd.f32 %v2027, %v2306
      %v2308 = vpop.f32.mrf.mxu0
      %2309 = vmatprep.mubr.bf16.mxu0 0
      %2310 = vmatmul.mubr.bf16.gmra.mxu0 %v1500
      %v2311 = vpop.f32.mrf.mxu0
      %v2312 = vadd.f32 %v2032, %v2311
      %v2313 = vpop.f32.mrf.mxu0
      %v2314 = vpop.f32.mrf.mxu0
      %v2315 = vadd.f32 %v2035, %v2314
      %v2316 = vpop.f32.mrf.mxu0
      %2317 = vmatprep.mubr.bf16.mxu0 0
      %2318 = vmatmul.mubr.bf16.gmra.mxu0 %v1503
      %v2319 = vpop.f32.mrf.mxu0
      %v2320 = vadd.f32 %v2040, %v2319
      %v2321 = vpop.f32.mrf.mxu0
      %v2322 = vpop.f32.mrf.mxu0
      %v2323 = vadd.f32 %v2043, %v2322
      %v2324 = vpop.f32.mrf.mxu0
      %2325 = vmatprep.mubr.bf16.mxu0 0
      %2326 = vmatmul.mubr.bf16.gmra.mxu0 %v1506
      %v2327 = vpop.f32.mrf.mxu0
      %v2328 = vadd.f32 %v2048, %v2327
      %v2329 = vpop.f32.mrf.mxu0
      %v2330 = vpop.f32.mrf.mxu0
      %v2331 = vadd.f32 %v2051, %v2330
      %v2332 = vpop.f32.mrf.mxu0
      %2333 = vmatprep.mubr.bf16.mxu0 0
      %2334 = vmatmul.mubr.bf16.gmra.mxu0 %v1509
      %v2335 = vpop.f32.mrf.mxu0
      %v2336 = vadd.f32 %v2056, %v2335
      %v2337 = vpop.f32.mrf.mxu0
      %v2338 = vpop.f32.mrf.mxu0
      %v2339 = vadd.f32 %v2059, %v2338
      %v2340 = vpop.f32.mrf.mxu0
      %2341 = vmatprep.mubr.bf16.mxu0 0
      %2342 = vmatmul.mubr.bf16.gmra.mxu0 %v1512
      %v2343 = vpop.f32.mrf.mxu0
      %v2344 = vadd.f32 %v2064, %v2343
      %v2345 = vpop.f32.mrf.mxu0
      %v2346 = vpop.f32.mrf.mxu0
      %v2347 = vadd.f32 %v2067, %v2346
      %v2348 = vpop.f32.mrf.mxu0
      %2349 = vmatprep.mubr.bf16.mxu0 0
      %2350 = vmatmul.mubr.bf16.gmra.mxu0 %v1515
      %v2351 = vpop.f32.mrf.mxu0
      %v2352 = vadd.f32 %v2072, %v2351
      %v2353 = vpop.f32.mrf.mxu0
      %v2354 = vpop.f32.mrf.mxu0
      %v2355 = vpop.f32.mrf.mxu0
      %2356 = vdwg.mxu0
      %v2357 = vmax.f32 %v2112, 0.0
      %v2358 = vmax.f32 %v2115, 0.0
      %v2359 = vmax.f32 %v2120, 0.0
      %v2360 = vmax.f32 %v2123, 0.0
      %v2361 = vmax.f32 %v2128, 0.0
      %v2362 = vmax.f32 %v2131, 0.0
      %v2363 = vmax.f32 %v2136, 0.0
      %v2364 = vmax.f32 %v2139, 0.0
      %v2365 = vmax.f32 %v2144, 0.0
      %v2366 = vmax.f32 %v2147, 0.0
      %v2367 = vmax.f32 %v2152, 0.0
      %v2368 = vmax.f32 %v2155, 0.0
      %v2369 = vmax.f32 %v2160, 0.0
      %v2370 = vmax.f32 %v2163, 0.0
      %v2371 = vmax.f32 %v2168, 0.0
      %v2372 = vmax.f32 %v2171, 0.0
      %v2373 = vmax.f32 %v2176, 0.0
      %v2374 = vmax.f32 %v2179, 0.0
      %v2375 = vmax.f32 %v2184, 0.0
      %v2376 = vmax.f32 %v2187, 0.0
      %v2377 = vmax.f32 %v2192, 0.0
      %v2378 = vmax.f32 %v2195, 0.0
      %v2379 = vmax.f32 %v2200, 0.0
      %v2380 = vmax.f32 %v2203, 0.0
      %v2381 = vmax.f32 %v2208, 0.0
      %v2382 = vmax.f32 %v2211, 0.0
      %v2383 = vmax.f32 %v2216, 0.0
      %v2384 = vmax.f32 %v2219, 0.0
      %v2385 = vmax.f32 %v2224, 0.0
      %v2386 = vmax.f32 %v2227, 0.0
      %v2387 = vmax.f32 %v2232, 0.0
      %v2388 = vmax.f32 %v2235, 0.0
      %v2389 = vmax.f32 %v2240, 0.0
      %v2390 = vmax.f32 %v2243, 0.0
      %v2391 = vmax.f32 %v2248, 0.0
      %v2392 = vmax.f32 %v2251, 0.0
      %v2393 = vmax.f32 %v2256, 0.0
      %v2394 = vmax.f32 %v2259, 0.0
      %v2395 = vmax.f32 %v2264, 0.0
      %v2396 = vmax.f32 %v2267, 0.0
      %v2397 = vmax.f32 %v2272, 0.0
      %v2398 = vmax.f32 %v2275, 0.0
      %v2399 = vmax.f32 %v2280, 0.0
      %v2400 = vmax.f32 %v2283, 0.0
      %v2401 = vmax.f32 %v2288, 0.0
      %v2402 = vmax.f32 %v2291, 0.0
      %v2403 = vmax.f32 %v2296, 0.0
      %v2404 = vmax.f32 %v2299, 0.0
      %v2405 = vmax.f32 %v2304, 0.0
      %v2406 = vmax.f32 %v2307, 0.0
      %v2407 = vmax.f32 %v2312, 0.0
      %v2408 = vmax.f32 %v2315, 0.0
      %v2409 = vmax.f32 %v2320, 0.0
      %v2410 = vmax.f32 %v2323, 0.0
      %v2411 = vmax.f32 %v2328, 0.0
      %v2412 = vmax.f32 %v2331, 0.0
      %v2413 = vmax.f32 %v2336, 0.0
      %v2414 = vmax.f32 %v2339, 0.0
      %v2415 = vmax.f32 %v2344, 0.0
      %v2416 = vmax.f32 %v2347, 0.0
      %v2417 = vmax.f32 %v2352, 0.0
      %v2418 = vpack.c.bf16 %v2358, %v2357
      %v2419 = vpack.c.bf16 %v2360, %v2359
      %v2420 = vpack.c.bf16 %v2362, %v2361
      %v2421 = vpack.c.bf16 %v2364, %v2363
      %v2422 = vpack.c.bf16 %v2366, %v2365
      %v2423 = vpack.c.bf16 %v2368, %v2367
      %v2424 = vpack.c.bf16 %v2370, %v2369
      %v2425 = vpack.c.bf16 %v2372, %v2371
      %v2426 = vpack.c.bf16 %v2374, %v2373
      %v2427 = vpack.c.bf16 %v2376, %v2375
      %v2428 = vpack.c.bf16 %v2378, %v2377
      %v2429 = vpack.c.bf16 %v2380, %v2379
      %v2430 = vpack.c.bf16 %v2382, %v2381
      %v2431 = vpack.c.bf16 %v2384, %v2383
      %v2432 = vpack.c.bf16 %v2386, %v2385
      %v2433 = vpack.c.bf16 %v2388, %v2387
      %v2434 = vpack.c.bf16 %v2390, %v2389
      %v2435 = vpack.c.bf16 %v2392, %v2391
      %v2436 = vpack.c.bf16 %v2394, %v2393
      %v2437 = vpack.c.bf16 %v2396, %v2395
      %v2438 = vpack.c.bf16 %v2398, %v2397
      %v2439 = vpack.c.bf16 %v2400, %v2399
      %v2440 = vpack.c.bf16 %v2402, %v2401
      %v2441 = vpack.c.bf16 %v2404, %v2403
      %v2442 = vpack.c.bf16 %v2406, %v2405
      %v2443 = vpack.c.bf16 %v2408, %v2407
      %v2444 = vpack.c.bf16 %v2410, %v2409
      %v2445 = vpack.c.bf16 %v2412, %v2411
      %v2446 = vpack.c.bf16 %v2414, %v2413
      %v2447 = vpack.c.bf16 %v2416, %v2415
      %v2448 = vpack.c.bf16 %v2417, %v2417
      %v2480 = vunpack.c.l.b16 %v2418
      %v2481 = vunpack.c.h.b16 %v2418
      %v2482 = vunpack.c.l.b16 %v2419
      %v2483 = vunpack.c.h.b16 %v2419
      %v2484 = vunpack.c.l.b16 %v2420
      %v2485 = vunpack.c.h.b16 %v2420
      %v2486 = vunpack.c.l.b16 %v2421
      %v2487 = vunpack.c.h.b16 %v2421
      %v2488 = vunpack.c.l.b16 %v2422
      %v2489 = vunpack.c.h.b16 %v2422
      %v2490 = vunpack.c.l.b16 %v2423
      %v2491 = vunpack.c.h.b16 %v2423
      %v2492 = vunpack.c.l.b16 %v2424
      %v2493 = vunpack.c.h.b16 %v2424
      %v2494 = vunpack.c.l.b16 %v2425
      %v2495 = vunpack.c.h.b16 %v2425
      %v2496 = vunpack.c.l.b16 %v2426
      %v2497 = vunpack.c.h.b16 %v2426
      %v2498 = vunpack.c.l.b16 %v2427
      %v2499 = vunpack.c.h.b16 %v2427
      %v2500 = vunpack.c.l.b16 %v2428
      %v2501 = vunpack.c.h.b16 %v2428
      %v2502 = vunpack.c.l.b16 %v2429
      %v2503 = vunpack.c.h.b16 %v2429
      %v2504 = vunpack.c.l.b16 %v2430
      %v2505 = vunpack.c.h.b16 %v2430
      %v2506 = vunpack.c.l.b16 %v2431
      %v2507 = vunpack.c.h.b16 %v2431
      %v2508 = vunpack.c.l.b16 %v2432
      %v2509 = vunpack.c.h.b16 %v2432
      %v2510 = vunpack.c.l.b16 %v2433
      %v2511 = vunpack.c.h.b16 %v2433
      %v2512 = vunpack.c.l.b16 %v2434
      %v2513 = vunpack.c.h.b16 %v2434
      %v2514 = vunpack.c.l.b16 %v2435
      %v2515 = vunpack.c.h.b16 %v2435
      %v2516 = vunpack.c.l.b16 %v2436
      %v2517 = vunpack.c.h.b16 %v2436
      %v2518 = vunpack.c.l.b16 %v2437
      %v2519 = vunpack.c.h.b16 %v2437
      %v2520 = vunpack.c.l.b16 %v2438
      %v2521 = vunpack.c.h.b16 %v2438
      %v2522 = vunpack.c.l.b16 %v2439
      %v2523 = vunpack.c.h.b16 %v2439
      %v2524 = vunpack.c.l.b16 %v2440
      %v2525 = vunpack.c.h.b16 %v2440
      %v2526 = vunpack.c.l.b16 %v2441
      %v2527 = vunpack.c.h.b16 %v2441
      %v2528 = vunpack.c.l.b16 %v2442
      %v2529 = vunpack.c.h.b16 %v2442
      %v2530 = vunpack.c.l.b16 %v2443
      %v2531 = vunpack.c.h.b16 %v2443
      %v2532 = vunpack.c.l.b16 %v2444
      %v2533 = vunpack.c.h.b16 %v2444
      %v2534 = vunpack.c.l.b16 %v2445
      %v2535 = vunpack.c.h.b16 %v2445
      %v2536 = vunpack.c.l.b16 %v2446
      %v2537 = vunpack.c.h.b16 %v2446
      %v2538 = vunpack.c.l.b16 %v2447
      %v2539 = vunpack.c.h.b16 %v2447
      %v2540 = vunpack.c.l.b16 %v2448
      %v2541 = vpack.c.b16 %v2480, %v2480
      %v2542 = vpack.c.b16 %v2481, %v2481
      %v2543 = vpack.c.b16 %v2482, %v2482
      %v2544 = vpack.c.b16 %v2483, %v2483
      %v2545 = vpack.c.b16 %v2484, %v2484
      %v2546 = vpack.c.b16 %v2485, %v2485
      %v2547 = vpack.c.b16 %v2486, %v2486
      %v2548 = vpack.c.b16 %v2487, %v2487
      %v2549 = vpack.c.b16 %v2488, %v2488
      %v2550 = vpack.c.b16 %v2489, %v2489
      %v2551 = vpack.c.b16 %v2490, %v2490
      %v2552 = vpack.c.b16 %v2491, %v2491
      %v2553 = vpack.c.b16 %v2492, %v2492
      %v2554 = vpack.c.b16 %v2493, %v2493
      %v2555 = vpack.c.b16 %v2494, %v2494
      %v2556 = vpack.c.b16 %v2495, %v2495
      %v2557 = vpack.c.b16 %v2496, %v2496
      %v2558 = vpack.c.b16 %v2497, %v2497
      %v2559 = vpack.c.b16 %v2498, %v2498
      %v2560 = vpack.c.b16 %v2499, %v2499
      %v2561 = vpack.c.b16 %v2500, %v2500
      %v2562 = vpack.c.b16 %v2501, %v2501
      %v2563 = vpack.c.b16 %v2502, %v2502
      %v2564 = vpack.c.b16 %v2503, %v2503
      %v2565 = vpack.c.b16 %v2504, %v2504
      %v2566 = vpack.c.b16 %v2505, %v2505
      %v2567 = vpack.c.b16 %v2506, %v2506
      %v2568 = vpack.c.b16 %v2507, %v2507
      %v2569 = vpack.c.b16 %v2508, %v2508
      %v2570 = vpack.c.b16 %v2509, %v2509
      %v2571 = vpack.c.b16 %v2510, %v2510
      %v2572 = vpack.c.b16 %v2511, %v2511
      %v2573 = vpack.c.b16 %v2512, %v2512
      %v2574 = vpack.c.b16 %v2513, %v2513
      %v2575 = vpack.c.b16 %v2514, %v2514
      %v2576 = vpack.c.b16 %v2515, %v2515
      %v2577 = vpack.c.b16 %v2516, %v2516
      %v2578 = vpack.c.b16 %v2517, %v2517
      %v2579 = vpack.c.b16 %v2518, %v2518
      %v2580 = vpack.c.b16 %v2519, %v2519
      %v2581 = vpack.c.b16 %v2520, %v2520
      %v2582 = vpack.c.b16 %v2521, %v2521
      %v2583 = vpack.c.b16 %v2522, %v2522
      %v2584 = vpack.c.b16 %v2523, %v2523
      %v2585 = vpack.c.b16 %v2524, %v2524
      %v2586 = vpack.c.b16 %v2525, %v2525
      %v2587 = vpack.c.b16 %v2526, %v2526
      %v2588 = vpack.c.b16 %v2527, %v2527
      %v2589 = vpack.c.b16 %v2528, %v2528
      %v2590 = vpack.c.b16 %v2529, %v2529
      %v2591 = vpack.c.b16 %v2530, %v2530
      %v2592 = vpack.c.b16 %v2531, %v2531
      %v2593 = vpack.c.b16 %v2532, %v2532
      %v2594 = vpack.c.b16 %v2533, %v2533
      %v2595 = vpack.c.b16 %v2534, %v2534
      %v2596 = vpack.c.b16 %v2535, %v2535
      %v2597 = vpack.c.b16 %v2536, %v2536
      %v2598 = vpack.c.b16 %v2537, %v2537
      %v2599 = vpack.c.b16 %v2538, %v2538
      %v2600 = vpack.c.b16 %v2539, %v2539
      %v2601 = vpack.c.b16 %v2540, %v2540
      %2663 = vst [vmem:[%s175] sm:$0xf] %v2541
      %2664 = vst [vmem:[%s175 + $0x4] sm:$0xf] %v2542
      %2665 = vst [vmem:[%s175 + $0x8] sm:$0xf] %v2543
      %2666 = vst [vmem:[%s175 + $0xc] sm:$0xf] %v2544
      %2667 = vst [vmem:[%s175 + $0x10] sm:$0xf] %v2545
      %2668 = vst [vmem:[%s175 + $0x14] sm:$0xf] %v2546
      %2669 = vst [vmem:[%s175 + $0x18] sm:$0xf] %v2547
      %2670 = vst [vmem:[%s175 + $0x1c] sm:$0xf] %v2548
      %2671 = vst [vmem:[%s175 + $0x20] sm:$0xf] %v2549
      %2672 = vst [vmem:[%s175 + $0x24] sm:$0xf] %v2550
      %2673 = vst [vmem:[%s175 + $0x28] sm:$0xf] %v2551
      %2674 = vst [vmem:[%s175 + $0x2c] sm:$0xf] %v2552
      %2675 = vst [vmem:[%s175 + $0x30] sm:$0xf] %v2553
      %2676 = vst [vmem:[%s175 + $0x34] sm:$0xf] %v2554
      %2677 = vst [vmem:[%s175 + $0x38] sm:$0xf] %v2555
      %2678 = vst [vmem:[%s175 + $0x3c] sm:$0xf] %v2556
      %2679 = vst [vmem:[%s175 + $0x40] sm:$0xf] %v2557
      %2680 = vst [vmem:[%s175 + $0x44] sm:$0xf] %v2558
      %2681 = vst [vmem:[%s175 + $0x48] sm:$0xf] %v2559
      %2682 = vst [vmem:[%s175 + $0x4c] sm:$0xf] %v2560
      %2683 = vst [vmem:[%s175 + $0x50] sm:$0xf] %v2561
      %2684 = vst [vmem:[%s175 + $0x54] sm:$0xf] %v2562
      %2685 = vst [vmem:[%s175 + $0x58] sm:$0xf] %v2563
      %2686 = vst [vmem:[%s175 + $0x5c] sm:$0xf] %v2564
      %2687 = vst [vmem:[%s175 + $0x60] sm:$0xf] %v2565
      %2688 = vst [vmem:[%s175 + $0x64] sm:$0xf] %v2566
      %2689 = vst [vmem:[%s175 + $0x68] sm:$0xf] %v2567
      %2690 = vst [vmem:[%s175 + $0x6c] sm:$0xf] %v2568
      %2691 = vst [vmem:[%s175 + $0x70] sm:$0xf] %v2569
      %2692 = vst [vmem:[%s175 + $0x74] sm:$0xf] %v2570
      %2693 = vst [vmem:[%s175 + $0x78] sm:$0xf] %v2571
      %2694 = vst [vmem:[%s175 + $0x7c] sm:$0xf] %v2572
      %2695 = vst [vmem:[%s175 + $0x80] sm:$0xf] %v2573
      %2696 = vst [vmem:[%s175 + $0x84] sm:$0xf] %v2574
      %2697 = vst [vmem:[%s175 + $0x88] sm:$0xf] %v2575
      %2698 = vst [vmem:[%s175 + $0x8c] sm:$0xf] %v2576
      %2699 = vst [vmem:[%s175 + $0x90] sm:$0xf] %v2577
      %2700 = vst [vmem:[%s175 + $0x94] sm:$0xf] %v2578
      %2701 = vst [vmem:[%s175 + $0x98] sm:$0xf] %v2579
      %2702 = vst [vmem:[%s175 + $0x9c] sm:$0xf] %v2580
      %2703 = vst [vmem:[%s175 + $0xa0] sm:$0xf] %v2581
      %2704 = vst [vmem:[%s175 + $0xa4] sm:$0xf] %v2582
      %2705 = vst [vmem:[%s175 + $0xa8] sm:$0xf] %v2583
      %2706 = vst [vmem:[%s175 + $0xac] sm:$0xf] %v2584
      %2707 = vst [vmem:[%s175 + $0xb0] sm:$0xf] %v2585
      %2708 = vst [vmem:[%s175 + $0xb4] sm:$0xf] %v2586
      %2709 = vst [vmem:[%s175 + $0xb8] sm:$0xf] %v2587
      %2710 = vst [vmem:[%s175 + $0xbc] sm:$0xf] %v2588
      %2711 = vst [vmem:[%s175 + $0xc0] sm:$0xf] %v2589
      %2712 = vst [vmem:[%s175 + $0xc4] sm:$0xf] %v2590
      %2713 = vst [vmem:[%s175 + $0xc8] sm:$0xf] %v2591
      %2714 = vst [vmem:[%s175 + $0xcc] sm:$0xf] %v2592
      %2715 = vst [vmem:[%s175 + $0xd0] sm:$0xf] %v2593
      %2716 = vst [vmem:[%s175 + $0xd4] sm:$0xf] %v2594
      %2717 = vst [vmem:[%s175 + $0xd8] sm:$0xf] %v2595
      %2718 = vst [vmem:[%s175 + $0xdc] sm:$0xf] %v2596
      %2719 = vst [vmem:[%s175 + $0xe0] sm:$0xf] %v2597
      %2720 = vst [vmem:[%s175 + $0xe4] sm:$0xf] %v2598
      %2721 = vst [vmem:[%s175 + $0xe8] sm:$0xf] %v2599
      %2722 = vst [vmem:[%s175 + $0xec] sm:$0xf] %v2600
      %2723 = vst [vmem:[%s175 + $0xf0] sm:$0xf] %v2601
      %s2724 = smul.u32 61, %s14
      %p2725 = scmp.lt.s32.totalorder %s2724, 182
      %s2726 = scalar_select %p2725, %s2724, 182
      %s2727 = smul.addr %s2726, 4
      %s2728 = scalar_lea.vmem %s3, %s2727
      // Predicated region
      $region33: #{vae_forward.16} parent=31 // pred_check
        %p2729 = pneg %p100
      $region34: #{vae_forward.16} parent=31 // pred_check_branch
        %2731 = sbr.rel (%p2729) target = $region36
      $region35: #{vae_forward.16} parent=31 // pred_region
        %s2732 = smul.u32 61, %s14
      $region36: #{vae_forward.16} parent=31 // pred_fallthru
        _
    $region32: #{vae_forward.16} parent=5 // pred_fallthru
      _
    %p2733 = scmp.le.s32.totalorder 2, %s9
    // Predicated region
    $region37: #{vae_forward.16} parent=5 // pred_check
      %p2734 = pneg %p2733
    $region38: #{vae_forward.16} parent=5 // pred_check_branch
      %2736 = sbr.rel (%p2734) target = $region40
    $region39: #{vae_forward.16} parent=5 // pred_region
      %s2737 = ssub.s32 %s9, 2
      // Predicated region
      $region41: #{vae_forward.16} parent=39 // pred_check
        %p2738 = pneg %p106
      $region42: #{vae_forward.16} parent=39 // pred_check_branch
        %2740 = sbr.rel (%p2738) target = $region44
      $region43: #{vae_forward.16} parent=39 // pred_region
        %s2741 = smul.u32 61, %s15
        %p2742 = scmp.lt.s32.totalorder %s2741, 182
        %s2743 = scalar_select %p2742, %s2741, 182
        %s2744 = smul.addr %s2743, 4
        %s2745 = scalar_lea.vmem %s3, %s2744
      $region44: #{vae_forward.16} parent=39 // pred_fallthru
        _
    $region40: #{vae_forward.16} parent=5 // pred_fallthru
      _
  $region6: #{vae_forward.16} parent=0 // loop_footer
    %s13 = sadd.s32 1, %s9
  $region7: #{vae_forward.16} parent=0 // loop_footer_branch
    %8 = sbr.rel target = $region3
  $region8: #{vae_forward.16} parent=0 // loop_exit
    _

// kernel: vae_forward.17
$region0: #{vae_forward.17}
  #allocation0 [shape = 'u32[]', space=smem, size = 0x4, offset = 0x4, fixed_abs, tag = 'smem constant byte address 0x4 - core index']
  #allocation1 [shape = 'u32[144,128]{1,0:T(1,128)}', space=vmem, size = 0x12000, scoped, tag = 'internal scratch']
  %s0 = inlined_call_operand.vmem [shape: bf16[1696,288], index: 0, kind: input, shape index: {}]
  %s1 = inlined_call_operand.vmem [shape: bf16[288,128], index: 1, kind: input, shape index: {}]
  %s2 = inlined_call_operand.vmem [shape: f32[1,128], index: 2, kind: input, shape index: {}]
  %s3 = inlined_call_operand.vmem [shape: f32[1696,128], index: 3, kind: output, shape index: {}]
  %s4 = sld [smem:[#allocation0]]
  $region45: #{vae_forward.17} parent=0
    _
  %s6 = ssub.s32 1, %s4
  %s7 = scalar_select 0, %s6, %s4
  loop: start=0, step=1, limit=6
  $region2: #{vae_forward.17} parent=0 // loop_pre_header
    _
  $region3: #{vae_forward.17} parent=0 // loop_header
    %s9 = sphi 0, %s13
    %p10 = scmp.ge.s32.totalorder %s9, 6
    %s19 = sphi 0, %s21
    %s22 = sphi 0, %s19
    %s23 = sphi 0, %s22
    %s39 = sphi 0, %s23
    %s43 = sphi 0, %s43
    %s45 = sphi 0, %s43
    %s46 = sphi 0, %s45
    %s60 = sphi 0, %s46
    %s64 = sphi 0, %s64
    %s66 = sphi 0, %s64
    %s67 = sphi 0, %s66
    %s81 = sphi 0, %s67
    %s87 = sphi 0, %s89
    %s90 = sphi 0, %s87
    %s91 = sphi 0, %s90
    %s107 = sphi 0, %s91
  $region4: #{vae_forward.17} parent=0 // loop_header_branch
    %12 = sbr.rel (%p10) target = $region8
  $region5: #{vae_forward.17} parent=0 // loop_body
    %s14 = ssub.s32 %s9, 1
    %s15 = ssub.s32 %s9, 2
    %s16 = sadd.s32 %s9, 1
    %s17 = ssub.s32 %s9, %s16
    %p18 = scmp.eq.s32.totalorder %s17, 0
    %s20 = sadd.s32 %s19, 1
    %s21 = scalar_select %p18, %s19, %s20
    %p24 = pneg %p18
    %p25 = scmp.eq.s32.totalorder %s9, 3
    %p26 = por %p24, %p25
    %p27 = scmp.ne.s32.totalorder %s19, %s22
    %p28 = scmp.eq.s32.totalorder %s9, 0
    %p29 = por %p27, %p28
    %p30 = scmp.ne.s32.totalorder %s19, %s22
    %p31 = scmp.eq.s32.totalorder %s14, 3
    %p32 = por %p30, %p31
    %p33 = scmp.ne.s32.totalorder %s22, %s23
    %p34 = scmp.eq.s32.totalorder %s14, 0
    %p35 = por %p33, %p34
    %p36 = scmp.ne.s32.totalorder %s22, %s23
    %p37 = scmp.eq.s32.totalorder %s15, 3
    %p38 = por %p36, %p37
    %p40 = scmp.ne.s32.totalorder %s23, %s39
    %p41 = scmp.eq.s32.totalorder %s15, 0
    %p42 = por %p40, %p41
    %s44 = sadd.s32 %s43, 1
    %p47 = scmp.eq.s32.totalorder %s9, 3
    %p48 = scmp.ne.s32.totalorder %s43, %s45
    %p49 = scmp.eq.s32.totalorder %s9, 0
    %p50 = por %p48, %p49
    %p51 = scmp.ne.s32.totalorder %s43, %s45
    %p52 = scmp.eq.s32.totalorder %s14, 3
    %p53 = por %p51, %p52
    %p54 = scmp.ne.s32.totalorder %s45, %s46
    %p55 = scmp.eq.s32.totalorder %s14, 0
    %p56 = por %p54, %p55
    %p57 = scmp.ne.s32.totalorder %s45, %s46
    %p58 = scmp.eq.s32.totalorder %s15, 3
    %p59 = por %p57, %p58
    %p61 = scmp.ne.s32.totalorder %s46, %s60
    %p62 = scmp.eq.s32.totalorder %s15, 0
    %p63 = por %p61, %p62
    %s65 = sadd.s32 %s64, 1
    %p68 = scmp.eq.s32.totalorder %s9, 3
    %p69 = scmp.ne.s32.totalorder %s64, %s66
    %p70 = scmp.eq.s32.totalorder %s9, 0
    %p71 = por %p69, %p70
    %p72 = scmp.ne.s32.totalorder %s64, %s66
    %p73 = scmp.eq.s32.totalorder %s14, 3
    %p74 = por %p72, %p73
    %p75 = scmp.ne.s32.totalorder %s66, %s67
    %p76 = scmp.eq.s32.totalorder %s14, 0
    %p77 = por %p75, %p76
    %p78 = scmp.ne.s32.totalorder %s66, %s67
    %p79 = scmp.eq.s32.totalorder %s15, 3
    %p80 = por %p78, %p79
    %p82 = scmp.ne.s32.totalorder %s67, %s81
    %p83 = scmp.eq.s32.totalorder %s15, 0
    %p84 = por %p82, %p83
    %s85 = ssub.s32 %s9, %s16
    %p86 = scmp.eq.s32.totalorder %s85, 0
    %s88 = sadd.s32 %s87, 1
    %s89 = scalar_select %p86, %s87, %s88
    %p92 = pneg %p86
    %p93 = scmp.eq.s32.totalorder %s9, 3
    %p94 = por %p92, %p93
    %p95 = scmp.ne.s32.totalorder %s87, %s90
    %p96 = scmp.eq.s32.totalorder %s9, 0
    %p97 = por %p95, %p96
    %p98 = scmp.ne.s32.totalorder %s87, %s90
    %p99 = scmp.eq.s32.totalorder %s14, 3
    %p100 = por %p98, %p99
    %p101 = scmp.ne.s32.totalorder %s90, %s91
    %p102 = scmp.eq.s32.totalorder %s14, 0
    %p103 = por %p101, %p102
    %p104 = scmp.ne.s32.totalorder %s90, %s91
    %p105 = scmp.eq.s32.totalorder %s15, 3
    %p106 = por %p104, %p105
    %p108 = scmp.ne.s32.totalorder %s91, %s107
    %p109 = scmp.eq.s32.totalorder %s15, 0
    %p110 = por %p108, %p109
    %p111 = scmp.le.s32.totalorder 1, %s9
    %p112 = scmp.lt.s32.totalorder %s9, 5
    %p113 = pnand %p111, %p112
    %p114 = pneg %p113
    // Predicated region
    $region9: #{vae_forward.17} parent=5 // pred_check
      _
    $region10: #{vae_forward.17} parent=5 // pred_check_branch
      %116 = sbr.rel (%p113) target = $region12
    $region11: #{vae_forward.17} parent=5 // pred_region
      %s117 = ssub.s32 %s9, 1
      // Predicated region
      $region13: #{vae_forward.17} parent=11 // pred_check
        %p118 = pneg %p56
      $region14: #{vae_forward.17} parent=11 // pred_check_branch
        %120 = sbr.rel (%p118) target = $region16
      $region15: #{vae_forward.17} parent=11 // pred_region
        _
      $region16: #{vae_forward.17} parent=11 // pred_fallthru
        _
      // Predicated region
      $region17: #{vae_forward.17} parent=11 // pred_check
        %p121 = pneg %p77
      $region18: #{vae_forward.17} parent=11 // pred_check_branch
        %123 = sbr.rel (%p121) target = $region20
      $region19: #{vae_forward.17} parent=11 // pred_region
        _
      $region20: #{vae_forward.17} parent=11 // pred_fallthru
        _
    $region12: #{vae_forward.17} parent=5 // pred_fallthru
      _
    %p124 = scmp.lt.s32.totalorder %s9, 4
    // Predicated region
    $region21: #{vae_forward.17} parent=5 // pred_check
      %p125 = pneg %p124
    $region22: #{vae_forward.17} parent=5 // pred_check_branch
      %127 = sbr.rel (%p125) target = $region24
    $region23: #{vae_forward.17} parent=5 // pred_region
      // Predicated region
      $region25: #{vae_forward.17} parent=23 // pred_check
        %p128 = pneg %p29
      $region26: #{vae_forward.17} parent=23 // pred_check_branch
        %130 = sbr.rel (%p128) target = $region28
      $region27: #{vae_forward.17} parent=23 // pred_region
        %s131 = smul.u32 53, %s9
        %p132 = scmp.lt.s32.totalorder %s131, 211
        %s133 = scalar_select %p132, %s131, 211
        %s134 = smul.addr %s133, 3
        %s135 = smul.addr %s134, 4
        %s136 = scalar_lea.vmem %s0, %s135
        %s137 = smul.u32 53, %s9
      $region28: #{vae_forward.17} parent=23 // pred_fallthru
        _
    $region24: #{vae_forward.17} parent=5 // pred_fallthru
      _
    %p138 = scmp.le.s32.totalorder 1, %s9
    %p139 = scmp.lt.s32.totalorder %s9, 5
    %p140 = pnand %p138, %p139
    %p141 = pneg %p140
    // Predicated region
    $region29: #{vae_forward.17} parent=5 // pred_check
      _
    $region30: #{vae_forward.17} parent=5 // pred_check_branch
      %143 = sbr.rel (%p140) target = $region32
    $region31: #{vae_forward.17} parent=5 // pred_region
      %s144 = ssub.s32 %s9, 1
      %s145 = smul.u32 53, %s14
      %p146 = scmp.lt.s32.totalorder %s145, 211
      %s147 = scalar_select %p146, %s145, 211
      %s148 = smul.addr %s147, 3
      %s149 = smul.addr %s148, 4
      %s150 = scalar_lea.vmem %s0, %s149
      %p151 = pneg %p35
      %p152 = pneg %p32
      %p153 = pneg %p56
      %p154 = pneg %p53
      %p155 = pneg %p77
      %p156 = pneg %p74
      %p157 = pneg %p103
      %p158 = pneg %p100
      %s159 = smul.u32 53, %s14
      %p160 = scmp.lt.s32.totalorder %s159, 211
      %s161 = scalar_select %p160, %s159, 211
      %s162 = smul.addr %s161, 8
      %s163 = scalar_lea.vmem %s3, %s162
      %s164 = smul.u32 53, %s14
      %p165 = scmp.lt.s32.totalorder %s164, 211
      %s166 = scalar_select %p165, %s164, 211
      %s167 = smul.addr %s166, 3
      %s168 = smul.addr %s167, 4
      %s169 = scalar_lea.vmem %s0, %s168
      %s170 = smul.u32 53, %s14
      %s171 = smul.u32 53, %s14
      %p172 = scmp.lt.s32.totalorder %s171, 211
      %s173 = scalar_select %p172, %s171, 211
      %s174 = smul.addr %s173, 8
      %s175 = scalar_lea.vmem %s3, %s174
      %s176 = smul.u32 53, %s14
      %v178 = vld [vmem:[%s169] sm:$0xff]
      %v179 = vld [vmem:[%s169 + $0x8] sm:$0xf]
      %v180 = vld [vmem:[%s169 + $0xc] sm:$0xff]
      %v181 = vld [vmem:[%s169 + $0x14] sm:$0xf]
      %v182 = vld [vmem:[%s169 + $0x18] sm:$0xff]
      %v183 = vld [vmem:[%s169 + $0x20] sm:$0xf]
      %v184 = vld [vmem:[%s169 + $0x24] sm:$0xff]
      %v185 = vld [vmem:[%s169 + $0x2c] sm:$0xf]
      %v186 = vld [vmem:[%s169 + $0x30] sm:$0xff]
      %v187 = vld [vmem:[%s169 + $0x38] sm:$0xf]
      %v188 = vld [vmem:[%s169 + $0x3c] sm:$0xff]
      %v189 = vld [vmem:[%s169 + $0x44] sm:$0xf]
      %v190 = vld [vmem:[%s169 + $0x48] sm:$0xff]
      %v191 = vld [vmem:[%s169 + $0x50] sm:$0xf]
      %v192 = vld [vmem:[%s169 + $0x54] sm:$0xff]
      %v193 = vld [vmem:[%s169 + $0x5c] sm:$0xf]
      %v194 = vld [vmem:[%s169 + $0x60] sm:$0xff]
      %v195 = vld [vmem:[%s169 + $0x68] sm:$0xf]
      %v196 = vld [vmem:[%s169 + $0x6c] sm:$0xff]
      %v197 = vld [vmem:[%s169 + $0x74] sm:$0xf]
      %v198 = vld [vmem:[%s169 + $0x78] sm:$0xff]
      %v199 = vld [vmem:[%s169 + $0x80] sm:$0xf]
      %v200 = vld [vmem:[%s169 + $0x84] sm:$0xff]
      %v201 = vld [vmem:[%s169 + $0x8c] sm:$0xf]
      %v202 = vld [vmem:[%s169 + $0x90] sm:$0xff]
      %v203 = vld [vmem:[%s169 + $0x98] sm:$0xf]
      %v204 = vld [vmem:[%s169 + $0x9c] sm:$0xff]
      %v205 = vld [vmem:[%s169 + $0xa4] sm:$0xf]
      %v206 = vld [vmem:[%s169 + $0xa8] sm:$0xff]
      %v207 = vld [vmem:[%s169 + $0xb0] sm:$0xf]
      %v208 = vld [vmem:[%s169 + $0xb4] sm:$0xff]
      %v209 = vld [vmem:[%s169 + $0xbc] sm:$0xf]
      %v210 = vld [vmem:[%s169 + $0xc0] sm:$0xff]
      %v211 = vld [vmem:[%s169 + $0xc8] sm:$0xf]
      %v212 = vld [vmem:[%s169 + $0xcc] sm:$0xff]
      %v213 = vld [vmem:[%s169 + $0xd4] sm:$0xf]
      %v214 = vld [vmem:[%s169 + $0xd8] sm:$0xff]
      %v215 = vld [vmem:[%s169 + $0xe0] sm:$0xf]
      %v216 = vld [vmem:[%s169 + $0xe4] sm:$0xff]
      %v217 = vld [vmem:[%s169 + $0xec] sm:$0xf]
      %v218 = vld [vmem:[%s169 + $0xf0] sm:$0xff]
      %v219 = vld [vmem:[%s169 + $0xf8] sm:$0xf]
      %v220 = vld [vmem:[%s169 + $0xfc] sm:$0xff]
      %v221 = vld [vmem:[%s169 + $0x104] sm:$0xf]
      %v222 = vld [vmem:[%s169 + $0x108] sm:$0xff]
      %v223 = vld [vmem:[%s169 + $0x110] sm:$0xf]
      %v224 = vld [vmem:[%s169 + $0x114] sm:$0xff]
      %v225 = vld [vmem:[%s169 + $0x11c] sm:$0xf]
      %v226 = vld [vmem:[%s169 + $0x120] sm:$0xff]
      %v227 = vld [vmem:[%s169 + $0x128] sm:$0xf]
      %v228 = vld [vmem:[%s169 + $0x12c] sm:$0xff]
      %v229 = vld [vmem:[%s169 + $0x134] sm:$0xf]
      %v230 = vld [vmem:[%s169 + $0x138] sm:$0xff]
      %v231 = vld [vmem:[%s169 + $0x140] sm:$0xf]
      %v232 = vld [vmem:[%s169 + $0x144] sm:$0xff]
      %v233 = vld [vmem:[%s169 + $0x14c] sm:$0xf]
      %v234 = vld [vmem:[%s169 + $0x150] sm:$0xff]
      %v235 = vld [vmem:[%s169 + $0x158] sm:$0xf]
      %v236 = vld [vmem:[%s169 + $0x15c] sm:$0xff]
      %v237 = vld [vmem:[%s169 + $0x164] sm:$0xf]
      %v238 = vld [vmem:[%s169 + $0x168] sm:$0xff]
      %v239 = vld [vmem:[%s169 + $0x170] sm:$0xf]
      %v240 = vld [vmem:[%s169 + $0x174] sm:$0xff]
      %v241 = vld [vmem:[%s169 + $0x17c] sm:$0xf]
      %v242 = vld [vmem:[%s169 + $0x180] sm:$0xff]
      %v243 = vld [vmem:[%s169 + $0x188] sm:$0xf]
      %v244 = vld [vmem:[%s169 + $0x18c] sm:$0xff]
      %v245 = vld [vmem:[%s169 + $0x194] sm:$0xf]
      %v246 = vld [vmem:[%s169 + $0x198] sm:$0xff]
      %v247 = vld [vmem:[%s169 + $0x1a0] sm:$0xf]
      %v248 = vld [vmem:[%s169 + $0x1a4] sm:$0xff]
      %v249 = vld [vmem:[%s169 + $0x1ac] sm:$0xf]
      %v250 = vld [vmem:[%s169 + $0x1b0] sm:$0xff]
      %v251 = vld [vmem:[%s169 + $0x1b8] sm:$0xf]
      %v252 = vld [vmem:[%s169 + $0x1bc] sm:$0xff]
      %v253 = vld [vmem:[%s169 + $0x1c4] sm:$0xf]
      %v254 = vld [vmem:[%s169 + $0x1c8] sm:$0xff]
      %v255 = vld [vmem:[%s169 + $0x1d0] sm:$0xf]
      %v256 = vld [vmem:[%s169 + $0x1d4] sm:$0xff]
      %v257 = vld [vmem:[%s169 + $0x1dc] sm:$0xf]
      %v258 = vld [vmem:[%s169 + $0x1e0] sm:$0xff]
      %v259 = vld [vmem:[%s169 + $0x1e8] sm:$0xf]
      %v260 = vld [vmem:[%s169 + $0x1ec] sm:$0xff]
      %v261 = vld [vmem:[%s169 + $0x1f4] sm:$0xf]
      %v262 = vld [vmem:[%s169 + $0x1f8] sm:$0xff]
      %v263 = vld [vmem:[%s169 + $0x200] sm:$0xf]
      %v264 = vld [vmem:[%s169 + $0x204] sm:$0xff]
      %v265 = vld [vmem:[%s169 + $0x20c] sm:$0xf]
      %v266 = vld [vmem:[%s169 + $0x210] sm:$0xff]
      %v267 = vld [vmem:[%s169 + $0x218] sm:$0xf]
      %v268 = vld [vmem:[%s169 + $0x21c] sm:$0xff]
      %v269 = vld [vmem:[%s169 + $0x224] sm:$0xf]
      %v270 = vld [vmem:[%s169 + $0x228] sm:$0xff]
      %v271 = vld [vmem:[%s169 + $0x230] sm:$0xf]
      %v272 = vld [vmem:[%s169 + $0x234] sm:$0xff]
      %v273 = vld [vmem:[%s169 + $0x23c] sm:$0xf]
      %v274 = vld [vmem:[%s169 + $0x240] sm:$0xff]
      %v275 = vld [vmem:[%s169 + $0x248] sm:$0xf]
      %v276 = vld [vmem:[%s169 + $0x24c] sm:$0xff]
      %v277 = vld [vmem:[%s169 + $0x254] sm:$0xf]
      %v278 = vld [vmem:[%s169 + $0x258] sm:$0xff]
      %v279 = vld [vmem:[%s169 + $0x260] sm:$0xf]
      %v280 = vld [vmem:[%s169 + $0x264] sm:$0xff]
      %v281 = vld [vmem:[%s169 + $0x26c] sm:$0xf]
      %v282 = vld [vmem:[%s169 + $0x270] sm:$0xff]
      %v283 = vld [vmem:[%s169 + $0x278] sm:$0xf]
      %v284 = vld [vmem:[%s1] sm:$0xf]
      %v285 = vld [vmem:[%s1 + $0x4] sm:$0xf]
      %v286 = vld [vmem:[%s1 + $0x8] sm:$0xf]
      %v287 = vld [vmem:[%s1 + $0xc] sm:$0xf]
      %v288 = vld [vmem:[%s1 + $0x10] sm:$0xf]
      %v289 = vld [vmem:[%s1 + $0x14] sm:$0xf]
      %v290 = vld [vmem:[%s1 + $0x18] sm:$0xf]
      %v291 = vld [vmem:[%s1 + $0x1c] sm:$0xf]
      %v292 = vld [vmem:[%s1 + $0x20] sm:$0xf]
      %v293 = vld [vmem:[%s1 + $0x24] sm:$0xf]
      %v294 = vld [vmem:[%s1 + $0x28] sm:$0xf]
      %v295 = vld [vmem:[%s1 + $0x2c] sm:$0xf]
      %v296 = vld [vmem:[%s1 + $0x30] sm:$0xf]
      %v297 = vld [vmem:[%s1 + $0x34] sm:$0xf]
      %v298 = vld [vmem:[%s1 + $0x38] sm:$0xf]
      %v299 = vld [vmem:[%s1 + $0x3c] sm:$0xf]
      %v300 = vld [vmem:[%s1 + $0x40] sm:$0xf]
      %v301 = vld [vmem:[%s1 + $0x44] sm:$0xf]
      %v302 = vld [vmem:[%s1 + $0x48] sm:$0xf]
      %v303 = vld [vmem:[%s1 + $0x4c] sm:$0xf]
      %v304 = vld [vmem:[%s1 + $0x50] sm:$0xf]
      %v305 = vld [vmem:[%s1 + $0x54] sm:$0xf]
      %v306 = vld [vmem:[%s1 + $0x58] sm:$0xf]
      %v307 = vld [vmem:[%s1 + $0x5c] sm:$0xf]
      %v308 = vld [vmem:[%s1 + $0x60] sm:$0xf]
      %v309 = vld [vmem:[%s1 + $0x64] sm:$0xf]
      %v310 = vld [vmem:[%s1 + $0x68] sm:$0xf]
      %v311 = vld [vmem:[%s1 + $0x6c] sm:$0xf]
      %v312 = vld [vmem:[%s1 + $0x70] sm:$0xf]
      %v313 = vld [vmem:[%s1 + $0x74] sm:$0xf]
      %v314 = vld [vmem:[%s1 + $0x78] sm:$0xf]
      %v315 = vld [vmem:[%s1 + $0x7c] sm:$0xf]
      %v316 = vld [vmem:[%s1 + $0x80] sm:$0xf]
      %v317 = vld [vmem:[%s1 + $0x84] sm:$0xf]
      %v318 = vld [vmem:[%s1 + $0x88] sm:$0xf]
      %v319 = vld [vmem:[%s1 + $0x8c] sm:$0xf]
      %v320 = vld [vmem:[%s2] sm:$0x1]
      %v322 = vlaneseq
      %v323 = vshrl.u32 %v322, 7
      %v324 = vsub.s32 0, %v323
      %v325 = vrot.slane %v320, %v324
      %v433 = vunpack.c.l.b16 %v178
      %v434 = vunpack.c.h.b16 %v178
      %v435 = vunpack.c.l.b16 %v179
      %v436 = vunpack.c.l.b16 %v180
      %v437 = vunpack.c.h.b16 %v180
      %v438 = vunpack.c.l.b16 %v181
      %v439 = vunpack.c.l.b16 %v182
      %v440 = vunpack.c.h.b16 %v182
      %v441 = vunpack.c.l.b16 %v183
      %v442 = vunpack.c.l.b16 %v184
      %v443 = vunpack.c.h.b16 %v184
      %v444 = vunpack.c.l.b16 %v185
      %v445 = vunpack.c.l.b16 %v186
      %v446 = vunpack.c.h.b16 %v186
      %v447 = vunpack.c.l.b16 %v187
      %v448 = vunpack.c.l.b16 %v188
      %v449 = vunpack.c.h.b16 %v188
      %v450 = vunpack.c.l.b16 %v189
      %v451 = vunpack.c.l.b16 %v190
      %v452 = vunpack.c.h.b16 %v190
      %v453 = vunpack.c.l.b16 %v191
      %v454 = vunpack.c.l.b16 %v192
      %v455 = vunpack.c.h.b16 %v192
      %v456 = vunpack.c.l.b16 %v193
      %v457 = vunpack.c.l.b16 %v194
      %v458 = vunpack.c.h.b16 %v194
      %v459 = vunpack.c.l.b16 %v195
      %v460 = vunpack.c.l.b16 %v196
      %v461 = vunpack.c.h.b16 %v196
      %v462 = vunpack.c.l.b16 %v197
      %v463 = vunpack.c.l.b16 %v198
      %v464 = vunpack.c.h.b16 %v198
      %v465 = vunpack.c.l.b16 %v199
      %v466 = vunpack.c.l.b16 %v200
      %v467 = vunpack.c.h.b16 %v200
      %v468 = vunpack.c.l.b16 %v201
      %v469 = vunpack.c.l.b16 %v202
      %v470 = vunpack.c.h.b16 %v202
      %v471 = vunpack.c.l.b16 %v203
      %v472 = vunpack.c.l.b16 %v204
      %v473 = vunpack.c.h.b16 %v204
      %v474 = vunpack.c.l.b16 %v205
      %v475 = vunpack.c.l.b16 %v206
      %v476 = vunpack.c.h.b16 %v206
      %v477 = vunpack.c.l.b16 %v207
      %v478 = vunpack.c.l.b16 %v208
      %v479 = vunpack.c.h.b16 %v208
      %v480 = vunpack.c.l.b16 %v209
      %v481 = vunpack.c.l.b16 %v210
      %v482 = vunpack.c.h.b16 %v210
      %v483 = vunpack.c.l.b16 %v211
      %v484 = vunpack.c.l.b16 %v212
      %v485 = vunpack.c.h.b16 %v212
      %v486 = vunpack.c.l.b16 %v213
      %v487 = vunpack.c.l.b16 %v214
      %v488 = vunpack.c.h.b16 %v214
      %v489 = vunpack.c.l.b16 %v215
      %v490 = vunpack.c.l.b16 %v216
      %v491 = vunpack.c.h.b16 %v216
      %v492 = vunpack.c.l.b16 %v217
      %v493 = vunpack.c.l.b16 %v218
      %v494 = vunpack.c.h.b16 %v218
      %v495 = vunpack.c.l.b16 %v219
      %v496 = vunpack.c.l.b16 %v220
      %v497 = vunpack.c.h.b16 %v220
      %v498 = vunpack.c.l.b16 %v221
      %v499 = vunpack.c.l.b16 %v222
      %v500 = vunpack.c.h.b16 %v222
      %v501 = vunpack.c.l.b16 %v223
      %v502 = vunpack.c.l.b16 %v224
      %v503 = vunpack.c.h.b16 %v224
      %v504 = vunpack.c.l.b16 %v225
      %v505 = vunpack.c.l.b16 %v226
      %v506 = vunpack.c.h.b16 %v226
      %v507 = vunpack.c.l.b16 %v227
      %v508 = vunpack.c.l.b16 %v228
      %v509 = vunpack.c.h.b16 %v228
      %v510 = vunpack.c.l.b16 %v229
      %v511 = vunpack.c.l.b16 %v230
      %v512 = vunpack.c.h.b16 %v230
      %v513 = vunpack.c.l.b16 %v231
      %v514 = vunpack.c.l.b16 %v232
      %v515 = vunpack.c.h.b16 %v232
      %v516 = vunpack.c.l.b16 %v233
      %v517 = vunpack.c.l.b16 %v234
      %v518 = vunpack.c.h.b16 %v234
      %v519 = vunpack.c.l.b16 %v235
      %v520 = vunpack.c.l.b16 %v236
      %v521 = vunpack.c.h.b16 %v236
      %v522 = vunpack.c.l.b16 %v237
      %v523 = vunpack.c.l.b16 %v238
      %v524 = vunpack.c.h.b16 %v238
      %v525 = vunpack.c.l.b16 %v239
      %v526 = vunpack.c.l.b16 %v240
      %v527 = vunpack.c.h.b16 %v240
      %v528 = vunpack.c.l.b16 %v241
      %v529 = vunpack.c.l.b16 %v242
      %v530 = vunpack.c.h.b16 %v242
      %v531 = vunpack.c.l.b16 %v243
      %v532 = vunpack.c.l.b16 %v244
      %v533 = vunpack.c.h.b16 %v244
      %v534 = vunpack.c.l.b16 %v245
      %v535 = vunpack.c.l.b16 %v246
      %v536 = vunpack.c.h.b16 %v246
      %v537 = vunpack.c.l.b16 %v247
      %v538 = vunpack.c.l.b16 %v248
      %v539 = vunpack.c.h.b16 %v248
      %v540 = vunpack.c.l.b16 %v249
      %v541 = vunpack.c.l.b16 %v250
      %v542 = vunpack.c.h.b16 %v250
      %v543 = vunpack.c.l.b16 %v251
      %v544 = vunpack.c.l.b16 %v252
      %v545 = vunpack.c.h.b16 %v252
      %v546 = vunpack.c.l.b16 %v253
      %v547 = vunpack.c.l.b16 %v254
      %v548 = vunpack.c.h.b16 %v254
      %v549 = vunpack.c.l.b16 %v255
      %v550 = vunpack.c.l.b16 %v256
      %v551 = vunpack.c.h.b16 %v256
      %v552 = vunpack.c.l.b16 %v257
      %v553 = vunpack.c.l.b16 %v258
      %v554 = vunpack.c.h.b16 %v258
      %v555 = vunpack.c.l.b16 %v259
      %v556 = vunpack.c.l.b16 %v260
      %v557 = vunpack.c.h.b16 %v260
      %v558 = vunpack.c.l.b16 %v261
      %v559 = vunpack.c.l.b16 %v262
      %v560 = vunpack.c.h.b16 %v262
      %v561 = vunpack.c.l.b16 %v263
      %v562 = vunpack.c.l.b16 %v264
      %v563 = vunpack.c.h.b16 %v264
      %v564 = vunpack.c.l.b16 %v265
      %v565 = vunpack.c.l.b16 %v266
      %v566 = vunpack.c.h.b16 %v266
      %v567 = vunpack.c.l.b16 %v267
      %v568 = vunpack.c.l.b16 %v268
      %v569 = vunpack.c.h.b16 %v268
      %v570 = vunpack.c.l.b16 %v269
      %v571 = vunpack.c.l.b16 %v270
      %v572 = vunpack.c.h.b16 %v270
      %v573 = vunpack.c.l.b16 %v271
      %v574 = vunpack.c.l.b16 %v272
      %v575 = vunpack.c.h.b16 %v272
      %v576 = vunpack.c.l.b16 %v273
      %v577 = vunpack.c.l.b16 %v274
      %v578 = vunpack.c.h.b16 %v274
      %v579 = vunpack.c.l.b16 %v275
      %v580 = vunpack.c.l.b16 %v276
      %v581 = vunpack.c.h.b16 %v276
      %v582 = vunpack.c.l.b16 %v277
      %v583 = vunpack.c.l.b16 %v278
      %v584 = vunpack.c.h.b16 %v278
      %v585 = vunpack.c.l.b16 %v279
      %v586 = vunpack.c.l.b16 %v280
      %v587 = vunpack.c.h.b16 %v280
      %v588 = vunpack.c.l.b16 %v281
      %v589 = vunpack.c.l.b16 %v282
      %v590 = vunpack.c.h.b16 %v282
      %v591 = vunpack.c.l.b16 %v283
      %v592 = vpack.c.b16 %v436, %v433
      %v593 = vpack.c.b16 %v437, %v434
      %v594 = vpack.c.b16 %v438, %v435
      %v595 = vpack.c.b16 %v442, %v439
      %v596 = vpack.c.b16 %v443, %v440
      %v597 = vpack.c.b16 %v444, %v441
      %v598 = vpack.c.b16 %v448, %v445
      %v599 = vpack.c.b16 %v449, %v446
      %v600 = vpack.c.b16 %v450, %v447
      %v601 = vpack.c.b16 %v454, %v451
      %v602 = vpack.c.b16 %v455, %v452
      %v603 = vpack.c.b16 %v456, %v453
      %v604 = vpack.c.b16 %v460, %v457
      %v605 = vpack.c.b16 %v461, %v458
      %v606 = vpack.c.b16 %v462, %v459
      %v607 = vpack.c.b16 %v466, %v463
      %v608 = vpack.c.b16 %v467, %v464
      %v609 = vpack.c.b16 %v468, %v465
      %v610 = vpack.c.b16 %v472, %v469
      %v611 = vpack.c.b16 %v473, %v470
      %v612 = vpack.c.b16 %v474, %v471
      %v613 = vpack.c.b16 %v478, %v475
      %v614 = vpack.c.b16 %v479, %v476
      %v615 = vpack.c.b16 %v480, %v477
      %v616 = vpack.c.b16 %v484, %v481
      %v617 = vpack.c.b16 %v485, %v482
      %v618 = vpack.c.b16 %v486, %v483
      %v619 = vpack.c.b16 %v490, %v487
      %v620 = vpack.c.b16 %v491, %v488
      %v621 = vpack.c.b16 %v492, %v489
      %v622 = vpack.c.b16 %v496, %v493
      %v623 = vpack.c.b16 %v497, %v494
      %v624 = vpack.c.b16 %v498, %v495
      %v625 = vpack.c.b16 %v502, %v499
      %v626 = vpack.c.b16 %v503, %v500
      %v627 = vpack.c.b16 %v504, %v501
      %v628 = vpack.c.b16 %v508, %v505
      %v629 = vpack.c.b16 %v509, %v506
      %v630 = vpack.c.b16 %v510, %v507
      %v631 = vpack.c.b16 %v514, %v511
      %v632 = vpack.c.b16 %v515, %v512
      %v633 = vpack.c.b16 %v516, %v513
      %v634 = vpack.c.b16 %v520, %v517
      %v635 = vpack.c.b16 %v521, %v518
      %v636 = vpack.c.b16 %v522, %v519
      %v637 = vpack.c.b16 %v526, %v523
      %v638 = vpack.c.b16 %v527, %v524
      %v639 = vpack.c.b16 %v528, %v525
      %v640 = vpack.c.b16 %v532, %v529
      %v641 = vpack.c.b16 %v533, %v530
      %v642 = vpack.c.b16 %v534, %v531
      %v643 = vpack.c.b16 %v538, %v535
      %v644 = vpack.c.b16 %v539, %v536
      %v645 = vpack.c.b16 %v540, %v537
      %v646 = vpack.c.b16 %v544, %v541
      %v647 = vpack.c.b16 %v545, %v542
      %v648 = vpack.c.b16 %v546, %v543
      %v649 = vpack.c.b16 %v550, %v547
      %v650 = vpack.c.b16 %v551, %v548
      %v651 = vpack.c.b16 %v552, %v549
      %v652 = vpack.c.b16 %v556, %v553
      %v653 = vpack.c.b16 %v557, %v554
      %v654 = vpack.c.b16 %v558, %v555
      %v655 = vpack.c.b16 %v562, %v559
      %v656 = vpack.c.b16 %v563, %v560
      %v657 = vpack.c.b16 %v564, %v561
      %v658 = vpack.c.b16 %v568, %v565
      %v659 = vpack.c.b16 %v569, %v566
      %v660 = vpack.c.b16 %v570, %v567
      %v661 = vpack.c.b16 %v574, %v571
      %v662 = vpack.c.b16 %v575, %v572
      %v663 = vpack.c.b16 %v576, %v573
      %v664 = vpack.c.b16 %v580, %v577
      %v665 = vpack.c.b16 %v581, %v578
      %v666 = vpack.c.b16 %v582, %v579
      %v667 = vpack.c.b16 %v586, %v583
      %v668 = vpack.c.b16 %v587, %v584
      %v669 = vpack.c.b16 %v588, %v585
      %v670 = vpack.c.b16 %v589, %v589
      %v671 = vpack.c.b16 %v590, %v590
      %v672 = vpack.c.b16 %v591, %v591
      %v763 = vunpack.c.l.b16 %v284
      %v764 = vunpack.c.l.b16 %v285
      %v765 = vunpack.c.l.b16 %v286
      %v766 = vunpack.c.l.b16 %v287
      %v767 = vunpack.c.l.b16 %v288
      %v768 = vunpack.c.l.b16 %v289
      %v769 = vunpack.c.l.b16 %v290
      %v770 = vunpack.c.l.b16 %v291
      %v771 = vunpack.c.l.b16 %v292
      %v772 = vunpack.c.l.b16 %v293
      %v773 = vunpack.c.l.b16 %v294
      %v774 = vunpack.c.l.b16 %v295
      %v775 = vunpack.c.l.b16 %v296
      %v776 = vunpack.c.l.b16 %v297
      %v777 = vunpack.c.l.b16 %v298
      %v778 = vunpack.c.l.b16 %v299
      %v779 = vunpack.c.l.b16 %v300
      %v780 = vunpack.c.l.b16 %v301
      %v781 = vunpack.c.l.b16 %v302
      %v782 = vunpack.c.l.b16 %v303
      %v783 = vunpack.c.l.b16 %v304
      %v784 = vunpack.c.l.b16 %v305
      %v785 = vunpack.c.l.b16 %v306
      %v786 = vunpack.c.l.b16 %v307
      %v787 = vunpack.c.l.b16 %v308
      %v788 = vunpack.c.l.b16 %v309
      %v789 = vunpack.c.l.b16 %v310
      %v790 = vunpack.c.l.b16 %v311
      %v791 = vunpack.c.l.b16 %v312
      %v792 = vunpack.c.l.b16 %v313
      %v793 = vunpack.c.l.b16 %v314
      %v794 = vunpack.c.l.b16 %v315
      %v795 = vunpack.c.l.b16 %v316
      %v796 = vunpack.c.l.b16 %v317
      %v797 = vunpack.c.l.b16 %v318
      %v798 = vunpack.c.l.b16 %v319
      %v799 = vpack.c.b16 %v764, %v763
      %v800 = vpack.c.b16 %v766, %v765
      %v801 = vpack.c.b16 %v768, %v767
      %v802 = vpack.c.b16 %v770, %v769
      %v803 = vpack.c.b16 %v772, %v771
      %v804 = vpack.c.b16 %v774, %v773
      %v805 = vpack.c.b16 %v776, %v775
      %v806 = vpack.c.b16 %v778, %v777
      %v807 = vpack.c.b16 %v780, %v779
      %v808 = vpack.c.b16 %v782, %v781
      %v809 = vpack.c.b16 %v784, %v783
      %v810 = vpack.c.b16 %v786, %v785
      %v811 = vpack.c.b16 %v788, %v787
      %v812 = vpack.c.b16 %v790, %v789
      %v813 = vpack.c.b16 %v792, %v791
      %v814 = vpack.c.b16 %v794, %v793
      %v815 = vpack.c.b16 %v796, %v795
      %v816 = vpack.c.b16 %v798, %v797
      %vm835 = vcmask 261120
      %v837 = vsel %vm835, %v594, 0
      %v840 = vsel %vm835, %v597, 0
      %v843 = vsel %vm835, %v600, 0
      %v846 = vsel %vm835, %v603, 0
      %v849 = vsel %vm835, %v606, 0
      %v852 = vsel %vm835, %v609, 0
      %v855 = vsel %vm835, %v612, 0
      %v858 = vsel %vm835, %v615, 0
      %v861 = vsel %vm835, %v618, 0
      %v864 = vsel %vm835, %v621, 0
      %v867 = vsel %vm835, %v624, 0
      %v870 = vsel %vm835, %v627, 0
      %v873 = vsel %vm835, %v630, 0
      %v876 = vsel %vm835, %v633, 0
      %v879 = vsel %vm835, %v636, 0
      %v882 = vsel %vm835, %v639, 0
      %v885 = vsel %vm835, %v642, 0
      %v888 = vsel %vm835, %v645, 0
      %v891 = vsel %vm835, %v648, 0
      %v894 = vsel %vm835, %v651, 0
      %v897 = vsel %vm835, %v654, 0
      %v900 = vsel %vm835, %v657, 0
      %v903 = vsel %vm835, %v660, 0
      %v906 = vsel %vm835, %v663, 0
      %v909 = vsel %vm835, %v666, 0
      %v912 = vsel %vm835, %v669, 0
      %v915 = vsel %vm835, %v672, 0
      %917 = vmatprep.subr.bf16.mxu0 0
      %918 = vmatpush1.bf16.msra.mxu0 %v806
      %919 = vmatprep.subr.bf16.mxu0 0
      %920 = vmatpush1.bf16.msra.mxu0 %v805
      %921 = vmatprep.subr.bf16.mxu0 0
      %922 = vmatpush1.bf16.msra.mxu0 %v804
      %923 = vmatprep.subr.bf16.mxu0 0
      %924 = vmatpush1.bf16.msra.mxu0 %v803
      %925 = vmatprep.subr.bf16.mxu0 0
      %926 = vmatpush1.bf16.msra.mxu0 %v802
      %927 = vmatprep.subr.bf16.mxu0 0
      %928 = vmatpush1.bf16.msra.mxu0 %v801
      %929 = vmatprep.subr.bf16.mxu0 0
      %930 = vmatpush1.bf16.msra.mxu0 %v800
      %931 = vmatprep.subr.bf16.mxu0 0
      %932 = vmatpush1.bf16.msra.mxu0 %v799
      %933 = vmatprep.subr.bf16.mxu0 0
      %934 = vmatpush2.bf16.msra.mxu0 %v814
      %935 = vmatprep.subr.bf16.mxu0 0
      %936 = vmatpush2.bf16.msra.mxu0 %v813
      %937 = vmatprep.subr.bf16.mxu0 0
      %938 = vmatpush2.bf16.msra.mxu0 %v812
      %939 = vmatprep.subr.bf16.mxu0 0
      %940 = vmatpush2.bf16.msra.mxu0 %v811
      %941 = vmatprep.subr.bf16.mxu0 0
      %942 = vmatpush2.bf16.msra.mxu0 %v810
      %943 = vmatprep.subr.bf16.mxu0 0
      %944 = vmatpush2.bf16.msra.mxu0 %v809
      %945 = vmatprep.subr.bf16.mxu0 0
      %946 = vmatpush2.bf16.msra.mxu0 %v808
      %947 = vmatprep.subr.bf16.mxu0 0
      %948 = vmatpush2.bf16.msra.mxu0 %v807
      %949 = vmatprep.mubr.bf16.mxu0 %v593
      %950 = vmatmul.mubr.bf16.gmra.mxu0 %v592
      %v951 = vpop.f32.mrf.mxu0
      %v952 = vadd.f32 %v325, %v951
      %v953 = vpop.f32.mrf.mxu0
      %v954 = vpop.f32.mrf.mxu0
      %v955 = vadd.f32 %v325, %v954
      %v956 = vpop.f32.mrf.mxu0
      %957 = vmatprep.mubr.bf16.mxu0 %v596
      %958 = vmatmul.mubr.bf16.gmra.mxu0 %v595
      %v959 = vpop.f32.mrf.mxu0
      %v960 = vadd.f32 %v325, %v959
      %v961 = vpop.f32.mrf.mxu0
      %v962 = vpop.f32.mrf.mxu0
      %v963 = vadd.f32 %v325, %v962
      %v964 = vpop.f32.mrf.mxu0
      %965 = vmatprep.mubr.bf16.mxu0 %v599
      %966 = vmatmul.mubr.bf16.gmra.mxu0 %v598
      %v967 = vpop.f32.mrf.mxu0
      %v968 = vadd.f32 %v325, %v967
      %v969 = vpop.f32.mrf.mxu0
      %v970 = vpop.f32.mrf.mxu0
      %v971 = vadd.f32 %v325, %v970
      %v972 = vpop.f32.mrf.mxu0
      %973 = vmatprep.mubr.bf16.mxu0 %v602
      %974 = vmatmul.mubr.bf16.gmra.mxu0 %v601
      %v975 = vpop.f32.mrf.mxu0
      %v976 = vadd.f32 %v325, %v975
      %v977 = vpop.f32.mrf.mxu0
      %v978 = vpop.f32.mrf.mxu0
      %v979 = vadd.f32 %v325, %v978
      %v980 = vpop.f32.mrf.mxu0
      %981 = vmatprep.mubr.bf16.mxu0 %v605
      %982 = vmatmul.mubr.bf16.gmra.mxu0 %v604
      %v983 = vpop.f32.mrf.mxu0
      %v984 = vadd.f32 %v325, %v983
      %v985 = vpop.f32.mrf.mxu0
      %v986 = vpop.f32.mrf.mxu0
      %v987 = vadd.f32 %v325, %v986
      %v988 = vpop.f32.mrf.mxu0
      %989 = vmatprep.mubr.bf16.mxu0 %v608
      %990 = vmatmul.mubr.bf16.gmra.mxu0 %v607
      %v991 = vpop.f32.mrf.mxu0
      %v992 = vadd.f32 %v325, %v991
      %v993 = vpop.f32.mrf.mxu0
      %v994 = vpop.f32.mrf.mxu0
      %v995 = vadd.f32 %v325, %v994
      %v996 = vpop.f32.mrf.mxu0
      %997 = vmatprep.mubr.bf16.mxu0 %v611
      %998 = vmatmul.mubr.bf16.gmra.mxu0 %v610
      %v999 = vpop.f32.mrf.mxu0
      %v1000 = vadd.f32 %v325, %v999
      %v1001 = vpop.f32.mrf.mxu0
      %v1002 = vpop.f32.mrf.mxu0
      %v1003 = vadd.f32 %v325, %v1002
      %v1004 = vpop.f32.mrf.mxu0
      %1005 = vmatprep.mubr.bf16.mxu0 %v614
      %1006 = vmatmul.mubr.bf16.gmra.mxu0 %v613
      %v1007 = vpop.f32.mrf.mxu0
      %v1008 = vadd.f32 %v325, %v1007
      %v1009 = vpop.f32.mrf.mxu0
      %v1010 = vpop.f32.mrf.mxu0
      %v1011 = vadd.f32 %v325, %v1010
      %v1012 = vpop.f32.mrf.mxu0
      %1013 = vmatprep.mubr.bf16.mxu0 %v617
      %1014 = vmatmul.mubr.bf16.gmra.mxu0 %v616
      %v1015 = vpop.f32.mrf.mxu0
      %v1016 = vadd.f32 %v325, %v1015
      %v1017 = vpop.f32.mrf.mxu0
      %v1018 = vpop.f32.mrf.mxu0
      %v1019 = vadd.f32 %v325, %v1018
      %v1020 = vpop.f32.mrf.mxu0
      %1021 = vmatprep.mubr.bf16.mxu0 %v620
      %1022 = vmatmul.mubr.bf16.gmra.mxu0 %v619
      %v1023 = vpop.f32.mrf.mxu0
      %v1024 = vadd.f32 %v325, %v1023
      %v1025 = vpop.f32.mrf.mxu0
      %v1026 = vpop.f32.mrf.mxu0
      %v1027 = vadd.f32 %v325, %v1026
      %v1028 = vpop.f32.mrf.mxu0
      %1029 = vmatprep.mubr.bf16.mxu0 %v623
      %1030 = vmatmul.mubr.bf16.gmra.mxu0 %v622
      %v1031 = vpop.f32.mrf.mxu0
      %v1032 = vadd.f32 %v325, %v1031
      %v1033 = vpop.f32.mrf.mxu0
      %v1034 = vpop.f32.mrf.mxu0
      %v1035 = vadd.f32 %v325, %v1034
      %v1036 = vpop.f32.mrf.mxu0
      %1037 = vmatprep.mubr.bf16.mxu0 %v626
      %1038 = vmatmul.mubr.bf16.gmra.mxu0 %v625
      %v1039 = vpop.f32.mrf.mxu0
      %v1040 = vadd.f32 %v325, %v1039
      %v1041 = vpop.f32.mrf.mxu0
      %v1042 = vpop.f32.mrf.mxu0
      %v1043 = vadd.f32 %v325, %v1042
      %v1044 = vpop.f32.mrf.mxu0
      %1045 = vmatprep.mubr.bf16.mxu0 %v629
      %1046 = vmatmul.mubr.bf16.gmra.mxu0 %v628
      %v1047 = vpop.f32.mrf.mxu0
      %v1048 = vadd.f32 %v325, %v1047
      %v1049 = vpop.f32.mrf.mxu0
      %v1050 = vpop.f32.mrf.mxu0
      %v1051 = vadd.f32 %v325, %v1050
      %v1052 = vpop.f32.mrf.mxu0
      %1053 = vmatprep.mubr.bf16.mxu0 %v632
      %1054 = vmatmul.mubr.bf16.gmra.mxu0 %v631
      %v1055 = vpop.f32.mrf.mxu0
      %v1056 = vadd.f32 %v325, %v1055
      %v1057 = vpop.f32.mrf.mxu0
      %v1058 = vpop.f32.mrf.mxu0
      %v1059 = vadd.f32 %v325, %v1058
      %v1060 = vpop.f32.mrf.mxu0
      %1061 = vmatprep.mubr.bf16.mxu0 %v635
      %1062 = vmatmul.mubr.bf16.gmra.mxu0 %v634
      %v1063 = vpop.f32.mrf.mxu0
      %v1064 = vadd.f32 %v325, %v1063
      %v1065 = vpop.f32.mrf.mxu0
      %v1066 = vpop.f32.mrf.mxu0
      %v1067 = vadd.f32 %v325, %v1066
      %v1068 = vpop.f32.mrf.mxu0
      %1069 = vmatprep.mubr.bf16.mxu0 %v638
      %1070 = vmatmul.mubr.bf16.gmra.mxu0 %v637
      %v1071 = vpop.f32.mrf.mxu0
      %v1072 = vadd.f32 %v325, %v1071
      %v1073 = vpop.f32.mrf.mxu0
      %v1074 = vpop.f32.mrf.mxu0
      %v1075 = vadd.f32 %v325, %v1074
      %v1076 = vpop.f32.mrf.mxu0
      %1077 = vmatprep.mubr.bf16.mxu0 %v641
      %1078 = vmatmul.mubr.bf16.gmra.mxu0 %v640
      %v1079 = vpop.f32.mrf.mxu0
      %v1080 = vadd.f32 %v325, %v1079
      %v1081 = vpop.f32.mrf.mxu0
      %v1082 = vpop.f32.mrf.mxu0
      %v1083 = vadd.f32 %v325, %v1082
      %v1084 = vpop.f32.mrf.mxu0
      %1085 = vmatprep.mubr.bf16.mxu0 %v644
      %1086 = vmatmul.mubr.bf16.gmra.mxu0 %v643
      %v1087 = vpop.f32.mrf.mxu0
      %v1088 = vadd.f32 %v325, %v1087
      %v1089 = vpop.f32.mrf.mxu0
      %v1090 = vpop.f32.mrf.mxu0
      %v1091 = vadd.f32 %v325, %v1090
      %v1092 = vpop.f32.mrf.mxu0
      %1093 = vmatprep.mubr.bf16.mxu0 %v647
      %1094 = vmatmul.mubr.bf16.gmra.mxu0 %v646
      %v1095 = vpop.f32.mrf.mxu0
      %v1096 = vadd.f32 %v325, %v1095
      %v1097 = vpop.f32.mrf.mxu0
      %v1098 = vpop.f32.mrf.mxu0
      %v1099 = vadd.f32 %v325, %v1098
      %v1100 = vpop.f32.mrf.mxu0
      %1101 = vmatprep.mubr.bf16.mxu0 %v650
      %1102 = vmatmul.mubr.bf16.gmra.mxu0 %v649
      %v1103 = vpop.f32.mrf.mxu0
      %v1104 = vadd.f32 %v325, %v1103
      %v1105 = vpop.f32.mrf.mxu0
      %v1106 = vpop.f32.mrf.mxu0
      %v1107 = vadd.f32 %v325, %v1106
      %v1108 = vpop.f32.mrf.mxu0
      %1109 = vmatprep.mubr.bf16.mxu0 %v653
      %1110 = vmatmul.mubr.bf16.gmra.mxu0 %v652
      %v1111 = vpop.f32.mrf.mxu0
      %v1112 = vadd.f32 %v325, %v1111
      %v1113 = vpop.f32.mrf.mxu0
      %v1114 = vpop.f32.mrf.mxu0
      %v1115 = vadd.f32 %v325, %v1114
      %v1116 = vpop.f32.mrf.mxu0
      %1117 = vmatprep.mubr.bf16.mxu0 %v656
      %1118 = vmatmul.mubr.bf16.gmra.mxu0 %v655
      %v1119 = vpop.f32.mrf.mxu0
      %v1120 = vadd.f32 %v325, %v1119
      %v1121 = vpop.f32.mrf.mxu0
      %v1122 = vpop.f32.mrf.mxu0
      %v1123 = vadd.f32 %v325, %v1122
      %v1124 = vpop.f32.mrf.mxu0
      %1125 = vmatprep.mubr.bf16.mxu0 %v659
      %1126 = vmatmul.mubr.bf16.gmra.mxu0 %v658
      %v1127 = vpop.f32.mrf.mxu0
      %v1128 = vadd.f32 %v325, %v1127
      %v1129 = vpop.f32.mrf.mxu0
      %v1130 = vpop.f32.mrf.mxu0
      %v1131 = vadd.f32 %v325, %v1130
      %v1132 = vpop.f32.mrf.mxu0
      %1133 = vmatprep.mubr.bf16.mxu0 %v662
      %1134 = vmatmul.mubr.bf16.gmra.mxu0 %v661
      %v1135 = vpop.f32.mrf.mxu0
      %v1136 = vadd.f32 %v325, %v1135
      %v1137 = vpop.f32.mrf.mxu0
      %v1138 = vpop.f32.mrf.mxu0
      %v1139 = vadd.f32 %v325, %v1138
      %v1140 = vpop.f32.mrf.mxu0
      %1141 = vmatprep.mubr.bf16.mxu0 %v665
      %1142 = vmatmul.mubr.bf16.gmra.mxu0 %v664
      %v1143 = vpop.f32.mrf.mxu0
      %v1144 = vadd.f32 %v325, %v1143
      %v1145 = vpop.f32.mrf.mxu0
      %v1146 = vpop.f32.mrf.mxu0
      %v1147 = vadd.f32 %v325, %v1146
      %v1148 = vpop.f32.mrf.mxu0
      %1149 = vmatprep.mubr.bf16.mxu0 %v668
      %1150 = vmatmul.mubr.bf16.gmra.mxu0 %v667
      %v1151 = vpop.f32.mrf.mxu0
      %v1152 = vadd.f32 %v325, %v1151
      %v1153 = vpop.f32.mrf.mxu0
      %v1154 = vpop.f32.mrf.mxu0
      %v1155 = vadd.f32 %v325, %v1154
      %v1156 = vpop.f32.mrf.mxu0
      %1157 = vmatprep.mubr.bf16.mxu0 %v671
      %1158 = vmatmul.mubr.bf16.gmra.mxu0 %v670
      %v1159 = vpop.f32.mrf.mxu0
      %v1160 = vadd.f32 %v325, %v1159
      %v1161 = vpop.f32.mrf.mxu0
      %v1162 = vpop.f32.mrf.mxu0
      %v1163 = vpop.f32.mrf.mxu0
      %1164 = vdwg.mxu0
      %1165 = vmatprep.subr.bf16.mxu0 0
      %1166 = vmatpush1.bf16.msra.mxu0 0
      %1167 = vmatprep.subr.bf16.mxu0 0
      %1168 = vmatpush1.bf16.msra.mxu0 0
      %1169 = vmatprep.subr.bf16.mxu0 0
      %1170 = vmatpush1.bf16.msra.mxu0 0
      %1171 = vmatprep.subr.bf16.mxu0 0
      %1172 = vmatpush1.bf16.msra.mxu0 0
      %1173 = vmatprep.subr.bf16.mxu0 0
      %1174 = vmatpush1.bf16.msra.mxu0 0
      %1175 = vmatprep.subr.bf16.mxu0 0
      %1176 = vmatpush1.bf16.msra.mxu0 0
      %1177 = vmatprep.subr.bf16.mxu0 0
      %1178 = vmatpush1.bf16.msra.mxu0 %v816
      %1179 = vmatprep.subr.bf16.mxu0 0
      %1180 = vmatpush1.bf16.msra.mxu0 %v815
      %1181 = vmatprep.subr.bf16.mxu0 0
      %1182 = vmatpush2.bf16.msra.mxu0 0
      %1183 = vmatprep.subr.bf16.mxu0 0
      %1184 = vmatpush2.bf16.msra.mxu0 0
      %1185 = vmatprep.subr.bf16.mxu0 0
      %1186 = vmatpush2.bf16.msra.mxu0 0
      %1187 = vmatprep.subr.bf16.mxu0 0
      %1188 = vmatpush2.bf16.msra.mxu0 0
      %1189 = vmatprep.subr.bf16.mxu0 0
      %1190 = vmatpush2.bf16.msra.mxu0 0
      %1191 = vmatprep.subr.bf16.mxu0 0
      %1192 = vmatpush2.bf16.msra.mxu0 0
      %1193 = vmatprep.subr.bf16.mxu0 0
      %1194 = vmatpush2.bf16.msra.mxu0 0
      %1195 = vmatprep.subr.bf16.mxu0 0
      %1196 = vmatpush2.bf16.msra.mxu0 0
      %1197 = vmatprep.mubr.bf16.mxu0 0
      %1198 = vmatmul.mubr.bf16.gmra.mxu0 %v837
      %v1199 = vpop.f32.mrf.mxu0
      %v1200 = vadd.f32 %v952, %v1199
      %v1201 = vpop.f32.mrf.mxu0
      %v1202 = vpop.f32.mrf.mxu0
      %v1203 = vadd.f32 %v955, %v1202
      %v1204 = vpop.f32.mrf.mxu0
      %1205 = vmatprep.mubr.bf16.mxu0 0
      %1206 = vmatmul.mubr.bf16.gmra.mxu0 %v840
      %v1207 = vpop.f32.mrf.mxu0
      %v1208 = vadd.f32 %v960, %v1207
      %v1209 = vpop.f32.mrf.mxu0
      %v1210 = vpop.f32.mrf.mxu0
      %v1211 = vadd.f32 %v963, %v1210
      %v1212 = vpop.f32.mrf.mxu0
      %1213 = vmatprep.mubr.bf16.mxu0 0
      %1214 = vmatmul.mubr.bf16.gmra.mxu0 %v843
      %v1215 = vpop.f32.mrf.mxu0
      %v1216 = vadd.f32 %v968, %v1215
      %v1217 = vpop.f32.mrf.mxu0
      %v1218 = vpop.f32.mrf.mxu0
      %v1219 = vadd.f32 %v971, %v1218
      %v1220 = vpop.f32.mrf.mxu0
      %1221 = vmatprep.mubr.bf16.mxu0 0
      %1222 = vmatmul.mubr.bf16.gmra.mxu0 %v846
      %v1223 = vpop.f32.mrf.mxu0
      %v1224 = vadd.f32 %v976, %v1223
      %v1225 = vpop.f32.mrf.mxu0
      %v1226 = vpop.f32.mrf.mxu0
      %v1227 = vadd.f32 %v979, %v1226
      %v1228 = vpop.f32.mrf.mxu0
      %1229 = vmatprep.mubr.bf16.mxu0 0
      %1230 = vmatmul.mubr.bf16.gmra.mxu0 %v849
      %v1231 = vpop.f32.mrf.mxu0
      %v1232 = vadd.f32 %v984, %v1231
      %v1233 = vpop.f32.mrf.mxu0
      %v1234 = vpop.f32.mrf.mxu0
      %v1235 = vadd.f32 %v987, %v1234
      %v1236 = vpop.f32.mrf.mxu0
      %1237 = vmatprep.mubr.bf16.mxu0 0
      %1238 = vmatmul.mubr.bf16.gmra.mxu0 %v852
      %v1239 = vpop.f32.mrf.mxu0
      %v1240 = vadd.f32 %v992, %v1239
      %v1241 = vpop.f32.mrf.mxu0
      %v1242 = vpop.f32.mrf.mxu0
      %v1243 = vadd.f32 %v995, %v1242
      %v1244 = vpop.f32.mrf.mxu0
      %1245 = vmatprep.mubr.bf16.mxu0 0
      %1246 = vmatmul.mubr.bf16.gmra.mxu0 %v855
      %v1247 = vpop.f32.mrf.mxu0
      %v1248 = vadd.f32 %v1000, %v1247
      %v1249 = vpop.f32.mrf.mxu0
      %v1250 = vpop.f32.mrf.mxu0
      %v1251 = vadd.f32 %v1003, %v1250
      %v1252 = vpop.f32.mrf.mxu0
      %1253 = vmatprep.mubr.bf16.mxu0 0
      %1254 = vmatmul.mubr.bf16.gmra.mxu0 %v858
      %v1255 = vpop.f32.mrf.mxu0
      %v1256 = vadd.f32 %v1008, %v1255
      %v1257 = vpop.f32.mrf.mxu0
      %v1258 = vpop.f32.mrf.mxu0
      %v1259 = vadd.f32 %v1011, %v1258
      %v1260 = vpop.f32.mrf.mxu0
      %1261 = vmatprep.mubr.bf16.mxu0 0
      %1262 = vmatmul.mubr.bf16.gmra.mxu0 %v861
      %v1263 = vpop.f32.mrf.mxu0
      %v1264 = vadd.f32 %v1016, %v1263
      %v1265 = vpop.f32.mrf.mxu0
      %v1266 = vpop.f32.mrf.mxu0
      %v1267 = vadd.f32 %v1019, %v1266
      %v1268 = vpop.f32.mrf.mxu0
      %1269 = vmatprep.mubr.bf16.mxu0 0
      %1270 = vmatmul.mubr.bf16.gmra.mxu0 %v864
      %v1271 = vpop.f32.mrf.mxu0
      %v1272 = vadd.f32 %v1024, %v1271
      %v1273 = vpop.f32.mrf.mxu0
      %v1274 = vpop.f32.mrf.mxu0
      %v1275 = vadd.f32 %v1027, %v1274
      %v1276 = vpop.f32.mrf.mxu0
      %1277 = vmatprep.mubr.bf16.mxu0 0
      %1278 = vmatmul.mubr.bf16.gmra.mxu0 %v867
      %v1279 = vpop.f32.mrf.mxu0
      %v1280 = vadd.f32 %v1032, %v1279
      %v1281 = vpop.f32.mrf.mxu0
      %v1282 = vpop.f32.mrf.mxu0
      %v1283 = vadd.f32 %v1035, %v1282
      %v1284 = vpop.f32.mrf.mxu0
      %1285 = vmatprep.mubr.bf16.mxu0 0
      %1286 = vmatmul.mubr.bf16.gmra.mxu0 %v870
      %v1287 = vpop.f32.mrf.mxu0
      %v1288 = vadd.f32 %v1040, %v1287
      %v1289 = vpop.f32.mrf.mxu0
      %v1290 = vpop.f32.mrf.mxu0
      %v1291 = vadd.f32 %v1043, %v1290
      %v1292 = vpop.f32.mrf.mxu0
      %1293 = vmatprep.mubr.bf16.mxu0 0
      %1294 = vmatmul.mubr.bf16.gmra.mxu0 %v873
      %v1295 = vpop.f32.mrf.mxu0
      %v1296 = vadd.f32 %v1048, %v1295
      %v1297 = vpop.f32.mrf.mxu0
      %v1298 = vpop.f32.mrf.mxu0
      %v1299 = vadd.f32 %v1051, %v1298
      %v1300 = vpop.f32.mrf.mxu0
      %1301 = vmatprep.mubr.bf16.mxu0 0
      %1302 = vmatmul.mubr.bf16.gmra.mxu0 %v876
      %v1303 = vpop.f32.mrf.mxu0
      %v1304 = vadd.f32 %v1056, %v1303
      %v1305 = vpop.f32.mrf.mxu0
      %v1306 = vpop.f32.mrf.mxu0
      %v1307 = vadd.f32 %v1059, %v1306
      %v1308 = vpop.f32.mrf.mxu0
      %1309 = vmatprep.mubr.bf16.mxu0 0
      %1310 = vmatmul.mubr.bf16.gmra.mxu0 %v879
      %v1311 = vpop.f32.mrf.mxu0
      %v1312 = vadd.f32 %v1064, %v1311
      %v1313 = vpop.f32.mrf.mxu0
      %v1314 = vpop.f32.mrf.mxu0
      %v1315 = vadd.f32 %v1067, %v1314
      %v1316 = vpop.f32.mrf.mxu0
      %1317 = vmatprep.mubr.bf16.mxu0 0
      %1318 = vmatmul.mubr.bf16.gmra.mxu0 %v882
      %v1319 = vpop.f32.mrf.mxu0
      %v1320 = vadd.f32 %v1072, %v1319
      %v1321 = vpop.f32.mrf.mxu0
      %v1322 = vpop.f32.mrf.mxu0
      %v1323 = vadd.f32 %v1075, %v1322
      %v1324 = vpop.f32.mrf.mxu0
      %1325 = vmatprep.mubr.bf16.mxu0 0
      %1326 = vmatmul.mubr.bf16.gmra.mxu0 %v885
      %v1327 = vpop.f32.mrf.mxu0
      %v1328 = vadd.f32 %v1080, %v1327
      %v1329 = vpop.f32.mrf.mxu0
      %v1330 = vpop.f32.mrf.mxu0
      %v1331 = vadd.f32 %v1083, %v1330
      %v1332 = vpop.f32.mrf.mxu0
      %1333 = vmatprep.mubr.bf16.mxu0 0
      %1334 = vmatmul.mubr.bf16.gmra.mxu0 %v888
      %v1335 = vpop.f32.mrf.mxu0
      %v1336 = vadd.f32 %v1088, %v1335
      %v1337 = vpop.f32.mrf.mxu0
      %v1338 = vpop.f32.mrf.mxu0
      %v1339 = vadd.f32 %v1091, %v1338
      %v1340 = vpop.f32.mrf.mxu0
      %1341 = vmatprep.mubr.bf16.mxu0 0
      %1342 = vmatmul.mubr.bf16.gmra.mxu0 %v891
      %v1343 = vpop.f32.mrf.mxu0
      %v1344 = vadd.f32 %v1096, %v1343
      %v1345 = vpop.f32.mrf.mxu0
      %v1346 = vpop.f32.mrf.mxu0
      %v1347 = vadd.f32 %v1099, %v1346
      %v1348 = vpop.f32.mrf.mxu0
      %1349 = vmatprep.mubr.bf16.mxu0 0
      %1350 = vmatmul.mubr.bf16.gmra.mxu0 %v894
      %v1351 = vpop.f32.mrf.mxu0
      %v1352 = vadd.f32 %v1104, %v1351
      %v1353 = vpop.f32.mrf.mxu0
      %v1354 = vpop.f32.mrf.mxu0
      %v1355 = vadd.f32 %v1107, %v1354
      %v1356 = vpop.f32.mrf.mxu0
      %1357 = vmatprep.mubr.bf16.mxu0 0
      %1358 = vmatmul.mubr.bf16.gmra.mxu0 %v897
      %v1359 = vpop.f32.mrf.mxu0
      %v1360 = vadd.f32 %v1112, %v1359
      %v1361 = vpop.f32.mrf.mxu0
      %v1362 = vpop.f32.mrf.mxu0
      %v1363 = vadd.f32 %v1115, %v1362
      %v1364 = vpop.f32.mrf.mxu0
      %1365 = vmatprep.mubr.bf16.mxu0 0
      %1366 = vmatmul.mubr.bf16.gmra.mxu0 %v900
      %v1367 = vpop.f32.mrf.mxu0
      %v1368 = vadd.f32 %v1120, %v1367
      %v1369 = vpop.f32.mrf.mxu0
      %v1370 = vpop.f32.mrf.mxu0
      %v1371 = vadd.f32 %v1123, %v1370
      %v1372 = vpop.f32.mrf.mxu0
      %1373 = vmatprep.mubr.bf16.mxu0 0
      %1374 = vmatmul.mubr.bf16.gmra.mxu0 %v903
      %v1375 = vpop.f32.mrf.mxu0
      %v1376 = vadd.f32 %v1128, %v1375
      %v1377 = vpop.f32.mrf.mxu0
      %v1378 = vpop.f32.mrf.mxu0
      %v1379 = vadd.f32 %v1131, %v1378
      %v1380 = vpop.f32.mrf.mxu0
      %1381 = vmatprep.mubr.bf16.mxu0 0
      %1382 = vmatmul.mubr.bf16.gmra.mxu0 %v906
      %v1383 = vpop.f32.mrf.mxu0
      %v1384 = vadd.f32 %v1136, %v1383
      %v1385 = vpop.f32.mrf.mxu0
      %v1386 = vpop.f32.mrf.mxu0
      %v1387 = vadd.f32 %v1139, %v1386
      %v1388 = vpop.f32.mrf.mxu0
      %1389 = vmatprep.mubr.bf16.mxu0 0
      %1390 = vmatmul.mubr.bf16.gmra.mxu0 %v909
      %v1391 = vpop.f32.mrf.mxu0
      %v1392 = vadd.f32 %v1144, %v1391
      %v1393 = vpop.f32.mrf.mxu0
      %v1394 = vpop.f32.mrf.mxu0
      %v1395 = vadd.f32 %v1147, %v1394
      %v1396 = vpop.f32.mrf.mxu0
      %1397 = vmatprep.mubr.bf16.mxu0 0
      %1398 = vmatmul.mubr.bf16.gmra.mxu0 %v912
      %v1399 = vpop.f32.mrf.mxu0
      %v1400 = vadd.f32 %v1152, %v1399
      %v1401 = vpop.f32.mrf.mxu0
      %v1402 = vpop.f32.mrf.mxu0
      %v1403 = vadd.f32 %v1155, %v1402
      %v1404 = vpop.f32.mrf.mxu0
      %1405 = vmatprep.mubr.bf16.mxu0 0
      %1406 = vmatmul.mubr.bf16.gmra.mxu0 %v915
      %v1407 = vpop.f32.mrf.mxu0
      %v1408 = vadd.f32 %v1160, %v1407
      %v1409 = vpop.f32.mrf.mxu0
      %v1410 = vpop.f32.mrf.mxu0
      %v1411 = vpop.f32.mrf.mxu0
      %1412 = vdwg.mxu0
      %v1413 = vxor.u32 %v1200, 2147483648
      %v1414 = vxor.u32 %v1203, 2147483648
      %v1415 = vxor.u32 %v1208, 2147483648
      %v1416 = vxor.u32 %v1211, 2147483648
      %v1417 = vxor.u32 %v1216, 2147483648
      %v1418 = vxor.u32 %v1219, 2147483648
      %v1419 = vxor.u32 %v1224, 2147483648
      %v1420 = vxor.u32 %v1227, 2147483648
      %v1421 = vxor.u32 %v1232, 2147483648
      %v1422 = vxor.u32 %v1235, 2147483648
      %v1423 = vxor.u32 %v1240, 2147483648
      %v1424 = vxor.u32 %v1243, 2147483648
      %v1425 = vxor.u32 %v1248, 2147483648
      %v1426 = vxor.u32 %v1251, 2147483648
      %v1427 = vxor.u32 %v1256, 2147483648
      %v1428 = vxor.u32 %v1259, 2147483648
      %v1429 = vxor.u32 %v1264, 2147483648
      %v1430 = vxor.u32 %v1267, 2147483648
      %v1431 = vxor.u32 %v1272, 2147483648
      %v1432 = vxor.u32 %v1275, 2147483648
      %v1433 = vxor.u32 %v1280, 2147483648
      %v1434 = vxor.u32 %v1283, 2147483648
      %v1435 = vxor.u32 %v1288, 2147483648
      %v1436 = vxor.u32 %v1291, 2147483648
      %v1437 = vxor.u32 %v1296, 2147483648
      %v1438 = vxor.u32 %v1299, 2147483648
      %v1439 = vxor.u32 %v1304, 2147483648
      %v1440 = vxor.u32 %v1307, 2147483648
      %v1441 = vxor.u32 %v1312, 2147483648
      %v1442 = vxor.u32 %v1315, 2147483648
      %v1443 = vxor.u32 %v1320, 2147483648
      %v1444 = vxor.u32 %v1323, 2147483648
      %v1445 = vxor.u32 %v1328, 2147483648
      %v1446 = vxor.u32 %v1331, 2147483648
      %v1447 = vxor.u32 %v1336, 2147483648
      %v1448 = vxor.u32 %v1339, 2147483648
      %v1449 = vxor.u32 %v1344, 2147483648
      %v1450 = vxor.u32 %v1347, 2147483648
      %v1451 = vxor.u32 %v1352, 2147483648
      %v1452 = vxor.u32 %v1355, 2147483648
      %v1453 = vxor.u32 %v1360, 2147483648
      %v1454 = vxor.u32 %v1363, 2147483648
      %v1455 = vxor.u32 %v1368, 2147483648
      %v1456 = vxor.u32 %v1371, 2147483648
      %v1457 = vxor.u32 %v1376, 2147483648
      %v1458 = vxor.u32 %v1379, 2147483648
      %v1459 = vxor.u32 %v1384, 2147483648
      %v1460 = vxor.u32 %v1387, 2147483648
      %v1461 = vxor.u32 %v1392, 2147483648
      %v1462 = vxor.u32 %v1395, 2147483648
      %v1463 = vxor.u32 %v1400, 2147483648
      %v1464 = vxor.u32 %v1403, 2147483648
      %v1465 = vxor.u32 %v1408, 2147483648
      %v1466 = vmul.f32 %v1413, 1.442695
      %v1467 = vpow.pop %v1466
      %v1468 = vmul.f32 %v1414, 1.442695
      %v1469 = vpow.pop %v1468
      %v1470 = vmul.f32 %v1415, 1.442695
      %v1471 = vpow.pop %v1470
      %v1472 = vmul.f32 %v1416, 1.442695
      %v1473 = vpow.pop %v1472
      %v1474 = vmul.f32 %v1417, 1.442695
      %v1475 = vpow.pop %v1474
      %v1476 = vmul.f32 %v1418, 1.442695
      %v1477 = vpow.pop %v1476
      %v1478 = vmul.f32 %v1419, 1.442695
      %v1479 = vpow.pop %v1478
      %v1480 = vmul.f32 %v1420, 1.442695
      %v1481 = vpow.pop %v1480
      %v1482 = vmul.f32 %v1421, 1.442695
      %v1483 = vpow.pop %v1482
      %v1484 = vmul.f32 %v1422, 1.442695
      %v1485 = vpow.pop %v1484
      %v1486 = vmul.f32 %v1423, 1.442695
      %v1487 = vpow.pop %v1486
      %v1488 = vmul.f32 %v1424, 1.442695
      %v1489 = vpow.pop %v1488
      %v1490 = vmul.f32 %v1425, 1.442695
      %v1491 = vpow.pop %v1490
      %v1492 = vmul.f32 %v1426, 1.442695
      %v1493 = vpow.pop %v1492
      %v1494 = vmul.f32 %v1427, 1.442695
      %v1495 = vpow.pop %v1494
      %v1496 = vmul.f32 %v1428, 1.442695
      %v1497 = vpow.pop %v1496
      %v1498 = vmul.f32 %v1429, 1.442695
      %v1499 = vpow.pop %v1498
      %v1500 = vmul.f32 %v1430, 1.442695
      %v1501 = vpow.pop %v1500
      %v1502 = vmul.f32 %v1431, 1.442695
      %v1503 = vpow.pop %v1502
      %v1504 = vmul.f32 %v1432, 1.442695
      %v1505 = vpow.pop %v1504
      %v1506 = vmul.f32 %v1433, 1.442695
      %v1507 = vpow.pop %v1506
      %v1508 = vmul.f32 %v1434, 1.442695
      %v1509 = vpow.pop %v1508
      %v1510 = vmul.f32 %v1435, 1.442695
      %v1511 = vpow.pop %v1510
      %v1512 = vmul.f32 %v1436, 1.442695
      %v1513 = vpow.pop %v1512
      %v1514 = vmul.f32 %v1437, 1.442695
      %v1515 = vpow.pop %v1514
      %v1516 = vmul.f32 %v1438, 1.442695
      %v1517 = vpow.pop %v1516
      %v1518 = vmul.f32 %v1439, 1.442695
      %v1519 = vpow.pop %v1518
      %v1520 = vmul.f32 %v1440, 1.442695
      %v1521 = vpow.pop %v1520
      %v1522 = vmul.f32 %v1441, 1.442695
      %v1523 = vpow.pop %v1522
      %v1524 = vmul.f32 %v1442, 1.442695
      %v1525 = vpow.pop %v1524
      %v1526 = vmul.f32 %v1443, 1.442695
      %v1527 = vpow.pop %v1526
      %v1528 = vmul.f32 %v1444, 1.442695
      %v1529 = vpow.pop %v1528
      %v1530 = vmul.f32 %v1445, 1.442695
      %v1531 = vpow.pop %v1530
      %v1532 = vmul.f32 %v1446, 1.442695
      %v1533 = vpow.pop %v1532
      %v1534 = vmul.f32 %v1447, 1.442695
      %v1535 = vpow.pop %v1534
      %v1536 = vmul.f32 %v1448, 1.442695
      %v1537 = vpow.pop %v1536
      %v1538 = vmul.f32 %v1449, 1.442695
      %v1539 = vpow.pop %v1538
      %v1540 = vmul.f32 %v1450, 1.442695
      %v1541 = vpow.pop %v1540
      %v1542 = vmul.f32 %v1451, 1.442695
      %v1543 = vpow.pop %v1542
      %v1544 = vmul.f32 %v1452, 1.442695
      %v1545 = vpow.pop %v1544
      %v1546 = vmul.f32 %v1453, 1.442695
      %v1547 = vpow.pop %v1546
      %v1548 = vmul.f32 %v1454, 1.442695
      %v1549 = vpow.pop %v1548
      %v1550 = vmul.f32 %v1455, 1.442695
      %v1551 = vpow.pop %v1550
      %v1552 = vmul.f32 %v1456, 1.442695
      %v1553 = vpow.pop %v1552
      %v1554 = vmul.f32 %v1457, 1.442695
      %v1555 = vpow.pop %v1554
      %v1556 = vmul.f32 %v1458, 1.442695
      %v1557 = vpow.pop %v1556
      %v1558 = vmul.f32 %v1459, 1.442695
      %v1559 = vpow.pop %v1558
      %v1560 = vmul.f32 %v1460, 1.442695
      %v1561 = vpow.pop %v1560
      %v1562 = vmul.f32 %v1461, 1.442695
      %v1563 = vpow.pop %v1562
      %v1564 = vmul.f32 %v1462, 1.442695
      %v1565 = vpow.pop %v1564
      %v1566 = vmul.f32 %v1463, 1.442695
      %v1567 = vpow.pop %v1566
      %v1568 = vmul.f32 %v1464, 1.442695
      %v1569 = vpow.pop %v1568
      %v1570 = vmul.f32 %v1465, 1.442695
      %v1571 = vpow.pop %v1570
      %v1572 = vadd.f32 %v1467, 1.0
      %v1573 = vadd.f32 %v1469, 1.0
      %v1574 = vadd.f32 %v1471, 1.0
      %v1575 = vadd.f32 %v1473, 1.0
      %v1576 = vadd.f32 %v1475, 1.0
      %v1577 = vadd.f32 %v1477, 1.0
      %v1578 = vadd.f32 %v1479, 1.0
      %v1579 = vadd.f32 %v1481, 1.0
      %v1580 = vadd.f32 %v1483, 1.0
      %v1581 = vadd.f32 %v1485, 1.0
      %v1582 = vadd.f32 %v1487, 1.0
      %v1583 = vadd.f32 %v1489, 1.0
      %v1584 = vadd.f32 %v1491, 1.0
      %v1585 = vadd.f32 %v1493, 1.0
      %v1586 = vadd.f32 %v1495, 1.0
      %v1587 = vadd.f32 %v1497, 1.0
      %v1588 = vadd.f32 %v1499, 1.0
      %v1589 = vadd.f32 %v1501, 1.0
      %v1590 = vadd.f32 %v1503, 1.0
      %v1591 = vadd.f32 %v1505, 1.0
      %v1592 = vadd.f32 %v1507, 1.0
      %v1593 = vadd.f32 %v1509, 1.0
      %v1594 = vadd.f32 %v1511, 1.0
      %v1595 = vadd.f32 %v1513, 1.0
      %v1596 = vadd.f32 %v1515, 1.0
      %v1597 = vadd.f32 %v1517, 1.0
      %v1598 = vadd.f32 %v1519, 1.0
      %v1599 = vadd.f32 %v1521, 1.0
      %v1600 = vadd.f32 %v1523, 1.0
      %v1601 = vadd.f32 %v1525, 1.0
      %v1602 = vadd.f32 %v1527, 1.0
      %v1603 = vadd.f32 %v1529, 1.0
      %v1604 = vadd.f32 %v1531, 1.0
      %v1605 = vadd.f32 %v1533, 1.0
      %v1606 = vadd.f32 %v1535, 1.0
      %v1607 = vadd.f32 %v1537, 1.0
      %v1608 = vadd.f32 %v1539, 1.0
      %v1609 = vadd.f32 %v1541, 1.0
      %v1610 = vadd.f32 %v1543, 1.0
      %v1611 = vadd.f32 %v1545, 1.0
      %v1612 = vadd.f32 %v1547, 1.0
      %v1613 = vadd.f32 %v1549, 1.0
      %v1614 = vadd.f32 %v1551, 1.0
      %v1615 = vadd.f32 %v1553, 1.0
      %v1616 = vadd.f32 %v1555, 1.0
      %v1617 = vadd.f32 %v1557, 1.0
      %v1618 = vadd.f32 %v1559, 1.0
      %v1619 = vadd.f32 %v1561, 1.0
      %v1620 = vadd.f32 %v1563, 1.0
      %v1621 = vadd.f32 %v1565, 1.0
      %v1622 = vadd.f32 %v1567, 1.0
      %v1623 = vadd.f32 %v1569, 1.0
      %v1624 = vadd.f32 %v1571, 1.0
      %v1625 = vrcp.pop %v1572
      %v1626 = vmul.f32 1.0, %v1625
      %v1627 = vrcp.pop %v1573
      %v1628 = vmul.f32 1.0, %v1627
      %v1629 = vrcp.pop %v1574
      %v1630 = vmul.f32 1.0, %v1629
      %v1631 = vrcp.pop %v1575
      %v1632 = vmul.f32 1.0, %v1631
      %v1633 = vrcp.pop %v1576
      %v1634 = vmul.f32 1.0, %v1633
      %v1635 = vrcp.pop %v1577
      %v1636 = vmul.f32 1.0, %v1635
      %v1637 = vrcp.pop %v1578
      %v1638 = vmul.f32 1.0, %v1637
      %v1639 = vrcp.pop %v1579
      %v1640 = vmul.f32 1.0, %v1639
      %v1641 = vrcp.pop %v1580
      %v1642 = vmul.f32 1.0, %v1641
      %v1643 = vrcp.pop %v1581
      %v1644 = vmul.f32 1.0, %v1643
      %v1645 = vrcp.pop %v1582
      %v1646 = vmul.f32 1.0, %v1645
      %v1647 = vrcp.pop %v1583
      %v1648 = vmul.f32 1.0, %v1647
      %v1649 = vrcp.pop %v1584
      %v1650 = vmul.f32 1.0, %v1649
      %v1651 = vrcp.pop %v1585
      %v1652 = vmul.f32 1.0, %v1651
      %v1653 = vrcp.pop %v1586
      %v1654 = vmul.f32 1.0, %v1653
      %v1655 = vrcp.pop %v1587
      %v1656 = vmul.f32 1.0, %v1655
      %v1657 = vrcp.pop %v1588
      %v1658 = vmul.f32 1.0, %v1657
      %v1659 = vrcp.pop %v1589
      %v1660 = vmul.f32 1.0, %v1659
      %v1661 = vrcp.pop %v1590
      %v1662 = vmul.f32 1.0, %v1661
      %v1663 = vrcp.pop %v1591
      %v1664 = vmul.f32 1.0, %v1663
      %v1665 = vrcp.pop %v1592
      %v1666 = vmul.f32 1.0, %v1665
      %v1667 = vrcp.pop %v1593
      %v1668 = vmul.f32 1.0, %v1667
      %v1669 = vrcp.pop %v1594
      %v1670 = vmul.f32 1.0, %v1669
      %v1671 = vrcp.pop %v1595
      %v1672 = vmul.f32 1.0, %v1671
      %v1673 = vrcp.pop %v1596
      %v1674 = vmul.f32 1.0, %v1673
      %v1675 = vrcp.pop %v1597
      %v1676 = vmul.f32 1.0, %v1675
      %v1677 = vrcp.pop %v1598
      %v1678 = vmul.f32 1.0, %v1677
      %v1679 = vrcp.pop %v1599
      %v1680 = vmul.f32 1.0, %v1679
      %v1681 = vrcp.pop %v1600
      %v1682 = vmul.f32 1.0, %v1681
      %v1683 = vrcp.pop %v1601
      %v1684 = vmul.f32 1.0, %v1683
      %v1685 = vrcp.pop %v1602
      %v1686 = vmul.f32 1.0, %v1685
      %v1687 = vrcp.pop %v1603
      %v1688 = vmul.f32 1.0, %v1687
      %v1689 = vrcp.pop %v1604
      %v1690 = vmul.f32 1.0, %v1689
      %v1691 = vrcp.pop %v1605
      %v1692 = vmul.f32 1.0, %v1691
      %v1693 = vrcp.pop %v1606
      %v1694 = vmul.f32 1.0, %v1693
      %v1695 = vrcp.pop %v1607
      %v1696 = vmul.f32 1.0, %v1695
      %v1697 = vrcp.pop %v1608
      %v1698 = vmul.f32 1.0, %v1697
      %v1699 = vrcp.pop %v1609
      %v1700 = vmul.f32 1.0, %v1699
      %v1701 = vrcp.pop %v1610
      %v1702 = vmul.f32 1.0, %v1701
      %v1703 = vrcp.pop %v1611
      %v1704 = vmul.f32 1.0, %v1703
      %v1705 = vrcp.pop %v1612
      %v1706 = vmul.f32 1.0, %v1705
      %v1707 = vrcp.pop %v1613
      %v1708 = vmul.f32 1.0, %v1707
      %v1709 = vrcp.pop %v1614
      %v1710 = vmul.f32 1.0, %v1709
      %v1711 = vrcp.pop %v1615
      %v1712 = vmul.f32 1.0, %v1711
      %v1713 = vrcp.pop %v1616
      %v1714 = vmul.f32 1.0, %v1713
      %v1715 = vrcp.pop %v1617
      %v1716 = vmul.f32 1.0, %v1715
      %v1717 = vrcp.pop %v1618
      %v1718 = vmul.f32 1.0, %v1717
      %v1719 = vrcp.pop %v1619
      %v1720 = vmul.f32 1.0, %v1719
      %v1721 = vrcp.pop %v1620
      %v1722 = vmul.f32 1.0, %v1721
      %v1723 = vrcp.pop %v1621
      %v1724 = vmul.f32 1.0, %v1723
      %v1725 = vrcp.pop %v1622
      %v1726 = vmul.f32 1.0, %v1725
      %v1727 = vrcp.pop %v1623
      %v1728 = vmul.f32 1.0, %v1727
      %v1729 = vrcp.pop %v1624
      %v1730 = vmul.f32 1.0, %v1729
      %1731 = vst [vmem:[%s175] sm:$0xff] %v1626
      %1732 = vst [vmem:[%s175 + $0x8] sm:$0xff] %v1628
      %1733 = vst [vmem:[%s175 + $0x10] sm:$0xff] %v1630
      %1734 = vst [vmem:[%s175 + $0x18] sm:$0xff] %v1632
      %1735 = vst [vmem:[%s175 + $0x20] sm:$0xff] %v1634
      %1736 = vst [vmem:[%s175 + $0x28] sm:$0xff] %v1636
      %1737 = vst [vmem:[%s175 + $0x30] sm:$0xff] %v1638
      %1738 = vst [vmem:[%s175 + $0x38] sm:$0xff] %v1640
      %1739 = vst [vmem:[%s175 + $0x40] sm:$0xff] %v1642
      %1740 = vst [vmem:[%s175 + $0x48] sm:$0xff] %v1644
      %1741 = vst [vmem:[%s175 + $0x50] sm:$0xff] %v1646
      %1742 = vst [vmem:[%s175 + $0x58] sm:$0xff] %v1648
      %1743 = vst [vmem:[%s175 + $0x60] sm:$0xff] %v1650
      %1744 = vst [vmem:[%s175 + $0x68] sm:$0xff] %v1652
      %1745 = vst [vmem:[%s175 + $0x70] sm:$0xff] %v1654
      %1746 = vst [vmem:[%s175 + $0x78] sm:$0xff] %v1656
      %1747 = vst [vmem:[%s175 + $0x80] sm:$0xff] %v1658
      %1748 = vst [vmem:[%s175 + $0x88] sm:$0xff] %v1660
      %1749 = vst [vmem:[%s175 + $0x90] sm:$0xff] %v1662
      %1750 = vst [vmem:[%s175 + $0x98] sm:$0xff] %v1664
      %1751 = vst [vmem:[%s175 + $0xa0] sm:$0xff] %v1666
      %1752 = vst [vmem:[%s175 + $0xa8] sm:$0xff] %v1668
      %1753 = vst [vmem:[%s175 + $0xb0] sm:$0xff] %v1670
      %1754 = vst [vmem:[%s175 + $0xb8] sm:$0xff] %v1672
      %1755 = vst [vmem:[%s175 + $0xc0] sm:$0xff] %v1674
      %1756 = vst [vmem:[%s175 + $0xc8] sm:$0xff] %v1676
      %1757 = vst [vmem:[%s175 + $0xd0] sm:$0xff] %v1678
      %1758 = vst [vmem:[%s175 + $0xd8] sm:$0xff] %v1680
      %1759 = vst [vmem:[%s175 + $0xe0] sm:$0xff] %v1682
      %1760 = vst [vmem:[%s175 + $0xe8] sm:$0xff] %v1684
      %1761 = vst [vmem:[%s175 + $0xf0] sm:$0xff] %v1686
      %1762 = vst [vmem:[%s175 + $0xf8] sm:$0xff] %v1688
      %1763 = vst [vmem:[%s175 + $0x100] sm:$0xff] %v1690
      %1764 = vst [vmem:[%s175 + $0x108] sm:$0xff] %v1692
      %1765 = vst [vmem:[%s175 + $0x110] sm:$0xff] %v1694
      %1766 = vst [vmem:[%s175 + $0x118] sm:$0xff] %v1696
      %1767 = vst [vmem:[%s175 + $0x120] sm:$0xff] %v1698
      %1768 = vst [vmem:[%s175 + $0x128] sm:$0xff] %v1700
      %1769 = vst [vmem:[%s175 + $0x130] sm:$0xff] %v1702
      %1770 = vst [vmem:[%s175 + $0x138] sm:$0xff] %v1704
      %1771 = vst [vmem:[%s175 + $0x140] sm:$0xff] %v1706
      %1772 = vst [vmem:[%s175 + $0x148] sm:$0xff] %v1708
      %1773 = vst [vmem:[%s175 + $0x150] sm:$0xff] %v1710
      %1774 = vst [vmem:[%s175 + $0x158] sm:$0xff] %v1712
      %1775 = vst [vmem:[%s175 + $0x160] sm:$0xff] %v1714
      %1776 = vst [vmem:[%s175 + $0x168] sm:$0xff] %v1716
      %1777 = vst [vmem:[%s175 + $0x170] sm:$0xff] %v1718
      %1778 = vst [vmem:[%s175 + $0x178] sm:$0xff] %v1720
      %1779 = vst [vmem:[%s175 + $0x180] sm:$0xff] %v1722
      %1780 = vst [vmem:[%s175 + $0x188] sm:$0xff] %v1724
      %1781 = vst [vmem:[%s175 + $0x190] sm:$0xff] %v1726
      %1782 = vst [vmem:[%s175 + $0x198] sm:$0xff] %v1728
      %1783 = vst [vmem:[%s175 + $0x1a0] sm:$0xff] %v1730
      %s1784 = smul.u32 53, %s14
      %p1785 = scmp.lt.s32.totalorder %s1784, 211
      %s1786 = scalar_select %p1785, %s1784, 211
      %s1787 = smul.addr %s1786, 8
      %s1788 = scalar_lea.vmem %s3, %s1787
      // Predicated region
      $region33: #{vae_forward.17} parent=31 // pred_check
        %p1789 = pneg %p100
      $region34: #{vae_forward.17} parent=31 // pred_check_branch
        %1791 = sbr.rel (%p1789) target = $region36
      $region35: #{vae_forward.17} parent=31 // pred_region
        %s1792 = smul.u32 53, %s14
      $region36: #{vae_forward.17} parent=31 // pred_fallthru
        _
    $region32: #{vae_forward.17} parent=5 // pred_fallthru
      _
    %p1793 = scmp.le.s32.totalorder 2, %s9
    // Predicated region
    $region37: #{vae_forward.17} parent=5 // pred_check
      %p1794 = pneg %p1793
    $region38: #{vae_forward.17} parent=5 // pred_check_branch
      %1796 = sbr.rel (%p1794) target = $region40
    $region39: #{vae_forward.17} parent=5 // pred_region
      %s1797 = ssub.s32 %s9, 2
      // Predicated region
      $region41: #{vae_forward.17} parent=39 // pred_check
        %p1798 = pneg %p106
      $region42: #{vae_forward.17} parent=39 // pred_check_branch
        %1800 = sbr.rel (%p1798) target = $region44
      $region43: #{vae_forward.17} parent=39 // pred_region
        %s1801 = smul.u32 53, %s15
        %p1802 = scmp.lt.s32.totalorder %s1801, 211
        %s1803 = scalar_select %p1802, %s1801, 211
        %s1804 = smul.addr %s1803, 8
        %s1805 = scalar_lea.vmem %s3, %s1804
      $region44: #{vae_forward.17} parent=39 // pred_fallthru
        _
    $region40: #{vae_forward.17} parent=5 // pred_fallthru
      _
  $region6: #{vae_forward.17} parent=0 // loop_footer
    %s13 = sadd.s32 1, %s9
  $region7: #{vae_forward.17} parent=0 // loop_footer_branch
    %8 = sbr.rel target = $region3
  $region8: #{vae_forward.17} parent=0 // loop_exit
    _

</llo_original>
